<compile_context>
chip_gen: v7x
topology: tpu7x:2x2x1
jax: 0.10.0
libtpu: 0.0.40
codegen_flags: <defaults>
</compile_context>

<pallas_src>
import jax
import jax.numpy as jnp
from jax.experimental import pallas as pl
from jax.experimental.pallas import tpu as pltpu


# -----------------------------------------------------------------------------
# Pallas kernels
# -----------------------------------------------------------------------------

def gemm_stats_kernel(p_ref, w_ref, y_ref, stats_ref):
    """Pass 1: bf16 im2col-GEMM (f32 accumulation) for one M-tile.

    Writes the raw GEMM tile (bf16) and per-tile BatchNorm partials:
    row 0 = per-channel sum, row 1 = per-channel sum-of-squares centered on
    the tile mean (so the wrapper can do a numerically robust Chan combine).
    Conv bias is omitted: it cancels exactly under training-mode BatchNorm.
    """
    y = jnp.dot(p_ref[...], w_ref[...], preferred_element_type=jnp.float32)
    rows = y.shape[0]
    tsum = jnp.sum(y, axis=0, keepdims=True)                  # [1, N]
    tmean = tsum * (1.0 / rows)
    cent = y - tmean
    tcss = jnp.sum(cent * cent, axis=0, keepdims=True)        # [1, N]
    stats_ref[...] = jnp.concatenate([tsum, tcss], axis=0)[None, :, :]
    y_ref[...] = y.astype(y_ref.dtype)


def bn_lrelu_kernel(y_ref, scale_ref, shift_ref, o_ref):
    """Pass 2: fused BatchNorm(train) scale/shift + LeakyReLU(0.1) per M-tile."""
    y = y_ref[...].astype(jnp.float32)
    yn = y * scale_ref[...] + shift_ref[...]
    o_ref[...] = jnp.where(yn >= 0.0, yn, 0.1 * yn).astype(o_ref.dtype)


def head_kernel(x_ref, wmu_ref, bmu_ref, wsg_ref, bsg_ref, n_ref, z_ref, kl_ref):
    """Fused VAE head: two lane-aligned GEMMs (mu, sigma),
    sigma = exp(clamp(s, max=1)), z = mu + sigma * eps,
    kl = sum KL(N(mu, sigma^2) || N(0,1)).  log(sigma) == clamped s, so no
    log() is evaluated."""
    x = x_ref[...]
    mu = jnp.dot(x, wmu_ref[...], preferred_element_type=jnp.float32) + bmu_ref[...]
    s = jnp.dot(x, wsg_ref[...], preferred_element_type=jnp.float32) + bsg_ref[...]
    s = jnp.minimum(s, 1.0)                                   # torch.clamp(max=1)
    sigma = jnp.exp(s)
    z_ref[...] = mu + sigma * n_ref[...]
    # TODO(synk): compute_kl_div was not provided in the reference; using the
    # standard closed-form KL(N(mu, sigma^2) || N(0,1)) with reduction='sum'.
    kl_terms = 0.5 * (sigma * sigma + mu * mu) - s - 0.5
    kl_ref[...] = jnp.sum(kl_terms, axis=(0, 1), keepdims=True)


# -----------------------------------------------------------------------------
# pallas_call wrappers
# -----------------------------------------------------------------------------

def _pick_tile_rows(m, target=512):
    """Largest divisor of m that is <= target and a multiple of 8 (else m)."""
    if m <= target:
        return m
    for t in range(target, 7, -1):
        if m % t == 0 and t % 8 == 0:
            return t
    return m


def conv_gemm_stats(patches, w_mat, tile_rows):
    Mp, Kp = patches.shape
    Np = w_mat.shape[1]
    n_m = Mp // tile_rows
    return pl.pallas_call(
        gemm_stats_kernel,
        out_shape=(
            jax.ShapeDtypeStruct((Mp, Np), jnp.bfloat16),
            jax.ShapeDtypeStruct((n_m, 2, Np), jnp.float32),
        ),
        grid=(n_m,),
        in_specs=[
            pl.BlockSpec((tile_rows, Kp), lambda m: (m, 0)),
            pl.BlockSpec((Kp, Np), lambda m: (0, 0)),    # weight resident
        ],
        out_specs=(
            pl.BlockSpec((tile_rows, Np), lambda m: (m, 0)),
            pl.BlockSpec((1, 2, Np), lambda m: (m, 0, 0)),
        ),
        compiler_params=pltpu.CompilerParams(
            dimension_semantics=("parallel",)),
    )(patches, w_mat)


def bn_lrelu_apply(y, scale, shift, tile_rows):
    Mp, Np = y.shape
    n_m = Mp // tile_rows
    return pl.pallas_call(
        bn_lrelu_kernel,
        out_shape=jax.ShapeDtypeStruct((Mp, Np), jnp.bfloat16),
        grid=(n_m,),
        in_specs=[
            pl.BlockSpec((tile_rows, Np), lambda m: (m, 0)),
            pl.BlockSpec((1, Np), lambda m: (0, 0)),
            pl.BlockSpec((1, Np), lambda m: (0, 0)),
        ],
        out_specs=pl.BlockSpec((tile_rows, Np), lambda m: (m, 0)),
        compiler_params=pltpu.CompilerParams(
            dimension_semantics=("parallel",)),
    )(y, scale, shift)


def vae_head(x_flat, w_mu, b_mu, w_sig, b_sig, noise):
    B, K = x_flat.shape
    L = w_mu.shape[1]
    full = lambda shp: pl.BlockSpec(shp, lambda i: (0,) * len(shp))
    z, kl = pl.pallas_call(
        head_kernel,
        out_shape=(
            jax.ShapeDtypeStruct((B, L), jnp.float32),
            jax.ShapeDtypeStruct((1, 1), jnp.float32),
        ),
        grid=(1,),
        in_specs=[full((B, K)), full((K, L)), full((1, L)),
                  full((K, L)), full((1, L)), full((B, L))],
        out_specs=(full((B, L)), full((1, 1))),
    )(x_flat, w_mu, b_mu, w_sig, b_sig, noise)
    return z, kl


# -----------------------------------------------------------------------------
# Glue: im2col, weight layout, BN combine, parameters
# -----------------------------------------------------------------------------

def im2col_nhwc(x, kernel=4, stride=2, pad=1):
    """x: [B, H, W, C] -> patches [B*Ho*Wo, KH*KW*C] (element order kh, kw, c).

    TODO(synk): move im2col into the conv kernel (space-to-depth + contiguous
    2x2 taps) to remove the ~4x HBM expansion; kept host-side for lowering
    robustness of sublane-offset slices.
    """
    B, H, W, C = x.shape
    xp = jnp.pad(x, ((0, 0), (pad, pad), (pad, pad), (0, 0)))
    Ho = (H + 2 * pad - kernel) // stride + 1
    Wo = (W + 2 * pad - kernel) // stride + 1
    pieces = []
    for kh in range(kernel):
        for kw in range(kernel):
            pieces.append(
                xp[:, kh:kh + stride * Ho:stride, kw:kw + stride * Wo:stride, :])
    p = jnp.stack(pieces, axis=3)                 # [B, Ho, Wo, KH*KW, C]
    return p.reshape(B * Ho * Wo, kernel * kernel * C), Ho, Wo


def torch_conv_w_to_mat(w_oihw):
    """[Cout, Cin, KH, KW] -> [KH*KW*Cin, Cout] matching im2col ordering."""
    cout, cin, kh, kw = w_oihw.shape
    return jnp.transpose(w_oihw, (2, 3, 1, 0)).reshape(kh * kw * cin, cout)


def block_diag_pack(w_mat, pack):
    """[K, N] -> block-diagonal [pack*K, pack*N]: `pack` adjacent output pixels
    share one GEMM row so the MXU result / stores are >= 128 lanes wide."""
    if pack == 1:
        return w_mat
    K, N = w_mat.shape
    out = jnp.zeros((pack * K, pack * N), w_mat.dtype)
    for g in range(pack):
        out = out.at[g * K:(g + 1) * K, g * N:(g + 1) * N].set(w_mat)
    return out


def fold_nchw_flatten(w_in_out, C, H, W):
    """Reorder rows of [C*H*W, out] from NCHW-flatten order to NHWC-flatten
    order, folding PyTorch's nn.Flatten permutation into the static weights."""
    out = w_in_out.shape[-1]
    return jnp.transpose(
        w_in_out.reshape(C, H, W, out), (1, 2, 0, 3)).reshape(C * H * W, out)


def finalize_bn_stats(partial, gamma, beta, pack, rows_per_tile, total_count,
                      eps=1e-5):
    """Chan parallel-variance combine of per-tile (and per lane-group) partials
    into a fused per-channel scale/shift, tiled back to the packed lane layout.
    Tiny [n_tiles, N]-sized XLA work."""
    n_ch = gamma.shape[0]
    n_m = partial.shape[0]
    sums = partial[:, 0, :].reshape(n_m * pack, n_ch)
    css = partial[:, 1, :].reshape(n_m * pack, n_ch)
    mean = jnp.sum(sums, axis=0) / total_count
    part_mean = sums / rows_per_tile
    var = (jnp.sum(css, axis=0)
           + rows_per_tile * jnp.sum((part_mean - mean) ** 2, axis=0)) / total_count
    scale = gamma * jax.lax.rsqrt(var + eps)       # biased var, eps=1e-5 (PyTorch)
    shift = beta - mean * scale
    scale_p = jnp.tile(scale, (pack,))[None, :].astype(jnp.float32)
    shift_p = jnp.tile(shift, (pack,))[None, :].astype(jnp.float32)
    return scale_p, shift_p


def conv_bn_lrelu_layer(x_nhwc, layer, pack):
    """One Conv(4x4, stride 2, pad 1, no bias) + BatchNorm(train) + LeakyReLU(0.1)."""
    B = x_nhwc.shape[0]
    n_ch = layer["gamma"].shape[0]
    patches, Ho, Wo = im2col_nhwc(x_nhwc)
    M, K = patches.shape
    Mp = M // pack
    patches_p = patches.reshape(Mp, pack * K)      # free row-major view
    tile_rows = _pick_tile_rows(Mp)
    y, partial = conv_gemm_stats(patches_p, layer["w"], tile_rows)
    scale_p, shift_p = finalize_bn_stats(
        partial, layer["gamma"], layer["beta"],
        pack=pack, rows_per_tile=tile_rows, total_count=M)
    a = bn_lrelu_apply(y, scale_p, shift_p, tile_rows)
    return a.reshape(B, Ho, Wo, n_ch)


def make_params(latent_dims, key):
    ks = jax.random.split(key, 5)
    scale = lambda fan_in: 1.0 / jnp.sqrt(jnp.float32(fan_in))

    def conv_layer(k, cin, cout, pack, ksz=4):
        w = jax.random.normal(k, (cout, cin, ksz, ksz), jnp.float32) * scale(cin * ksz * ksz)
        # Conv bias dropped: it cancels exactly under training-mode BatchNorm.
        w_mat = block_diag_pack(torch_conv_w_to_mat(w), pack)
        return dict(w=w_mat.astype(jnp.bfloat16),
                    gamma=jnp.ones((cout,), jnp.float32),    # BN weight = 1
                    beta=jnp.zeros((cout,), jnp.float32))    # BN bias = 0

    feat = 256 * 4 * 4
    # mu head in PyTorch [out, in] layout; sigma head zero-filled as in __init__.
    w_mu_pt = jax.random.normal(ks[3], (latent_dims, feat), jnp.float32) * scale(feat)
    b_mu = jax.random.normal(ks[4], (1, latent_dims), jnp.float32) * scale(feat)
    w_sig_pt = jnp.zeros((latent_dims, feat), jnp.float32)
    b_sig = jnp.zeros((1, latent_dims), jnp.float32)

    return {
        "c1": conv_layer(ks[0], 3, 64, pack=2),    # lane-densified: 64 -> 128 lanes
        "c2": conv_layer(ks[1], 64, 128, pack=1),
        "c3": conv_layer(ks[2], 128, 256, pack=1),
        # Separate lane-aligned mu / sigma weights (no in-kernel column split),
        # with PyTorch's NCHW flatten permutation folded into the rows.
        "w_mu": fold_nchw_flatten(w_mu_pt.T, 256, 4, 4).astype(jnp.bfloat16),
        "w_sig": fold_nchw_flatten(w_sig_pt.T, 256, 4, 4).astype(jnp.bfloat16),
        "b_mu": b_mu,
        "b_sig": b_sig,
    }


# c1 pairs 2 adjacent output pixels per GEMM row (lane-dense 128-wide stores).
_CONV_PACK = (("c1", 2), ("c2", 1), ("c3", 1))


@jax.jit
def encoder_forward(params, x_nchw, noise):
    """x_nchw: [B, 3, 32, 32] float32.  Returns (z [B, latent], kl [1, 1])."""
    x = jnp.transpose(x_nchw, (0, 2, 3, 1)).astype(jnp.bfloat16)   # NHWC, bf16
    for name, pack in _CONV_PACK:
        x = conv_bn_lrelu_layer(x, params[name], pack)
    B = x.shape[0]
    x_flat = x.reshape(B, -1)   # NHWC flatten; NCHW permutation lives in w_mu/w_sig
    # TODO(synk): the head could be fused into c3's normalize pass to save one
    # [B, 4096] HBM round trip; kept separate for simplicity.
    return vae_head(x_flat, params["w_mu"], params["b_mu"],
                    params["w_sig"], params["b_sig"], noise)


# -----------------------------------------------------------------------------
# Demo
# -----------------------------------------------------------------------------

if __name__ == "__main__":
    latent_dims = 8
    batch = 2

    key = jax.random.PRNGKey(0)
    k_x, k_params, k_noise = jax.random.split(key, 3)

    # CIFAR-shaped input (spatial 32 required by the Linear(256*4*4, .) head).
    x = jax.random.normal(k_x, (batch, 3, 32, 32), jnp.float32)
    params = make_params(latent_dims, k_params)
    noise = jax.random.normal(k_noise, (batch, latent_dims), jnp.float32)

    z, kl = encoder_forward(params, x, noise)
    z = jax.block_until_ready(z)
    kl = jax.block_until_ready(kl)

    assert z.shape == (batch, latent_dims)
    assert kl.shape == (1, 1)
    assert bool(jnp.all(jnp.isfinite(z))) and bool(jnp.isfinite(kl[0, 0]))

    print("KERNEL_OK")
</pallas_src>

<mosaic_0001>
module attributes {stable_mosaic.version = 11 : i64} {
  func.func @gemm_stats_kernel(%arg0: i32, %arg1: memref<256x96xbf16, #tpu.memory_space<vmem>>, %arg2: memref<96x128xbf16, #tpu.memory_space<vmem>>, %arg3: memref<256x128xbf16, #tpu.memory_space<vmem>>, %arg4: memref<1x2x128xf32, #tpu.memory_space<vmem>>) attributes {dimension_semantics = [#tpu.dimension_semantics<parallel>], iteration_bounds = array<i64: 1>, scalar_prefetch = 0 : i64, scratch_operands = 0 : i64, tpu.core_type = #tpu.core_type<tc>, window_params = [{transform_indices = @transform_0, window_bounds = array<i64: 256, 96>}, {pipeline_mode = #tpu.pipeline_mode<synchronous>, transform_indices = @transform_1, window_bounds = array<i64: 96, 128>}, {transform_indices = @transform_2, window_bounds = array<i64: 256, 128>}, {transform_indices = @transform_3, window_bounds = array<i64: 1, 2, 128>}]} {
    %c0 = arith.constant 0 : index
    %c0_0 = arith.constant 0 : index
    %0 = vector.load %arg1[%c0, %c0_0] : memref<256x96xbf16, #tpu.memory_space<vmem>>, vector<256x96xbf16>
    %c0_1 = arith.constant 0 : index
    %c0_2 = arith.constant 0 : index
    %1 = vector.load %arg2[%c0_1, %c0_2] : memref<96x128xbf16, #tpu.memory_space<vmem>>, vector<96x128xbf16>
    %cst = arith.constant dense<0.000000e+00> : vector<256x128xf32>
    %2 = tpu.matmul %0, %1, %cst {dimension_numbers = #tpu.dot_dimension_numbers<[1], [0], [0], [1], [0, 0, 1, 1], [], []>} : vector<256x96xbf16>, vector<96x128xbf16>, vector<256x128xf32> -> vector<256x128xf32>
    %cst_3 = arith.constant dense<0.000000e+00> : vector<128xf32>
    %3 = vector.multi_reduction <add>, %2, %cst_3 [0] : vector<256x128xf32> to vector<128xf32>
    %4 = vector.shape_cast %3 : vector<128xf32> to vector<1x128xf32>
    %cst_4 = arith.constant 3.906250e-03 : f32
    %5 = vector.broadcast %cst_4 : f32 to vector<1x128xf32>
    %6 = arith.mulf %4, %5 : vector<1x128xf32>
    %7 = vector.broadcast %6 : vector<1x128xf32> to vector<256x128xf32>
    %8 = arith.subf %2, %7 : vector<256x128xf32>
    %9 = arith.mulf %8, %8 : vector<256x128xf32>
    %cst_5 = arith.constant dense<0.000000e+00> : vector<128xf32>
    %10 = vector.multi_reduction <add>, %9, %cst_5 [0] : vector<256x128xf32> to vector<128xf32>
    %11 = vector.shape_cast %10 : vector<128xf32> to vector<1x128xf32>
    %12 = tpu.concatenate %4, %11 in 0 : vector<1x128xf32>, vector<1x128xf32> -> vector<2x128xf32>
    %13 = vector.shape_cast %12 : vector<2x128xf32> to vector<1x2x128xf32>
    %c0_6 = arith.constant 0 : index
    %c0_7 = arith.constant 0 : index
    %c0_8 = arith.constant 0 : index
    %14 = vector.load %arg4[%c0_6, %c0_7, %c0_8] : memref<1x2x128xf32, #tpu.memory_space<vmem>>, vector<1x2x128xf32>
    tpu.vector_store %arg4[%c0_6, %c0_7, %c0_8], %13 {strides = array<i32>} : memref<1x2x128xf32, #tpu.memory_space<vmem>>, vector<1x2x128xf32>,
    %15 = arith.truncf %2 : vector<256x128xf32> to vector<256x128xbf16>
    %c0_9 = arith.constant 0 : index
    %c0_10 = arith.constant 0 : index
    %16 = vector.load %arg3[%c0_9, %c0_10] : memref<256x128xbf16, #tpu.memory_space<vmem>>, vector<256x128xbf16>
    tpu.vector_store %arg3[%c0_9, %c0_10], %15 {strides = array<i32>} : memref<256x128xbf16, #tpu.memory_space<vmem>>, vector<256x128xbf16>,
    return
  }
  func.func @transform_0(%arg0: i32) -> (i32, i32) {
    %c0_i32 = arith.constant 0 : i32
    %c0_i32_0 = arith.constant 0 : i32
    return %arg0, %c0_i32 : i32, i32
  }
  func.func @transform_1(%arg0: i32) -> (i32, i32) {
    %c0_i32 = arith.constant 0 : i32
    %c0_i32_0 = arith.constant 0 : i32
    %c0_i32_1 = arith.constant 0 : i32
    return %c0_i32, %c0_i32_0 : i32, i32
  }
  func.func @transform_2(%arg0: i32) -> (i32, i32) {
    %c0_i32 = arith.constant 0 : i32
    %c0_i32_0 = arith.constant 0 : i32
    return %arg0, %c0_i32 : i32, i32
  }
  func.func @transform_3(%arg0: i32) -> (i32, i32, i32) {
    %c0_i32 = arith.constant 0 : i32
    %c0_i32_0 = arith.constant 0 : i32
    %c0_i32_1 = arith.constant 0 : i32
    return %arg0, %c0_i32, %c0_i32_0 : i32, i32, i32
  }
}

module attributes {stable_mosaic.version = 11 : i64} {
  func.func @bn_lrelu_kernel(%arg0: i32, %arg1: memref<256x128xbf16, #tpu.memory_space<vmem>>, %arg2: memref<1x128xf32, #tpu.memory_space<vmem>>, %arg3: memref<1x128xf32, #tpu.memory_space<vmem>>, %arg4: memref<256x128xbf16, #tpu.memory_space<vmem>>) attributes {dimension_semantics = [#tpu.dimension_semantics<parallel>], iteration_bounds = array<i64: 1>, scalar_prefetch = 0 : i64, scratch_operands = 0 : i64, tpu.core_type = #tpu.core_type<tc>, window_params = [{transform_indices = @transform_0, window_bounds = array<i64: 256, 128>}, {pipeline_mode = #tpu.pipeline_mode<synchronous>, transform_indices = @transform_1, window_bounds = array<i64: 1, 128>}, {pipeline_mode = #tpu.pipeline_mode<synchronous>, transform_indices = @transform_2, window_bounds = array<i64: 1, 128>}, {transform_indices = @transform_3, window_bounds = array<i64: 256, 128>}]} {
    %c0 = arith.constant 0 : index
    %c0_0 = arith.constant 0 : index
    %0 = vector.load %arg1[%c0, %c0_0] : memref<256x128xbf16, #tpu.memory_space<vmem>>, vector<256x128xbf16>
    %1 = arith.extf %0 : vector<256x128xbf16> to vector<256x128xf32>
    %c0_1 = arith.constant 0 : index
    %c0_2 = arith.constant 0 : index
    %2 = vector.load %arg2[%c0_1, %c0_2] : memref<1x128xf32, #tpu.memory_space<vmem>>, vector<1x128xf32>
    %3 = vector.broadcast %2 : vector<1x128xf32> to vector<256x128xf32>
    %4 = arith.mulf %1, %3 : vector<256x128xf32>
    %c0_3 = arith.constant 0 : index
    %c0_4 = arith.constant 0 : index
    %5 = vector.load %arg3[%c0_3, %c0_4] : memref<1x128xf32, #tpu.memory_space<vmem>>, vector<1x128xf32>
    %6 = vector.broadcast %5 : vector<1x128xf32> to vector<256x128xf32>
    %7 = arith.addf %4, %6 : vector<256x128xf32>
    %cst = arith.constant 0.000000e+00 : f32
    %8 = vector.broadcast %cst : f32 to vector<256x128xf32>
    %9 = arith.cmpf oge, %7, %8 : vector<256x128xf32>
    %cst_5 = arith.constant 1.000000e-01 : f32
    %10 = vector.broadcast %cst_5 : f32 to vector<256x128xf32>
    %11 = arith.mulf %10, %7 : vector<256x128xf32>
    %12 = arith.select %9, %7, %11 : vector<256x128xi1>, vector<256x128xf32>
    %13 = arith.truncf %12 : vector<256x128xf32> to vector<256x128xbf16>
    %c0_6 = arith.constant 0 : index
    %c0_7 = arith.constant 0 : index
    %14 = vector.load %arg4[%c0_6, %c0_7] : memref<256x128xbf16, #tpu.memory_space<vmem>>, vector<256x128xbf16>
    tpu.vector_store %arg4[%c0_6, %c0_7], %13 {strides = array<i32>} : memref<256x128xbf16, #tpu.memory_space<vmem>>, vector<256x128xbf16>,
    return
  }
  func.func @transform_0(%arg0: i32) -> (i32, i32) {
    %c0_i32 = arith.constant 0 : i32
    %c0_i32_0 = arith.constant 0 : i32
    return %arg0, %c0_i32 : i32, i32
  }
  func.func @transform_1(%arg0: i32) -> (i32, i32) {
    %c0_i32 = arith.constant 0 : i32
    %c0_i32_0 = arith.constant 0 : i32
    %c0_i32_1 = arith.constant 0 : i32
    return %c0_i32, %c0_i32_0 : i32, i32
  }
  func.func @transform_2(%arg0: i32) -> (i32, i32) {
    %c0_i32 = arith.constant 0 : i32
    %c0_i32_0 = arith.constant 0 : i32
    %c0_i32_1 = arith.constant 0 : i32
    return %c0_i32, %c0_i32_0 : i32, i32
  }
  func.func @transform_3(%arg0: i32) -> (i32, i32) {
    %c0_i32 = arith.constant 0 : i32
    %c0_i32_0 = arith.constant 0 : i32
    return %arg0, %c0_i32 : i32, i32
  }
}

module attributes {stable_mosaic.version = 11 : i64} {
  func.func @gemm_stats_kernel(%arg0: i32, %arg1: memref<128x1024xbf16, #tpu.memory_space<vmem>>, %arg2: memref<1024x128xbf16, #tpu.memory_space<vmem>>, %arg3: memref<128x128xbf16, #tpu.memory_space<vmem>>, %arg4: memref<1x2x128xf32, #tpu.memory_space<vmem>>) attributes {dimension_semantics = [#tpu.dimension_semantics<parallel>], iteration_bounds = array<i64: 1>, scalar_prefetch = 0 : i64, scratch_operands = 0 : i64, tpu.core_type = #tpu.core_type<tc>, window_params = [{transform_indices = @transform_0, window_bounds = array<i64: 128, 1024>}, {pipeline_mode = #tpu.pipeline_mode<synchronous>, transform_indices = @transform_1, window_bounds = array<i64: 1024, 128>}, {transform_indices = @transform_2, window_bounds = array<i64: 128, 128>}, {transform_indices = @transform_3, window_bounds = array<i64: 1, 2, 128>}]} {
    %c0 = arith.constant 0 : index
    %c0_0 = arith.constant 0 : index
    %0 = vector.load %arg1[%c0, %c0_0] : memref<128x1024xbf16, #tpu.memory_space<vmem>>, vector<128x1024xbf16>
    %c0_1 = arith.constant 0 : index
    %c0_2 = arith.constant 0 : index
    %1 = vector.load %arg2[%c0_1, %c0_2] : memref<1024x128xbf16, #tpu.memory_space<vmem>>, vector<1024x128xbf16>
    %cst = arith.constant dense<0.000000e+00> : vector<128x128xf32>
    %2 = tpu.matmul %0, %1, %cst {dimension_numbers = #tpu.dot_dimension_numbers<[1], [0], [0], [1], [0, 0, 1, 1], [], []>} : vector<128x1024xbf16>, vector<1024x128xbf16>, vector<128x128xf32> -> vector<128x128xf32>
    %cst_3 = arith.constant dense<0.000000e+00> : vector<128xf32>
    %3 = vector.multi_reduction <add>, %2, %cst_3 [0] : vector<128x128xf32> to vector<128xf32>
    %4 = vector.shape_cast %3 : vector<128xf32> to vector<1x128xf32>
    %cst_4 = arith.constant 7.812500e-03 : f32
    %5 = vector.broadcast %cst_4 : f32 to vector<1x128xf32>
    %6 = arith.mulf %4, %5 : vector<1x128xf32>
    %7 = vector.broadcast %6 : vector<1x128xf32> to vector<128x128xf32>
    %8 = arith.subf %2, %7 : vector<128x128xf32>
    %9 = arith.mulf %8, %8 : vector<128x128xf32>
    %cst_5 = arith.constant dense<0.000000e+00> : vector<128xf32>
    %10 = vector.multi_reduction <add>, %9, %cst_5 [0] : vector<128x128xf32> to vector<128xf32>
    %11 = vector.shape_cast %10 : vector<128xf32> to vector<1x128xf32>
    %12 = tpu.concatenate %4, %11 in 0 : vector<1x128xf32>, vector<1x128xf32> -> vector<2x128xf32>
    %13 = vector.shape_cast %12 : vector<2x128xf32> to vector<1x2x128xf32>
    %c0_6 = arith.constant 0 : index
    %c0_7 = arith.constant 0 : index
    %c0_8 = arith.constant 0 : index
    %14 = vector.load %arg4[%c0_6, %c0_7, %c0_8] : memref<1x2x128xf32, #tpu.memory_space<vmem>>, vector<1x2x128xf32>
    tpu.vector_store %arg4[%c0_6, %c0_7, %c0_8], %13 {strides = array<i32>} : memref<1x2x128xf32, #tpu.memory_space<vmem>>, vector<1x2x128xf32>,
    %15 = arith.truncf %2 : vector<128x128xf32> to vector<128x128xbf16>
    %c0_9 = arith.constant 0 : index
    %c0_10 = arith.constant 0 : index
    %16 = vector.load %arg3[%c0_9, %c0_10] : memref<128x128xbf16, #tpu.memory_space<vmem>>, vector<128x128xbf16>
    tpu.vector_store %arg3[%c0_9, %c0_10], %15 {strides = array<i32>} : memref<128x128xbf16, #tpu.memory_space<vmem>>, vector<128x128xbf16>,
    return
  }
  func.func @transform_0(%arg0: i32) -> (i32, i32) {
    %c0_i32 = arith.constant 0 : i32
    %c0_i32_0 = arith.constant 0 : i32
    return %arg0, %c0_i32 : i32, i32
  }
  func.func @transform_1(%arg0: i32) -> (i32, i32) {
    %c0_i32 = arith.constant 0 : i32
    %c0_i32_0 = arith.constant 0 : i32
    %c0_i32_1 = arith.constant 0 : i32
    return %c0_i32, %c0_i32_0 : i32, i32
  }
  func.func @transform_2(%arg0: i32) -> (i32, i32) {
    %c0_i32 = arith.constant 0 : i32
    %c0_i32_0 = arith.constant 0 : i32
    return %arg0, %c0_i32 : i32, i32
  }
  func.func @transform_3(%arg0: i32) -> (i32, i32, i32) {
    %c0_i32 = arith.constant 0 : i32
    %c0_i32_0 = arith.constant 0 : i32
    %c0_i32_1 = arith.constant 0 : i32
    return %arg0, %c0_i32, %c0_i32_0 : i32, i32, i32
  }
}

module attributes {stable_mosaic.version = 11 : i64} {
  func.func @bn_lrelu_kernel(%arg0: i32, %arg1: memref<128x128xbf16, #tpu.memory_space<vmem>>, %arg2: memref<1x128xf32, #tpu.memory_space<vmem>>, %arg3: memref<1x128xf32, #tpu.memory_space<vmem>>, %arg4: memref<128x128xbf16, #tpu.memory_space<vmem>>) attributes {dimension_semantics = [#tpu.dimension_semantics<parallel>], iteration_bounds = array<i64: 1>, scalar_prefetch = 0 : i64, scratch_operands = 0 : i64, tpu.core_type = #tpu.core_type<tc>, window_params = [{transform_indices = @transform_0, window_bounds = array<i64: 128, 128>}, {pipeline_mode = #tpu.pipeline_mode<synchronous>, transform_indices = @transform_1, window_bounds = array<i64: 1, 128>}, {pipeline_mode = #tpu.pipeline_mode<synchronous>, transform_indices = @transform_2, window_bounds = array<i64: 1, 128>}, {transform_indices = @transform_3, window_bounds = array<i64: 128, 128>}]} {
    %c0 = arith.constant 0 : index
    %c0_0 = arith.constant 0 : index
    %0 = vector.load %arg1[%c0, %c0_0] : memref<128x128xbf16, #tpu.memory_space<vmem>>, vector<128x128xbf16>
    %1 = arith.extf %0 : vector<128x128xbf16> to vector<128x128xf32>
    %c0_1 = arith.constant 0 : index
    %c0_2 = arith.constant 0 : index
    %2 = vector.load %arg2[%c0_1, %c0_2] : memref<1x128xf32, #tpu.memory_space<vmem>>, vector<1x128xf32>
    %3 = vector.broadcast %2 : vector<1x128xf32> to vector<128x128xf32>
    %4 = arith.mulf %1, %3 : vector<128x128xf32>
    %c0_3 = arith.constant 0 : index
    %c0_4 = arith.constant 0 : index
    %5 = vector.load %arg3[%c0_3, %c0_4] : memref<1x128xf32, #tpu.memory_space<vmem>>, vector<1x128xf32>
    %6 = vector.broadcast %5 : vector<1x128xf32> to vector<128x128xf32>
    %7 = arith.addf %4, %6 : vector<128x128xf32>
    %cst = arith.constant 0.000000e+00 : f32
    %8 = vector.broadcast %cst : f32 to vector<128x128xf32>
    %9 = arith.cmpf oge, %7, %8 : vector<128x128xf32>
    %cst_5 = arith.constant 1.000000e-01 : f32
    %10 = vector.broadcast %cst_5 : f32 to vector<128x128xf32>
    %11 = arith.mulf %10, %7 : vector<128x128xf32>
    %12 = arith.select %9, %7, %11 : vector<128x128xi1>, vector<128x128xf32>
    %13 = arith.truncf %12 : vector<128x128xf32> to vector<128x128xbf16>
    %c0_6 = arith.constant 0 : index
    %c0_7 = arith.constant 0 : index
    %14 = vector.load %arg4[%c0_6, %c0_7] : memref<128x128xbf16, #tpu.memory_space<vmem>>, vector<128x128xbf16>
    tpu.vector_store %arg4[%c0_6, %c0_7], %13 {strides = array<i32>} : memref<128x128xbf16, #tpu.memory_space<vmem>>, vector<128x128xbf16>,
    return
  }
  func.func @transform_0(%arg0: i32) -> (i32, i32) {
    %c0_i32 = arith.constant 0 : i32
    %c0_i32_0 = arith.constant 0 : i32
    return %arg0, %c0_i32 : i32, i32
  }
  func.func @transform_1(%arg0: i32) -> (i32, i32) {
    %c0_i32 = arith.constant 0 : i32
    %c0_i32_0 = arith.constant 0 : i32
    %c0_i32_1 = arith.constant 0 : i32
    return %c0_i32, %c0_i32_0 : i32, i32
  }
  func.func @transform_2(%arg0: i32) -> (i32, i32) {
    %c0_i32 = arith.constant 0 : i32
    %c0_i32_0 = arith.constant 0 : i32
    %c0_i32_1 = arith.constant 0 : i32
    return %c0_i32, %c0_i32_0 : i32, i32
  }
  func.func @transform_3(%arg0: i32) -> (i32, i32) {
    %c0_i32 = arith.constant 0 : i32
    %c0_i32_0 = arith.constant 0 : i32
    return %arg0, %c0_i32 : i32, i32
  }
}

module attributes {stable_mosaic.version = 11 : i64} {
  func.func @gemm_stats_kernel(%arg0: i32, %arg1: memref<32x2048xbf16, #tpu.memory_space<vmem>>, %arg2: memref<2048x256xbf16, #tpu.memory_space<vmem>>, %arg3: memref<32x256xbf16, #tpu.memory_space<vmem>>, %arg4: memref<1x2x256xf32, #tpu.memory_space<vmem>>) attributes {dimension_semantics = [#tpu.dimension_semantics<parallel>], iteration_bounds = array<i64: 1>, scalar_prefetch = 0 : i64, scratch_operands = 0 : i64, tpu.core_type = #tpu.core_type<tc>, window_params = [{transform_indices = @transform_0, window_bounds = array<i64: 32, 2048>}, {pipeline_mode = #tpu.pipeline_mode<synchronous>, transform_indices = @transform_1, window_bounds = array<i64: 2048, 256>}, {transform_indices = @transform_2, window_bounds = array<i64: 32, 256>}, {transform_indices = @transform_3, window_bounds = array<i64: 1, 2, 256>}]} {
    %c0 = arith.constant 0 : index
    %c0_0 = arith.constant 0 : index
    %0 = vector.load %arg1[%c0, %c0_0] : memref<32x2048xbf16, #tpu.memory_space<vmem>>, vector<32x2048xbf16>
    %c0_1 = arith.constant 0 : index
    %c0_2 = arith.constant 0 : index
    %1 = vector.load %arg2[%c0_1, %c0_2] : memref<2048x256xbf16, #tpu.memory_space<vmem>>, vector<2048x256xbf16>
    %cst = arith.constant dense<0.000000e+00> : vector<32x256xf32>
    %2 = tpu.matmul %0, %1, %cst {dimension_numbers = #tpu.dot_dimension_numbers<[1], [0], [0], [1], [0, 0, 1, 1], [], []>} : vector<32x2048xbf16>, vector<2048x256xbf16>, vector<32x256xf32> -> vector<32x256xf32>
    %cst_3 = arith.constant dense<0.000000e+00> : vector<256xf32>
    %3 = vector.multi_reduction <add>, %2, %cst_3 [0] : vector<32x256xf32> to vector<256xf32>
    %4 = vector.shape_cast %3 : vector<256xf32> to vector<1x256xf32>
    %cst_4 = arith.constant 3.125000e-02 : f32
    %5 = vector.broadcast %cst_4 : f32 to vector<1x256xf32>
    %6 = arith.mulf %4, %5 : vector<1x256xf32>
    %7 = vector.broadcast %6 : vector<1x256xf32> to vector<32x256xf32>
    %8 = arith.subf %2, %7 : vector<32x256xf32>
    %9 = arith.mulf %8, %8 : vector<32x256xf32>
    %cst_5 = arith.constant dense<0.000000e+00> : vector<256xf32>
    %10 = vector.multi_reduction <add>, %9, %cst_5 [0] : vector<32x256xf32> to vector<256xf32>
    %11 = vector.shape_cast %10 : vector<256xf32> to vector<1x256xf32>
    %12 = tpu.concatenate %4, %11 in 0 : vector<1x256xf32>, vector<1x256xf32> -> vector<2x256xf32>
    %13 = vector.shape_cast %12 : vector<2x256xf32> to vector<1x2x256xf32>
    %c0_6 = arith.constant 0 : index
    %c0_7 = arith.constant 0 : index
    %c0_8 = arith.constant 0 : index
    %14 = vector.load %arg4[%c0_6, %c0_7, %c0_8] : memref<1x2x256xf32, #tpu.memory_space<vmem>>, vector<1x2x256xf32>
    tpu.vector_store %arg4[%c0_6, %c0_7, %c0_8], %13 {strides = array<i32>} : memref<1x2x256xf32, #tpu.memory_space<vmem>>, vector<1x2x256xf32>,
    %15 = arith.truncf %2 : vector<32x256xf32> to vector<32x256xbf16>
    %c0_9 = arith.constant 0 : index
    %c0_10 = arith.constant 0 : index
    %16 = vector.load %arg3[%c0_9, %c0_10] : memref<32x256xbf16, #tpu.memory_space<vmem>>, vector<32x256xbf16>
    tpu.vector_store %arg3[%c0_9, %c0_10], %15 {strides = array<i32>} : memref<32x256xbf16, #tpu.memory_space<vmem>>, vector<32x256xbf16>,
    return
  }
  func.func @transform_0(%arg0: i32) -> (i32, i32) {
    %c0_i32 = arith.constant 0 : i32
    %c0_i32_0 = arith.constant 0 : i32
    return %arg0, %c0_i32 : i32, i32
  }
  func.func @transform_1(%arg0: i32) -> (i32, i32) {
    %c0_i32 = arith.constant 0 : i32
    %c0_i32_0 = arith.constant 0 : i32
    %c0_i32_1 = arith.constant 0 : i32
    return %c0_i32, %c0_i32_0 : i32, i32
  }
  func.func @transform_2(%arg0: i32) -> (i32, i32) {
    %c0_i32 = arith.constant 0 : i32
    %c0_i32_0 = arith.constant 0 : i32
    return %arg0, %c0_i32 : i32, i32
  }
  func.func @transform_3(%arg0: i32) -> (i32, i32, i32) {
    %c0_i32 = arith.constant 0 : i32
    %c0_i32_0 = arith.constant 0 : i32
    %c0_i32_1 = arith.constant 0 : i32
    return %arg0, %c0_i32, %c0_i32_0 : i32, i32, i32
  }
}

module attributes {stable_mosaic.version = 11 : i64} {
  func.func @bn_lrelu_kernel(%arg0: i32, %arg1: memref<32x256xbf16, #tpu.memory_space<vmem>>, %arg2: memref<1x256xf32, #tpu.memory_space<vmem>>, %arg3: memref<1x256xf32, #tpu.memory_space<vmem>>, %arg4: memref<32x256xbf16, #tpu.memory_space<vmem>>) attributes {dimension_semantics = [#tpu.dimension_semantics<parallel>], iteration_bounds = array<i64: 1>, scalar_prefetch = 0 : i64, scratch_operands = 0 : i64, tpu.core_type = #tpu.core_type<tc>, window_params = [{transform_indices = @transform_0, window_bounds = array<i64: 32, 256>}, {pipeline_mode = #tpu.pipeline_mode<synchronous>, transform_indices = @transform_1, window_bounds = array<i64: 1, 256>}, {pipeline_mode = #tpu.pipeline_mode<synchronous>, transform_indices = @transform_2, window_bounds = array<i64: 1, 256>}, {transform_indices = @transform_3, window_bounds = array<i64: 32, 256>}]} {
    %c0 = arith.constant 0 : index
    %c0_0 = arith.constant 0 : index
    %0 = vector.load %arg1[%c0, %c0_0] : memref<32x256xbf16, #tpu.memory_space<vmem>>, vector<32x256xbf16>
    %1 = arith.extf %0 : vector<32x256xbf16> to vector<32x256xf32>
    %c0_1 = arith.constant 0 : index
    %c0_2 = arith.constant 0 : index
    %2 = vector.load %arg2[%c0_1, %c0_2] : memref<1x256xf32, #tpu.memory_space<vmem>>, vector<1x256xf32>
    %3 = vector.broadcast %2 : vector<1x256xf32> to vector<32x256xf32>
    %4 = arith.mulf %1, %3 : vector<32x256xf32>
    %c0_3 = arith.constant 0 : index
    %c0_4 = arith.constant 0 : index
    %5 = vector.load %arg3[%c0_3, %c0_4] : memref<1x256xf32, #tpu.memory_space<vmem>>, vector<1x256xf32>
    %6 = vector.broadcast %5 : vector<1x256xf32> to vector<32x256xf32>
    %7 = arith.addf %4, %6 : vector<32x256xf32>
    %cst = arith.constant 0.000000e+00 : f32
    %8 = vector.broadcast %cst : f32 to vector<32x256xf32>
    %9 = arith.cmpf oge, %7, %8 : vector<32x256xf32>
    %cst_5 = arith.constant 1.000000e-01 : f32
    %10 = vector.broadcast %cst_5 : f32 to vector<32x256xf32>
    %11 = arith.mulf %10, %7 : vector<32x256xf32>
    %12 = arith.select %9, %7, %11 : vector<32x256xi1>, vector<32x256xf32>
    %13 = arith.truncf %12 : vector<32x256xf32> to vector<32x256xbf16>
    %c0_6 = arith.constant 0 : index
    %c0_7 = arith.constant 0 : index
    %14 = vector.load %arg4[%c0_6, %c0_7] : memref<32x256xbf16, #tpu.memory_space<vmem>>, vector<32x256xbf16>
    tpu.vector_store %arg4[%c0_6, %c0_7], %13 {strides = array<i32>} : memref<32x256xbf16, #tpu.memory_space<vmem>>, vector<32x256xbf16>,
    return
  }
  func.func @transform_0(%arg0: i32) -> (i32, i32) {
    %c0_i32 = arith.constant 0 : i32
    %c0_i32_0 = arith.constant 0 : i32
    return %arg0, %c0_i32 : i32, i32
  }
  func.func @transform_1(%arg0: i32) -> (i32, i32) {
    %c0_i32 = arith.constant 0 : i32
    %c0_i32_0 = arith.constant 0 : i32
    %c0_i32_1 = arith.constant 0 : i32
    return %c0_i32, %c0_i32_0 : i32, i32
  }
  func.func @transform_2(%arg0: i32) -> (i32, i32) {
    %c0_i32 = arith.constant 0 : i32
    %c0_i32_0 = arith.constant 0 : i32
    %c0_i32_1 = arith.constant 0 : i32
    return %c0_i32, %c0_i32_0 : i32, i32
  }
  func.func @transform_3(%arg0: i32) -> (i32, i32) {
    %c0_i32 = arith.constant 0 : i32
    %c0_i32_0 = arith.constant 0 : i32
    return %arg0, %c0_i32 : i32, i32
  }
}

module attributes {stable_mosaic.version = 11 : i64} {
  func.func @head_kernel(%arg0: i32, %arg1: memref<2x4096xbf16, #tpu.memory_space<vmem>>, %arg2: memref<4096x8xbf16, #tpu.memory_space<vmem>>, %arg3: memref<1x8xf32, #tpu.memory_space<vmem>>, %arg4: memref<4096x8xbf16, #tpu.memory_space<vmem>>, %arg5: memref<1x8xf32, #tpu.memory_space<vmem>>, %arg6: memref<2x8xf32, #tpu.memory_space<vmem>>, %arg7: memref<2x8xf32, #tpu.memory_space<vmem>>, %arg8: memref<1x1xf32, #tpu.memory_space<vmem>>) attributes {dimension_semantics = [#tpu.dimension_semantics<arbitrary>], iteration_bounds = array<i64: 1>, scalar_prefetch = 0 : i64, scratch_operands = 0 : i64, tpu.core_type = #tpu.core_type<tc>, window_params = [{pipeline_mode = #tpu.pipeline_mode<synchronous>, transform_indices = @transform_0, window_bounds = array<i64: 2, 4096>}, {pipeline_mode = #tpu.pipeline_mode<synchronous>, transform_indices = @transform_1, window_bounds = array<i64: 4096, 8>}, {pipeline_mode = #tpu.pipeline_mode<synchronous>, transform_indices = @transform_2, window_bounds = array<i64: 1, 8>}, {pipeline_mode = #tpu.pipeline_mode<synchronous>, transform_indices = @transform_3, window_bounds = array<i64: 4096, 8>}, {pipeline_mode = #tpu.pipeline_mode<synchronous>, transform_indices = @transform_4, window_bounds = array<i64: 1, 8>}, {pipeline_mode = #tpu.pipeline_mode<synchronous>, transform_indices = @transform_5, window_bounds = array<i64: 2, 8>}, {pipeline_mode = #tpu.pipeline_mode<synchronous>, transform_indices = @transform_6, window_bounds = array<i64: 2, 8>}, {pipeline_mode = #tpu.pipeline_mode<synchronous>, transform_indices = @transform_7, window_bounds = array<i64: 1, 1>}]} {
    %c0 = arith.constant 0 : index
    %c0_0 = arith.constant 0 : index
    %0 = vector.load %arg1[%c0, %c0_0] : memref<2x4096xbf16, #tpu.memory_space<vmem>>, vector<2x4096xbf16>
    %c0_1 = arith.constant 0 : index
    %c0_2 = arith.constant 0 : index
    %1 = vector.load %arg2[%c0_1, %c0_2] : memref<4096x8xbf16, #tpu.memory_space<vmem>>, vector<4096x8xbf16>
    %cst = arith.constant dense<0.000000e+00> : vector<2x8xf32>
    %2 = tpu.matmul %0, %1, %cst {dimension_numbers = #tpu.dot_dimension_numbers<[1], [0], [0], [1], [0, 0, 1, 1], [], []>} : vector<2x4096xbf16>, vector<4096x8xbf16>, vector<2x8xf32> -> vector<2x8xf32>
    %c0_3 = arith.constant 0 : index
    %c0_4 = arith.constant 0 : index
    %3 = vector.load %arg3[%c0_3, %c0_4] : memref<1x8xf32, #tpu.memory_space<vmem>>, vector<1x8xf32>
    %4 = vector.broadcast %3 : vector<1x8xf32> to vector<2x8xf32>
    %5 = arith.addf %2, %4 : vector<2x8xf32>
    %c0_5 = arith.constant 0 : index
    %c0_6 = arith.constant 0 : index
    %6 = vector.load %arg4[%c0_5, %c0_6] : memref<4096x8xbf16, #tpu.memory_space<vmem>>, vector<4096x8xbf16>
    %cst_7 = arith.constant dense<0.000000e+00> : vector<2x8xf32>
    %7 = tpu.matmul %0, %6, %cst_7 {dimension_numbers = #tpu.dot_dimension_numbers<[1], [0], [0], [1], [0, 0, 1, 1], [], []>} : vector<2x4096xbf16>, vector<4096x8xbf16>, vector<2x8xf32> -> vector<2x8xf32>
    %c0_8 = arith.constant 0 : index
    %c0_9 = arith.constant 0 : index
    %8 = vector.load %arg5[%c0_8, %c0_9] : memref<1x8xf32, #tpu.memory_space<vmem>>, vector<1x8xf32>
    %9 = vector.broadcast %8 : vector<1x8xf32> to vector<2x8xf32>
    %10 = arith.addf %7, %9 : vector<2x8xf32>
    %cst_10 = arith.constant 1.000000e+00 : f32
    %11 = vector.broadcast %cst_10 : f32 to vector<2x8xf32>
    %12 = arith.minimumf %10, %11 : vector<2x8xf32>
    %13 = math.exp %12 : vector<2x8xf32>
    %c0_11 = arith.constant 0 : index
    %c0_12 = arith.constant 0 : index
    %14 = vector.load %arg6[%c0_11, %c0_12] : memref<2x8xf32, #tpu.memory_space<vmem>>, vector<2x8xf32>
    %15 = arith.mulf %13, %14 : vector<2x8xf32>
    %16 = arith.addf %5, %15 : vector<2x8xf32>
    %c0_13 = arith.constant 0 : index
    %c0_14 = arith.constant 0 : index
    %17 = vector.load %arg7[%c0_13, %c0_14] : memref<2x8xf32, #tpu.memory_space<vmem>>, vector<2x8xf32>
    tpu.vector_store %arg7[%c0_13, %c0_14], %16 {strides = array<i32>} : memref<2x8xf32, #tpu.memory_space<vmem>>, vector<2x8xf32>,
    %18 = arith.mulf %13, %13 : vector<2x8xf32>
    %19 = arith.mulf %5, %5 : vector<2x8xf32>
    %20 = arith.addf %18, %19 : vector<2x8xf32>
    %cst_15 = arith.constant 5.000000e-01 : f32
    %21 = vector.broadcast %cst_15 : f32 to vector<2x8xf32>
    %22 = arith.mulf %21, %20 : vector<2x8xf32>
    %23 = arith.subf %22, %12 : vector<2x8xf32>
    %cst_16 = arith.constant 5.000000e-01 : f32
    %24 = vector.broadcast %cst_16 : f32 to vector<2x8xf32>
    %25 = arith.subf %23, %24 : vector<2x8xf32>
    %26 = vector.shape_cast %25 : vector<2x8xf32> to vector<1x2x8xf32>
    %cst_17 = arith.constant dense<0.000000e+00> : vector<1xf32>
    %27 = vector.multi_reduction <add>, %26, %cst_17 [1, 2] : vector<1x2x8xf32> to vector<1xf32>
    %28 = vector.shape_cast %27 : vector<1xf32> to vector<1x1x1xf32>
    %29 = vector.extract %28[0, 0, 0] : f32 from vector<1x1x1xf32>
    %30 = vector.broadcast %29 : f32 to vector<1x1xf32>
    %c0_18 = arith.constant 0 : index
    %c0_19 = arith.constant 0 : index
    %31 = vector.load %arg8[%c0_18, %c0_19] : memref<1x1xf32, #tpu.memory_space<vmem>>, vector<1x1xf32>
    tpu.vector_store %arg8[%c0_18, %c0_19], %30 {strides = array<i32>} : memref<1x1xf32, #tpu.memory_space<vmem>>, vector<1x1xf32>,
    return
  }
  func.func @transform_0(%arg0: i32) -> (i32, i32) {
    %c0_i32 = arith.constant 0 : i32
    %c0_i32_0 = arith.constant 0 : i32
    %c0_i32_1 = arith.constant 0 : i32
    return %c0_i32, %c0_i32_0 : i32, i32
  }
  func.func @transform_1(%arg0: i32) -> (i32, i32) {
    %c0_i32 = arith.constant 0 : i32
    %c0_i32_0 = arith.constant 0 : i32
    %c0_i32_1 = arith.constant 0 : i32
    return %c0_i32, %c0_i32_0 : i32, i32
  }
  func.func @transform_2(%arg0: i32) -> (i32, i32) {
    %c0_i32 = arith.constant 0 : i32
    %c0_i32_0 = arith.constant 0 : i32
    %c0_i32_1 = arith.constant 0 : i32
    return %c0_i32, %c0_i32_0 : i32, i32
  }
  func.func @transform_3(%arg0: i32) -> (i32, i32) {
    %c0_i32 = arith.constant 0 : i32
    %c0_i32_0 = arith.constant 0 : i32
    %c0_i32_1 = arith.constant 0 : i32
    return %c0_i32, %c0_i32_0 : i32, i32
  }
  func.func @transform_4(%arg0: i32) -> (i32, i32) {
    %c0_i32 = arith.constant 0 : i32
    %c0_i32_0 = arith.constant 0 : i32
    %c0_i32_1 = arith.constant 0 : i32
    return %c0_i32, %c0_i32_0 : i32, i32
  }
  func.func @transform_5(%arg0: i32) -> (i32, i32) {
    %c0_i32 = arith.constant 0 : i32
    %c0_i32_0 = arith.constant 0 : i32
    %c0_i32_1 = arith.constant 0 : i32
    return %c0_i32, %c0_i32_0 : i32, i32
  }
  func.func @transform_6(%arg0: i32) -> (i32, i32) {
    %c0_i32 = arith.constant 0 : i32
    %c0_i32_0 = arith.constant 0 : i32
    %c0_i32_1 = arith.constant 0 : i32
    return %c0_i32, %c0_i32_0 : i32, i32
  }
  func.func @transform_7(%arg0: i32) -> (i32, i32) {
    %c0_i32 = arith.constant 0 : i32
    %c0_i32_0 = arith.constant 0 : i32
    %c0_i32_1 = arith.constant 0 : i32
    return %c0_i32, %c0_i32_0 : i32, i32
  }
}

</mosaic_0001>

<llo_original>
// kernel: squeeze.6
$region0: #{squeeze.6}
  %s0 = inlined_call_operand.vmem [shape: f32[128], index: 0, kind: input, shape index: {}]
  %s1 = inlined_call_operand.vmem [shape: f32[2,64], index: 1, kind: output, shape index: {}]
  $region1: #{squeeze.6} parent=0
    #allocation0 [shape = 'u8[4096]{0}', space=vmem, size = 0x1000, scoped, tag = 'scoped mem for output reshape']
    #allocation1 [shape = 'u8[4096]{0}', space=vmem, size = 0x1000, scoped, tag = 'scoped mem for input reshape']
    %s3 = sshllo.u32 0, 1
    %v4 = vld [vmem:[%s0] sm:%s3]
    %5 = vst [vmem:[#allocation1] sm:%s3] %v4
    %v6 = vld [vmem:[#allocation1] sm:$0x1]
    %vm7 = vcmask 523264
    %8 = vst.msk [vmem:[#allocation0] sm:$0x1] %vm7, %v6
    %v9 = vld [vmem:[#allocation1] sm:$0x1]
    %10 = vrot.lane.b32.xlu0 %v9, 64
    %v11 = vpop.permute.xlu0 %10
    %vm12 = vcmask 523264
    %s13 = scalar_lea.vmem [#allocation0], 1
    %14 = vst.msk [vmem:[%s13] sm:$0x1] %vm12, %v11
    %s16 = sshllo.u32 0, 2
    %v18 = vld [vmem:[#allocation0] sm:%s16]
    %s19 = sshllo.u32 0, 2
    %20 = vst [vmem:[%s1] sm:%s19] %v18

// kernel: tile.17
$region0: #{tile.17}
  #allocation0 [shape = 's32[1]{0}', space=sflag, size = 0x4, scoped, tag = 'scoped memory for tile.17']
  %s0 = inlined_call_operand.vmem [shape: f32[64], index: 0, kind: input, shape index: {}]
  %s1 = inlined_call_operand.vmem [shape: f32[2,64], index: 1, kind: output, shape index: {}]
  // Predicated region
  $region2: #{tile.17} parent=0 // pred_check
    _
  $region3: #{tile.17} parent=0 // pred_check_branch
    %3 = sbr.rel (0) target = $region5
  $region4: #{tile.17} parent=0 // pred_region
    _
  $region5: #{tile.17} parent=0 // pred_fallthru
    _
  %v4 = vld [vmem:[%s0] ss:$0 sm:$0xff]
  %5 = vst [vmem:[%s1] sm:$0x3] %v4

// kernel: tile.18
$region0: #{tile.18}
  %s0 = inlined_call_operand.vmem [shape: f32[2,64], index: 0, kind: input, shape index: {}]
  %s1 = inlined_call_operand.vmem [shape: f32[1,128], index: 1, kind: output, shape index: {}]
  $region1: #{tile.18} parent=0
    #allocation0 [shape = 'u8[4096]{0}', space=vmem, size = 0x1000, scoped, tag = 'scoped mem for output reshape']
    #allocation1 [shape = 'u8[4096]{0}', space=vmem, size = 0x1000, scoped, tag = 'scoped mem for input reshape']
    %s3 = sshllo.u32 0, 2
    %v4 = vld [vmem:[%s0] sm:%s3]
    %5 = vst [vmem:[#allocation1] sm:%s3] %v4
    %v6 = vld [vmem:[#allocation1] sm:$0x1]
    %vm7 = vcmask 523264
    %8 = vst.msk [vmem:[#allocation0] sm:$0x1] %vm7, %v6
    %s9 = scalar_lea.vmem [#allocation1], 1
    %v10 = vld [vmem:[%s9] sm:$0x1]
    %11 = vrot.lane.b32.xlu0 %v10, 64
    %v12 = vpop.permute.xlu0 %11
    %vm13 = vcmask 1048064
    %14 = vst.msk [vmem:[#allocation0] sm:$0x1] %vm13, %v12
    %s16 = sshllo.u32 0, 1
    %v18 = vld [vmem:[#allocation0] sm:%s16]
    %s19 = sshllo.u32 0, 1
    %20 = vst [vmem:[%s1] sm:%s19] %v18

// kernel: encoder_forward.7
$region0: #{encoder_forward.7}
  #allocation0 [shape = 'u32[]', space=smem, size = 0x4, offset = 0x4, fixed_abs, tag = 'smem constant byte address 0x4 - core index']
  #allocation1 [shape = 'u32[144,128]{1,0:T(1,128)}', space=vmem, size = 0x12000, scoped, tag = 'internal scratch']
  %s0 = inlined_call_operand.vmem [shape: bf16[256,96], index: 0, kind: input, shape index: {}]
  %s1 = inlined_call_operand.vmem [shape: bf16[96,128], index: 1, kind: input, shape index: {}]
  %s2 = inlined_call_operand.vmem [shape: bf16[256,128], index: 2, kind: output, shape index: {0}]
  %s3 = inlined_call_operand.vmem [shape: f32[1,2,128], index: 3, kind: output, shape index: {1}]
  %4 = xla_tuple %s2, %s3
  %s5 = sld [smem:[#allocation0]]
  $region26: #{encoder_forward.7} parent=0
    _
  %s7 = ssub.s32 1, %s5
  %s8 = scalar_select 0, %s7, %s5
  // Predicated region
  $region2: #{encoder_forward.7} parent=0 // pred_check
    _
  $region3: #{encoder_forward.7} parent=0 // pred_check_branch
    %10 = sbr.rel (0) target = $region5
  $region4: #{encoder_forward.7} parent=0 // pred_region
    _
  $region5: #{encoder_forward.7} parent=0 // pred_fallthru
    _
  // Predicated region
  $region6: #{encoder_forward.7} parent=0 // pred_check
    _
  $region7: #{encoder_forward.7} parent=0 // pred_check_branch
    %12 = sbr.rel (0) target = $region9
  $region8: #{encoder_forward.7} parent=0 // pred_region
    _
  $region9: #{encoder_forward.7} parent=0 // pred_fallthru
    _
  %v14 = vld [vmem:[%s0] sm:$0xf]
  %v15 = vld [vmem:[%s0 + $0x4] sm:$0xf]
  %v16 = vld [vmem:[%s0 + $0x8] sm:$0xf]
  %v17 = vld [vmem:[%s0 + $0xc] sm:$0xf]
  %v18 = vld [vmem:[%s0 + $0x10] sm:$0xf]
  %v19 = vld [vmem:[%s0 + $0x14] sm:$0xf]
  %v20 = vld [vmem:[%s0 + $0x18] sm:$0xf]
  %v21 = vld [vmem:[%s0 + $0x1c] sm:$0xf]
  %v22 = vld [vmem:[%s0 + $0x20] sm:$0xf]
  %v23 = vld [vmem:[%s0 + $0x24] sm:$0xf]
  %v24 = vld [vmem:[%s0 + $0x28] sm:$0xf]
  %v25 = vld [vmem:[%s0 + $0x2c] sm:$0xf]
  %v26 = vld [vmem:[%s0 + $0x30] sm:$0xf]
  %v27 = vld [vmem:[%s0 + $0x34] sm:$0xf]
  %v28 = vld [vmem:[%s0 + $0x38] sm:$0xf]
  %v29 = vld [vmem:[%s0 + $0x3c] sm:$0xf]
  %v30 = vld [vmem:[%s0 + $0x40] sm:$0xf]
  %v31 = vld [vmem:[%s0 + $0x44] sm:$0xf]
  %v32 = vld [vmem:[%s0 + $0x48] sm:$0xf]
  %v33 = vld [vmem:[%s0 + $0x4c] sm:$0xf]
  %v34 = vld [vmem:[%s0 + $0x50] sm:$0xf]
  %v35 = vld [vmem:[%s0 + $0x54] sm:$0xf]
  %v36 = vld [vmem:[%s0 + $0x58] sm:$0xf]
  %v37 = vld [vmem:[%s0 + $0x5c] sm:$0xf]
  %v38 = vld [vmem:[%s0 + $0x60] sm:$0xf]
  %v39 = vld [vmem:[%s0 + $0x64] sm:$0xf]
  %v40 = vld [vmem:[%s0 + $0x68] sm:$0xf]
  %v41 = vld [vmem:[%s0 + $0x6c] sm:$0xf]
  %v42 = vld [vmem:[%s0 + $0x70] sm:$0xf]
  %v43 = vld [vmem:[%s0 + $0x74] sm:$0xf]
  %v44 = vld [vmem:[%s0 + $0x78] sm:$0xf]
  %v45 = vld [vmem:[%s0 + $0x7c] sm:$0xf]
  %v46 = vld [vmem:[%s1] sm:$0xf]
  %v47 = vld [vmem:[%s1 + $0x4] sm:$0xf]
  %v48 = vld [vmem:[%s1 + $0x8] sm:$0xf]
  %v49 = vld [vmem:[%s1 + $0xc] sm:$0xf]
  %v50 = vld [vmem:[%s1 + $0x10] sm:$0xf]
  %v51 = vld [vmem:[%s1 + $0x14] sm:$0xf]
  %v52 = vld [vmem:[%s1 + $0x18] sm:$0xf]
  %v53 = vld [vmem:[%s1 + $0x1c] sm:$0xf]
  %v54 = vld [vmem:[%s1 + $0x20] sm:$0xf]
  %v55 = vld [vmem:[%s1 + $0x24] sm:$0xf]
  %v56 = vld [vmem:[%s1 + $0x28] sm:$0xf]
  %v57 = vld [vmem:[%s1 + $0x2c] sm:$0xf]
  %v90 = vunpack.c.l.b16 %v14
  %v91 = vunpack.c.l.b16 %v15
  %v92 = vunpack.c.l.b16 %v16
  %v93 = vunpack.c.l.b16 %v17
  %v94 = vunpack.c.l.b16 %v18
  %v95 = vunpack.c.l.b16 %v19
  %v96 = vunpack.c.l.b16 %v20
  %v97 = vunpack.c.l.b16 %v21
  %v98 = vunpack.c.l.b16 %v22
  %v99 = vunpack.c.l.b16 %v23
  %v100 = vunpack.c.l.b16 %v24
  %v101 = vunpack.c.l.b16 %v25
  %v102 = vunpack.c.l.b16 %v26
  %v103 = vunpack.c.l.b16 %v27
  %v104 = vunpack.c.l.b16 %v28
  %v105 = vunpack.c.l.b16 %v29
  %v106 = vunpack.c.l.b16 %v30
  %v107 = vunpack.c.l.b16 %v31
  %v108 = vunpack.c.l.b16 %v32
  %v109 = vunpack.c.l.b16 %v33
  %v110 = vunpack.c.l.b16 %v34
  %v111 = vunpack.c.l.b16 %v35
  %v112 = vunpack.c.l.b16 %v36
  %v113 = vunpack.c.l.b16 %v37
  %v114 = vunpack.c.l.b16 %v38
  %v115 = vunpack.c.l.b16 %v39
  %v116 = vunpack.c.l.b16 %v40
  %v117 = vunpack.c.l.b16 %v41
  %v118 = vunpack.c.l.b16 %v42
  %v119 = vunpack.c.l.b16 %v43
  %v120 = vunpack.c.l.b16 %v44
  %v121 = vunpack.c.l.b16 %v45
  %v122 = vpack.c.b16 %v91, %v90
  %v123 = vpack.c.b16 %v93, %v92
  %v124 = vpack.c.b16 %v95, %v94
  %v125 = vpack.c.b16 %v97, %v96
  %v126 = vpack.c.b16 %v99, %v98
  %v127 = vpack.c.b16 %v101, %v100
  %v128 = vpack.c.b16 %v103, %v102
  %v129 = vpack.c.b16 %v105, %v104
  %v130 = vpack.c.b16 %v107, %v106
  %v131 = vpack.c.b16 %v109, %v108
  %v132 = vpack.c.b16 %v111, %v110
  %v133 = vpack.c.b16 %v113, %v112
  %v134 = vpack.c.b16 %v115, %v114
  %v135 = vpack.c.b16 %v117, %v116
  %v136 = vpack.c.b16 %v119, %v118
  %v137 = vpack.c.b16 %v121, %v120
  %v150 = vunpack.c.l.b16 %v46
  %v151 = vunpack.c.l.b16 %v47
  %v152 = vunpack.c.l.b16 %v48
  %v153 = vunpack.c.l.b16 %v49
  %v154 = vunpack.c.l.b16 %v50
  %v155 = vunpack.c.l.b16 %v51
  %v156 = vunpack.c.l.b16 %v52
  %v157 = vunpack.c.l.b16 %v53
  %v158 = vunpack.c.l.b16 %v54
  %v159 = vunpack.c.l.b16 %v55
  %v160 = vunpack.c.l.b16 %v56
  %v161 = vunpack.c.l.b16 %v57
  %v162 = vpack.c.b16 %v151, %v150
  %v163 = vpack.c.b16 %v153, %v152
  %v164 = vpack.c.b16 %v155, %v154
  %v165 = vpack.c.b16 %v157, %v156
  %v166 = vpack.c.b16 %v159, %v158
  %v167 = vpack.c.b16 %v161, %v160
  %vm174 = vcmask 785408
  %v176 = vsel %vm174, %v122, 0
  %v179 = vsel %vm174, %v123, 0
  %v182 = vsel %vm174, %v124, 0
  %v185 = vsel %vm174, %v125, 0
  %v188 = vsel %vm174, %v126, 0
  %v191 = vsel %vm174, %v127, 0
  %v194 = vsel %vm174, %v128, 0
  %v197 = vsel %vm174, %v129, 0
  %v200 = vsel %vm174, %v130, 0
  %v203 = vsel %vm174, %v131, 0
  %v206 = vsel %vm174, %v132, 0
  %v209 = vsel %vm174, %v133, 0
  %v212 = vsel %vm174, %v134, 0
  %v215 = vsel %vm174, %v135, 0
  %v218 = vsel %vm174, %v136, 0
  %v221 = vsel %vm174, %v137, 0
  %223 = vmatprep.subr.bf16.mxu0 0
  %224 = vmatpush1.bf16.msra.mxu0 %v162
  %225 = vmatprep.subr.bf16.mxu0 0
  %226 = vmatpush1.bf16.msra.mxu0 %v163
  %227 = vmatprep.subr.bf16.mxu0 0
  %228 = vmatpush1.bf16.msra.mxu0 %v164
  %229 = vmatprep.subr.bf16.mxu0 0
  %230 = vmatpush1.bf16.msra.mxu0 %v165
  %231 = vmatprep.subr.bf16.mxu0 0
  %232 = vmatpush1.bf16.msra.mxu0 %v166
  %233 = vmatprep.subr.bf16.mxu0 0
  %234 = vmatpush1.bf16.msra.mxu0 %v167
  %235 = vmatprep.subr.bf16.mxu0 0
  %236 = vmatpush1.bf16.msra.mxu0 0
  %237 = vmatprep.subr.bf16.mxu0 0
  %238 = vmatpush1.bf16.msra.mxu0 0
  %239 = vmatprep.subr.bf16.mxu0 0
  %240 = vmatpush1.bf16.msra.mxu0 0
  %241 = vmatprep.subr.bf16.mxu0 0
  %242 = vmatpush1.bf16.msra.mxu0 0
  %243 = vmatprep.subr.bf16.mxu0 0
  %244 = vmatpush1.bf16.msra.mxu0 0
  %245 = vmatprep.subr.bf16.mxu0 0
  %246 = vmatpush1.bf16.msra.mxu0 0
  %247 = vmatprep.subr.bf16.mxu0 0
  %248 = vmatpush1.bf16.msra.mxu0 0
  %249 = vmatprep.subr.bf16.mxu0 0
  %250 = vmatpush1.bf16.msra.mxu0 0
  %251 = vmatprep.subr.bf16.mxu0 0
  %252 = vmatpush1.bf16.msra.mxu0 0
  %253 = vmatprep.subr.bf16.mxu0 0
  %254 = vmatpush1.bf16.msra.mxu0 0
  %255 = vmatprep.mubr.bf16.mxu0 0
  %256 = vmatmul.mubr.bf16.gmra.mrb[0].mxu0 %v176
  %v257 = vpop.f32.mrb[0].mxu0
  %v258 = vadd.f32 0.0, %v257
  %v259 = vpop.f32.mrb[0].mxu0
  %v260 = vpop.f32.mrb[0].mxu0
  %v261 = vadd.f32 0.0, %v260
  %v262 = vpop.f32.mrb[0].mxu0
  %263 = vmatprep.mubr.bf16.mxu0 0
  %264 = vmatmul.mubr.bf16.gmra.mrb[0].mxu0 %v179
  %v265 = vpop.f32.mrb[0].mxu0
  %v266 = vadd.f32 0.0, %v265
  %v267 = vpop.f32.mrb[0].mxu0
  %v268 = vpop.f32.mrb[0].mxu0
  %v269 = vadd.f32 0.0, %v268
  %v270 = vpop.f32.mrb[0].mxu0
  %271 = vmatprep.mubr.bf16.mxu0 0
  %272 = vmatmul.mubr.bf16.gmra.mrb[0].mxu0 %v182
  %v273 = vpop.f32.mrb[0].mxu0
  %v274 = vadd.f32 0.0, %v273
  %v275 = vpop.f32.mrb[0].mxu0
  %v276 = vpop.f32.mrb[0].mxu0
  %v277 = vadd.f32 0.0, %v276
  %v278 = vpop.f32.mrb[0].mxu0
  %279 = vmatprep.mubr.bf16.mxu0 0
  %280 = vmatmul.mubr.bf16.gmra.mrb[0].mxu0 %v185
  %v281 = vpop.f32.mrb[0].mxu0
  %v282 = vadd.f32 0.0, %v281
  %v283 = vpop.f32.mrb[0].mxu0
  %v284 = vpop.f32.mrb[0].mxu0
  %v285 = vadd.f32 0.0, %v284
  %v286 = vpop.f32.mrb[0].mxu0
  %287 = vmatprep.mubr.bf16.mxu0 0
  %288 = vmatmul.mubr.bf16.gmra.mrb[0].mxu0 %v188
  %v289 = vpop.f32.mrb[0].mxu0
  %v290 = vadd.f32 0.0, %v289
  %v291 = vpop.f32.mrb[0].mxu0
  %v292 = vpop.f32.mrb[0].mxu0
  %v293 = vadd.f32 0.0, %v292
  %v294 = vpop.f32.mrb[0].mxu0
  %295 = vmatprep.mubr.bf16.mxu0 0
  %296 = vmatmul.mubr.bf16.gmra.mrb[0].mxu0 %v191
  %v297 = vpop.f32.mrb[0].mxu0
  %v298 = vadd.f32 0.0, %v297
  %v299 = vpop.f32.mrb[0].mxu0
  %v300 = vpop.f32.mrb[0].mxu0
  %v301 = vadd.f32 0.0, %v300
  %v302 = vpop.f32.mrb[0].mxu0
  %303 = vmatprep.mubr.bf16.mxu0 0
  %304 = vmatmul.mubr.bf16.gmra.mrb[0].mxu0 %v194
  %v305 = vpop.f32.mrb[0].mxu0
  %v306 = vadd.f32 0.0, %v305
  %v307 = vpop.f32.mrb[0].mxu0
  %v308 = vpop.f32.mrb[0].mxu0
  %v309 = vadd.f32 0.0, %v308
  %v310 = vpop.f32.mrb[0].mxu0
  %311 = vmatprep.mubr.bf16.mxu0 0
  %312 = vmatmul.mubr.bf16.gmra.mrb[0].mxu0 %v197
  %v313 = vpop.f32.mrb[0].mxu0
  %v314 = vadd.f32 0.0, %v313
  %v315 = vpop.f32.mrb[0].mxu0
  %v316 = vpop.f32.mrb[0].mxu0
  %v317 = vadd.f32 0.0, %v316
  %v318 = vpop.f32.mrb[0].mxu0
  %319 = vmatprep.mubr.bf16.mxu0 0
  %320 = vmatmul.mubr.bf16.gmra.mrb[0].mxu0 %v200
  %v321 = vpop.f32.mrb[0].mxu0
  %v322 = vadd.f32 0.0, %v321
  %v323 = vpop.f32.mrb[0].mxu0
  %v324 = vpop.f32.mrb[0].mxu0
  %v325 = vadd.f32 0.0, %v324
  %v326 = vpop.f32.mrb[0].mxu0
  %327 = vmatprep.mubr.bf16.mxu0 0
  %328 = vmatmul.mubr.bf16.gmra.mrb[0].mxu0 %v203
  %v329 = vpop.f32.mrb[0].mxu0
  %v330 = vadd.f32 0.0, %v329
  %v331 = vpop.f32.mrb[0].mxu0
  %v332 = vpop.f32.mrb[0].mxu0
  %v333 = vadd.f32 0.0, %v332
  %v334 = vpop.f32.mrb[0].mxu0
  %335 = vmatprep.mubr.bf16.mxu0 0
  %336 = vmatmul.mubr.bf16.gmra.mrb[0].mxu0 %v206
  %v337 = vpop.f32.mrb[0].mxu0
  %v338 = vadd.f32 0.0, %v337
  %v339 = vpop.f32.mrb[0].mxu0
  %v340 = vpop.f32.mrb[0].mxu0
  %v341 = vadd.f32 0.0, %v340
  %v342 = vpop.f32.mrb[0].mxu0
  %343 = vmatprep.mubr.bf16.mxu0 0
  %344 = vmatmul.mubr.bf16.gmra.mrb[0].mxu0 %v209
  %v345 = vpop.f32.mrb[0].mxu0
  %v346 = vadd.f32 0.0, %v345
  %v347 = vpop.f32.mrb[0].mxu0
  %v348 = vpop.f32.mrb[0].mxu0
  %v349 = vadd.f32 0.0, %v348
  %v350 = vpop.f32.mrb[0].mxu0
  %351 = vmatprep.mubr.bf16.mxu0 0
  %352 = vmatmul.mubr.bf16.gmra.mrb[0].mxu0 %v212
  %v353 = vpop.f32.mrb[0].mxu0
  %v354 = vadd.f32 0.0, %v353
  %v355 = vpop.f32.mrb[0].mxu0
  %v356 = vpop.f32.mrb[0].mxu0
  %v357 = vadd.f32 0.0, %v356
  %v358 = vpop.f32.mrb[0].mxu0
  %359 = vmatprep.mubr.bf16.mxu0 0
  %360 = vmatmul.mubr.bf16.gmra.mrb[0].mxu0 %v215
  %v361 = vpop.f32.mrb[0].mxu0
  %v362 = vadd.f32 0.0, %v361
  %v363 = vpop.f32.mrb[0].mxu0
  %v364 = vpop.f32.mrb[0].mxu0
  %v365 = vadd.f32 0.0, %v364
  %v366 = vpop.f32.mrb[0].mxu0
  %367 = vmatprep.mubr.bf16.mxu0 0
  %368 = vmatmul.mubr.bf16.gmra.mrb[0].mxu0 %v218
  %v369 = vpop.f32.mrb[0].mxu0
  %v370 = vadd.f32 0.0, %v369
  %v371 = vpop.f32.mrb[0].mxu0
  %v372 = vpop.f32.mrb[0].mxu0
  %v373 = vadd.f32 0.0, %v372
  %v374 = vpop.f32.mrb[0].mxu0
  %375 = vmatprep.mubr.bf16.mxu0 0
  %376 = vmatmul.mubr.bf16.gmra.mrb[0].mxu0 %v221
  %v377 = vpop.f32.mrb[0].mxu0
  %v378 = vadd.f32 0.0, %v377
  %v379 = vpop.f32.mrb[0].mxu0
  %v380 = vpop.f32.mrb[0].mxu0
  %v381 = vadd.f32 0.0, %v380
  %v382 = vpop.f32.mrb[0].mxu0
  %383 = vdwg.mxu0
  %v384 = vadd.f32 %v258, %v261
  %v385 = vadd.f32 %v384, %v266
  %v386 = vadd.f32 %v385, %v269
  %v387 = vadd.f32 %v386, %v274
  %v388 = vadd.f32 %v387, %v277
  %v389 = vadd.f32 %v388, %v282
  %v390 = vadd.f32 %v389, %v285
  %v391 = vadd.f32 %v390, %v290
  %v392 = vadd.f32 %v391, %v293
  %v393 = vadd.f32 %v392, %v298
  %v394 = vadd.f32 %v393, %v301
  %v395 = vadd.f32 %v394, %v306
  %v396 = vadd.f32 %v395, %v309
  %v397 = vadd.f32 %v396, %v314
  %v398 = vadd.f32 %v397, %v317
  %v399 = vadd.f32 %v398, %v322
  %v400 = vadd.f32 %v399, %v325
  %v401 = vadd.f32 %v400, %v330
  %v402 = vadd.f32 %v401, %v333
  %v403 = vadd.f32 %v402, %v338
  %v404 = vadd.f32 %v403, %v341
  %v405 = vadd.f32 %v404, %v346
  %v406 = vadd.f32 %v405, %v349
  %v407 = vadd.f32 %v406, %v354
  %v408 = vadd.f32 %v407, %v357
  %v409 = vadd.f32 %v408, %v362
  %v410 = vadd.f32 %v409, %v365
  %v411 = vadd.f32 %v410, %v370
  %v412 = vadd.f32 %v411, %v373
  %v413 = vadd.f32 %v412, %v378
  %v414 = vadd.f32 %v413, %v381
  %v415 = vrot.slane %v414, 4
  %v416 = vadd.f32 %v414, %v415
  %v417 = vrot.slane %v416, 2
  %v418 = vadd.f32 %v416, %v417
  %v419 = vrot.slane %v418, 1
  %v420 = vadd.f32 %v418, %v419
  %v421 = vmul.f32 %v420, 0.00390625
  %v422 = vsub.f32 %v258, %v421
  %v423 = vsub.f32 %v261, %v421
  %v424 = vsub.f32 %v266, %v421
  %v425 = vsub.f32 %v269, %v421
  %v426 = vsub.f32 %v274, %v421
  %v427 = vsub.f32 %v277, %v421
  %v428 = vsub.f32 %v282, %v421
  %v429 = vsub.f32 %v285, %v421
  %v430 = vsub.f32 %v290, %v421
  %v431 = vsub.f32 %v293, %v421
  %v432 = vsub.f32 %v298, %v421
  %v433 = vsub.f32 %v301, %v421
  %v434 = vsub.f32 %v306, %v421
  %v435 = vsub.f32 %v309, %v421
  %v436 = vsub.f32 %v314, %v421
  %v437 = vsub.f32 %v317, %v421
  %v438 = vsub.f32 %v322, %v421
  %v439 = vsub.f32 %v325, %v421
  %v440 = vsub.f32 %v330, %v421
  %v441 = vsub.f32 %v333, %v421
  %v442 = vsub.f32 %v338, %v421
  %v443 = vsub.f32 %v341, %v421
  %v444 = vsub.f32 %v346, %v421
  %v445 = vsub.f32 %v349, %v421
  %v446 = vsub.f32 %v354, %v421
  %v447 = vsub.f32 %v357, %v421
  %v448 = vsub.f32 %v362, %v421
  %v449 = vsub.f32 %v365, %v421
  %v450 = vsub.f32 %v370, %v421
  %v451 = vsub.f32 %v373, %v421
  %v452 = vsub.f32 %v378, %v421
  %v453 = vsub.f32 %v381, %v421
  %v454 = vmul.f32 %v422, %v422
  %v455 = vmul.f32 %v423, %v423
  %v456 = vmul.f32 %v424, %v424
  %v457 = vmul.f32 %v425, %v425
  %v458 = vmul.f32 %v426, %v426
  %v459 = vmul.f32 %v427, %v427
  %v460 = vmul.f32 %v428, %v428
  %v461 = vmul.f32 %v429, %v429
  %v462 = vmul.f32 %v430, %v430
  %v463 = vmul.f32 %v431, %v431
  %v464 = vmul.f32 %v432, %v432
  %v465 = vmul.f32 %v433, %v433
  %v466 = vmul.f32 %v434, %v434
  %v467 = vmul.f32 %v435, %v435
  %v468 = vmul.f32 %v436, %v436
  %v469 = vmul.f32 %v437, %v437
  %v470 = vmul.f32 %v438, %v438
  %v471 = vmul.f32 %v439, %v439
  %v472 = vmul.f32 %v440, %v440
  %v473 = vmul.f32 %v441, %v441
  %v474 = vmul.f32 %v442, %v442
  %v475 = vmul.f32 %v443, %v443
  %v476 = vmul.f32 %v444, %v444
  %v477 = vmul.f32 %v445, %v445
  %v478 = vmul.f32 %v446, %v446
  %v479 = vmul.f32 %v447, %v447
  %v480 = vmul.f32 %v448, %v448
  %v481 = vmul.f32 %v449, %v449
  %v482 = vmul.f32 %v450, %v450
  %v483 = vmul.f32 %v451, %v451
  %v484 = vmul.f32 %v452, %v452
  %v485 = vmul.f32 %v453, %v453
  %v486 = vadd.f32 %v454, %v455
  %v487 = vadd.f32 %v486, %v456
  %v488 = vadd.f32 %v487, %v457
  %v489 = vadd.f32 %v488, %v458
  %v490 = vadd.f32 %v489, %v459
  %v491 = vadd.f32 %v490, %v460
  %v492 = vadd.f32 %v491, %v461
  %v493 = vadd.f32 %v492, %v462
  %v494 = vadd.f32 %v493, %v463
  %v495 = vadd.f32 %v494, %v464
  %v496 = vadd.f32 %v495, %v465
  %v497 = vadd.f32 %v496, %v466
  %v498 = vadd.f32 %v497, %v467
  %v499 = vadd.f32 %v498, %v468
  %v500 = vadd.f32 %v499, %v469
  %v501 = vadd.f32 %v500, %v470
  %v502 = vadd.f32 %v501, %v471
  %v503 = vadd.f32 %v502, %v472
  %v504 = vadd.f32 %v503, %v473
  %v505 = vadd.f32 %v504, %v474
  %v506 = vadd.f32 %v505, %v475
  %v507 = vadd.f32 %v506, %v476
  %v508 = vadd.f32 %v507, %v477
  %v509 = vadd.f32 %v508, %v478
  %v510 = vadd.f32 %v509, %v479
  %v511 = vadd.f32 %v510, %v480
  %v512 = vadd.f32 %v511, %v481
  %v513 = vadd.f32 %v512, %v482
  %v514 = vadd.f32 %v513, %v483
  %v515 = vadd.f32 %v514, %v484
  %v516 = vadd.f32 %v515, %v485
  %v517 = vrot.slane %v516, 4
  %v518 = vadd.f32 %v516, %v517
  %v519 = vrot.slane %v518, 2
  %v520 = vadd.f32 %v518, %v519
  %v521 = vrot.slane %v520, 1
  %v522 = vadd.f32 %v520, %v521
  %vm523 = vcmask 1040384
  %v524 = vsel %vm523, %v420, %v522
  %525 = vst [vmem:[%s3] sm:$0x3] %v524
  %v526 = vpack.c.bf16 %v261, %v258
  %v527 = vpack.c.bf16 %v269, %v266
  %v528 = vpack.c.bf16 %v277, %v274
  %v529 = vpack.c.bf16 %v285, %v282
  %v530 = vpack.c.bf16 %v293, %v290
  %v531 = vpack.c.bf16 %v301, %v298
  %v532 = vpack.c.bf16 %v309, %v306
  %v533 = vpack.c.bf16 %v317, %v314
  %v534 = vpack.c.bf16 %v325, %v322
  %v535 = vpack.c.bf16 %v333, %v330
  %v536 = vpack.c.bf16 %v341, %v338
  %v537 = vpack.c.bf16 %v349, %v346
  %v538 = vpack.c.bf16 %v357, %v354
  %v539 = vpack.c.bf16 %v365, %v362
  %v540 = vpack.c.bf16 %v373, %v370
  %v541 = vpack.c.bf16 %v381, %v378
  %v558 = vunpack.c.l.b16 %v526
  %v559 = vunpack.c.h.b16 %v526
  %v560 = vunpack.c.l.b16 %v527
  %v561 = vunpack.c.h.b16 %v527
  %v562 = vunpack.c.l.b16 %v528
  %v563 = vunpack.c.h.b16 %v528
  %v564 = vunpack.c.l.b16 %v529
  %v565 = vunpack.c.h.b16 %v529
  %v566 = vunpack.c.l.b16 %v530
  %v567 = vunpack.c.h.b16 %v530
  %v568 = vunpack.c.l.b16 %v531
  %v569 = vunpack.c.h.b16 %v531
  %v570 = vunpack.c.l.b16 %v532
  %v571 = vunpack.c.h.b16 %v532
  %v572 = vunpack.c.l.b16 %v533
  %v573 = vunpack.c.h.b16 %v533
  %v574 = vunpack.c.l.b16 %v534
  %v575 = vunpack.c.h.b16 %v534
  %v576 = vunpack.c.l.b16 %v535
  %v577 = vunpack.c.h.b16 %v535
  %v578 = vunpack.c.l.b16 %v536
  %v579 = vunpack.c.h.b16 %v536
  %v580 = vunpack.c.l.b16 %v537
  %v581 = vunpack.c.h.b16 %v537
  %v582 = vunpack.c.l.b16 %v538
  %v583 = vunpack.c.h.b16 %v538
  %v584 = vunpack.c.l.b16 %v539
  %v585 = vunpack.c.h.b16 %v539
  %v586 = vunpack.c.l.b16 %v540
  %v587 = vunpack.c.h.b16 %v540
  %v588 = vunpack.c.l.b16 %v541
  %v589 = vunpack.c.h.b16 %v541
  %v590 = vpack.c.b16 %v558, %v558
  %v591 = vpack.c.b16 %v559, %v559
  %v592 = vpack.c.b16 %v560, %v560
  %v593 = vpack.c.b16 %v561, %v561
  %v594 = vpack.c.b16 %v562, %v562
  %v595 = vpack.c.b16 %v563, %v563
  %v596 = vpack.c.b16 %v564, %v564
  %v597 = vpack.c.b16 %v565, %v565
  %v598 = vpack.c.b16 %v566, %v566
  %v599 = vpack.c.b16 %v567, %v567
  %v600 = vpack.c.b16 %v568, %v568
  %v601 = vpack.c.b16 %v569, %v569
  %v602 = vpack.c.b16 %v570, %v570
  %v603 = vpack.c.b16 %v571, %v571
  %v604 = vpack.c.b16 %v572, %v572
  %v605 = vpack.c.b16 %v573, %v573
  %v606 = vpack.c.b16 %v574, %v574
  %v607 = vpack.c.b16 %v575, %v575
  %v608 = vpack.c.b16 %v576, %v576
  %v609 = vpack.c.b16 %v577, %v577
  %v610 = vpack.c.b16 %v578, %v578
  %v611 = vpack.c.b16 %v579, %v579
  %v612 = vpack.c.b16 %v580, %v580
  %v613 = vpack.c.b16 %v581, %v581
  %v614 = vpack.c.b16 %v582, %v582
  %v615 = vpack.c.b16 %v583, %v583
  %v616 = vpack.c.b16 %v584, %v584
  %v617 = vpack.c.b16 %v585, %v585
  %v618 = vpack.c.b16 %v586, %v586
  %v619 = vpack.c.b16 %v587, %v587
  %v620 = vpack.c.b16 %v588, %v588
  %v621 = vpack.c.b16 %v589, %v589
  %654 = vst [vmem:[%s2] sm:$0xf] %v590
  %655 = vst [vmem:[%s2 + $0x4] sm:$0xf] %v591
  %656 = vst [vmem:[%s2 + $0x8] sm:$0xf] %v592
  %657 = vst [vmem:[%s2 + $0xc] sm:$0xf] %v593
  %658 = vst [vmem:[%s2 + $0x10] sm:$0xf] %v594
  %659 = vst [vmem:[%s2 + $0x14] sm:$0xf] %v595
  %660 = vst [vmem:[%s2 + $0x18] sm:$0xf] %v596
  %661 = vst [vmem:[%s2 + $0x1c] sm:$0xf] %v597
  %662 = vst [vmem:[%s2 + $0x20] sm:$0xf] %v598
  %663 = vst [vmem:[%s2 + $0x24] sm:$0xf] %v599
  %664 = vst [vmem:[%s2 + $0x28] sm:$0xf] %v600
  %665 = vst [vmem:[%s2 + $0x2c] sm:$0xf] %v601
  %666 = vst [vmem:[%s2 + $0x30] sm:$0xf] %v602
  %667 = vst [vmem:[%s2 + $0x34] sm:$0xf] %v603
  %668 = vst [vmem:[%s2 + $0x38] sm:$0xf] %v604
  %669 = vst [vmem:[%s2 + $0x3c] sm:$0xf] %v605
  %670 = vst [vmem:[%s2 + $0x40] sm:$0xf] %v606
  %671 = vst [vmem:[%s2 + $0x44] sm:$0xf] %v607
  %672 = vst [vmem:[%s2 + $0x48] sm:$0xf] %v608
  %673 = vst [vmem:[%s2 + $0x4c] sm:$0xf] %v609
  %674 = vst [vmem:[%s2 + $0x50] sm:$0xf] %v610
  %675 = vst [vmem:[%s2 + $0x54] sm:$0xf] %v611
  %676 = vst [vmem:[%s2 + $0x58] sm:$0xf] %v612
  %677 = vst [vmem:[%s2 + $0x5c] sm:$0xf] %v613
  %678 = vst [vmem:[%s2 + $0x60] sm:$0xf] %v614
  %679 = vst [vmem:[%s2 + $0x64] sm:$0xf] %v615
  %680 = vst [vmem:[%s2 + $0x68] sm:$0xf] %v616
  %681 = vst [vmem:[%s2 + $0x6c] sm:$0xf] %v617
  %682 = vst [vmem:[%s2 + $0x70] sm:$0xf] %v618
  %683 = vst [vmem:[%s2 + $0x74] sm:$0xf] %v619
  %684 = vst [vmem:[%s2 + $0x78] sm:$0xf] %v620
  %685 = vst [vmem:[%s2 + $0x7c] sm:$0xf] %v621
  // Predicated region
  $region10: #{encoder_forward.7} parent=0 // pred_check
    _
  $region11: #{encoder_forward.7} parent=0 // pred_check_branch
    %687 = sbr.rel (0) target = $region13
  $region12: #{encoder_forward.7} parent=0 // pred_region
    _
  $region13: #{encoder_forward.7} parent=0 // pred_fallthru
    _
  // Predicated region
  $region14: #{encoder_forward.7} parent=0 // pred_check
    _
  $region15: #{encoder_forward.7} parent=0 // pred_check_branch
    %689 = sbr.rel (0) target = $region17
  $region16: #{encoder_forward.7} parent=0 // pred_region
    _
  $region17: #{encoder_forward.7} parent=0 // pred_fallthru
    _
  // Predicated region
  $region18: #{encoder_forward.7} parent=0 // pred_check
    _
  $region19: #{encoder_forward.7} parent=0 // pred_check_branch
    %691 = sbr.rel (0) target = $region21
  $region20: #{encoder_forward.7} parent=0 // pred_region
    _
  $region21: #{encoder_forward.7} parent=0 // pred_fallthru
    _
  // Predicated region
  $region22: #{encoder_forward.7} parent=0 // pred_check
    _
  $region23: #{encoder_forward.7} parent=0 // pred_check_branch
    %693 = sbr.rel (0) target = $region25
  $region24: #{encoder_forward.7} parent=0 // pred_region
    _
  $region25: #{encoder_forward.7} parent=0 // pred_fallthru
    _

// kernel: encoder_forward.8
$region0: #{encoder_forward.8}
  #allocation0 [shape = 'u32[]', space=smem, size = 0x4, offset = 0x4, fixed_abs, tag = 'smem constant byte address 0x4 - core index']
  #allocation1 [shape = 'u32[144,128]{1,0:T(1,128)}', space=vmem, size = 0x12000, scoped, tag = 'internal scratch']
  %s0 = inlined_call_operand.vmem [shape: bf16[256,128], index: 0, kind: input, shape index: {}]
  %s1 = inlined_call_operand.vmem [shape: f32[1,128], index: 1, kind: input, shape index: {}]
  %s2 = inlined_call_operand.vmem [shape: f32[1,128], index: 2, kind: input, shape index: {}]
  %s3 = inlined_call_operand.vmem [shape: bf16[256,128], index: 3, kind: output, shape index: {}]
  %s4 = sld [smem:[#allocation0]]
  $region22: #{encoder_forward.8} parent=0
    _
  %s6 = ssub.s32 1, %s4
  %s7 = scalar_select 0, %s6, %s4
  // Predicated region
  $region2: #{encoder_forward.8} parent=0 // pred_check
    _
  $region3: #{encoder_forward.8} parent=0 // pred_check_branch
    %9 = sbr.rel (0) target = $region5
  $region4: #{encoder_forward.8} parent=0 // pred_region
    _
  $region5: #{encoder_forward.8} parent=0 // pred_fallthru
    _
  // Predicated region
  $region6: #{encoder_forward.8} parent=0 // pred_check
    _
  $region7: #{encoder_forward.8} parent=0 // pred_check_branch
    %11 = sbr.rel (0) target = $region9
  $region8: #{encoder_forward.8} parent=0 // pred_region
    _
  $region9: #{encoder_forward.8} parent=0 // pred_fallthru
    _
  // Predicated region
  $region10: #{encoder_forward.8} parent=0 // pred_check
    _
  $region11: #{encoder_forward.8} parent=0 // pred_check_branch
    %13 = sbr.rel (0) target = $region13
  $region12: #{encoder_forward.8} parent=0 // pred_region
    _
  $region13: #{encoder_forward.8} parent=0 // pred_fallthru
    _
  %v14 = vld [vmem:[%s0] sm:$0xf]
  %v15 = vld [vmem:[%s0 + $0x4] sm:$0xf]
  %v16 = vld [vmem:[%s0 + $0x8] sm:$0xf]
  %v17 = vld [vmem:[%s0 + $0xc] sm:$0xf]
  %v18 = vld [vmem:[%s0 + $0x10] sm:$0xf]
  %v19 = vld [vmem:[%s0 + $0x14] sm:$0xf]
  %v20 = vld [vmem:[%s0 + $0x18] sm:$0xf]
  %v21 = vld [vmem:[%s0 + $0x1c] sm:$0xf]
  %v22 = vld [vmem:[%s0 + $0x20] sm:$0xf]
  %v23 = vld [vmem:[%s0 + $0x24] sm:$0xf]
  %v24 = vld [vmem:[%s0 + $0x28] sm:$0xf]
  %v25 = vld [vmem:[%s0 + $0x2c] sm:$0xf]
  %v26 = vld [vmem:[%s0 + $0x30] sm:$0xf]
  %v27 = vld [vmem:[%s0 + $0x34] sm:$0xf]
  %v28 = vld [vmem:[%s0 + $0x38] sm:$0xf]
  %v29 = vld [vmem:[%s0 + $0x3c] sm:$0xf]
  %v30 = vld [vmem:[%s0 + $0x40] sm:$0xf]
  %v31 = vld [vmem:[%s0 + $0x44] sm:$0xf]
  %v32 = vld [vmem:[%s0 + $0x48] sm:$0xf]
  %v33 = vld [vmem:[%s0 + $0x4c] sm:$0xf]
  %v34 = vld [vmem:[%s0 + $0x50] sm:$0xf]
  %v35 = vld [vmem:[%s0 + $0x54] sm:$0xf]
  %v36 = vld [vmem:[%s0 + $0x58] sm:$0xf]
  %v37 = vld [vmem:[%s0 + $0x5c] sm:$0xf]
  %v38 = vld [vmem:[%s0 + $0x60] sm:$0xf]
  %v39 = vld [vmem:[%s0 + $0x64] sm:$0xf]
  %v40 = vld [vmem:[%s0 + $0x68] sm:$0xf]
  %v41 = vld [vmem:[%s0 + $0x6c] sm:$0xf]
  %v42 = vld [vmem:[%s0 + $0x70] sm:$0xf]
  %v43 = vld [vmem:[%s0 + $0x74] sm:$0xf]
  %v44 = vld [vmem:[%s0 + $0x78] sm:$0xf]
  %v45 = vld [vmem:[%s0 + $0x7c] sm:$0xf]
  %v46 = vunpack.c.l.bf16 %v14
  %v47 = vunpack.c.l.bf16 %v15
  %v48 = vunpack.c.l.bf16 %v16
  %v49 = vunpack.c.l.bf16 %v17
  %v50 = vunpack.c.l.bf16 %v18
  %v51 = vunpack.c.l.bf16 %v19
  %v52 = vunpack.c.l.bf16 %v20
  %v53 = vunpack.c.l.bf16 %v21
  %v54 = vunpack.c.l.bf16 %v22
  %v55 = vunpack.c.l.bf16 %v23
  %v56 = vunpack.c.l.bf16 %v24
  %v57 = vunpack.c.l.bf16 %v25
  %v58 = vunpack.c.l.bf16 %v26
  %v59 = vunpack.c.l.bf16 %v27
  %v60 = vunpack.c.l.bf16 %v28
  %v61 = vunpack.c.l.bf16 %v29
  %v62 = vunpack.c.l.bf16 %v30
  %v63 = vunpack.c.l.bf16 %v31
  %v64 = vunpack.c.l.bf16 %v32
  %v65 = vunpack.c.l.bf16 %v33
  %v66 = vunpack.c.l.bf16 %v34
  %v67 = vunpack.c.l.bf16 %v35
  %v68 = vunpack.c.l.bf16 %v36
  %v69 = vunpack.c.l.bf16 %v37
  %v70 = vunpack.c.l.bf16 %v38
  %v71 = vunpack.c.l.bf16 %v39
  %v72 = vunpack.c.l.bf16 %v40
  %v73 = vunpack.c.l.bf16 %v41
  %v74 = vunpack.c.l.bf16 %v42
  %v75 = vunpack.c.l.bf16 %v43
  %v76 = vunpack.c.l.bf16 %v44
  %v77 = vunpack.c.l.bf16 %v45
  %v78 = vld [vmem:[%s1] sm:$0x1]
  %v80 = vlaneseq
  %v81 = vshrl.u32 %v80, 7
  %v82 = vsub.s32 0, %v81
  %v83 = vrot.slane %v78, %v82
  %v85 = vmul.f32 %v46, %v83
  %v86 = vmul.f32 %v47, %v83
  %v87 = vmul.f32 %v48, %v83
  %v88 = vmul.f32 %v49, %v83
  %v89 = vmul.f32 %v50, %v83
  %v90 = vmul.f32 %v51, %v83
  %v91 = vmul.f32 %v52, %v83
  %v92 = vmul.f32 %v53, %v83
  %v93 = vmul.f32 %v54, %v83
  %v94 = vmul.f32 %v55, %v83
  %v95 = vmul.f32 %v56, %v83
  %v96 = vmul.f32 %v57, %v83
  %v97 = vmul.f32 %v58, %v83
  %v98 = vmul.f32 %v59, %v83
  %v99 = vmul.f32 %v60, %v83
  %v100 = vmul.f32 %v61, %v83
  %v101 = vmul.f32 %v62, %v83
  %v102 = vmul.f32 %v63, %v83
  %v103 = vmul.f32 %v64, %v83
  %v104 = vmul.f32 %v65, %v83
  %v105 = vmul.f32 %v66, %v83
  %v106 = vmul.f32 %v67, %v83
  %v107 = vmul.f32 %v68, %v83
  %v108 = vmul.f32 %v69, %v83
  %v109 = vmul.f32 %v70, %v83
  %v110 = vmul.f32 %v71, %v83
  %v111 = vmul.f32 %v72, %v83
  %v112 = vmul.f32 %v73, %v83
  %v113 = vmul.f32 %v74, %v83
  %v114 = vmul.f32 %v75, %v83
  %v115 = vmul.f32 %v76, %v83
  %v116 = vmul.f32 %v77, %v83
  %v117 = vld [vmem:[%s2] sm:$0x1]
  %v119 = vlaneseq
  %v120 = vshrl.u32 %v119, 7
  %v121 = vsub.s32 0, %v120
  %v122 = vrot.slane %v117, %v121
  %v124 = vadd.f32 %v85, %v122
  %v125 = vadd.f32 %v86, %v122
  %v126 = vadd.f32 %v87, %v122
  %v127 = vadd.f32 %v88, %v122
  %v128 = vadd.f32 %v89, %v122
  %v129 = vadd.f32 %v90, %v122
  %v130 = vadd.f32 %v91, %v122
  %v131 = vadd.f32 %v92, %v122
  %v132 = vadd.f32 %v93, %v122
  %v133 = vadd.f32 %v94, %v122
  %v134 = vadd.f32 %v95, %v122
  %v135 = vadd.f32 %v96, %v122
  %v136 = vadd.f32 %v97, %v122
  %v137 = vadd.f32 %v98, %v122
  %v138 = vadd.f32 %v99, %v122
  %v139 = vadd.f32 %v100, %v122
  %v140 = vadd.f32 %v101, %v122
  %v141 = vadd.f32 %v102, %v122
  %v142 = vadd.f32 %v103, %v122
  %v143 = vadd.f32 %v104, %v122
  %v144 = vadd.f32 %v105, %v122
  %v145 = vadd.f32 %v106, %v122
  %v146 = vadd.f32 %v107, %v122
  %v147 = vadd.f32 %v108, %v122
  %v148 = vadd.f32 %v109, %v122
  %v149 = vadd.f32 %v110, %v122
  %v150 = vadd.f32 %v111, %v122
  %v151 = vadd.f32 %v112, %v122
  %v152 = vadd.f32 %v113, %v122
  %v153 = vadd.f32 %v114, %v122
  %v154 = vadd.f32 %v115, %v122
  %v155 = vadd.f32 %v116, %v122
  %vm156 = vcmp.ge.f32.partialorder %v124, 0.0
  %vm157 = vcmp.ge.f32.partialorder %v125, 0.0
  %vm158 = vcmp.ge.f32.partialorder %v126, 0.0
  %vm159 = vcmp.ge.f32.partialorder %v127, 0.0
  %vm160 = vcmp.ge.f32.partialorder %v128, 0.0
  %vm161 = vcmp.ge.f32.partialorder %v129, 0.0
  %vm162 = vcmp.ge.f32.partialorder %v130, 0.0
  %vm163 = vcmp.ge.f32.partialorder %v131, 0.0
  %vm164 = vcmp.ge.f32.partialorder %v132, 0.0
  %vm165 = vcmp.ge.f32.partialorder %v133, 0.0
  %vm166 = vcmp.ge.f32.partialorder %v134, 0.0
  %vm167 = vcmp.ge.f32.partialorder %v135, 0.0
  %vm168 = vcmp.ge.f32.partialorder %v136, 0.0
  %vm169 = vcmp.ge.f32.partialorder %v137, 0.0
  %vm170 = vcmp.ge.f32.partialorder %v138, 0.0
  %vm171 = vcmp.ge.f32.partialorder %v139, 0.0
  %vm172 = vcmp.ge.f32.partialorder %v140, 0.0
  %vm173 = vcmp.ge.f32.partialorder %v141, 0.0
  %vm174 = vcmp.ge.f32.partialorder %v142, 0.0
  %vm175 = vcmp.ge.f32.partialorder %v143, 0.0
  %vm176 = vcmp.ge.f32.partialorder %v144, 0.0
  %vm177 = vcmp.ge.f32.partialorder %v145, 0.0
  %vm178 = vcmp.ge.f32.partialorder %v146, 0.0
  %vm179 = vcmp.ge.f32.partialorder %v147, 0.0
  %vm180 = vcmp.ge.f32.partialorder %v148, 0.0
  %vm181 = vcmp.ge.f32.partialorder %v149, 0.0
  %vm182 = vcmp.ge.f32.partialorder %v150, 0.0
  %vm183 = vcmp.ge.f32.partialorder %v151, 0.0
  %vm184 = vcmp.ge.f32.partialorder %v152, 0.0
  %vm185 = vcmp.ge.f32.partialorder %v153, 0.0
  %vm186 = vcmp.ge.f32.partialorder %v154, 0.0
  %vm187 = vcmp.ge.f32.partialorder %v155, 0.0
  %v188 = vmul.f32 %v124, 0.1
  %v189 = vmul.f32 %v125, 0.1
  %v190 = vmul.f32 %v126, 0.1
  %v191 = vmul.f32 %v127, 0.1
  %v192 = vmul.f32 %v128, 0.1
  %v193 = vmul.f32 %v129, 0.1
  %v194 = vmul.f32 %v130, 0.1
  %v195 = vmul.f32 %v131, 0.1
  %v196 = vmul.f32 %v132, 0.1
  %v197 = vmul.f32 %v133, 0.1
  %v198 = vmul.f32 %v134, 0.1
  %v199 = vmul.f32 %v135, 0.1
  %v200 = vmul.f32 %v136, 0.1
  %v201 = vmul.f32 %v137, 0.1
  %v202 = vmul.f32 %v138, 0.1
  %v203 = vmul.f32 %v139, 0.1
  %v204 = vmul.f32 %v140, 0.1
  %v205 = vmul.f32 %v141, 0.1
  %v206 = vmul.f32 %v142, 0.1
  %v207 = vmul.f32 %v143, 0.1
  %v208 = vmul.f32 %v144, 0.1
  %v209 = vmul.f32 %v145, 0.1
  %v210 = vmul.f32 %v146, 0.1
  %v211 = vmul.f32 %v147, 0.1
  %v212 = vmul.f32 %v148, 0.1
  %v213 = vmul.f32 %v149, 0.1
  %v214 = vmul.f32 %v150, 0.1
  %v215 = vmul.f32 %v151, 0.1
  %v216 = vmul.f32 %v152, 0.1
  %v217 = vmul.f32 %v153, 0.1
  %v218 = vmul.f32 %v154, 0.1
  %v219 = vmul.f32 %v155, 0.1
  %v220 = vsel %vm156, %v124, %v188
  %v221 = vsel %vm157, %v125, %v189
  %v222 = vsel %vm158, %v126, %v190
  %v223 = vsel %vm159, %v127, %v191
  %v224 = vsel %vm160, %v128, %v192
  %v225 = vsel %vm161, %v129, %v193
  %v226 = vsel %vm162, %v130, %v194
  %v227 = vsel %vm163, %v131, %v195
  %v228 = vsel %vm164, %v132, %v196
  %v229 = vsel %vm165, %v133, %v197
  %v230 = vsel %vm166, %v134, %v198
  %v231 = vsel %vm167, %v135, %v199
  %v232 = vsel %vm168, %v136, %v200
  %v233 = vsel %vm169, %v137, %v201
  %v234 = vsel %vm170, %v138, %v202
  %v235 = vsel %vm171, %v139, %v203
  %v236 = vsel %vm172, %v140, %v204
  %v237 = vsel %vm173, %v141, %v205
  %v238 = vsel %vm174, %v142, %v206
  %v239 = vsel %vm175, %v143, %v207
  %v240 = vsel %vm176, %v144, %v208
  %v241 = vsel %vm177, %v145, %v209
  %v242 = vsel %vm178, %v146, %v210
  %v243 = vsel %vm179, %v147, %v211
  %v244 = vsel %vm180, %v148, %v212
  %v245 = vsel %vm181, %v149, %v213
  %v246 = vsel %vm182, %v150, %v214
  %v247 = vsel %vm183, %v151, %v215
  %v248 = vsel %vm184, %v152, %v216
  %v249 = vsel %vm185, %v153, %v217
  %v250 = vsel %vm186, %v154, %v218
  %v251 = vsel %vm187, %v155, %v219
  %v252 = vpack.c.bf16 %v221, %v220
  %v253 = vpack.c.bf16 %v223, %v222
  %v254 = vpack.c.bf16 %v225, %v224
  %v255 = vpack.c.bf16 %v227, %v226
  %v256 = vpack.c.bf16 %v229, %v228
  %v257 = vpack.c.bf16 %v231, %v230
  %v258 = vpack.c.bf16 %v233, %v232
  %v259 = vpack.c.bf16 %v235, %v234
  %v260 = vpack.c.bf16 %v237, %v236
  %v261 = vpack.c.bf16 %v239, %v238
  %v262 = vpack.c.bf16 %v241, %v240
  %v263 = vpack.c.bf16 %v243, %v242
  %v264 = vpack.c.bf16 %v245, %v244
  %v265 = vpack.c.bf16 %v247, %v246
  %v266 = vpack.c.bf16 %v249, %v248
  %v267 = vpack.c.bf16 %v251, %v250
  %v284 = vunpack.c.l.b16 %v252
  %v285 = vunpack.c.h.b16 %v252
  %v286 = vunpack.c.l.b16 %v253
  %v287 = vunpack.c.h.b16 %v253
  %v288 = vunpack.c.l.b16 %v254
  %v289 = vunpack.c.h.b16 %v254
  %v290 = vunpack.c.l.b16 %v255
  %v291 = vunpack.c.h.b16 %v255
  %v292 = vunpack.c.l.b16 %v256
  %v293 = vunpack.c.h.b16 %v256
  %v294 = vunpack.c.l.b16 %v257
  %v295 = vunpack.c.h.b16 %v257
  %v296 = vunpack.c.l.b16 %v258
  %v297 = vunpack.c.h.b16 %v258
  %v298 = vunpack.c.l.b16 %v259
  %v299 = vunpack.c.h.b16 %v259
  %v300 = vunpack.c.l.b16 %v260
  %v301 = vunpack.c.h.b16 %v260
  %v302 = vunpack.c.l.b16 %v261
  %v303 = vunpack.c.h.b16 %v261
  %v304 = vunpack.c.l.b16 %v262
  %v305 = vunpack.c.h.b16 %v262
  %v306 = vunpack.c.l.b16 %v263
  %v307 = vunpack.c.h.b16 %v263
  %v308 = vunpack.c.l.b16 %v264
  %v309 = vunpack.c.h.b16 %v264
  %v310 = vunpack.c.l.b16 %v265
  %v311 = vunpack.c.h.b16 %v265
  %v312 = vunpack.c.l.b16 %v266
  %v313 = vunpack.c.h.b16 %v266
  %v314 = vunpack.c.l.b16 %v267
  %v315 = vunpack.c.h.b16 %v267
  %v316 = vpack.c.b16 %v284, %v284
  %v317 = vpack.c.b16 %v285, %v285
  %v318 = vpack.c.b16 %v286, %v286
  %v319 = vpack.c.b16 %v287, %v287
  %v320 = vpack.c.b16 %v288, %v288
  %v321 = vpack.c.b16 %v289, %v289
  %v322 = vpack.c.b16 %v290, %v290
  %v323 = vpack.c.b16 %v291, %v291
  %v324 = vpack.c.b16 %v292, %v292
  %v325 = vpack.c.b16 %v293, %v293
  %v326 = vpack.c.b16 %v294, %v294
  %v327 = vpack.c.b16 %v295, %v295
  %v328 = vpack.c.b16 %v296, %v296
  %v329 = vpack.c.b16 %v297, %v297
  %v330 = vpack.c.b16 %v298, %v298
  %v331 = vpack.c.b16 %v299, %v299
  %v332 = vpack.c.b16 %v300, %v300
  %v333 = vpack.c.b16 %v301, %v301
  %v334 = vpack.c.b16 %v302, %v302
  %v335 = vpack.c.b16 %v303, %v303
  %v336 = vpack.c.b16 %v304, %v304
  %v337 = vpack.c.b16 %v305, %v305
  %v338 = vpack.c.b16 %v306, %v306
  %v339 = vpack.c.b16 %v307, %v307
  %v340 = vpack.c.b16 %v308, %v308
  %v341 = vpack.c.b16 %v309, %v309
  %v342 = vpack.c.b16 %v310, %v310
  %v343 = vpack.c.b16 %v311, %v311
  %v344 = vpack.c.b16 %v312, %v312
  %v345 = vpack.c.b16 %v313, %v313
  %v346 = vpack.c.b16 %v314, %v314
  %v347 = vpack.c.b16 %v315, %v315
  %380 = vst [vmem:[%s3] sm:$0xf] %v316
  %381 = vst [vmem:[%s3 + $0x4] sm:$0xf] %v317
  %382 = vst [vmem:[%s3 + $0x8] sm:$0xf] %v318
  %383 = vst [vmem:[%s3 + $0xc] sm:$0xf] %v319
  %384 = vst [vmem:[%s3 + $0x10] sm:$0xf] %v320
  %385 = vst [vmem:[%s3 + $0x14] sm:$0xf] %v321
  %386 = vst [vmem:[%s3 + $0x18] sm:$0xf] %v322
  %387 = vst [vmem:[%s3 + $0x1c] sm:$0xf] %v323
  %388 = vst [vmem:[%s3 + $0x20] sm:$0xf] %v324
  %389 = vst [vmem:[%s3 + $0x24] sm:$0xf] %v325
  %390 = vst [vmem:[%s3 + $0x28] sm:$0xf] %v326
  %391 = vst [vmem:[%s3 + $0x2c] sm:$0xf] %v327
  %392 = vst [vmem:[%s3 + $0x30] sm:$0xf] %v328
  %393 = vst [vmem:[%s3 + $0x34] sm:$0xf] %v329
  %394 = vst [vmem:[%s3 + $0x38] sm:$0xf] %v330
  %395 = vst [vmem:[%s3 + $0x3c] sm:$0xf] %v331
  %396 = vst [vmem:[%s3 + $0x40] sm:$0xf] %v332
  %397 = vst [vmem:[%s3 + $0x44] sm:$0xf] %v333
  %398 = vst [vmem:[%s3 + $0x48] sm:$0xf] %v334
  %399 = vst [vmem:[%s3 + $0x4c] sm:$0xf] %v335
  %400 = vst [vmem:[%s3 + $0x50] sm:$0xf] %v336
  %401 = vst [vmem:[%s3 + $0x54] sm:$0xf] %v337
  %402 = vst [vmem:[%s3 + $0x58] sm:$0xf] %v338
  %403 = vst [vmem:[%s3 + $0x5c] sm:$0xf] %v339
  %404 = vst [vmem:[%s3 + $0x60] sm:$0xf] %v340
  %405 = vst [vmem:[%s3 + $0x64] sm:$0xf] %v341
  %406 = vst [vmem:[%s3 + $0x68] sm:$0xf] %v342
  %407 = vst [vmem:[%s3 + $0x6c] sm:$0xf] %v343
  %408 = vst [vmem:[%s3 + $0x70] sm:$0xf] %v344
  %409 = vst [vmem:[%s3 + $0x74] sm:$0xf] %v345
  %410 = vst [vmem:[%s3 + $0x78] sm:$0xf] %v346
  %411 = vst [vmem:[%s3 + $0x7c] sm:$0xf] %v347
  // Predicated region
  $region14: #{encoder_forward.8} parent=0 // pred_check
    _
  $region15: #{encoder_forward.8} parent=0 // pred_check_branch
    %413 = sbr.rel (0) target = $region17
  $region16: #{encoder_forward.8} parent=0 // pred_region
    _
  $region17: #{encoder_forward.8} parent=0 // pred_fallthru
    _
  // Predicated region
  $region18: #{encoder_forward.8} parent=0 // pred_check
    _
  $region19: #{encoder_forward.8} parent=0 // pred_check_branch
    %415 = sbr.rel (0) target = $region21
  $region20: #{encoder_forward.8} parent=0 // pred_region
    _
  $region21: #{encoder_forward.8} parent=0 // pred_fallthru
    _

// kernel: encoder_forward.9
$region0: #{encoder_forward.9}
  #allocation0 [shape = 'u32[]', space=smem, size = 0x4, offset = 0x4, fixed_abs, tag = 'smem constant byte address 0x4 - core index']
  #allocation1 [shape = 'u32[144,128]{1,0:T(1,128)}', space=vmem, size = 0x12000, scoped, tag = 'internal scratch']
  %s0 = inlined_call_operand.vmem [shape: bf16[128,1024], index: 0, kind: input, shape index: {}]
  %s1 = inlined_call_operand.vmem [shape: bf16[1024,128], index: 1, kind: input, shape index: {}]
  %s2 = inlined_call_operand.vmem [shape: bf16[128,128], index: 2, kind: output, shape index: {0}]
  %s3 = inlined_call_operand.vmem [shape: f32[1,2,128], index: 3, kind: output, shape index: {1}]
  %4 = xla_tuple %s2, %s3
  %s5 = sld [smem:[#allocation0]]
  $region26: #{encoder_forward.9} parent=0
    _
  %s7 = ssub.s32 1, %s5
  %s8 = scalar_select 0, %s7, %s5
  // Predicated region
  $region2: #{encoder_forward.9} parent=0 // pred_check
    _
  $region3: #{encoder_forward.9} parent=0 // pred_check_branch
    %10 = sbr.rel (0) target = $region5
  $region4: #{encoder_forward.9} parent=0 // pred_region
    _
  $region5: #{encoder_forward.9} parent=0 // pred_fallthru
    _
  // Predicated region
  $region6: #{encoder_forward.9} parent=0 // pred_check
    _
  $region7: #{encoder_forward.9} parent=0 // pred_check_branch
    %12 = sbr.rel (0) target = $region9
  $region8: #{encoder_forward.9} parent=0 // pred_region
    _
  $region9: #{encoder_forward.9} parent=0 // pred_fallthru
    _
  %v14 = vld [vmem:[%s0] sm:$0xff]
  %v15 = vld [vmem:[%s0 + $0x8] sm:$0xff]
  %v16 = vld [vmem:[%s0 + $0x10] sm:$0xff]
  %v17 = vld [vmem:[%s0 + $0x18] sm:$0xff]
  %v18 = vld [vmem:[%s0 + $0x20] sm:$0xff]
  %v19 = vld [vmem:[%s0 + $0x28] sm:$0xff]
  %v20 = vld [vmem:[%s0 + $0x30] sm:$0xff]
  %v21 = vld [vmem:[%s0 + $0x38] sm:$0xff]
  %v22 = vld [vmem:[%s0 + $0x40] sm:$0xff]
  %v23 = vld [vmem:[%s0 + $0x48] sm:$0xff]
  %v24 = vld [vmem:[%s0 + $0x50] sm:$0xff]
  %v25 = vld [vmem:[%s0 + $0x58] sm:$0xff]
  %v26 = vld [vmem:[%s0 + $0x60] sm:$0xff]
  %v27 = vld [vmem:[%s0 + $0x68] sm:$0xff]
  %v28 = vld [vmem:[%s0 + $0x70] sm:$0xff]
  %v29 = vld [vmem:[%s0 + $0x78] sm:$0xff]
  %v30 = vld [vmem:[%s0 + $0x80] sm:$0xff]
  %v31 = vld [vmem:[%s0 + $0x88] sm:$0xff]
  %v32 = vld [vmem:[%s0 + $0x90] sm:$0xff]
  %v33 = vld [vmem:[%s0 + $0x98] sm:$0xff]
  %v34 = vld [vmem:[%s0 + $0xa0] sm:$0xff]
  %v35 = vld [vmem:[%s0 + $0xa8] sm:$0xff]
  %v36 = vld [vmem:[%s0 + $0xb0] sm:$0xff]
  %v37 = vld [vmem:[%s0 + $0xb8] sm:$0xff]
  %v38 = vld [vmem:[%s0 + $0xc0] sm:$0xff]
  %v39 = vld [vmem:[%s0 + $0xc8] sm:$0xff]
  %v40 = vld [vmem:[%s0 + $0xd0] sm:$0xff]
  %v41 = vld [vmem:[%s0 + $0xd8] sm:$0xff]
  %v42 = vld [vmem:[%s0 + $0xe0] sm:$0xff]
  %v43 = vld [vmem:[%s0 + $0xe8] sm:$0xff]
  %v44 = vld [vmem:[%s0 + $0xf0] sm:$0xff]
  %v45 = vld [vmem:[%s0 + $0xf8] sm:$0xff]
  %v46 = vld [vmem:[%s0 + $0x100] sm:$0xff]
  %v47 = vld [vmem:[%s0 + $0x108] sm:$0xff]
  %v48 = vld [vmem:[%s0 + $0x110] sm:$0xff]
  %v49 = vld [vmem:[%s0 + $0x118] sm:$0xff]
  %v50 = vld [vmem:[%s0 + $0x120] sm:$0xff]
  %v51 = vld [vmem:[%s0 + $0x128] sm:$0xff]
  %v52 = vld [vmem:[%s0 + $0x130] sm:$0xff]
  %v53 = vld [vmem:[%s0 + $0x138] sm:$0xff]
  %v54 = vld [vmem:[%s0 + $0x140] sm:$0xff]
  %v55 = vld [vmem:[%s0 + $0x148] sm:$0xff]
  %v56 = vld [vmem:[%s0 + $0x150] sm:$0xff]
  %v57 = vld [vmem:[%s0 + $0x158] sm:$0xff]
  %v58 = vld [vmem:[%s0 + $0x160] sm:$0xff]
  %v59 = vld [vmem:[%s0 + $0x168] sm:$0xff]
  %v60 = vld [vmem:[%s0 + $0x170] sm:$0xff]
  %v61 = vld [vmem:[%s0 + $0x178] sm:$0xff]
  %v62 = vld [vmem:[%s0 + $0x180] sm:$0xff]
  %v63 = vld [vmem:[%s0 + $0x188] sm:$0xff]
  %v64 = vld [vmem:[%s0 + $0x190] sm:$0xff]
  %v65 = vld [vmem:[%s0 + $0x198] sm:$0xff]
  %v66 = vld [vmem:[%s0 + $0x1a0] sm:$0xff]
  %v67 = vld [vmem:[%s0 + $0x1a8] sm:$0xff]
  %v68 = vld [vmem:[%s0 + $0x1b0] sm:$0xff]
  %v69 = vld [vmem:[%s0 + $0x1b8] sm:$0xff]
  %v70 = vld [vmem:[%s0 + $0x1c0] sm:$0xff]
  %v71 = vld [vmem:[%s0 + $0x1c8] sm:$0xff]
  %v72 = vld [vmem:[%s0 + $0x1d0] sm:$0xff]
  %v73 = vld [vmem:[%s0 + $0x1d8] sm:$0xff]
  %v74 = vld [vmem:[%s0 + $0x1e0] sm:$0xff]
  %v75 = vld [vmem:[%s0 + $0x1e8] sm:$0xff]
  %v76 = vld [vmem:[%s0 + $0x1f0] sm:$0xff]
  %v77 = vld [vmem:[%s0 + $0x1f8] sm:$0xff]
  %v78 = vld [vmem:[%s1] sm:$0xf]
  %v79 = vld [vmem:[%s1 + $0x4] sm:$0xf]
  %v80 = vld [vmem:[%s1 + $0x8] sm:$0xf]
  %v81 = vld [vmem:[%s1 + $0xc] sm:$0xf]
  %v82 = vld [vmem:[%s1 + $0x10] sm:$0xf]
  %v83 = vld [vmem:[%s1 + $0x14] sm:$0xf]
  %v84 = vld [vmem:[%s1 + $0x18] sm:$0xf]
  %v85 = vld [vmem:[%s1 + $0x1c] sm:$0xf]
  %v86 = vld [vmem:[%s1 + $0x20] sm:$0xf]
  %v87 = vld [vmem:[%s1 + $0x24] sm:$0xf]
  %v88 = vld [vmem:[%s1 + $0x28] sm:$0xf]
  %v89 = vld [vmem:[%s1 + $0x2c] sm:$0xf]
  %v90 = vld [vmem:[%s1 + $0x30] sm:$0xf]
  %v91 = vld [vmem:[%s1 + $0x34] sm:$0xf]
  %v92 = vld [vmem:[%s1 + $0x38] sm:$0xf]
  %v93 = vld [vmem:[%s1 + $0x3c] sm:$0xf]
  %v94 = vld [vmem:[%s1 + $0x40] sm:$0xf]
  %v95 = vld [vmem:[%s1 + $0x44] sm:$0xf]
  %v96 = vld [vmem:[%s1 + $0x48] sm:$0xf]
  %v97 = vld [vmem:[%s1 + $0x4c] sm:$0xf]
  %v98 = vld [vmem:[%s1 + $0x50] sm:$0xf]
  %v99 = vld [vmem:[%s1 + $0x54] sm:$0xf]
  %v100 = vld [vmem:[%s1 + $0x58] sm:$0xf]
  %v101 = vld [vmem:[%s1 + $0x5c] sm:$0xf]
  %v102 = vld [vmem:[%s1 + $0x60] sm:$0xf]
  %v103 = vld [vmem:[%s1 + $0x64] sm:$0xf]
  %v104 = vld [vmem:[%s1 + $0x68] sm:$0xf]
  %v105 = vld [vmem:[%s1 + $0x6c] sm:$0xf]
  %v106 = vld [vmem:[%s1 + $0x70] sm:$0xf]
  %v107 = vld [vmem:[%s1 + $0x74] sm:$0xf]
  %v108 = vld [vmem:[%s1 + $0x78] sm:$0xf]
  %v109 = vld [vmem:[%s1 + $0x7c] sm:$0xf]
  %v110 = vld [vmem:[%s1 + $0x80] sm:$0xf]
  %v111 = vld [vmem:[%s1 + $0x84] sm:$0xf]
  %v112 = vld [vmem:[%s1 + $0x88] sm:$0xf]
  %v113 = vld [vmem:[%s1 + $0x8c] sm:$0xf]
  %v114 = vld [vmem:[%s1 + $0x90] sm:$0xf]
  %v115 = vld [vmem:[%s1 + $0x94] sm:$0xf]
  %v116 = vld [vmem:[%s1 + $0x98] sm:$0xf]
  %v117 = vld [vmem:[%s1 + $0x9c] sm:$0xf]
  %v118 = vld [vmem:[%s1 + $0xa0] sm:$0xf]
  %v119 = vld [vmem:[%s1 + $0xa4] sm:$0xf]
  %v120 = vld [vmem:[%s1 + $0xa8] sm:$0xf]
  %v121 = vld [vmem:[%s1 + $0xac] sm:$0xf]
  %v122 = vld [vmem:[%s1 + $0xb0] sm:$0xf]
  %v123 = vld [vmem:[%s1 + $0xb4] sm:$0xf]
  %v124 = vld [vmem:[%s1 + $0xb8] sm:$0xf]
  %v125 = vld [vmem:[%s1 + $0xbc] sm:$0xf]
  %v126 = vld [vmem:[%s1 + $0xc0] sm:$0xf]
  %v127 = vld [vmem:[%s1 + $0xc4] sm:$0xf]
  %v128 = vld [vmem:[%s1 + $0xc8] sm:$0xf]
  %v129 = vld [vmem:[%s1 + $0xcc] sm:$0xf]
  %v130 = vld [vmem:[%s1 + $0xd0] sm:$0xf]
  %v131 = vld [vmem:[%s1 + $0xd4] sm:$0xf]
  %v132 = vld [vmem:[%s1 + $0xd8] sm:$0xf]
  %v133 = vld [vmem:[%s1 + $0xdc] sm:$0xf]
  %v134 = vld [vmem:[%s1 + $0xe0] sm:$0xf]
  %v135 = vld [vmem:[%s1 + $0xe4] sm:$0xf]
  %v136 = vld [vmem:[%s1 + $0xe8] sm:$0xf]
  %v137 = vld [vmem:[%s1 + $0xec] sm:$0xf]
  %v138 = vld [vmem:[%s1 + $0xf0] sm:$0xf]
  %v139 = vld [vmem:[%s1 + $0xf4] sm:$0xf]
  %v140 = vld [vmem:[%s1 + $0xf8] sm:$0xf]
  %v141 = vld [vmem:[%s1 + $0xfc] sm:$0xf]
  %v142 = vld [vmem:[%s1 + $0x100] sm:$0xf]
  %v143 = vld [vmem:[%s1 + $0x104] sm:$0xf]
  %v144 = vld [vmem:[%s1 + $0x108] sm:$0xf]
  %v145 = vld [vmem:[%s1 + $0x10c] sm:$0xf]
  %v146 = vld [vmem:[%s1 + $0x110] sm:$0xf]
  %v147 = vld [vmem:[%s1 + $0x114] sm:$0xf]
  %v148 = vld [vmem:[%s1 + $0x118] sm:$0xf]
  %v149 = vld [vmem:[%s1 + $0x11c] sm:$0xf]
  %v150 = vld [vmem:[%s1 + $0x120] sm:$0xf]
  %v151 = vld [vmem:[%s1 + $0x124] sm:$0xf]
  %v152 = vld [vmem:[%s1 + $0x128] sm:$0xf]
  %v153 = vld [vmem:[%s1 + $0x12c] sm:$0xf]
  %v154 = vld [vmem:[%s1 + $0x130] sm:$0xf]
  %v155 = vld [vmem:[%s1 + $0x134] sm:$0xf]
  %v156 = vld [vmem:[%s1 + $0x138] sm:$0xf]
  %v157 = vld [vmem:[%s1 + $0x13c] sm:$0xf]
  %v158 = vld [vmem:[%s1 + $0x140] sm:$0xf]
  %v159 = vld [vmem:[%s1 + $0x144] sm:$0xf]
  %v160 = vld [vmem:[%s1 + $0x148] sm:$0xf]
  %v161 = vld [vmem:[%s1 + $0x14c] sm:$0xf]
  %v162 = vld [vmem:[%s1 + $0x150] sm:$0xf]
  %v163 = vld [vmem:[%s1 + $0x154] sm:$0xf]
  %v164 = vld [vmem:[%s1 + $0x158] sm:$0xf]
  %v165 = vld [vmem:[%s1 + $0x15c] sm:$0xf]
  %v166 = vld [vmem:[%s1 + $0x160] sm:$0xf]
  %v167 = vld [vmem:[%s1 + $0x164] sm:$0xf]
  %v168 = vld [vmem:[%s1 + $0x168] sm:$0xf]
  %v169 = vld [vmem:[%s1 + $0x16c] sm:$0xf]
  %v170 = vld [vmem:[%s1 + $0x170] sm:$0xf]
  %v171 = vld [vmem:[%s1 + $0x174] sm:$0xf]
  %v172 = vld [vmem:[%s1 + $0x178] sm:$0xf]
  %v173 = vld [vmem:[%s1 + $0x17c] sm:$0xf]
  %v174 = vld [vmem:[%s1 + $0x180] sm:$0xf]
  %v175 = vld [vmem:[%s1 + $0x184] sm:$0xf]
  %v176 = vld [vmem:[%s1 + $0x188] sm:$0xf]
  %v177 = vld [vmem:[%s1 + $0x18c] sm:$0xf]
  %v178 = vld [vmem:[%s1 + $0x190] sm:$0xf]
  %v179 = vld [vmem:[%s1 + $0x194] sm:$0xf]
  %v180 = vld [vmem:[%s1 + $0x198] sm:$0xf]
  %v181 = vld [vmem:[%s1 + $0x19c] sm:$0xf]
  %v182 = vld [vmem:[%s1 + $0x1a0] sm:$0xf]
  %v183 = vld [vmem:[%s1 + $0x1a4] sm:$0xf]
  %v184 = vld [vmem:[%s1 + $0x1a8] sm:$0xf]
  %v185 = vld [vmem:[%s1 + $0x1ac] sm:$0xf]
  %v186 = vld [vmem:[%s1 + $0x1b0] sm:$0xf]
  %v187 = vld [vmem:[%s1 + $0x1b4] sm:$0xf]
  %v188 = vld [vmem:[%s1 + $0x1b8] sm:$0xf]
  %v189 = vld [vmem:[%s1 + $0x1bc] sm:$0xf]
  %v190 = vld [vmem:[%s1 + $0x1c0] sm:$0xf]
  %v191 = vld [vmem:[%s1 + $0x1c4] sm:$0xf]
  %v192 = vld [vmem:[%s1 + $0x1c8] sm:$0xf]
  %v193 = vld [vmem:[%s1 + $0x1cc] sm:$0xf]
  %v194 = vld [vmem:[%s1 + $0x1d0] sm:$0xf]
  %v195 = vld [vmem:[%s1 + $0x1d4] sm:$0xf]
  %v196 = vld [vmem:[%s1 + $0x1d8] sm:$0xf]
  %v197 = vld [vmem:[%s1 + $0x1dc] sm:$0xf]
  %v198 = vld [vmem:[%s1 + $0x1e0] sm:$0xf]
  %v199 = vld [vmem:[%s1 + $0x1e4] sm:$0xf]
  %v200 = vld [vmem:[%s1 + $0x1e8] sm:$0xf]
  %v201 = vld [vmem:[%s1 + $0x1ec] sm:$0xf]
  %v202 = vld [vmem:[%s1 + $0x1f0] sm:$0xf]
  %v203 = vld [vmem:[%s1 + $0x1f4] sm:$0xf]
  %v204 = vld [vmem:[%s1 + $0x1f8] sm:$0xf]
  %v205 = vld [vmem:[%s1 + $0x1fc] sm:$0xf]
  %v270 = vunpack.c.l.b16 %v14
  %v271 = vunpack.c.h.b16 %v14
  %v272 = vunpack.c.l.b16 %v15
  %v273 = vunpack.c.h.b16 %v15
  %v274 = vunpack.c.l.b16 %v16
  %v275 = vunpack.c.h.b16 %v16
  %v276 = vunpack.c.l.b16 %v17
  %v277 = vunpack.c.h.b16 %v17
  %v278 = vunpack.c.l.b16 %v18
  %v279 = vunpack.c.h.b16 %v18
  %v280 = vunpack.c.l.b16 %v19
  %v281 = vunpack.c.h.b16 %v19
  %v282 = vunpack.c.l.b16 %v20
  %v283 = vunpack.c.h.b16 %v20
  %v284 = vunpack.c.l.b16 %v21
  %v285 = vunpack.c.h.b16 %v21
  %v286 = vunpack.c.l.b16 %v22
  %v287 = vunpack.c.h.b16 %v22
  %v288 = vunpack.c.l.b16 %v23
  %v289 = vunpack.c.h.b16 %v23
  %v290 = vunpack.c.l.b16 %v24
  %v291 = vunpack.c.h.b16 %v24
  %v292 = vunpack.c.l.b16 %v25
  %v293 = vunpack.c.h.b16 %v25
  %v294 = vunpack.c.l.b16 %v26
  %v295 = vunpack.c.h.b16 %v26
  %v296 = vunpack.c.l.b16 %v27
  %v297 = vunpack.c.h.b16 %v27
  %v298 = vunpack.c.l.b16 %v28
  %v299 = vunpack.c.h.b16 %v28
  %v300 = vunpack.c.l.b16 %v29
  %v301 = vunpack.c.h.b16 %v29
  %v302 = vunpack.c.l.b16 %v30
  %v303 = vunpack.c.h.b16 %v30
  %v304 = vunpack.c.l.b16 %v31
  %v305 = vunpack.c.h.b16 %v31
  %v306 = vunpack.c.l.b16 %v32
  %v307 = vunpack.c.h.b16 %v32
  %v308 = vunpack.c.l.b16 %v33
  %v309 = vunpack.c.h.b16 %v33
  %v310 = vunpack.c.l.b16 %v34
  %v311 = vunpack.c.h.b16 %v34
  %v312 = vunpack.c.l.b16 %v35
  %v313 = vunpack.c.h.b16 %v35
  %v314 = vunpack.c.l.b16 %v36
  %v315 = vunpack.c.h.b16 %v36
  %v316 = vunpack.c.l.b16 %v37
  %v317 = vunpack.c.h.b16 %v37
  %v318 = vunpack.c.l.b16 %v38
  %v319 = vunpack.c.h.b16 %v38
  %v320 = vunpack.c.l.b16 %v39
  %v321 = vunpack.c.h.b16 %v39
  %v322 = vunpack.c.l.b16 %v40
  %v323 = vunpack.c.h.b16 %v40
  %v324 = vunpack.c.l.b16 %v41
  %v325 = vunpack.c.h.b16 %v41
  %v326 = vunpack.c.l.b16 %v42
  %v327 = vunpack.c.h.b16 %v42
  %v328 = vunpack.c.l.b16 %v43
  %v329 = vunpack.c.h.b16 %v43
  %v330 = vunpack.c.l.b16 %v44
  %v331 = vunpack.c.h.b16 %v44
  %v332 = vunpack.c.l.b16 %v45
  %v333 = vunpack.c.h.b16 %v45
  %v334 = vunpack.c.l.b16 %v46
  %v335 = vunpack.c.h.b16 %v46
  %v336 = vunpack.c.l.b16 %v47
  %v337 = vunpack.c.h.b16 %v47
  %v338 = vunpack.c.l.b16 %v48
  %v339 = vunpack.c.h.b16 %v48
  %v340 = vunpack.c.l.b16 %v49
  %v341 = vunpack.c.h.b16 %v49
  %v342 = vunpack.c.l.b16 %v50
  %v343 = vunpack.c.h.b16 %v50
  %v344 = vunpack.c.l.b16 %v51
  %v345 = vunpack.c.h.b16 %v51
  %v346 = vunpack.c.l.b16 %v52
  %v347 = vunpack.c.h.b16 %v52
  %v348 = vunpack.c.l.b16 %v53
  %v349 = vunpack.c.h.b16 %v53
  %v350 = vunpack.c.l.b16 %v54
  %v351 = vunpack.c.h.b16 %v54
  %v352 = vunpack.c.l.b16 %v55
  %v353 = vunpack.c.h.b16 %v55
  %v354 = vunpack.c.l.b16 %v56
  %v355 = vunpack.c.h.b16 %v56
  %v356 = vunpack.c.l.b16 %v57
  %v357 = vunpack.c.h.b16 %v57
  %v358 = vunpack.c.l.b16 %v58
  %v359 = vunpack.c.h.b16 %v58
  %v360 = vunpack.c.l.b16 %v59
  %v361 = vunpack.c.h.b16 %v59
  %v362 = vunpack.c.l.b16 %v60
  %v363 = vunpack.c.h.b16 %v60
  %v364 = vunpack.c.l.b16 %v61
  %v365 = vunpack.c.h.b16 %v61
  %v366 = vunpack.c.l.b16 %v62
  %v367 = vunpack.c.h.b16 %v62
  %v368 = vunpack.c.l.b16 %v63
  %v369 = vunpack.c.h.b16 %v63
  %v370 = vunpack.c.l.b16 %v64
  %v371 = vunpack.c.h.b16 %v64
  %v372 = vunpack.c.l.b16 %v65
  %v373 = vunpack.c.h.b16 %v65
  %v374 = vunpack.c.l.b16 %v66
  %v375 = vunpack.c.h.b16 %v66
  %v376 = vunpack.c.l.b16 %v67
  %v377 = vunpack.c.h.b16 %v67
  %v378 = vunpack.c.l.b16 %v68
  %v379 = vunpack.c.h.b16 %v68
  %v380 = vunpack.c.l.b16 %v69
  %v381 = vunpack.c.h.b16 %v69
  %v382 = vunpack.c.l.b16 %v70
  %v383 = vunpack.c.h.b16 %v70
  %v384 = vunpack.c.l.b16 %v71
  %v385 = vunpack.c.h.b16 %v71
  %v386 = vunpack.c.l.b16 %v72
  %v387 = vunpack.c.h.b16 %v72
  %v388 = vunpack.c.l.b16 %v73
  %v389 = vunpack.c.h.b16 %v73
  %v390 = vunpack.c.l.b16 %v74
  %v391 = vunpack.c.h.b16 %v74
  %v392 = vunpack.c.l.b16 %v75
  %v393 = vunpack.c.h.b16 %v75
  %v394 = vunpack.c.l.b16 %v76
  %v395 = vunpack.c.h.b16 %v76
  %v396 = vunpack.c.l.b16 %v77
  %v397 = vunpack.c.h.b16 %v77
  %v398 = vpack.c.b16 %v278, %v270
  %v399 = vpack.c.b16 %v279, %v271
  %v400 = vpack.c.b16 %v280, %v272
  %v401 = vpack.c.b16 %v281, %v273
  %v402 = vpack.c.b16 %v282, %v274
  %v403 = vpack.c.b16 %v283, %v275
  %v404 = vpack.c.b16 %v284, %v276
  %v405 = vpack.c.b16 %v285, %v277
  %v406 = vpack.c.b16 %v294, %v286
  %v407 = vpack.c.b16 %v295, %v287
  %v408 = vpack.c.b16 %v296, %v288
  %v409 = vpack.c.b16 %v297, %v289
  %v410 = vpack.c.b16 %v298, %v290
  %v411 = vpack.c.b16 %v299, %v291
  %v412 = vpack.c.b16 %v300, %v292
  %v413 = vpack.c.b16 %v301, %v293
  %v414 = vpack.c.b16 %v310, %v302
  %v415 = vpack.c.b16 %v311, %v303
  %v416 = vpack.c.b16 %v312, %v304
  %v417 = vpack.c.b16 %v313, %v305
  %v418 = vpack.c.b16 %v314, %v306
  %v419 = vpack.c.b16 %v315, %v307
  %v420 = vpack.c.b16 %v316, %v308
  %v421 = vpack.c.b16 %v317, %v309
  %v422 = vpack.c.b16 %v326, %v318
  %v423 = vpack.c.b16 %v327, %v319
  %v424 = vpack.c.b16 %v328, %v320
  %v425 = vpack.c.b16 %v329, %v321
  %v426 = vpack.c.b16 %v330, %v322
  %v427 = vpack.c.b16 %v331, %v323
  %v428 = vpack.c.b16 %v332, %v324
  %v429 = vpack.c.b16 %v333, %v325
  %v430 = vpack.c.b16 %v342, %v334
  %v431 = vpack.c.b16 %v343, %v335
  %v432 = vpack.c.b16 %v344, %v336
  %v433 = vpack.c.b16 %v345, %v337
  %v434 = vpack.c.b16 %v346, %v338
  %v435 = vpack.c.b16 %v347, %v339
  %v436 = vpack.c.b16 %v348, %v340
  %v437 = vpack.c.b16 %v349, %v341
  %v438 = vpack.c.b16 %v358, %v350
  %v439 = vpack.c.b16 %v359, %v351
  %v440 = vpack.c.b16 %v360, %v352
  %v441 = vpack.c.b16 %v361, %v353
  %v442 = vpack.c.b16 %v362, %v354
  %v443 = vpack.c.b16 %v363, %v355
  %v444 = vpack.c.b16 %v364, %v356
  %v445 = vpack.c.b16 %v365, %v357
  %v446 = vpack.c.b16 %v374, %v366
  %v447 = vpack.c.b16 %v375, %v367
  %v448 = vpack.c.b16 %v376, %v368
  %v449 = vpack.c.b16 %v377, %v369
  %v450 = vpack.c.b16 %v378, %v370
  %v451 = vpack.c.b16 %v379, %v371
  %v452 = vpack.c.b16 %v380, %v372
  %v453 = vpack.c.b16 %v381, %v373
  %v454 = vpack.c.b16 %v390, %v382
  %v455 = vpack.c.b16 %v391, %v383
  %v456 = vpack.c.b16 %v392, %v384
  %v457 = vpack.c.b16 %v393, %v385
  %v458 = vpack.c.b16 %v394, %v386
  %v459 = vpack.c.b16 %v395, %v387
  %v460 = vpack.c.b16 %v396, %v388
  %v461 = vpack.c.b16 %v397, %v389
  %v654 = vunpack.c.l.b16 %v78
  %v655 = vunpack.c.l.b16 %v79
  %v656 = vunpack.c.l.b16 %v80
  %v657 = vunpack.c.l.b16 %v81
  %v658 = vunpack.c.l.b16 %v82
  %v659 = vunpack.c.l.b16 %v83
  %v660 = vunpack.c.l.b16 %v84
  %v661 = vunpack.c.l.b16 %v85
  %v662 = vunpack.c.l.b16 %v86
  %v663 = vunpack.c.l.b16 %v87
  %v664 = vunpack.c.l.b16 %v88
  %v665 = vunpack.c.l.b16 %v89
  %v666 = vunpack.c.l.b16 %v90
  %v667 = vunpack.c.l.b16 %v91
  %v668 = vunpack.c.l.b16 %v92
  %v669 = vunpack.c.l.b16 %v93
  %v670 = vunpack.c.l.b16 %v94
  %v671 = vunpack.c.l.b16 %v95
  %v672 = vunpack.c.l.b16 %v96
  %v673 = vunpack.c.l.b16 %v97
  %v674 = vunpack.c.l.b16 %v98
  %v675 = vunpack.c.l.b16 %v99
  %v676 = vunpack.c.l.b16 %v100
  %v677 = vunpack.c.l.b16 %v101
  %v678 = vunpack.c.l.b16 %v102
  %v679 = vunpack.c.l.b16 %v103
  %v680 = vunpack.c.l.b16 %v104
  %v681 = vunpack.c.l.b16 %v105
  %v682 = vunpack.c.l.b16 %v106
  %v683 = vunpack.c.l.b16 %v107
  %v684 = vunpack.c.l.b16 %v108
  %v685 = vunpack.c.l.b16 %v109
  %v686 = vunpack.c.l.b16 %v110
  %v687 = vunpack.c.l.b16 %v111
  %v688 = vunpack.c.l.b16 %v112
  %v689 = vunpack.c.l.b16 %v113
  %v690 = vunpack.c.l.b16 %v114
  %v691 = vunpack.c.l.b16 %v115
  %v692 = vunpack.c.l.b16 %v116
  %v693 = vunpack.c.l.b16 %v117
  %v694 = vunpack.c.l.b16 %v118
  %v695 = vunpack.c.l.b16 %v119
  %v696 = vunpack.c.l.b16 %v120
  %v697 = vunpack.c.l.b16 %v121
  %v698 = vunpack.c.l.b16 %v122
  %v699 = vunpack.c.l.b16 %v123
  %v700 = vunpack.c.l.b16 %v124
  %v701 = vunpack.c.l.b16 %v125
  %v702 = vunpack.c.l.b16 %v126
  %v703 = vunpack.c.l.b16 %v127
  %v704 = vunpack.c.l.b16 %v128
  %v705 = vunpack.c.l.b16 %v129
  %v706 = vunpack.c.l.b16 %v130
  %v707 = vunpack.c.l.b16 %v131
  %v708 = vunpack.c.l.b16 %v132
  %v709 = vunpack.c.l.b16 %v133
  %v710 = vunpack.c.l.b16 %v134
  %v711 = vunpack.c.l.b16 %v135
  %v712 = vunpack.c.l.b16 %v136
  %v713 = vunpack.c.l.b16 %v137
  %v714 = vunpack.c.l.b16 %v138
  %v715 = vunpack.c.l.b16 %v139
  %v716 = vunpack.c.l.b16 %v140
  %v717 = vunpack.c.l.b16 %v141
  %v718 = vunpack.c.l.b16 %v142
  %v719 = vunpack.c.l.b16 %v143
  %v720 = vunpack.c.l.b16 %v144
  %v721 = vunpack.c.l.b16 %v145
  %v722 = vunpack.c.l.b16 %v146
  %v723 = vunpack.c.l.b16 %v147
  %v724 = vunpack.c.l.b16 %v148
  %v725 = vunpack.c.l.b16 %v149
  %v726 = vunpack.c.l.b16 %v150
  %v727 = vunpack.c.l.b16 %v151
  %v728 = vunpack.c.l.b16 %v152
  %v729 = vunpack.c.l.b16 %v153
  %v730 = vunpack.c.l.b16 %v154
  %v731 = vunpack.c.l.b16 %v155
  %v732 = vunpack.c.l.b16 %v156
  %v733 = vunpack.c.l.b16 %v157
  %v734 = vunpack.c.l.b16 %v158
  %v735 = vunpack.c.l.b16 %v159
  %v736 = vunpack.c.l.b16 %v160
  %v737 = vunpack.c.l.b16 %v161
  %v738 = vunpack.c.l.b16 %v162
  %v739 = vunpack.c.l.b16 %v163
  %v740 = vunpack.c.l.b16 %v164
  %v741 = vunpack.c.l.b16 %v165
  %v742 = vunpack.c.l.b16 %v166
  %v743 = vunpack.c.l.b16 %v167
  %v744 = vunpack.c.l.b16 %v168
  %v745 = vunpack.c.l.b16 %v169
  %v746 = vunpack.c.l.b16 %v170
  %v747 = vunpack.c.l.b16 %v171
  %v748 = vunpack.c.l.b16 %v172
  %v749 = vunpack.c.l.b16 %v173
  %v750 = vunpack.c.l.b16 %v174
  %v751 = vunpack.c.l.b16 %v175
  %v752 = vunpack.c.l.b16 %v176
  %v753 = vunpack.c.l.b16 %v177
  %v754 = vunpack.c.l.b16 %v178
  %v755 = vunpack.c.l.b16 %v179
  %v756 = vunpack.c.l.b16 %v180
  %v757 = vunpack.c.l.b16 %v181
  %v758 = vunpack.c.l.b16 %v182
  %v759 = vunpack.c.l.b16 %v183
  %v760 = vunpack.c.l.b16 %v184
  %v761 = vunpack.c.l.b16 %v185
  %v762 = vunpack.c.l.b16 %v186
  %v763 = vunpack.c.l.b16 %v187
  %v764 = vunpack.c.l.b16 %v188
  %v765 = vunpack.c.l.b16 %v189
  %v766 = vunpack.c.l.b16 %v190
  %v767 = vunpack.c.l.b16 %v191
  %v768 = vunpack.c.l.b16 %v192
  %v769 = vunpack.c.l.b16 %v193
  %v770 = vunpack.c.l.b16 %v194
  %v771 = vunpack.c.l.b16 %v195
  %v772 = vunpack.c.l.b16 %v196
  %v773 = vunpack.c.l.b16 %v197
  %v774 = vunpack.c.l.b16 %v198
  %v775 = vunpack.c.l.b16 %v199
  %v776 = vunpack.c.l.b16 %v200
  %v777 = vunpack.c.l.b16 %v201
  %v778 = vunpack.c.l.b16 %v202
  %v779 = vunpack.c.l.b16 %v203
  %v780 = vunpack.c.l.b16 %v204
  %v781 = vunpack.c.l.b16 %v205
  %v782 = vpack.c.b16 %v655, %v654
  %v783 = vpack.c.b16 %v657, %v656
  %v784 = vpack.c.b16 %v659, %v658
  %v785 = vpack.c.b16 %v661, %v660
  %v786 = vpack.c.b16 %v663, %v662
  %v787 = vpack.c.b16 %v665, %v664
  %v788 = vpack.c.b16 %v667, %v666
  %v789 = vpack.c.b16 %v669, %v668
  %v790 = vpack.c.b16 %v671, %v670
  %v791 = vpack.c.b16 %v673, %v672
  %v792 = vpack.c.b16 %v675, %v674
  %v793 = vpack.c.b16 %v677, %v676
  %v794 = vpack.c.b16 %v679, %v678
  %v795 = vpack.c.b16 %v681, %v680
  %v796 = vpack.c.b16 %v683, %v682
  %v797 = vpack.c.b16 %v685, %v684
  %v798 = vpack.c.b16 %v687, %v686
  %v799 = vpack.c.b16 %v689, %v688
  %v800 = vpack.c.b16 %v691, %v690
  %v801 = vpack.c.b16 %v693, %v692
  %v802 = vpack.c.b16 %v695, %v694
  %v803 = vpack.c.b16 %v697, %v696
  %v804 = vpack.c.b16 %v699, %v698
  %v805 = vpack.c.b16 %v701, %v700
  %v806 = vpack.c.b16 %v703, %v702
  %v807 = vpack.c.b16 %v705, %v704
  %v808 = vpack.c.b16 %v707, %v706
  %v809 = vpack.c.b16 %v709, %v708
  %v810 = vpack.c.b16 %v711, %v710
  %v811 = vpack.c.b16 %v713, %v712
  %v812 = vpack.c.b16 %v715, %v714
  %v813 = vpack.c.b16 %v717, %v716
  %v814 = vpack.c.b16 %v719, %v718
  %v815 = vpack.c.b16 %v721, %v720
  %v816 = vpack.c.b16 %v723, %v722
  %v817 = vpack.c.b16 %v725, %v724
  %v818 = vpack.c.b16 %v727, %v726
  %v819 = vpack.c.b16 %v729, %v728
  %v820 = vpack.c.b16 %v731, %v730
  %v821 = vpack.c.b16 %v733, %v732
  %v822 = vpack.c.b16 %v735, %v734
  %v823 = vpack.c.b16 %v737, %v736
  %v824 = vpack.c.b16 %v739, %v738
  %v825 = vpack.c.b16 %v741, %v740
  %v826 = vpack.c.b16 %v743, %v742
  %v827 = vpack.c.b16 %v745, %v744
  %v828 = vpack.c.b16 %v747, %v746
  %v829 = vpack.c.b16 %v749, %v748
  %v830 = vpack.c.b16 %v751, %v750
  %v831 = vpack.c.b16 %v753, %v752
  %v832 = vpack.c.b16 %v755, %v754
  %v833 = vpack.c.b16 %v757, %v756
  %v834 = vpack.c.b16 %v759, %v758
  %v835 = vpack.c.b16 %v761, %v760
  %v836 = vpack.c.b16 %v763, %v762
  %v837 = vpack.c.b16 %v765, %v764
  %v838 = vpack.c.b16 %v767, %v766
  %v839 = vpack.c.b16 %v769, %v768
  %v840 = vpack.c.b16 %v771, %v770
  %v841 = vpack.c.b16 %v773, %v772
  %v842 = vpack.c.b16 %v775, %v774
  %v843 = vpack.c.b16 %v777, %v776
  %v844 = vpack.c.b16 %v779, %v778
  %v845 = vpack.c.b16 %v781, %v780
  %910 = vmatprep.subr.bf16.mxu0 0
  %911 = vmatpush1.bf16.msra.mxu0 %v782
  %912 = vmatprep.subr.bf16.mxu0 0
  %913 = vmatpush1.bf16.msra.mxu0 %v783
  %914 = vmatprep.subr.bf16.mxu0 0
  %915 = vmatpush1.bf16.msra.mxu0 %v784
  %916 = vmatprep.subr.bf16.mxu0 0
  %917 = vmatpush1.bf16.msra.mxu0 %v785
  %918 = vmatprep.subr.bf16.mxu0 0
  %919 = vmatpush1.bf16.msra.mxu0 %v786
  %920 = vmatprep.subr.bf16.mxu0 0
  %921 = vmatpush1.bf16.msra.mxu0 %v787
  %922 = vmatprep.subr.bf16.mxu0 0
  %923 = vmatpush1.bf16.msra.mxu0 %v788
  %924 = vmatprep.subr.bf16.mxu0 0
  %925 = vmatpush1.bf16.msra.mxu0 %v789
  %926 = vmatprep.subr.bf16.mxu0 0
  %927 = vmatpush1.bf16.msra.mxu0 %v790
  %928 = vmatprep.subr.bf16.mxu0 0
  %929 = vmatpush1.bf16.msra.mxu0 %v791
  %930 = vmatprep.subr.bf16.mxu0 0
  %931 = vmatpush1.bf16.msra.mxu0 %v792
  %932 = vmatprep.subr.bf16.mxu0 0
  %933 = vmatpush1.bf16.msra.mxu0 %v793
  %934 = vmatprep.subr.bf16.mxu0 0
  %935 = vmatpush1.bf16.msra.mxu0 %v794
  %936 = vmatprep.subr.bf16.mxu0 0
  %937 = vmatpush1.bf16.msra.mxu0 %v795
  %938 = vmatprep.subr.bf16.mxu0 0
  %939 = vmatpush1.bf16.msra.mxu0 %v796
  %940 = vmatprep.subr.bf16.mxu0 0
  %941 = vmatpush1.bf16.msra.mxu0 %v797
  %942 = vmatprep.mubr.bf16.mxu0 %v399
  %943 = vmatmul.mubr.bf16.gmra.mrb[0].mxu0 %v398
  %v944 = vpop.f32.mrb[0].mxu0
  %v945 = vadd.f32 0.0, %v944
  %v946 = vpop.f32.mrb[0].mxu0
  %v947 = vpop.f32.mrb[0].mxu0
  %v948 = vadd.f32 0.0, %v947
  %v949 = vpop.f32.mrb[0].mxu0
  %950 = vmatprep.mubr.bf16.mxu0 %v407
  %951 = vmatmul.mubr.bf16.gmra.mrb[0].mxu0 %v406
  %v952 = vpop.f32.mrb[0].mxu0
  %v953 = vadd.f32 0.0, %v952
  %v954 = vpop.f32.mrb[0].mxu0
  %v955 = vpop.f32.mrb[0].mxu0
  %v956 = vadd.f32 0.0, %v955
  %v957 = vpop.f32.mrb[0].mxu0
  %958 = vmatprep.mubr.bf16.mxu0 %v415
  %959 = vmatmul.mubr.bf16.gmra.mrb[0].mxu0 %v414
  %v960 = vpop.f32.mrb[0].mxu0
  %v961 = vadd.f32 0.0, %v960
  %v962 = vpop.f32.mrb[0].mxu0
  %v963 = vpop.f32.mrb[0].mxu0
  %v964 = vadd.f32 0.0, %v963
  %v965 = vpop.f32.mrb[0].mxu0
  %966 = vmatprep.mubr.bf16.mxu0 %v423
  %967 = vmatmul.mubr.bf16.gmra.mrb[0].mxu0 %v422
  %v968 = vpop.f32.mrb[0].mxu0
  %v969 = vadd.f32 0.0, %v968
  %v970 = vpop.f32.mrb[0].mxu0
  %v971 = vpop.f32.mrb[0].mxu0
  %v972 = vadd.f32 0.0, %v971
  %v973 = vpop.f32.mrb[0].mxu0
  %974 = vmatprep.mubr.bf16.mxu0 %v431
  %975 = vmatmul.mubr.bf16.gmra.mrb[0].mxu0 %v430
  %v976 = vpop.f32.mrb[0].mxu0
  %v977 = vadd.f32 0.0, %v976
  %v978 = vpop.f32.mrb[0].mxu0
  %v979 = vpop.f32.mrb[0].mxu0
  %v980 = vadd.f32 0.0, %v979
  %v981 = vpop.f32.mrb[0].mxu0
  %982 = vmatprep.mubr.bf16.mxu0 %v439
  %983 = vmatmul.mubr.bf16.gmra.mrb[0].mxu0 %v438
  %v984 = vpop.f32.mrb[0].mxu0
  %v985 = vadd.f32 0.0, %v984
  %v986 = vpop.f32.mrb[0].mxu0
  %v987 = vpop.f32.mrb[0].mxu0
  %v988 = vadd.f32 0.0, %v987
  %v989 = vpop.f32.mrb[0].mxu0
  %990 = vmatprep.mubr.bf16.mxu0 %v447
  %991 = vmatmul.mubr.bf16.gmra.mrb[0].mxu0 %v446
  %v992 = vpop.f32.mrb[0].mxu0
  %v993 = vadd.f32 0.0, %v992
  %v994 = vpop.f32.mrb[0].mxu0
  %v995 = vpop.f32.mrb[0].mxu0
  %v996 = vadd.f32 0.0, %v995
  %v997 = vpop.f32.mrb[0].mxu0
  %998 = vmatprep.mubr.bf16.mxu0 %v455
  %999 = vmatmul.mubr.bf16.gmra.mrb[0].mxu0 %v454
  %v1000 = vpop.f32.mrb[0].mxu0
  %v1001 = vadd.f32 0.0, %v1000
  %v1002 = vpop.f32.mrb[0].mxu0
  %v1003 = vpop.f32.mrb[0].mxu0
  %v1004 = vadd.f32 0.0, %v1003
  %v1005 = vpop.f32.mrb[0].mxu0
  %1006 = vdwg.mxu0
  %1007 = vmatprep.subr.bf16.mxu0 0
  %1008 = vmatpush1.bf16.msra.mxu0 %v798
  %1009 = vmatprep.subr.bf16.mxu0 0
  %1010 = vmatpush1.bf16.msra.mxu0 %v799
  %1011 = vmatprep.subr.bf16.mxu0 0
  %1012 = vmatpush1.bf16.msra.mxu0 %v800
  %1013 = vmatprep.subr.bf16.mxu0 0
  %1014 = vmatpush1.bf16.msra.mxu0 %v801
  %1015 = vmatprep.subr.bf16.mxu0 0
  %1016 = vmatpush1.bf16.msra.mxu0 %v802
  %1017 = vmatprep.subr.bf16.mxu0 0
  %1018 = vmatpush1.bf16.msra.mxu0 %v803
  %1019 = vmatprep.subr.bf16.mxu0 0
  %1020 = vmatpush1.bf16.msra.mxu0 %v804
  %1021 = vmatprep.subr.bf16.mxu0 0
  %1022 = vmatpush1.bf16.msra.mxu0 %v805
  %1023 = vmatprep.subr.bf16.mxu0 0
  %1024 = vmatpush1.bf16.msra.mxu0 %v806
  %1025 = vmatprep.subr.bf16.mxu0 0
  %1026 = vmatpush1.bf16.msra.mxu0 %v807
  %1027 = vmatprep.subr.bf16.mxu0 0
  %1028 = vmatpush1.bf16.msra.mxu0 %v808
  %1029 = vmatprep.subr.bf16.mxu0 0
  %1030 = vmatpush1.bf16.msra.mxu0 %v809
  %1031 = vmatprep.subr.bf16.mxu0 0
  %1032 = vmatpush1.bf16.msra.mxu0 %v810
  %1033 = vmatprep.subr.bf16.mxu0 0
  %1034 = vmatpush1.bf16.msra.mxu0 %v811
  %1035 = vmatprep.subr.bf16.mxu0 0
  %1036 = vmatpush1.bf16.msra.mxu0 %v812
  %1037 = vmatprep.subr.bf16.mxu0 0
  %1038 = vmatpush1.bf16.msra.mxu0 %v813
  %1039 = vmatprep.mubr.bf16.mxu0 %v401
  %1040 = vmatmul.mubr.bf16.gmra.mrb[0].mxu0 %v400
  %v1041 = vpop.f32.mrb[0].mxu0
  %v1042 = vadd.f32 %v945, %v1041
  %v1043 = vpop.f32.mrb[0].mxu0
  %v1044 = vpop.f32.mrb[0].mxu0
  %v1045 = vadd.f32 %v948, %v1044
  %v1046 = vpop.f32.mrb[0].mxu0
  %1047 = vmatprep.mubr.bf16.mxu0 %v409
  %1048 = vmatmul.mubr.bf16.gmra.mrb[0].mxu0 %v408
  %v1049 = vpop.f32.mrb[0].mxu0
  %v1050 = vadd.f32 %v953, %v1049
  %v1051 = vpop.f32.mrb[0].mxu0
  %v1052 = vpop.f32.mrb[0].mxu0
  %v1053 = vadd.f32 %v956, %v1052
  %v1054 = vpop.f32.mrb[0].mxu0
  %1055 = vmatprep.mubr.bf16.mxu0 %v417
  %1056 = vmatmul.mubr.bf16.gmra.mrb[0].mxu0 %v416
  %v1057 = vpop.f32.mrb[0].mxu0
  %v1058 = vadd.f32 %v961, %v1057
  %v1059 = vpop.f32.mrb[0].mxu0
  %v1060 = vpop.f32.mrb[0].mxu0
  %v1061 = vadd.f32 %v964, %v1060
  %v1062 = vpop.f32.mrb[0].mxu0
  %1063 = vmatprep.mubr.bf16.mxu0 %v425
  %1064 = vmatmul.mubr.bf16.gmra.mrb[0].mxu0 %v424
  %v1065 = vpop.f32.mrb[0].mxu0
  %v1066 = vadd.f32 %v969, %v1065
  %v1067 = vpop.f32.mrb[0].mxu0
  %v1068 = vpop.f32.mrb[0].mxu0
  %v1069 = vadd.f32 %v972, %v1068
  %v1070 = vpop.f32.mrb[0].mxu0
  %1071 = vmatprep.mubr.bf16.mxu0 %v433
  %1072 = vmatmul.mubr.bf16.gmra.mrb[0].mxu0 %v432
  %v1073 = vpop.f32.mrb[0].mxu0
  %v1074 = vadd.f32 %v977, %v1073
  %v1075 = vpop.f32.mrb[0].mxu0
  %v1076 = vpop.f32.mrb[0].mxu0
  %v1077 = vadd.f32 %v980, %v1076
  %v1078 = vpop.f32.mrb[0].mxu0
  %1079 = vmatprep.mubr.bf16.mxu0 %v441
  %1080 = vmatmul.mubr.bf16.gmra.mrb[0].mxu0 %v440
  %v1081 = vpop.f32.mrb[0].mxu0
  %v1082 = vadd.f32 %v985, %v1081
  %v1083 = vpop.f32.mrb[0].mxu0
  %v1084 = vpop.f32.mrb[0].mxu0
  %v1085 = vadd.f32 %v988, %v1084
  %v1086 = vpop.f32.mrb[0].mxu0
  %1087 = vmatprep.mubr.bf16.mxu0 %v449
  %1088 = vmatmul.mubr.bf16.gmra.mrb[0].mxu0 %v448
  %v1089 = vpop.f32.mrb[0].mxu0
  %v1090 = vadd.f32 %v993, %v1089
  %v1091 = vpop.f32.mrb[0].mxu0
  %v1092 = vpop.f32.mrb[0].mxu0
  %v1093 = vadd.f32 %v996, %v1092
  %v1094 = vpop.f32.mrb[0].mxu0
  %1095 = vmatprep.mubr.bf16.mxu0 %v457
  %1096 = vmatmul.mubr.bf16.gmra.mrb[0].mxu0 %v456
  %v1097 = vpop.f32.mrb[0].mxu0
  %v1098 = vadd.f32 %v1001, %v1097
  %v1099 = vpop.f32.mrb[0].mxu0
  %v1100 = vpop.f32.mrb[0].mxu0
  %v1101 = vadd.f32 %v1004, %v1100
  %v1102 = vpop.f32.mrb[0].mxu0
  %1103 = vdwg.mxu0
  %1104 = vmatprep.subr.bf16.mxu0 0
  %1105 = vmatpush1.bf16.msra.mxu0 %v814
  %1106 = vmatprep.subr.bf16.mxu0 0
  %1107 = vmatpush1.bf16.msra.mxu0 %v815
  %1108 = vmatprep.subr.bf16.mxu0 0
  %1109 = vmatpush1.bf16.msra.mxu0 %v816
  %1110 = vmatprep.subr.bf16.mxu0 0
  %1111 = vmatpush1.bf16.msra.mxu0 %v817
  %1112 = vmatprep.subr.bf16.mxu0 0
  %1113 = vmatpush1.bf16.msra.mxu0 %v818
  %1114 = vmatprep.subr.bf16.mxu0 0
  %1115 = vmatpush1.bf16.msra.mxu0 %v819
  %1116 = vmatprep.subr.bf16.mxu0 0
  %1117 = vmatpush1.bf16.msra.mxu0 %v820
  %1118 = vmatprep.subr.bf16.mxu0 0
  %1119 = vmatpush1.bf16.msra.mxu0 %v821
  %1120 = vmatprep.subr.bf16.mxu0 0
  %1121 = vmatpush1.bf16.msra.mxu0 %v822
  %1122 = vmatprep.subr.bf16.mxu0 0
  %1123 = vmatpush1.bf16.msra.mxu0 %v823
  %1124 = vmatprep.subr.bf16.mxu0 0
  %1125 = vmatpush1.bf16.msra.mxu0 %v824
  %1126 = vmatprep.subr.bf16.mxu0 0
  %1127 = vmatpush1.bf16.msra.mxu0 %v825
  %1128 = vmatprep.subr.bf16.mxu0 0
  %1129 = vmatpush1.bf16.msra.mxu0 %v826
  %1130 = vmatprep.subr.bf16.mxu0 0
  %1131 = vmatpush1.bf16.msra.mxu0 %v827
  %1132 = vmatprep.subr.bf16.mxu0 0
  %1133 = vmatpush1.bf16.msra.mxu0 %v828
  %1134 = vmatprep.subr.bf16.mxu0 0
  %1135 = vmatpush1.bf16.msra.mxu0 %v829
  %1136 = vmatprep.mubr.bf16.mxu0 %v403
  %1137 = vmatmul.mubr.bf16.gmra.mrb[0].mxu0 %v402
  %v1138 = vpop.f32.mrb[0].mxu0
  %v1139 = vadd.f32 %v1042, %v1138
  %v1140 = vpop.f32.mrb[0].mxu0
  %v1141 = vpop.f32.mrb[0].mxu0
  %v1142 = vadd.f32 %v1045, %v1141
  %v1143 = vpop.f32.mrb[0].mxu0
  %1144 = vmatprep.mubr.bf16.mxu0 %v411
  %1145 = vmatmul.mubr.bf16.gmra.mrb[0].mxu0 %v410
  %v1146 = vpop.f32.mrb[0].mxu0
  %v1147 = vadd.f32 %v1050, %v1146
  %v1148 = vpop.f32.mrb[0].mxu0
  %v1149 = vpop.f32.mrb[0].mxu0
  %v1150 = vadd.f32 %v1053, %v1149
  %v1151 = vpop.f32.mrb[0].mxu0
  %1152 = vmatprep.mubr.bf16.mxu0 %v419
  %1153 = vmatmul.mubr.bf16.gmra.mrb[0].mxu0 %v418
  %v1154 = vpop.f32.mrb[0].mxu0
  %v1155 = vadd.f32 %v1058, %v1154
  %v1156 = vpop.f32.mrb[0].mxu0
  %v1157 = vpop.f32.mrb[0].mxu0
  %v1158 = vadd.f32 %v1061, %v1157
  %v1159 = vpop.f32.mrb[0].mxu0
  %1160 = vmatprep.mubr.bf16.mxu0 %v427
  %1161 = vmatmul.mubr.bf16.gmra.mrb[0].mxu0 %v426
  %v1162 = vpop.f32.mrb[0].mxu0
  %v1163 = vadd.f32 %v1066, %v1162
  %v1164 = vpop.f32.mrb[0].mxu0
  %v1165 = vpop.f32.mrb[0].mxu0
  %v1166 = vadd.f32 %v1069, %v1165
  %v1167 = vpop.f32.mrb[0].mxu0
  %1168 = vmatprep.mubr.bf16.mxu0 %v435
  %1169 = vmatmul.mubr.bf16.gmra.mrb[0].mxu0 %v434
  %v1170 = vpop.f32.mrb[0].mxu0
  %v1171 = vadd.f32 %v1074, %v1170
  %v1172 = vpop.f32.mrb[0].mxu0
  %v1173 = vpop.f32.mrb[0].mxu0
  %v1174 = vadd.f32 %v1077, %v1173
  %v1175 = vpop.f32.mrb[0].mxu0
  %1176 = vmatprep.mubr.bf16.mxu0 %v443
  %1177 = vmatmul.mubr.bf16.gmra.mrb[0].mxu0 %v442
  %v1178 = vpop.f32.mrb[0].mxu0
  %v1179 = vadd.f32 %v1082, %v1178
  %v1180 = vpop.f32.mrb[0].mxu0
  %v1181 = vpop.f32.mrb[0].mxu0
  %v1182 = vadd.f32 %v1085, %v1181
  %v1183 = vpop.f32.mrb[0].mxu0
  %1184 = vmatprep.mubr.bf16.mxu0 %v451
  %1185 = vmatmul.mubr.bf16.gmra.mrb[0].mxu0 %v450
  %v1186 = vpop.f32.mrb[0].mxu0
  %v1187 = vadd.f32 %v1090, %v1186
  %v1188 = vpop.f32.mrb[0].mxu0
  %v1189 = vpop.f32.mrb[0].mxu0
  %v1190 = vadd.f32 %v1093, %v1189
  %v1191 = vpop.f32.mrb[0].mxu0
  %1192 = vmatprep.mubr.bf16.mxu0 %v459
  %1193 = vmatmul.mubr.bf16.gmra.mrb[0].mxu0 %v458
  %v1194 = vpop.f32.mrb[0].mxu0
  %v1195 = vadd.f32 %v1098, %v1194
  %v1196 = vpop.f32.mrb[0].mxu0
  %v1197 = vpop.f32.mrb[0].mxu0
  %v1198 = vadd.f32 %v1101, %v1197
  %v1199 = vpop.f32.mrb[0].mxu0
  %1200 = vdwg.mxu0
  %1201 = vmatprep.subr.bf16.mxu0 0
  %1202 = vmatpush1.bf16.msra.mxu0 %v830
  %1203 = vmatprep.subr.bf16.mxu0 0
  %1204 = vmatpush1.bf16.msra.mxu0 %v831
  %1205 = vmatprep.subr.bf16.mxu0 0
  %1206 = vmatpush1.bf16.msra.mxu0 %v832
  %1207 = vmatprep.subr.bf16.mxu0 0
  %1208 = vmatpush1.bf16.msra.mxu0 %v833
  %1209 = vmatprep.subr.bf16.mxu0 0
  %1210 = vmatpush1.bf16.msra.mxu0 %v834
  %1211 = vmatprep.subr.bf16.mxu0 0
  %1212 = vmatpush1.bf16.msra.mxu0 %v835
  %1213 = vmatprep.subr.bf16.mxu0 0
  %1214 = vmatpush1.bf16.msra.mxu0 %v836
  %1215 = vmatprep.subr.bf16.mxu0 0
  %1216 = vmatpush1.bf16.msra.mxu0 %v837
  %1217 = vmatprep.subr.bf16.mxu0 0
  %1218 = vmatpush1.bf16.msra.mxu0 %v838
  %1219 = vmatprep.subr.bf16.mxu0 0
  %1220 = vmatpush1.bf16.msra.mxu0 %v839
  %1221 = vmatprep.subr.bf16.mxu0 0
  %1222 = vmatpush1.bf16.msra.mxu0 %v840
  %1223 = vmatprep.subr.bf16.mxu0 0
  %1224 = vmatpush1.bf16.msra.mxu0 %v841
  %1225 = vmatprep.subr.bf16.mxu0 0
  %1226 = vmatpush1.bf16.msra.mxu0 %v842
  %1227 = vmatprep.subr.bf16.mxu0 0
  %1228 = vmatpush1.bf16.msra.mxu0 %v843
  %1229 = vmatprep.subr.bf16.mxu0 0
  %1230 = vmatpush1.bf16.msra.mxu0 %v844
  %1231 = vmatprep.subr.bf16.mxu0 0
  %1232 = vmatpush1.bf16.msra.mxu0 %v845
  %1233 = vmatprep.mubr.bf16.mxu0 %v405
  %1234 = vmatmul.mubr.bf16.gmra.mrb[0].mxu0 %v404
  %v1235 = vpop.f32.mrb[0].mxu0
  %v1236 = vadd.f32 %v1139, %v1235
  %v1237 = vpop.f32.mrb[0].mxu0
  %v1238 = vpop.f32.mrb[0].mxu0
  %v1239 = vadd.f32 %v1142, %v1238
  %v1240 = vpop.f32.mrb[0].mxu0
  %1241 = vmatprep.mubr.bf16.mxu0 %v413
  %1242 = vmatmul.mubr.bf16.gmra.mrb[0].mxu0 %v412
  %v1243 = vpop.f32.mrb[0].mxu0
  %v1244 = vadd.f32 %v1147, %v1243
  %v1245 = vpop.f32.mrb[0].mxu0
  %v1246 = vpop.f32.mrb[0].mxu0
  %v1247 = vadd.f32 %v1150, %v1246
  %v1248 = vpop.f32.mrb[0].mxu0
  %1249 = vmatprep.mubr.bf16.mxu0 %v421
  %1250 = vmatmul.mubr.bf16.gmra.mrb[0].mxu0 %v420
  %v1251 = vpop.f32.mrb[0].mxu0
  %v1252 = vadd.f32 %v1155, %v1251
  %v1253 = vpop.f32.mrb[0].mxu0
  %v1254 = vpop.f32.mrb[0].mxu0
  %v1255 = vadd.f32 %v1158, %v1254
  %v1256 = vpop.f32.mrb[0].mxu0
  %1257 = vmatprep.mubr.bf16.mxu0 %v429
  %1258 = vmatmul.mubr.bf16.gmra.mrb[0].mxu0 %v428
  %v1259 = vpop.f32.mrb[0].mxu0
  %v1260 = vadd.f32 %v1163, %v1259
  %v1261 = vpop.f32.mrb[0].mxu0
  %v1262 = vpop.f32.mrb[0].mxu0
  %v1263 = vadd.f32 %v1166, %v1262
  %v1264 = vpop.f32.mrb[0].mxu0
  %1265 = vmatprep.mubr.bf16.mxu0 %v437
  %1266 = vmatmul.mubr.bf16.gmra.mrb[0].mxu0 %v436
  %v1267 = vpop.f32.mrb[0].mxu0
  %v1268 = vadd.f32 %v1171, %v1267
  %v1269 = vpop.f32.mrb[0].mxu0
  %v1270 = vpop.f32.mrb[0].mxu0
  %v1271 = vadd.f32 %v1174, %v1270
  %v1272 = vpop.f32.mrb[0].mxu0
  %1273 = vmatprep.mubr.bf16.mxu0 %v445
  %1274 = vmatmul.mubr.bf16.gmra.mrb[0].mxu0 %v444
  %v1275 = vpop.f32.mrb[0].mxu0
  %v1276 = vadd.f32 %v1179, %v1275
  %v1277 = vpop.f32.mrb[0].mxu0
  %v1278 = vpop.f32.mrb[0].mxu0
  %v1279 = vadd.f32 %v1182, %v1278
  %v1280 = vpop.f32.mrb[0].mxu0
  %1281 = vmatprep.mubr.bf16.mxu0 %v453
  %1282 = vmatmul.mubr.bf16.gmra.mrb[0].mxu0 %v452
  %v1283 = vpop.f32.mrb[0].mxu0
  %v1284 = vadd.f32 %v1187, %v1283
  %v1285 = vpop.f32.mrb[0].mxu0
  %v1286 = vpop.f32.mrb[0].mxu0
  %v1287 = vadd.f32 %v1190, %v1286
  %v1288 = vpop.f32.mrb[0].mxu0
  %1289 = vmatprep.mubr.bf16.mxu0 %v461
  %1290 = vmatmul.mubr.bf16.gmra.mrb[0].mxu0 %v460
  %v1291 = vpop.f32.mrb[0].mxu0
  %v1292 = vadd.f32 %v1195, %v1291
  %v1293 = vpop.f32.mrb[0].mxu0
  %v1294 = vpop.f32.mrb[0].mxu0
  %v1295 = vadd.f32 %v1198, %v1294
  %v1296 = vpop.f32.mrb[0].mxu0
  %1297 = vdwg.mxu0
  %v1298 = vadd.f32 %v1236, %v1239
  %v1299 = vadd.f32 %v1298, %v1244
  %v1300 = vadd.f32 %v1299, %v1247
  %v1301 = vadd.f32 %v1300, %v1252
  %v1302 = vadd.f32 %v1301, %v1255
  %v1303 = vadd.f32 %v1302, %v1260
  %v1304 = vadd.f32 %v1303, %v1263
  %v1305 = vadd.f32 %v1304, %v1268
  %v1306 = vadd.f32 %v1305, %v1271
  %v1307 = vadd.f32 %v1306, %v1276
  %v1308 = vadd.f32 %v1307, %v1279
  %v1309 = vadd.f32 %v1308, %v1284
  %v1310 = vadd.f32 %v1309, %v1287
  %v1311 = vadd.f32 %v1310, %v1292
  %v1312 = vadd.f32 %v1311, %v1295
  %v1313 = vrot.slane %v1312, 4
  %v1314 = vadd.f32 %v1312, %v1313
  %v1315 = vrot.slane %v1314, 2
  %v1316 = vadd.f32 %v1314, %v1315
  %v1317 = vrot.slane %v1316, 1
  %v1318 = vadd.f32 %v1316, %v1317
  %v1319 = vmul.f32 %v1318, 0.0078125
  %v1320 = vsub.f32 %v1236, %v1319
  %v1321 = vsub.f32 %v1239, %v1319
  %v1322 = vsub.f32 %v1244, %v1319
  %v1323 = vsub.f32 %v1247, %v1319
  %v1324 = vsub.f32 %v1252, %v1319
  %v1325 = vsub.f32 %v1255, %v1319
  %v1326 = vsub.f32 %v1260, %v1319
  %v1327 = vsub.f32 %v1263, %v1319
  %v1328 = vsub.f32 %v1268, %v1319
  %v1329 = vsub.f32 %v1271, %v1319
  %v1330 = vsub.f32 %v1276, %v1319
  %v1331 = vsub.f32 %v1279, %v1319
  %v1332 = vsub.f32 %v1284, %v1319
  %v1333 = vsub.f32 %v1287, %v1319
  %v1334 = vsub.f32 %v1292, %v1319
  %v1335 = vsub.f32 %v1295, %v1319
  %v1336 = vmul.f32 %v1320, %v1320
  %v1337 = vmul.f32 %v1321, %v1321
  %v1338 = vmul.f32 %v1322, %v1322
  %v1339 = vmul.f32 %v1323, %v1323
  %v1340 = vmul.f32 %v1324, %v1324
  %v1341 = vmul.f32 %v1325, %v1325
  %v1342 = vmul.f32 %v1326, %v1326
  %v1343 = vmul.f32 %v1327, %v1327
  %v1344 = vmul.f32 %v1328, %v1328
  %v1345 = vmul.f32 %v1329, %v1329
  %v1346 = vmul.f32 %v1330, %v1330
  %v1347 = vmul.f32 %v1331, %v1331
  %v1348 = vmul.f32 %v1332, %v1332
  %v1349 = vmul.f32 %v1333, %v1333
  %v1350 = vmul.f32 %v1334, %v1334
  %v1351 = vmul.f32 %v1335, %v1335
  %v1352 = vadd.f32 %v1336, %v1337
  %v1353 = vadd.f32 %v1352, %v1338
  %v1354 = vadd.f32 %v1353, %v1339
  %v1355 = vadd.f32 %v1354, %v1340
  %v1356 = vadd.f32 %v1355, %v1341
  %v1357 = vadd.f32 %v1356, %v1342
  %v1358 = vadd.f32 %v1357, %v1343
  %v1359 = vadd.f32 %v1358, %v1344
  %v1360 = vadd.f32 %v1359, %v1345
  %v1361 = vadd.f32 %v1360, %v1346
  %v1362 = vadd.f32 %v1361, %v1347
  %v1363 = vadd.f32 %v1362, %v1348
  %v1364 = vadd.f32 %v1363, %v1349
  %v1365 = vadd.f32 %v1364, %v1350
  %v1366 = vadd.f32 %v1365, %v1351
  %v1367 = vrot.slane %v1366, 4
  %v1368 = vadd.f32 %v1366, %v1367
  %v1369 = vrot.slane %v1368, 2
  %v1370 = vadd.f32 %v1368, %v1369
  %v1371 = vrot.slane %v1370, 1
  %v1372 = vadd.f32 %v1370, %v1371
  %vm1373 = vcmask 1040384
  %v1374 = vsel %vm1373, %v1318, %v1372
  %1375 = vst [vmem:[%s3] sm:$0x3] %v1374
  %v1376 = vpack.c.bf16 %v1239, %v1236
  %v1377 = vpack.c.bf16 %v1247, %v1244
  %v1378 = vpack.c.bf16 %v1255, %v1252
  %v1379 = vpack.c.bf16 %v1263, %v1260
  %v1380 = vpack.c.bf16 %v1271, %v1268
  %v1381 = vpack.c.bf16 %v1279, %v1276
  %v1382 = vpack.c.bf16 %v1287, %v1284
  %v1383 = vpack.c.bf16 %v1295, %v1292
  %v1392 = vunpack.c.l.b16 %v1376
  %v1393 = vunpack.c.h.b16 %v1376
  %v1394 = vunpack.c.l.b16 %v1377
  %v1395 = vunpack.c.h.b16 %v1377
  %v1396 = vunpack.c.l.b16 %v1378
  %v1397 = vunpack.c.h.b16 %v1378
  %v1398 = vunpack.c.l.b16 %v1379
  %v1399 = vunpack.c.h.b16 %v1379
  %v1400 = vunpack.c.l.b16 %v1380
  %v1401 = vunpack.c.h.b16 %v1380
  %v1402 = vunpack.c.l.b16 %v1381
  %v1403 = vunpack.c.h.b16 %v1381
  %v1404 = vunpack.c.l.b16 %v1382
  %v1405 = vunpack.c.h.b16 %v1382
  %v1406 = vunpack.c.l.b16 %v1383
  %v1407 = vunpack.c.h.b16 %v1383
  %v1408 = vpack.c.b16 %v1392, %v1392
  %v1409 = vpack.c.b16 %v1393, %v1393
  %v1410 = vpack.c.b16 %v1394, %v1394
  %v1411 = vpack.c.b16 %v1395, %v1395
  %v1412 = vpack.c.b16 %v1396, %v1396
  %v1413 = vpack.c.b16 %v1397, %v1397
  %v1414 = vpack.c.b16 %v1398, %v1398
  %v1415 = vpack.c.b16 %v1399, %v1399
  %v1416 = vpack.c.b16 %v1400, %v1400
  %v1417 = vpack.c.b16 %v1401, %v1401
  %v1418 = vpack.c.b16 %v1402, %v1402
  %v1419 = vpack.c.b16 %v1403, %v1403
  %v1420 = vpack.c.b16 %v1404, %v1404
  %v1421 = vpack.c.b16 %v1405, %v1405
  %v1422 = vpack.c.b16 %v1406, %v1406
  %v1423 = vpack.c.b16 %v1407, %v1407
  %1440 = vst [vmem:[%s2] sm:$0xf] %v1408
  %1441 = vst [vmem:[%s2 + $0x4] sm:$0xf] %v1409
  %1442 = vst [vmem:[%s2 + $0x8] sm:$0xf] %v1410
  %1443 = vst [vmem:[%s2 + $0xc] sm:$0xf] %v1411
  %1444 = vst [vmem:[%s2 + $0x10] sm:$0xf] %v1412
  %1445 = vst [vmem:[%s2 + $0x14] sm:$0xf] %v1413
  %1446 = vst [vmem:[%s2 + $0x18] sm:$0xf] %v1414
  %1447 = vst [vmem:[%s2 + $0x1c] sm:$0xf] %v1415
  %1448 = vst [vmem:[%s2 + $0x20] sm:$0xf] %v1416
  %1449 = vst [vmem:[%s2 + $0x24] sm:$0xf] %v1417
  %1450 = vst [vmem:[%s2 + $0x28] sm:$0xf] %v1418
  %1451 = vst [vmem:[%s2 + $0x2c] sm:$0xf] %v1419
  %1452 = vst [vmem:[%s2 + $0x30] sm:$0xf] %v1420
  %1453 = vst [vmem:[%s2 + $0x34] sm:$0xf] %v1421
  %1454 = vst [vmem:[%s2 + $0x38] sm:$0xf] %v1422
  %1455 = vst [vmem:[%s2 + $0x3c] sm:$0xf] %v1423
  // Predicated region
  $region10: #{encoder_forward.9} parent=0 // pred_check
    _
  $region11: #{encoder_forward.9} parent=0 // pred_check_branch
    %1457 = sbr.rel (0) target = $region13
  $region12: #{encoder_forward.9} parent=0 // pred_region
    _
  $region13: #{encoder_forward.9} parent=0 // pred_fallthru
    _
  // Predicated region
  $region14: #{encoder_forward.9} parent=0 // pred_check
    _
  $region15: #{encoder_forward.9} parent=0 // pred_check_branch
    %1459 = sbr.rel (0) target = $region17
  $region16: #{encoder_forward.9} parent=0 // pred_region
    _
  $region17: #{encoder_forward.9} parent=0 // pred_fallthru
    _
  // Predicated region
  $region18: #{encoder_forward.9} parent=0 // pred_check
    _
  $region19: #{encoder_forward.9} parent=0 // pred_check_branch
    %1461 = sbr.rel (0) target = $region21
  $region20: #{encoder_forward.9} parent=0 // pred_region
    _
  $region21: #{encoder_forward.9} parent=0 // pred_fallthru
    _
  // Predicated region
  $region22: #{encoder_forward.9} parent=0 // pred_check
    _
  $region23: #{encoder_forward.9} parent=0 // pred_check_branch
    %1463 = sbr.rel (0) target = $region25
  $region24: #{encoder_forward.9} parent=0 // pred_region
    _
  $region25: #{encoder_forward.9} parent=0 // pred_fallthru
    _

// kernel: encoder_forward.10
$region0: #{encoder_forward.10}
  #allocation0 [shape = 'u32[]', space=smem, size = 0x4, offset = 0x4, fixed_abs, tag = 'smem constant byte address 0x4 - core index']
  #allocation1 [shape = 'u32[144,128]{1,0:T(1,128)}', space=vmem, size = 0x12000, scoped, tag = 'internal scratch']
  %s0 = inlined_call_operand.vmem [shape: bf16[128,128], index: 0, kind: input, shape index: {}]
  %s1 = inlined_call_operand.vmem [shape: f32[1,128], index: 1, kind: input, shape index: {}]
  %s2 = inlined_call_operand.vmem [shape: f32[1,128], index: 2, kind: input, shape index: {}]
  %s3 = inlined_call_operand.vmem [shape: bf16[128,128], index: 3, kind: output, shape index: {}]
  %s4 = sld [smem:[#allocation0]]
  $region22: #{encoder_forward.10} parent=0
    _
  %s6 = ssub.s32 1, %s4
  %s7 = scalar_select 0, %s6, %s4
  // Predicated region
  $region2: #{encoder_forward.10} parent=0 // pred_check
    _
  $region3: #{encoder_forward.10} parent=0 // pred_check_branch
    %9 = sbr.rel (0) target = $region5
  $region4: #{encoder_forward.10} parent=0 // pred_region
    _
  $region5: #{encoder_forward.10} parent=0 // pred_fallthru
    _
  // Predicated region
  $region6: #{encoder_forward.10} parent=0 // pred_check
    _
  $region7: #{encoder_forward.10} parent=0 // pred_check_branch
    %11 = sbr.rel (0) target = $region9
  $region8: #{encoder_forward.10} parent=0 // pred_region
    _
  $region9: #{encoder_forward.10} parent=0 // pred_fallthru
    _
  // Predicated region
  $region10: #{encoder_forward.10} parent=0 // pred_check
    _
  $region11: #{encoder_forward.10} parent=0 // pred_check_branch
    %13 = sbr.rel (0) target = $region13
  $region12: #{encoder_forward.10} parent=0 // pred_region
    _
  $region13: #{encoder_forward.10} parent=0 // pred_fallthru
    _
  %v14 = vld [vmem:[%s0] sm:$0xf]
  %v15 = vld [vmem:[%s0 + $0x4] sm:$0xf]
  %v16 = vld [vmem:[%s0 + $0x8] sm:$0xf]
  %v17 = vld [vmem:[%s0 + $0xc] sm:$0xf]
  %v18 = vld [vmem:[%s0 + $0x10] sm:$0xf]
  %v19 = vld [vmem:[%s0 + $0x14] sm:$0xf]
  %v20 = vld [vmem:[%s0 + $0x18] sm:$0xf]
  %v21 = vld [vmem:[%s0 + $0x1c] sm:$0xf]
  %v22 = vld [vmem:[%s0 + $0x20] sm:$0xf]
  %v23 = vld [vmem:[%s0 + $0x24] sm:$0xf]
  %v24 = vld [vmem:[%s0 + $0x28] sm:$0xf]
  %v25 = vld [vmem:[%s0 + $0x2c] sm:$0xf]
  %v26 = vld [vmem:[%s0 + $0x30] sm:$0xf]
  %v27 = vld [vmem:[%s0 + $0x34] sm:$0xf]
  %v28 = vld [vmem:[%s0 + $0x38] sm:$0xf]
  %v29 = vld [vmem:[%s0 + $0x3c] sm:$0xf]
  %v30 = vunpack.c.l.bf16 %v14
  %v31 = vunpack.c.l.bf16 %v15
  %v32 = vunpack.c.l.bf16 %v16
  %v33 = vunpack.c.l.bf16 %v17
  %v34 = vunpack.c.l.bf16 %v18
  %v35 = vunpack.c.l.bf16 %v19
  %v36 = vunpack.c.l.bf16 %v20
  %v37 = vunpack.c.l.bf16 %v21
  %v38 = vunpack.c.l.bf16 %v22
  %v39 = vunpack.c.l.bf16 %v23
  %v40 = vunpack.c.l.bf16 %v24
  %v41 = vunpack.c.l.bf16 %v25
  %v42 = vunpack.c.l.bf16 %v26
  %v43 = vunpack.c.l.bf16 %v27
  %v44 = vunpack.c.l.bf16 %v28
  %v45 = vunpack.c.l.bf16 %v29
  %v46 = vld [vmem:[%s1] sm:$0x1]
  %v48 = vlaneseq
  %v49 = vshrl.u32 %v48, 7
  %v50 = vsub.s32 0, %v49
  %v51 = vrot.slane %v46, %v50
  %v53 = vmul.f32 %v30, %v51
  %v54 = vmul.f32 %v31, %v51
  %v55 = vmul.f32 %v32, %v51
  %v56 = vmul.f32 %v33, %v51
  %v57 = vmul.f32 %v34, %v51
  %v58 = vmul.f32 %v35, %v51
  %v59 = vmul.f32 %v36, %v51
  %v60 = vmul.f32 %v37, %v51
  %v61 = vmul.f32 %v38, %v51
  %v62 = vmul.f32 %v39, %v51
  %v63 = vmul.f32 %v40, %v51
  %v64 = vmul.f32 %v41, %v51
  %v65 = vmul.f32 %v42, %v51
  %v66 = vmul.f32 %v43, %v51
  %v67 = vmul.f32 %v44, %v51
  %v68 = vmul.f32 %v45, %v51
  %v69 = vld [vmem:[%s2] sm:$0x1]
  %v71 = vlaneseq
  %v72 = vshrl.u32 %v71, 7
  %v73 = vsub.s32 0, %v72
  %v74 = vrot.slane %v69, %v73
  %v76 = vadd.f32 %v53, %v74
  %v77 = vadd.f32 %v54, %v74
  %v78 = vadd.f32 %v55, %v74
  %v79 = vadd.f32 %v56, %v74
  %v80 = vadd.f32 %v57, %v74
  %v81 = vadd.f32 %v58, %v74
  %v82 = vadd.f32 %v59, %v74
  %v83 = vadd.f32 %v60, %v74
  %v84 = vadd.f32 %v61, %v74
  %v85 = vadd.f32 %v62, %v74
  %v86 = vadd.f32 %v63, %v74
  %v87 = vadd.f32 %v64, %v74
  %v88 = vadd.f32 %v65, %v74
  %v89 = vadd.f32 %v66, %v74
  %v90 = vadd.f32 %v67, %v74
  %v91 = vadd.f32 %v68, %v74
  %vm92 = vcmp.ge.f32.partialorder %v76, 0.0
  %vm93 = vcmp.ge.f32.partialorder %v77, 0.0
  %vm94 = vcmp.ge.f32.partialorder %v78, 0.0
  %vm95 = vcmp.ge.f32.partialorder %v79, 0.0
  %vm96 = vcmp.ge.f32.partialorder %v80, 0.0
  %vm97 = vcmp.ge.f32.partialorder %v81, 0.0
  %vm98 = vcmp.ge.f32.partialorder %v82, 0.0
  %vm99 = vcmp.ge.f32.partialorder %v83, 0.0
  %vm100 = vcmp.ge.f32.partialorder %v84, 0.0
  %vm101 = vcmp.ge.f32.partialorder %v85, 0.0
  %vm102 = vcmp.ge.f32.partialorder %v86, 0.0
  %vm103 = vcmp.ge.f32.partialorder %v87, 0.0
  %vm104 = vcmp.ge.f32.partialorder %v88, 0.0
  %vm105 = vcmp.ge.f32.partialorder %v89, 0.0
  %vm106 = vcmp.ge.f32.partialorder %v90, 0.0
  %vm107 = vcmp.ge.f32.partialorder %v91, 0.0
  %v108 = vmul.f32 %v76, 0.1
  %v109 = vmul.f32 %v77, 0.1
  %v110 = vmul.f32 %v78, 0.1
  %v111 = vmul.f32 %v79, 0.1
  %v112 = vmul.f32 %v80, 0.1
  %v113 = vmul.f32 %v81, 0.1
  %v114 = vmul.f32 %v82, 0.1
  %v115 = vmul.f32 %v83, 0.1
  %v116 = vmul.f32 %v84, 0.1
  %v117 = vmul.f32 %v85, 0.1
  %v118 = vmul.f32 %v86, 0.1
  %v119 = vmul.f32 %v87, 0.1
  %v120 = vmul.f32 %v88, 0.1
  %v121 = vmul.f32 %v89, 0.1
  %v122 = vmul.f32 %v90, 0.1
  %v123 = vmul.f32 %v91, 0.1
  %v124 = vsel %vm92, %v76, %v108
  %v125 = vsel %vm93, %v77, %v109
  %v126 = vsel %vm94, %v78, %v110
  %v127 = vsel %vm95, %v79, %v111
  %v128 = vsel %vm96, %v80, %v112
  %v129 = vsel %vm97, %v81, %v113
  %v130 = vsel %vm98, %v82, %v114
  %v131 = vsel %vm99, %v83, %v115
  %v132 = vsel %vm100, %v84, %v116
  %v133 = vsel %vm101, %v85, %v117
  %v134 = vsel %vm102, %v86, %v118
  %v135 = vsel %vm103, %v87, %v119
  %v136 = vsel %vm104, %v88, %v120
  %v137 = vsel %vm105, %v89, %v121
  %v138 = vsel %vm106, %v90, %v122
  %v139 = vsel %vm107, %v91, %v123
  %v140 = vpack.c.bf16 %v125, %v124
  %v141 = vpack.c.bf16 %v127, %v126
  %v142 = vpack.c.bf16 %v129, %v128
  %v143 = vpack.c.bf16 %v131, %v130
  %v144 = vpack.c.bf16 %v133, %v132
  %v145 = vpack.c.bf16 %v135, %v134
  %v146 = vpack.c.bf16 %v137, %v136
  %v147 = vpack.c.bf16 %v139, %v138
  %v156 = vunpack.c.l.b16 %v140
  %v157 = vunpack.c.h.b16 %v140
  %v158 = vunpack.c.l.b16 %v141
  %v159 = vunpack.c.h.b16 %v141
  %v160 = vunpack.c.l.b16 %v142
  %v161 = vunpack.c.h.b16 %v142
  %v162 = vunpack.c.l.b16 %v143
  %v163 = vunpack.c.h.b16 %v143
  %v164 = vunpack.c.l.b16 %v144
  %v165 = vunpack.c.h.b16 %v144
  %v166 = vunpack.c.l.b16 %v145
  %v167 = vunpack.c.h.b16 %v145
  %v168 = vunpack.c.l.b16 %v146
  %v169 = vunpack.c.h.b16 %v146
  %v170 = vunpack.c.l.b16 %v147
  %v171 = vunpack.c.h.b16 %v147
  %v172 = vpack.c.b16 %v156, %v156
  %v173 = vpack.c.b16 %v157, %v157
  %v174 = vpack.c.b16 %v158, %v158
  %v175 = vpack.c.b16 %v159, %v159
  %v176 = vpack.c.b16 %v160, %v160
  %v177 = vpack.c.b16 %v161, %v161
  %v178 = vpack.c.b16 %v162, %v162
  %v179 = vpack.c.b16 %v163, %v163
  %v180 = vpack.c.b16 %v164, %v164
  %v181 = vpack.c.b16 %v165, %v165
  %v182 = vpack.c.b16 %v166, %v166
  %v183 = vpack.c.b16 %v167, %v167
  %v184 = vpack.c.b16 %v168, %v168
  %v185 = vpack.c.b16 %v169, %v169
  %v186 = vpack.c.b16 %v170, %v170
  %v187 = vpack.c.b16 %v171, %v171
  %204 = vst [vmem:[%s3] sm:$0xf] %v172
  %205 = vst [vmem:[%s3 + $0x4] sm:$0xf] %v173
  %206 = vst [vmem:[%s3 + $0x8] sm:$0xf] %v174
  %207 = vst [vmem:[%s3 + $0xc] sm:$0xf] %v175
  %208 = vst [vmem:[%s3 + $0x10] sm:$0xf] %v176
  %209 = vst [vmem:[%s3 + $0x14] sm:$0xf] %v177
  %210 = vst [vmem:[%s3 + $0x18] sm:$0xf] %v178
  %211 = vst [vmem:[%s3 + $0x1c] sm:$0xf] %v179
  %212 = vst [vmem:[%s3 + $0x20] sm:$0xf] %v180
  %213 = vst [vmem:[%s3 + $0x24] sm:$0xf] %v181
  %214 = vst [vmem:[%s3 + $0x28] sm:$0xf] %v182
  %215 = vst [vmem:[%s3 + $0x2c] sm:$0xf] %v183
  %216 = vst [vmem:[%s3 + $0x30] sm:$0xf] %v184
  %217 = vst [vmem:[%s3 + $0x34] sm:$0xf] %v185
  %218 = vst [vmem:[%s3 + $0x38] sm:$0xf] %v186
  %219 = vst [vmem:[%s3 + $0x3c] sm:$0xf] %v187
  // Predicated region
  $region14: #{encoder_forward.10} parent=0 // pred_check
    _
  $region15: #{encoder_forward.10} parent=0 // pred_check_branch
    %221 = sbr.rel (0) target = $region17
  $region16: #{encoder_forward.10} parent=0 // pred_region
    _
  $region17: #{encoder_forward.10} parent=0 // pred_fallthru
    _
  // Predicated region
  $region18: #{encoder_forward.10} parent=0 // pred_check
    _
  $region19: #{encoder_forward.10} parent=0 // pred_check_branch
    %223 = sbr.rel (0) target = $region21
  $region20: #{encoder_forward.10} parent=0 // pred_region
    _
  $region21: #{encoder_forward.10} parent=0 // pred_fallthru
    _

// kernel: encoder_forward.12
$region0: #{encoder_forward.12}
  #allocation0 [shape = 'u32[]', space=smem, size = 0x4, offset = 0x4, fixed_abs, tag = 'smem constant byte address 0x4 - core index']
  #allocation1 [shape = 'u32[144,128]{1,0:T(1,128)}', space=vmem, size = 0x12000, scoped, tag = 'internal scratch']
  %s0 = inlined_call_operand.vmem [shape: bf16[32,256], index: 0, kind: input, shape index: {}]
  %s1 = inlined_call_operand.vmem [shape: f32[1,256], index: 1, kind: input, shape index: {}]
  %s2 = inlined_call_operand.vmem [shape: f32[1,256], index: 2, kind: input, shape index: {}]
  %s3 = inlined_call_operand.vmem [shape: bf16[32,256], index: 3, kind: output, shape index: {}]
  %s4 = sld [smem:[#allocation0]]
  $region22: #{encoder_forward.12} parent=0
    _
  %s6 = ssub.s32 1, %s4
  %s7 = scalar_select 0, %s6, %s4
  // Predicated region
  $region2: #{encoder_forward.12} parent=0 // pred_check
    _
  $region3: #{encoder_forward.12} parent=0 // pred_check_branch
    %9 = sbr.rel (0) target = $region5
  $region4: #{encoder_forward.12} parent=0 // pred_region
    _
  $region5: #{encoder_forward.12} parent=0 // pred_fallthru
    _
  // Predicated region
  $region6: #{encoder_forward.12} parent=0 // pred_check
    _
  $region7: #{encoder_forward.12} parent=0 // pred_check_branch
    %11 = sbr.rel (0) target = $region9
  $region8: #{encoder_forward.12} parent=0 // pred_region
    _
  $region9: #{encoder_forward.12} parent=0 // pred_fallthru
    _
  // Predicated region
  $region10: #{encoder_forward.12} parent=0 // pred_check
    _
  $region11: #{encoder_forward.12} parent=0 // pred_check_branch
    %13 = sbr.rel (0) target = $region13
  $region12: #{encoder_forward.12} parent=0 // pred_region
    _
  $region13: #{encoder_forward.12} parent=0 // pred_fallthru
    _
  %v14 = vld [vmem:[%s0] sm:$0xff]
  %v15 = vld [vmem:[%s0 + $0x8] sm:$0xff]
  %v16 = vld [vmem:[%s0 + $0x10] sm:$0xff]
  %v17 = vld [vmem:[%s0 + $0x18] sm:$0xff]
  %v18 = vunpack.c.l.bf16 %v14
  %v19 = vunpack.c.h.bf16 %v14
  %v20 = vunpack.c.l.bf16 %v15
  %v21 = vunpack.c.h.bf16 %v15
  %v22 = vunpack.c.l.bf16 %v16
  %v23 = vunpack.c.h.bf16 %v16
  %v24 = vunpack.c.l.bf16 %v17
  %v25 = vunpack.c.h.bf16 %v17
  %v26 = vld [vmem:[%s1] sm:$0x3]
  %v28 = vlaneseq
  %v29 = vshrl.u32 %v28, 7
  %v30 = vsub.s32 0, %v29
  %v31 = vrot.slane %v26, %v30
  %v32 = vlaneseq
  %v33 = vshrl.u32 %v32, 7
  %v34 = vsub.s32 1, %v33
  %v35 = vrot.slane %v26, %v34
  %v38 = vmul.f32 %v18, %v31
  %v39 = vmul.f32 %v19, %v35
  %v40 = vmul.f32 %v20, %v31
  %v41 = vmul.f32 %v21, %v35
  %v42 = vmul.f32 %v22, %v31
  %v43 = vmul.f32 %v23, %v35
  %v44 = vmul.f32 %v24, %v31
  %v45 = vmul.f32 %v25, %v35
  %v46 = vld [vmem:[%s2] sm:$0x3]
  %v48 = vlaneseq
  %v49 = vshrl.u32 %v48, 7
  %v50 = vsub.s32 0, %v49
  %v51 = vrot.slane %v46, %v50
  %v52 = vlaneseq
  %v53 = vshrl.u32 %v52, 7
  %v54 = vsub.s32 1, %v53
  %v55 = vrot.slane %v46, %v54
  %v58 = vadd.f32 %v38, %v51
  %v59 = vadd.f32 %v39, %v55
  %v60 = vadd.f32 %v40, %v51
  %v61 = vadd.f32 %v41, %v55
  %v62 = vadd.f32 %v42, %v51
  %v63 = vadd.f32 %v43, %v55
  %v64 = vadd.f32 %v44, %v51
  %v65 = vadd.f32 %v45, %v55
  %vm66 = vcmp.ge.f32.partialorder %v58, 0.0
  %vm67 = vcmp.ge.f32.partialorder %v59, 0.0
  %vm68 = vcmp.ge.f32.partialorder %v60, 0.0
  %vm69 = vcmp.ge.f32.partialorder %v61, 0.0
  %vm70 = vcmp.ge.f32.partialorder %v62, 0.0
  %vm71 = vcmp.ge.f32.partialorder %v63, 0.0
  %vm72 = vcmp.ge.f32.partialorder %v64, 0.0
  %vm73 = vcmp.ge.f32.partialorder %v65, 0.0
  %v74 = vmul.f32 %v58, 0.1
  %v75 = vmul.f32 %v59, 0.1
  %v76 = vmul.f32 %v60, 0.1
  %v77 = vmul.f32 %v61, 0.1
  %v78 = vmul.f32 %v62, 0.1
  %v79 = vmul.f32 %v63, 0.1
  %v80 = vmul.f32 %v64, 0.1
  %v81 = vmul.f32 %v65, 0.1
  %v82 = vsel %vm66, %v58, %v74
  %v83 = vsel %vm67, %v59, %v75
  %v84 = vsel %vm68, %v60, %v76
  %v85 = vsel %vm69, %v61, %v77
  %v86 = vsel %vm70, %v62, %v78
  %v87 = vsel %vm71, %v63, %v79
  %v88 = vsel %vm72, %v64, %v80
  %v89 = vsel %vm73, %v65, %v81
  %v90 = vpack.c.bf16 %v84, %v82
  %v91 = vpack.c.bf16 %v85, %v83
  %v92 = vpack.c.bf16 %v88, %v86
  %v93 = vpack.c.bf16 %v89, %v87
  %v98 = vunpack.c.l.b16 %v90
  %v99 = vunpack.c.l.b16 %v91
  %v100 = vunpack.c.h.b16 %v90
  %v101 = vunpack.c.h.b16 %v91
  %v102 = vunpack.c.l.b16 %v92
  %v103 = vunpack.c.l.b16 %v93
  %v104 = vunpack.c.h.b16 %v92
  %v105 = vunpack.c.h.b16 %v93
  %v106 = vpack.c.b16 %v99, %v98
  %v107 = vpack.c.b16 %v101, %v100
  %v108 = vpack.c.b16 %v103, %v102
  %v109 = vpack.c.b16 %v105, %v104
  %114 = vst [vmem:[%s3] sm:$0xff] %v106
  %115 = vst [vmem:[%s3 + $0x8] sm:$0xff] %v107
  %116 = vst [vmem:[%s3 + $0x10] sm:$0xff] %v108
  %117 = vst [vmem:[%s3 + $0x18] sm:$0xff] %v109
  // Predicated region
  $region14: #{encoder_forward.12} parent=0 // pred_check
    _
  $region15: #{encoder_forward.12} parent=0 // pred_check_branch
    %119 = sbr.rel (0) target = $region17
  $region16: #{encoder_forward.12} parent=0 // pred_region
    _
  $region17: #{encoder_forward.12} parent=0 // pred_fallthru
    _
  // Predicated region
  $region18: #{encoder_forward.12} parent=0 // pred_check
    _
  $region19: #{encoder_forward.12} parent=0 // pred_check_branch
    %121 = sbr.rel (0) target = $region21
  $region20: #{encoder_forward.12} parent=0 // pred_region
    _
  $region21: #{encoder_forward.12} parent=0 // pred_fallthru
    _

// kernel: encoder_forward.11
$region0: #{encoder_forward.11}
  #allocation0 [shape = 'u32[]', space=smem, size = 0x4, offset = 0x4, fixed_abs, tag = 'smem constant byte address 0x4 - core index']
  #allocation1 [shape = 'u32[144,128]{1,0:T(1,128)}', space=vmem, size = 0x12000, scoped, tag = 'internal scratch']
  %s0 = inlined_call_operand.vmem [shape: bf16[32,2048], index: 0, kind: input, shape index: {}]
  %s1 = inlined_call_operand.vmem [shape: bf16[2048,256], index: 1, kind: input, shape index: {}]
  %s2 = inlined_call_operand.vmem [shape: bf16[32,256], index: 2, kind: output, shape index: {0}]
  %s3 = inlined_call_operand.vmem [shape: f32[1,2,256], index: 3, kind: output, shape index: {1}]
  %4 = xla_tuple %s2, %s3
  %s5 = sld [smem:[#allocation0]]
  $region26: #{encoder_forward.11} parent=0
    _
  %s7 = ssub.s32 1, %s5
  %s8 = scalar_select 0, %s7, %s5
  // Predicated region
  $region2: #{encoder_forward.11} parent=0 // pred_check
    _
  $region3: #{encoder_forward.11} parent=0 // pred_check_branch
    %10 = sbr.rel (0) target = $region5
  $region4: #{encoder_forward.11} parent=0 // pred_region
    _
  $region5: #{encoder_forward.11} parent=0 // pred_fallthru
    _
  // Predicated region
  $region6: #{encoder_forward.11} parent=0 // pred_check
    _
  $region7: #{encoder_forward.11} parent=0 // pred_check_branch
    %12 = sbr.rel (0) target = $region9
  $region8: #{encoder_forward.11} parent=0 // pred_region
    _
  $region9: #{encoder_forward.11} parent=0 // pred_fallthru
    _
  %v13 = vld [vmem:[%s0] sm:$0xff]
  %v14 = vld [vmem:[%s0 + $0x8] sm:$0xff]
  %v15 = vld [vmem:[%s0 + $0x10] sm:$0xff]
  %v16 = vld [vmem:[%s0 + $0x18] sm:$0xff]
  %v17 = vld [vmem:[%s0 + $0x20] sm:$0xff]
  %v18 = vld [vmem:[%s0 + $0x28] sm:$0xff]
  %v19 = vld [vmem:[%s0 + $0x30] sm:$0xff]
  %v20 = vld [vmem:[%s0 + $0x38] sm:$0xff]
  %v21 = vld [vmem:[%s0 + $0x40] sm:$0xff]
  %v22 = vld [vmem:[%s0 + $0x48] sm:$0xff]
  %v23 = vld [vmem:[%s0 + $0x50] sm:$0xff]
  %v24 = vld [vmem:[%s0 + $0x58] sm:$0xff]
  %v25 = vld [vmem:[%s0 + $0x60] sm:$0xff]
  %v26 = vld [vmem:[%s0 + $0x68] sm:$0xff]
  %v27 = vld [vmem:[%s0 + $0x70] sm:$0xff]
  %v28 = vld [vmem:[%s0 + $0x78] sm:$0xff]
  %v29 = vld [vmem:[%s0 + $0x80] sm:$0xff]
  %v30 = vld [vmem:[%s0 + $0x88] sm:$0xff]
  %v31 = vld [vmem:[%s0 + $0x90] sm:$0xff]
  %v32 = vld [vmem:[%s0 + $0x98] sm:$0xff]
  %v33 = vld [vmem:[%s0 + $0xa0] sm:$0xff]
  %v34 = vld [vmem:[%s0 + $0xa8] sm:$0xff]
  %v35 = vld [vmem:[%s0 + $0xb0] sm:$0xff]
  %v36 = vld [vmem:[%s0 + $0xb8] sm:$0xff]
  %v37 = vld [vmem:[%s0 + $0xc0] sm:$0xff]
  %v38 = vld [vmem:[%s0 + $0xc8] sm:$0xff]
  %v39 = vld [vmem:[%s0 + $0xd0] sm:$0xff]
  %v40 = vld [vmem:[%s0 + $0xd8] sm:$0xff]
  %v41 = vld [vmem:[%s0 + $0xe0] sm:$0xff]
  %v42 = vld [vmem:[%s0 + $0xe8] sm:$0xff]
  %v43 = vld [vmem:[%s0 + $0xf0] sm:$0xff]
  %v44 = vld [vmem:[%s0 + $0xf8] sm:$0xff]
  %v45 = vld [vmem:[%s1] sm:$0xff]
  %v46 = vld [vmem:[%s1 + $0x8] sm:$0xff]
  %v47 = vld [vmem:[%s1 + $0x10] sm:$0xff]
  %v48 = vld [vmem:[%s1 + $0x18] sm:$0xff]
  %v49 = vld [vmem:[%s1 + $0x20] sm:$0xff]
  %v50 = vld [vmem:[%s1 + $0x28] sm:$0xff]
  %v51 = vld [vmem:[%s1 + $0x30] sm:$0xff]
  %v52 = vld [vmem:[%s1 + $0x38] sm:$0xff]
  %v53 = vld [vmem:[%s1 + $0x40] sm:$0xff]
  %v54 = vld [vmem:[%s1 + $0x48] sm:$0xff]
  %v55 = vld [vmem:[%s1 + $0x50] sm:$0xff]
  %v56 = vld [vmem:[%s1 + $0x58] sm:$0xff]
  %v57 = vld [vmem:[%s1 + $0x60] sm:$0xff]
  %v58 = vld [vmem:[%s1 + $0x68] sm:$0xff]
  %v59 = vld [vmem:[%s1 + $0x70] sm:$0xff]
  %v60 = vld [vmem:[%s1 + $0x78] sm:$0xff]
  %v61 = vld [vmem:[%s1 + $0x80] sm:$0xff]
  %v62 = vld [vmem:[%s1 + $0x88] sm:$0xff]
  %v63 = vld [vmem:[%s1 + $0x90] sm:$0xff]
  %v64 = vld [vmem:[%s1 + $0x98] sm:$0xff]
  %v65 = vld [vmem:[%s1 + $0xa0] sm:$0xff]
  %v66 = vld [vmem:[%s1 + $0xa8] sm:$0xff]
  %v67 = vld [vmem:[%s1 + $0xb0] sm:$0xff]
  %v68 = vld [vmem:[%s1 + $0xb8] sm:$0xff]
  %v69 = vld [vmem:[%s1 + $0xc0] sm:$0xff]
  %v70 = vld [vmem:[%s1 + $0xc8] sm:$0xff]
  %v71 = vld [vmem:[%s1 + $0xd0] sm:$0xff]
  %v72 = vld [vmem:[%s1 + $0xd8] sm:$0xff]
  %v73 = vld [vmem:[%s1 + $0xe0] sm:$0xff]
  %v74 = vld [vmem:[%s1 + $0xe8] sm:$0xff]
  %v75 = vld [vmem:[%s1 + $0xf0] sm:$0xff]
  %v76 = vld [vmem:[%s1 + $0xf8] sm:$0xff]
  %v77 = vld [vmem:[%s1 + $0x100] sm:$0xff]
  %v78 = vld [vmem:[%s1 + $0x108] sm:$0xff]
  %v79 = vld [vmem:[%s1 + $0x110] sm:$0xff]
  %v80 = vld [vmem:[%s1 + $0x118] sm:$0xff]
  %v81 = vld [vmem:[%s1 + $0x120] sm:$0xff]
  %v82 = vld [vmem:[%s1 + $0x128] sm:$0xff]
  %v83 = vld [vmem:[%s1 + $0x130] sm:$0xff]
  %v84 = vld [vmem:[%s1 + $0x138] sm:$0xff]
  %v85 = vld [vmem:[%s1 + $0x140] sm:$0xff]
  %v86 = vld [vmem:[%s1 + $0x148] sm:$0xff]
  %v87 = vld [vmem:[%s1 + $0x150] sm:$0xff]
  %v88 = vld [vmem:[%s1 + $0x158] sm:$0xff]
  %v89 = vld [vmem:[%s1 + $0x160] sm:$0xff]
  %v90 = vld [vmem:[%s1 + $0x168] sm:$0xff]
  %v91 = vld [vmem:[%s1 + $0x170] sm:$0xff]
  %v92 = vld [vmem:[%s1 + $0x178] sm:$0xff]
  %v93 = vld [vmem:[%s1 + $0x180] sm:$0xff]
  %v94 = vld [vmem:[%s1 + $0x188] sm:$0xff]
  %v95 = vld [vmem:[%s1 + $0x190] sm:$0xff]
  %v96 = vld [vmem:[%s1 + $0x198] sm:$0xff]
  %v97 = vld [vmem:[%s1 + $0x1a0] sm:$0xff]
  %v98 = vld [vmem:[%s1 + $0x1a8] sm:$0xff]
  %v99 = vld [vmem:[%s1 + $0x1b0] sm:$0xff]
  %v100 = vld [vmem:[%s1 + $0x1b8] sm:$0xff]
  %v101 = vld [vmem:[%s1 + $0x1c0] sm:$0xff]
  %v102 = vld [vmem:[%s1 + $0x1c8] sm:$0xff]
  %v103 = vld [vmem:[%s1 + $0x1d0] sm:$0xff]
  %v104 = vld [vmem:[%s1 + $0x1d8] sm:$0xff]
  %v105 = vld [vmem:[%s1 + $0x1e0] sm:$0xff]
  %v106 = vld [vmem:[%s1 + $0x1e8] sm:$0xff]
  %v107 = vld [vmem:[%s1 + $0x1f0] sm:$0xff]
  %v108 = vld [vmem:[%s1 + $0x1f8] sm:$0xff]
  %v109 = vld [vmem:[%s1 + $0x200] sm:$0xff]
  %v110 = vld [vmem:[%s1 + $0x208] sm:$0xff]
  %v111 = vld [vmem:[%s1 + $0x210] sm:$0xff]
  %v112 = vld [vmem:[%s1 + $0x218] sm:$0xff]
  %v113 = vld [vmem:[%s1 + $0x220] sm:$0xff]
  %v114 = vld [vmem:[%s1 + $0x228] sm:$0xff]
  %v115 = vld [vmem:[%s1 + $0x230] sm:$0xff]
  %v116 = vld [vmem:[%s1 + $0x238] sm:$0xff]
  %v117 = vld [vmem:[%s1 + $0x240] sm:$0xff]
  %v118 = vld [vmem:[%s1 + $0x248] sm:$0xff]
  %v119 = vld [vmem:[%s1 + $0x250] sm:$0xff]
  %v120 = vld [vmem:[%s1 + $0x258] sm:$0xff]
  %v121 = vld [vmem:[%s1 + $0x260] sm:$0xff]
  %v122 = vld [vmem:[%s1 + $0x268] sm:$0xff]
  %v123 = vld [vmem:[%s1 + $0x270] sm:$0xff]
  %v124 = vld [vmem:[%s1 + $0x278] sm:$0xff]
  %v125 = vld [vmem:[%s1 + $0x280] sm:$0xff]
  %v126 = vld [vmem:[%s1 + $0x288] sm:$0xff]
  %v127 = vld [vmem:[%s1 + $0x290] sm:$0xff]
  %v128 = vld [vmem:[%s1 + $0x298] sm:$0xff]
  %v129 = vld [vmem:[%s1 + $0x2a0] sm:$0xff]
  %v130 = vld [vmem:[%s1 + $0x2a8] sm:$0xff]
  %v131 = vld [vmem:[%s1 + $0x2b0] sm:$0xff]
  %v132 = vld [vmem:[%s1 + $0x2b8] sm:$0xff]
  %v133 = vld [vmem:[%s1 + $0x2c0] sm:$0xff]
  %v134 = vld [vmem:[%s1 + $0x2c8] sm:$0xff]
  %v135 = vld [vmem:[%s1 + $0x2d0] sm:$0xff]
  %v136 = vld [vmem:[%s1 + $0x2d8] sm:$0xff]
  %v137 = vld [vmem:[%s1 + $0x2e0] sm:$0xff]
  %v138 = vld [vmem:[%s1 + $0x2e8] sm:$0xff]
  %v139 = vld [vmem:[%s1 + $0x2f0] sm:$0xff]
  %v140 = vld [vmem:[%s1 + $0x2f8] sm:$0xff]
  %v141 = vld [vmem:[%s1 + $0x300] sm:$0xff]
  %v142 = vld [vmem:[%s1 + $0x308] sm:$0xff]
  %v143 = vld [vmem:[%s1 + $0x310] sm:$0xff]
  %v144 = vld [vmem:[%s1 + $0x318] sm:$0xff]
  %v145 = vld [vmem:[%s1 + $0x320] sm:$0xff]
  %v146 = vld [vmem:[%s1 + $0x328] sm:$0xff]
  %v147 = vld [vmem:[%s1 + $0x330] sm:$0xff]
  %v148 = vld [vmem:[%s1 + $0x338] sm:$0xff]
  %v149 = vld [vmem:[%s1 + $0x340] sm:$0xff]
  %v150 = vld [vmem:[%s1 + $0x348] sm:$0xff]
  %v151 = vld [vmem:[%s1 + $0x350] sm:$0xff]
  %v152 = vld [vmem:[%s1 + $0x358] sm:$0xff]
  %v153 = vld [vmem:[%s1 + $0x360] sm:$0xff]
  %v154 = vld [vmem:[%s1 + $0x368] sm:$0xff]
  %v155 = vld [vmem:[%s1 + $0x370] sm:$0xff]
  %v156 = vld [vmem:[%s1 + $0x378] sm:$0xff]
  %v157 = vld [vmem:[%s1 + $0x380] sm:$0xff]
  %v158 = vld [vmem:[%s1 + $0x388] sm:$0xff]
  %v159 = vld [vmem:[%s1 + $0x390] sm:$0xff]
  %v160 = vld [vmem:[%s1 + $0x398] sm:$0xff]
  %v161 = vld [vmem:[%s1 + $0x3a0] sm:$0xff]
  %v162 = vld [vmem:[%s1 + $0x3a8] sm:$0xff]
  %v163 = vld [vmem:[%s1 + $0x3b0] sm:$0xff]
  %v164 = vld [vmem:[%s1 + $0x3b8] sm:$0xff]
  %v165 = vld [vmem:[%s1 + $0x3c0] sm:$0xff]
  %v166 = vld [vmem:[%s1 + $0x3c8] sm:$0xff]
  %v167 = vld [vmem:[%s1 + $0x3d0] sm:$0xff]
  %v168 = vld [vmem:[%s1 + $0x3d8] sm:$0xff]
  %v169 = vld [vmem:[%s1 + $0x3e0] sm:$0xff]
  %v170 = vld [vmem:[%s1 + $0x3e8] sm:$0xff]
  %v171 = vld [vmem:[%s1 + $0x3f0] sm:$0xff]
  %v172 = vld [vmem:[%s1 + $0x3f8] sm:$0xff]
  %v173 = vld [vmem:[%s1 + $0x400] sm:$0xff]
  %v174 = vld [vmem:[%s1 + $0x408] sm:$0xff]
  %v175 = vld [vmem:[%s1 + $0x410] sm:$0xff]
  %v176 = vld [vmem:[%s1 + $0x418] sm:$0xff]
  %v177 = vld [vmem:[%s1 + $0x420] sm:$0xff]
  %v178 = vld [vmem:[%s1 + $0x428] sm:$0xff]
  %v179 = vld [vmem:[%s1 + $0x430] sm:$0xff]
  %v180 = vld [vmem:[%s1 + $0x438] sm:$0xff]
  %v181 = vld [vmem:[%s1 + $0x440] sm:$0xff]
  %v182 = vld [vmem:[%s1 + $0x448] sm:$0xff]
  %v183 = vld [vmem:[%s1 + $0x450] sm:$0xff]
  %v184 = vld [vmem:[%s1 + $0x458] sm:$0xff]
  %v185 = vld [vmem:[%s1 + $0x460] sm:$0xff]
  %v186 = vld [vmem:[%s1 + $0x468] sm:$0xff]
  %v187 = vld [vmem:[%s1 + $0x470] sm:$0xff]
  %v188 = vld [vmem:[%s1 + $0x478] sm:$0xff]
  %v189 = vld [vmem:[%s1 + $0x480] sm:$0xff]
  %v190 = vld [vmem:[%s1 + $0x488] sm:$0xff]
  %v191 = vld [vmem:[%s1 + $0x490] sm:$0xff]
  %v192 = vld [vmem:[%s1 + $0x498] sm:$0xff]
  %v193 = vld [vmem:[%s1 + $0x4a0] sm:$0xff]
  %v194 = vld [vmem:[%s1 + $0x4a8] sm:$0xff]
  %v195 = vld [vmem:[%s1 + $0x4b0] sm:$0xff]
  %v196 = vld [vmem:[%s1 + $0x4b8] sm:$0xff]
  %v197 = vld [vmem:[%s1 + $0x4c0] sm:$0xff]
  %v198 = vld [vmem:[%s1 + $0x4c8] sm:$0xff]
  %v199 = vld [vmem:[%s1 + $0x4d0] sm:$0xff]
  %v200 = vld [vmem:[%s1 + $0x4d8] sm:$0xff]
  %v201 = vld [vmem:[%s1 + $0x4e0] sm:$0xff]
  %v202 = vld [vmem:[%s1 + $0x4e8] sm:$0xff]
  %v203 = vld [vmem:[%s1 + $0x4f0] sm:$0xff]
  %v204 = vld [vmem:[%s1 + $0x4f8] sm:$0xff]
  %v205 = vld [vmem:[%s1 + $0x500] sm:$0xff]
  %v206 = vld [vmem:[%s1 + $0x508] sm:$0xff]
  %v207 = vld [vmem:[%s1 + $0x510] sm:$0xff]
  %v208 = vld [vmem:[%s1 + $0x518] sm:$0xff]
  %v209 = vld [vmem:[%s1 + $0x520] sm:$0xff]
  %v210 = vld [vmem:[%s1 + $0x528] sm:$0xff]
  %v211 = vld [vmem:[%s1 + $0x530] sm:$0xff]
  %v212 = vld [vmem:[%s1 + $0x538] sm:$0xff]
  %v213 = vld [vmem:[%s1 + $0x540] sm:$0xff]
  %v214 = vld [vmem:[%s1 + $0x548] sm:$0xff]
  %v215 = vld [vmem:[%s1 + $0x550] sm:$0xff]
  %v216 = vld [vmem:[%s1 + $0x558] sm:$0xff]
  %v217 = vld [vmem:[%s1 + $0x560] sm:$0xff]
  %v218 = vld [vmem:[%s1 + $0x568] sm:$0xff]
  %v219 = vld [vmem:[%s1 + $0x570] sm:$0xff]
  %v220 = vld [vmem:[%s1 + $0x578] sm:$0xff]
  %v221 = vld [vmem:[%s1 + $0x580] sm:$0xff]
  %v222 = vld [vmem:[%s1 + $0x588] sm:$0xff]
  %v223 = vld [vmem:[%s1 + $0x590] sm:$0xff]
  %v224 = vld [vmem:[%s1 + $0x598] sm:$0xff]
  %v225 = vld [vmem:[%s1 + $0x5a0] sm:$0xff]
  %v226 = vld [vmem:[%s1 + $0x5a8] sm:$0xff]
  %v227 = vld [vmem:[%s1 + $0x5b0] sm:$0xff]
  %v228 = vld [vmem:[%s1 + $0x5b8] sm:$0xff]
  %v229 = vld [vmem:[%s1 + $0x5c0] sm:$0xff]
  %v230 = vld [vmem:[%s1 + $0x5c8] sm:$0xff]
  %v231 = vld [vmem:[%s1 + $0x5d0] sm:$0xff]
  %v232 = vld [vmem:[%s1 + $0x5d8] sm:$0xff]
  %v233 = vld [vmem:[%s1 + $0x5e0] sm:$0xff]
  %v234 = vld [vmem:[%s1 + $0x5e8] sm:$0xff]
  %v235 = vld [vmem:[%s1 + $0x5f0] sm:$0xff]
  %v236 = vld [vmem:[%s1 + $0x5f8] sm:$0xff]
  %v237 = vld [vmem:[%s1 + $0x600] sm:$0xff]
  %v238 = vld [vmem:[%s1 + $0x608] sm:$0xff]
  %v239 = vld [vmem:[%s1 + $0x610] sm:$0xff]
  %v240 = vld [vmem:[%s1 + $0x618] sm:$0xff]
  %v241 = vld [vmem:[%s1 + $0x620] sm:$0xff]
  %v242 = vld [vmem:[%s1 + $0x628] sm:$0xff]
  %v243 = vld [vmem:[%s1 + $0x630] sm:$0xff]
  %v244 = vld [vmem:[%s1 + $0x638] sm:$0xff]
  %v245 = vld [vmem:[%s1 + $0x640] sm:$0xff]
  %v246 = vld [vmem:[%s1 + $0x648] sm:$0xff]
  %v247 = vld [vmem:[%s1 + $0x650] sm:$0xff]
  %v248 = vld [vmem:[%s1 + $0x658] sm:$0xff]
  %v249 = vld [vmem:[%s1 + $0x660] sm:$0xff]
  %v250 = vld [vmem:[%s1 + $0x668] sm:$0xff]
  %v251 = vld [vmem:[%s1 + $0x670] sm:$0xff]
  %v252 = vld [vmem:[%s1 + $0x678] sm:$0xff]
  %v253 = vld [vmem:[%s1 + $0x680] sm:$0xff]
  %v254 = vld [vmem:[%s1 + $0x688] sm:$0xff]
  %v255 = vld [vmem:[%s1 + $0x690] sm:$0xff]
  %v256 = vld [vmem:[%s1 + $0x698] sm:$0xff]
  %v257 = vld [vmem:[%s1 + $0x6a0] sm:$0xff]
  %v258 = vld [vmem:[%s1 + $0x6a8] sm:$0xff]
  %v259 = vld [vmem:[%s1 + $0x6b0] sm:$0xff]
  %v260 = vld [vmem:[%s1 + $0x6b8] sm:$0xff]
  %v261 = vld [vmem:[%s1 + $0x6c0] sm:$0xff]
  %v262 = vld [vmem:[%s1 + $0x6c8] sm:$0xff]
  %v263 = vld [vmem:[%s1 + $0x6d0] sm:$0xff]
  %v264 = vld [vmem:[%s1 + $0x6d8] sm:$0xff]
  %v265 = vld [vmem:[%s1 + $0x6e0] sm:$0xff]
  %v266 = vld [vmem:[%s1 + $0x6e8] sm:$0xff]
  %v267 = vld [vmem:[%s1 + $0x6f0] sm:$0xff]
  %v268 = vld [vmem:[%s1 + $0x6f8] sm:$0xff]
  %v269 = vld [vmem:[%s1 + $0x700] sm:$0xff]
  %v270 = vld [vmem:[%s1 + $0x708] sm:$0xff]
  %v271 = vld [vmem:[%s1 + $0x710] sm:$0xff]
  %v272 = vld [vmem:[%s1 + $0x718] sm:$0xff]
  %v273 = vld [vmem:[%s1 + $0x720] sm:$0xff]
  %v274 = vld [vmem:[%s1 + $0x728] sm:$0xff]
  %v275 = vld [vmem:[%s1 + $0x730] sm:$0xff]
  %v276 = vld [vmem:[%s1 + $0x738] sm:$0xff]
  %v277 = vld [vmem:[%s1 + $0x740] sm:$0xff]
  %v278 = vld [vmem:[%s1 + $0x748] sm:$0xff]
  %v279 = vld [vmem:[%s1 + $0x750] sm:$0xff]
  %v280 = vld [vmem:[%s1 + $0x758] sm:$0xff]
  %v281 = vld [vmem:[%s1 + $0x760] sm:$0xff]
  %v282 = vld [vmem:[%s1 + $0x768] sm:$0xff]
  %v283 = vld [vmem:[%s1 + $0x770] sm:$0xff]
  %v284 = vld [vmem:[%s1 + $0x778] sm:$0xff]
  %v285 = vld [vmem:[%s1 + $0x780] sm:$0xff]
  %v286 = vld [vmem:[%s1 + $0x788] sm:$0xff]
  %v287 = vld [vmem:[%s1 + $0x790] sm:$0xff]
  %v288 = vld [vmem:[%s1 + $0x798] sm:$0xff]
  %v289 = vld [vmem:[%s1 + $0x7a0] sm:$0xff]
  %v290 = vld [vmem:[%s1 + $0x7a8] sm:$0xff]
  %v291 = vld [vmem:[%s1 + $0x7b0] sm:$0xff]
  %v292 = vld [vmem:[%s1 + $0x7b8] sm:$0xff]
  %v293 = vld [vmem:[%s1 + $0x7c0] sm:$0xff]
  %v294 = vld [vmem:[%s1 + $0x7c8] sm:$0xff]
  %v295 = vld [vmem:[%s1 + $0x7d0] sm:$0xff]
  %v296 = vld [vmem:[%s1 + $0x7d8] sm:$0xff]
  %v297 = vld [vmem:[%s1 + $0x7e0] sm:$0xff]
  %v298 = vld [vmem:[%s1 + $0x7e8] sm:$0xff]
  %v299 = vld [vmem:[%s1 + $0x7f0] sm:$0xff]
  %v300 = vld [vmem:[%s1 + $0x7f8] sm:$0xff]
  %v333 = vunpack.c.l.b16 %v13
  %v334 = vunpack.c.h.b16 %v13
  %v335 = vunpack.c.l.b16 %v14
  %v336 = vunpack.c.h.b16 %v14
  %v337 = vunpack.c.l.b16 %v15
  %v338 = vunpack.c.h.b16 %v15
  %v339 = vunpack.c.l.b16 %v16
  %v340 = vunpack.c.h.b16 %v16
  %v341 = vunpack.c.l.b16 %v17
  %v342 = vunpack.c.h.b16 %v17
  %v343 = vunpack.c.l.b16 %v18
  %v344 = vunpack.c.h.b16 %v18
  %v345 = vunpack.c.l.b16 %v19
  %v346 = vunpack.c.h.b16 %v19
  %v347 = vunpack.c.l.b16 %v20
  %v348 = vunpack.c.h.b16 %v20
  %v349 = vunpack.c.l.b16 %v21
  %v350 = vunpack.c.h.b16 %v21
  %v351 = vunpack.c.l.b16 %v22
  %v352 = vunpack.c.h.b16 %v22
  %v353 = vunpack.c.l.b16 %v23
  %v354 = vunpack.c.h.b16 %v23
  %v355 = vunpack.c.l.b16 %v24
  %v356 = vunpack.c.h.b16 %v24
  %v357 = vunpack.c.l.b16 %v25
  %v358 = vunpack.c.h.b16 %v25
  %v359 = vunpack.c.l.b16 %v26
  %v360 = vunpack.c.h.b16 %v26
  %v361 = vunpack.c.l.b16 %v27
  %v362 = vunpack.c.h.b16 %v27
  %v363 = vunpack.c.l.b16 %v28
  %v364 = vunpack.c.h.b16 %v28
  %v365 = vunpack.c.l.b16 %v29
  %v366 = vunpack.c.h.b16 %v29
  %v367 = vunpack.c.l.b16 %v30
  %v368 = vunpack.c.h.b16 %v30
  %v369 = vunpack.c.l.b16 %v31
  %v370 = vunpack.c.h.b16 %v31
  %v371 = vunpack.c.l.b16 %v32
  %v372 = vunpack.c.h.b16 %v32
  %v373 = vunpack.c.l.b16 %v33
  %v374 = vunpack.c.h.b16 %v33
  %v375 = vunpack.c.l.b16 %v34
  %v376 = vunpack.c.h.b16 %v34
  %v377 = vunpack.c.l.b16 %v35
  %v378 = vunpack.c.h.b16 %v35
  %v379 = vunpack.c.l.b16 %v36
  %v380 = vunpack.c.h.b16 %v36
  %v381 = vunpack.c.l.b16 %v37
  %v382 = vunpack.c.h.b16 %v37
  %v383 = vunpack.c.l.b16 %v38
  %v384 = vunpack.c.h.b16 %v38
  %v385 = vunpack.c.l.b16 %v39
  %v386 = vunpack.c.h.b16 %v39
  %v387 = vunpack.c.l.b16 %v40
  %v388 = vunpack.c.h.b16 %v40
  %v389 = vunpack.c.l.b16 %v41
  %v390 = vunpack.c.h.b16 %v41
  %v391 = vunpack.c.l.b16 %v42
  %v392 = vunpack.c.h.b16 %v42
  %v393 = vunpack.c.l.b16 %v43
  %v394 = vunpack.c.h.b16 %v43
  %v395 = vunpack.c.l.b16 %v44
  %v396 = vunpack.c.h.b16 %v44
  %v397 = vpack.c.b16 %v349, %v333
  %v398 = vpack.c.b16 %v350, %v334
  %v399 = vpack.c.b16 %v351, %v335
  %v400 = vpack.c.b16 %v352, %v336
  %v401 = vpack.c.b16 %v353, %v337
  %v402 = vpack.c.b16 %v354, %v338
  %v403 = vpack.c.b16 %v355, %v339
  %v404 = vpack.c.b16 %v356, %v340
  %v405 = vpack.c.b16 %v357, %v341
  %v406 = vpack.c.b16 %v358, %v342
  %v407 = vpack.c.b16 %v359, %v343
  %v408 = vpack.c.b16 %v360, %v344
  %v409 = vpack.c.b16 %v361, %v345
  %v410 = vpack.c.b16 %v362, %v346
  %v411 = vpack.c.b16 %v363, %v347
  %v412 = vpack.c.b16 %v364, %v348
  %v413 = vpack.c.b16 %v381, %v365
  %v414 = vpack.c.b16 %v382, %v366
  %v415 = vpack.c.b16 %v383, %v367
  %v416 = vpack.c.b16 %v384, %v368
  %v417 = vpack.c.b16 %v385, %v369
  %v418 = vpack.c.b16 %v386, %v370
  %v419 = vpack.c.b16 %v387, %v371
  %v420 = vpack.c.b16 %v388, %v372
  %v421 = vpack.c.b16 %v389, %v373
  %v422 = vpack.c.b16 %v390, %v374
  %v423 = vpack.c.b16 %v391, %v375
  %v424 = vpack.c.b16 %v392, %v376
  %v425 = vpack.c.b16 %v393, %v377
  %v426 = vpack.c.b16 %v394, %v378
  %v427 = vpack.c.b16 %v395, %v379
  %v428 = vpack.c.b16 %v396, %v380
  %v717 = vunpack.c.l.b16 %v45
  %v718 = vunpack.c.h.b16 %v45
  %v719 = vunpack.c.l.b16 %v46
  %v720 = vunpack.c.h.b16 %v46
  %v721 = vunpack.c.l.b16 %v47
  %v722 = vunpack.c.h.b16 %v47
  %v723 = vunpack.c.l.b16 %v48
  %v724 = vunpack.c.h.b16 %v48
  %v725 = vunpack.c.l.b16 %v49
  %v726 = vunpack.c.h.b16 %v49
  %v727 = vunpack.c.l.b16 %v50
  %v728 = vunpack.c.h.b16 %v50
  %v729 = vunpack.c.l.b16 %v51
  %v730 = vunpack.c.h.b16 %v51
  %v731 = vunpack.c.l.b16 %v52
  %v732 = vunpack.c.h.b16 %v52
  %v733 = vunpack.c.l.b16 %v53
  %v734 = vunpack.c.h.b16 %v53
  %v735 = vunpack.c.l.b16 %v54
  %v736 = vunpack.c.h.b16 %v54
  %v737 = vunpack.c.l.b16 %v55
  %v738 = vunpack.c.h.b16 %v55
  %v739 = vunpack.c.l.b16 %v56
  %v740 = vunpack.c.h.b16 %v56
  %v741 = vunpack.c.l.b16 %v57
  %v742 = vunpack.c.h.b16 %v57
  %v743 = vunpack.c.l.b16 %v58
  %v744 = vunpack.c.h.b16 %v58
  %v745 = vunpack.c.l.b16 %v59
  %v746 = vunpack.c.h.b16 %v59
  %v747 = vunpack.c.l.b16 %v60
  %v748 = vunpack.c.h.b16 %v60
  %v749 = vunpack.c.l.b16 %v61
  %v750 = vunpack.c.h.b16 %v61
  %v751 = vunpack.c.l.b16 %v62
  %v752 = vunpack.c.h.b16 %v62
  %v753 = vunpack.c.l.b16 %v63
  %v754 = vunpack.c.h.b16 %v63
  %v755 = vunpack.c.l.b16 %v64
  %v756 = vunpack.c.h.b16 %v64
  %v757 = vunpack.c.l.b16 %v65
  %v758 = vunpack.c.h.b16 %v65
  %v759 = vunpack.c.l.b16 %v66
  %v760 = vunpack.c.h.b16 %v66
  %v761 = vunpack.c.l.b16 %v67
  %v762 = vunpack.c.h.b16 %v67
  %v763 = vunpack.c.l.b16 %v68
  %v764 = vunpack.c.h.b16 %v68
  %v765 = vunpack.c.l.b16 %v69
  %v766 = vunpack.c.h.b16 %v69
  %v767 = vunpack.c.l.b16 %v70
  %v768 = vunpack.c.h.b16 %v70
  %v769 = vunpack.c.l.b16 %v71
  %v770 = vunpack.c.h.b16 %v71
  %v771 = vunpack.c.l.b16 %v72
  %v772 = vunpack.c.h.b16 %v72
  %v773 = vunpack.c.l.b16 %v73
  %v774 = vunpack.c.h.b16 %v73
  %v775 = vunpack.c.l.b16 %v74
  %v776 = vunpack.c.h.b16 %v74
  %v777 = vunpack.c.l.b16 %v75
  %v778 = vunpack.c.h.b16 %v75
  %v779 = vunpack.c.l.b16 %v76
  %v780 = vunpack.c.h.b16 %v76
  %v781 = vunpack.c.l.b16 %v77
  %v782 = vunpack.c.h.b16 %v77
  %v783 = vunpack.c.l.b16 %v78
  %v784 = vunpack.c.h.b16 %v78
  %v785 = vunpack.c.l.b16 %v79
  %v786 = vunpack.c.h.b16 %v79
  %v787 = vunpack.c.l.b16 %v80
  %v788 = vunpack.c.h.b16 %v80
  %v789 = vunpack.c.l.b16 %v81
  %v790 = vunpack.c.h.b16 %v81
  %v791 = vunpack.c.l.b16 %v82
  %v792 = vunpack.c.h.b16 %v82
  %v793 = vunpack.c.l.b16 %v83
  %v794 = vunpack.c.h.b16 %v83
  %v795 = vunpack.c.l.b16 %v84
  %v796 = vunpack.c.h.b16 %v84
  %v797 = vunpack.c.l.b16 %v85
  %v798 = vunpack.c.h.b16 %v85
  %v799 = vunpack.c.l.b16 %v86
  %v800 = vunpack.c.h.b16 %v86
  %v801 = vunpack.c.l.b16 %v87
  %v802 = vunpack.c.h.b16 %v87
  %v803 = vunpack.c.l.b16 %v88
  %v804 = vunpack.c.h.b16 %v88
  %v805 = vunpack.c.l.b16 %v89
  %v806 = vunpack.c.h.b16 %v89
  %v807 = vunpack.c.l.b16 %v90
  %v808 = vunpack.c.h.b16 %v90
  %v809 = vunpack.c.l.b16 %v91
  %v810 = vunpack.c.h.b16 %v91
  %v811 = vunpack.c.l.b16 %v92
  %v812 = vunpack.c.h.b16 %v92
  %v813 = vunpack.c.l.b16 %v93
  %v814 = vunpack.c.h.b16 %v93
  %v815 = vunpack.c.l.b16 %v94
  %v816 = vunpack.c.h.b16 %v94
  %v817 = vunpack.c.l.b16 %v95
  %v818 = vunpack.c.h.b16 %v95
  %v819 = vunpack.c.l.b16 %v96
  %v820 = vunpack.c.h.b16 %v96
  %v821 = vunpack.c.l.b16 %v97
  %v822 = vunpack.c.h.b16 %v97
  %v823 = vunpack.c.l.b16 %v98
  %v824 = vunpack.c.h.b16 %v98
  %v825 = vunpack.c.l.b16 %v99
  %v826 = vunpack.c.h.b16 %v99
  %v827 = vunpack.c.l.b16 %v100
  %v828 = vunpack.c.h.b16 %v100
  %v829 = vunpack.c.l.b16 %v101
  %v830 = vunpack.c.h.b16 %v101
  %v831 = vunpack.c.l.b16 %v102
  %v832 = vunpack.c.h.b16 %v102
  %v833 = vunpack.c.l.b16 %v103
  %v834 = vunpack.c.h.b16 %v103
  %v835 = vunpack.c.l.b16 %v104
  %v836 = vunpack.c.h.b16 %v104
  %v837 = vunpack.c.l.b16 %v105
  %v838 = vunpack.c.h.b16 %v105
  %v839 = vunpack.c.l.b16 %v106
  %v840 = vunpack.c.h.b16 %v106
  %v841 = vunpack.c.l.b16 %v107
  %v842 = vunpack.c.h.b16 %v107
  %v843 = vunpack.c.l.b16 %v108
  %v844 = vunpack.c.h.b16 %v108
  %v845 = vunpack.c.l.b16 %v109
  %v846 = vunpack.c.h.b16 %v109
  %v847 = vunpack.c.l.b16 %v110
  %v848 = vunpack.c.h.b16 %v110
  %v849 = vunpack.c.l.b16 %v111
  %v850 = vunpack.c.h.b16 %v111
  %v851 = vunpack.c.l.b16 %v112
  %v852 = vunpack.c.h.b16 %v112
  %v853 = vunpack.c.l.b16 %v113
  %v854 = vunpack.c.h.b16 %v113
  %v855 = vunpack.c.l.b16 %v114
  %v856 = vunpack.c.h.b16 %v114
  %v857 = vunpack.c.l.b16 %v115
  %v858 = vunpack.c.h.b16 %v115
  %v859 = vunpack.c.l.b16 %v116
  %v860 = vunpack.c.h.b16 %v116
  %v861 = vunpack.c.l.b16 %v117
  %v862 = vunpack.c.h.b16 %v117
  %v863 = vunpack.c.l.b16 %v118
  %v864 = vunpack.c.h.b16 %v118
  %v865 = vunpack.c.l.b16 %v119
  %v866 = vunpack.c.h.b16 %v119
  %v867 = vunpack.c.l.b16 %v120
  %v868 = vunpack.c.h.b16 %v120
  %v869 = vunpack.c.l.b16 %v121
  %v870 = vunpack.c.h.b16 %v121
  %v871 = vunpack.c.l.b16 %v122
  %v872 = vunpack.c.h.b16 %v122
  %v873 = vunpack.c.l.b16 %v123
  %v874 = vunpack.c.h.b16 %v123
  %v875 = vunpack.c.l.b16 %v124
  %v876 = vunpack.c.h.b16 %v124
  %v877 = vunpack.c.l.b16 %v125
  %v878 = vunpack.c.h.b16 %v125
  %v879 = vunpack.c.l.b16 %v126
  %v880 = vunpack.c.h.b16 %v126
  %v881 = vunpack.c.l.b16 %v127
  %v882 = vunpack.c.h.b16 %v127
  %v883 = vunpack.c.l.b16 %v128
  %v884 = vunpack.c.h.b16 %v128
  %v885 = vunpack.c.l.b16 %v129
  %v886 = vunpack.c.h.b16 %v129
  %v887 = vunpack.c.l.b16 %v130
  %v888 = vunpack.c.h.b16 %v130
  %v889 = vunpack.c.l.b16 %v131
  %v890 = vunpack.c.h.b16 %v131
  %v891 = vunpack.c.l.b16 %v132
  %v892 = vunpack.c.h.b16 %v132
  %v893 = vunpack.c.l.b16 %v133
  %v894 = vunpack.c.h.b16 %v133
  %v895 = vunpack.c.l.b16 %v134
  %v896 = vunpack.c.h.b16 %v134
  %v897 = vunpack.c.l.b16 %v135
  %v898 = vunpack.c.h.b16 %v135
  %v899 = vunpack.c.l.b16 %v136
  %v900 = vunpack.c.h.b16 %v136
  %v901 = vunpack.c.l.b16 %v137
  %v902 = vunpack.c.h.b16 %v137
  %v903 = vunpack.c.l.b16 %v138
  %v904 = vunpack.c.h.b16 %v138
  %v905 = vunpack.c.l.b16 %v139
  %v906 = vunpack.c.h.b16 %v139
  %v907 = vunpack.c.l.b16 %v140
  %v908 = vunpack.c.h.b16 %v140
  %v909 = vunpack.c.l.b16 %v141
  %v910 = vunpack.c.h.b16 %v141
  %v911 = vunpack.c.l.b16 %v142
  %v912 = vunpack.c.h.b16 %v142
  %v913 = vunpack.c.l.b16 %v143
  %v914 = vunpack.c.h.b16 %v143
  %v915 = vunpack.c.l.b16 %v144
  %v916 = vunpack.c.h.b16 %v144
  %v917 = vunpack.c.l.b16 %v145
  %v918 = vunpack.c.h.b16 %v145
  %v919 = vunpack.c.l.b16 %v146
  %v920 = vunpack.c.h.b16 %v146
  %v921 = vunpack.c.l.b16 %v147
  %v922 = vunpack.c.h.b16 %v147
  %v923 = vunpack.c.l.b16 %v148
  %v924 = vunpack.c.h.b16 %v148
  %v925 = vunpack.c.l.b16 %v149
  %v926 = vunpack.c.h.b16 %v149
  %v927 = vunpack.c.l.b16 %v150
  %v928 = vunpack.c.h.b16 %v150
  %v929 = vunpack.c.l.b16 %v151
  %v930 = vunpack.c.h.b16 %v151
  %v931 = vunpack.c.l.b16 %v152
  %v932 = vunpack.c.h.b16 %v152
  %v933 = vunpack.c.l.b16 %v153
  %v934 = vunpack.c.h.b16 %v153
  %v935 = vunpack.c.l.b16 %v154
  %v936 = vunpack.c.h.b16 %v154
  %v937 = vunpack.c.l.b16 %v155
  %v938 = vunpack.c.h.b16 %v155
  %v939 = vunpack.c.l.b16 %v156
  %v940 = vunpack.c.h.b16 %v156
  %v941 = vunpack.c.l.b16 %v157
  %v942 = vunpack.c.h.b16 %v157
  %v943 = vunpack.c.l.b16 %v158
  %v944 = vunpack.c.h.b16 %v158
  %v945 = vunpack.c.l.b16 %v159
  %v946 = vunpack.c.h.b16 %v159
  %v947 = vunpack.c.l.b16 %v160
  %v948 = vunpack.c.h.b16 %v160
  %v949 = vunpack.c.l.b16 %v161
  %v950 = vunpack.c.h.b16 %v161
  %v951 = vunpack.c.l.b16 %v162
  %v952 = vunpack.c.h.b16 %v162
  %v953 = vunpack.c.l.b16 %v163
  %v954 = vunpack.c.h.b16 %v163
  %v955 = vunpack.c.l.b16 %v164
  %v956 = vunpack.c.h.b16 %v164
  %v957 = vunpack.c.l.b16 %v165
  %v958 = vunpack.c.h.b16 %v165
  %v959 = vunpack.c.l.b16 %v166
  %v960 = vunpack.c.h.b16 %v166
  %v961 = vunpack.c.l.b16 %v167
  %v962 = vunpack.c.h.b16 %v167
  %v963 = vunpack.c.l.b16 %v168
  %v964 = vunpack.c.h.b16 %v168
  %v965 = vunpack.c.l.b16 %v169
  %v966 = vunpack.c.h.b16 %v169
  %v967 = vunpack.c.l.b16 %v170
  %v968 = vunpack.c.h.b16 %v170
  %v969 = vunpack.c.l.b16 %v171
  %v970 = vunpack.c.h.b16 %v171
  %v971 = vunpack.c.l.b16 %v172
  %v972 = vunpack.c.h.b16 %v172
  %v973 = vunpack.c.l.b16 %v173
  %v974 = vunpack.c.h.b16 %v173
  %v975 = vunpack.c.l.b16 %v174
  %v976 = vunpack.c.h.b16 %v174
  %v977 = vunpack.c.l.b16 %v175
  %v978 = vunpack.c.h.b16 %v175
  %v979 = vunpack.c.l.b16 %v176
  %v980 = vunpack.c.h.b16 %v176
  %v981 = vunpack.c.l.b16 %v177
  %v982 = vunpack.c.h.b16 %v177
  %v983 = vunpack.c.l.b16 %v178
  %v984 = vunpack.c.h.b16 %v178
  %v985 = vunpack.c.l.b16 %v179
  %v986 = vunpack.c.h.b16 %v179
  %v987 = vunpack.c.l.b16 %v180
  %v988 = vunpack.c.h.b16 %v180
  %v989 = vunpack.c.l.b16 %v181
  %v990 = vunpack.c.h.b16 %v181
  %v991 = vunpack.c.l.b16 %v182
  %v992 = vunpack.c.h.b16 %v182
  %v993 = vunpack.c.l.b16 %v183
  %v994 = vunpack.c.h.b16 %v183
  %v995 = vunpack.c.l.b16 %v184
  %v996 = vunpack.c.h.b16 %v184
  %v997 = vunpack.c.l.b16 %v185
  %v998 = vunpack.c.h.b16 %v185
  %v999 = vunpack.c.l.b16 %v186
  %v1000 = vunpack.c.h.b16 %v186
  %v1001 = vunpack.c.l.b16 %v187
  %v1002 = vunpack.c.h.b16 %v187
  %v1003 = vunpack.c.l.b16 %v188
  %v1004 = vunpack.c.h.b16 %v188
  %v1005 = vunpack.c.l.b16 %v189
  %v1006 = vunpack.c.h.b16 %v189
  %v1007 = vunpack.c.l.b16 %v190
  %v1008 = vunpack.c.h.b16 %v190
  %v1009 = vunpack.c.l.b16 %v191
  %v1010 = vunpack.c.h.b16 %v191
  %v1011 = vunpack.c.l.b16 %v192
  %v1012 = vunpack.c.h.b16 %v192
  %v1013 = vunpack.c.l.b16 %v193
  %v1014 = vunpack.c.h.b16 %v193
  %v1015 = vunpack.c.l.b16 %v194
  %v1016 = vunpack.c.h.b16 %v194
  %v1017 = vunpack.c.l.b16 %v195
  %v1018 = vunpack.c.h.b16 %v195
  %v1019 = vunpack.c.l.b16 %v196
  %v1020 = vunpack.c.h.b16 %v196
  %v1021 = vunpack.c.l.b16 %v197
  %v1022 = vunpack.c.h.b16 %v197
  %v1023 = vunpack.c.l.b16 %v198
  %v1024 = vunpack.c.h.b16 %v198
  %v1025 = vunpack.c.l.b16 %v199
  %v1026 = vunpack.c.h.b16 %v199
  %v1027 = vunpack.c.l.b16 %v200
  %v1028 = vunpack.c.h.b16 %v200
  %v1029 = vunpack.c.l.b16 %v201
  %v1030 = vunpack.c.h.b16 %v201
  %v1031 = vunpack.c.l.b16 %v202
  %v1032 = vunpack.c.h.b16 %v202
  %v1033 = vunpack.c.l.b16 %v203
  %v1034 = vunpack.c.h.b16 %v203
  %v1035 = vunpack.c.l.b16 %v204
  %v1036 = vunpack.c.h.b16 %v204
  %v1037 = vunpack.c.l.b16 %v205
  %v1038 = vunpack.c.h.b16 %v205
  %v1039 = vunpack.c.l.b16 %v206
  %v1040 = vunpack.c.h.b16 %v206
  %v1041 = vunpack.c.l.b16 %v207
  %v1042 = vunpack.c.h.b16 %v207
  %v1043 = vunpack.c.l.b16 %v208
  %v1044 = vunpack.c.h.b16 %v208
  %v1045 = vunpack.c.l.b16 %v209
  %v1046 = vunpack.c.h.b16 %v209
  %v1047 = vunpack.c.l.b16 %v210
  %v1048 = vunpack.c.h.b16 %v210
  %v1049 = vunpack.c.l.b16 %v211
  %v1050 = vunpack.c.h.b16 %v211
  %v1051 = vunpack.c.l.b16 %v212
  %v1052 = vunpack.c.h.b16 %v212
  %v1053 = vunpack.c.l.b16 %v213
  %v1054 = vunpack.c.h.b16 %v213
  %v1055 = vunpack.c.l.b16 %v214
  %v1056 = vunpack.c.h.b16 %v214
  %v1057 = vunpack.c.l.b16 %v215
  %v1058 = vunpack.c.h.b16 %v215
  %v1059 = vunpack.c.l.b16 %v216
  %v1060 = vunpack.c.h.b16 %v216
  %v1061 = vunpack.c.l.b16 %v217
  %v1062 = vunpack.c.h.b16 %v217
  %v1063 = vunpack.c.l.b16 %v218
  %v1064 = vunpack.c.h.b16 %v218
  %v1065 = vunpack.c.l.b16 %v219
  %v1066 = vunpack.c.h.b16 %v219
  %v1067 = vunpack.c.l.b16 %v220
  %v1068 = vunpack.c.h.b16 %v220
  %v1069 = vunpack.c.l.b16 %v221
  %v1070 = vunpack.c.h.b16 %v221
  %v1071 = vunpack.c.l.b16 %v222
  %v1072 = vunpack.c.h.b16 %v222
  %v1073 = vunpack.c.l.b16 %v223
  %v1074 = vunpack.c.h.b16 %v223
  %v1075 = vunpack.c.l.b16 %v224
  %v1076 = vunpack.c.h.b16 %v224
  %v1077 = vunpack.c.l.b16 %v225
  %v1078 = vunpack.c.h.b16 %v225
  %v1079 = vunpack.c.l.b16 %v226
  %v1080 = vunpack.c.h.b16 %v226
  %v1081 = vunpack.c.l.b16 %v227
  %v1082 = vunpack.c.h.b16 %v227
  %v1083 = vunpack.c.l.b16 %v228
  %v1084 = vunpack.c.h.b16 %v228
  %v1085 = vunpack.c.l.b16 %v229
  %v1086 = vunpack.c.h.b16 %v229
  %v1087 = vunpack.c.l.b16 %v230
  %v1088 = vunpack.c.h.b16 %v230
  %v1089 = vunpack.c.l.b16 %v231
  %v1090 = vunpack.c.h.b16 %v231
  %v1091 = vunpack.c.l.b16 %v232
  %v1092 = vunpack.c.h.b16 %v232
  %v1093 = vunpack.c.l.b16 %v233
  %v1094 = vunpack.c.h.b16 %v233
  %v1095 = vunpack.c.l.b16 %v234
  %v1096 = vunpack.c.h.b16 %v234
  %v1097 = vunpack.c.l.b16 %v235
  %v1098 = vunpack.c.h.b16 %v235
  %v1099 = vunpack.c.l.b16 %v236
  %v1100 = vunpack.c.h.b16 %v236
  %v1101 = vunpack.c.l.b16 %v237
  %v1102 = vunpack.c.h.b16 %v237
  %v1103 = vunpack.c.l.b16 %v238
  %v1104 = vunpack.c.h.b16 %v238
  %v1105 = vunpack.c.l.b16 %v239
  %v1106 = vunpack.c.h.b16 %v239
  %v1107 = vunpack.c.l.b16 %v240
  %v1108 = vunpack.c.h.b16 %v240
  %v1109 = vunpack.c.l.b16 %v241
  %v1110 = vunpack.c.h.b16 %v241
  %v1111 = vunpack.c.l.b16 %v242
  %v1112 = vunpack.c.h.b16 %v242
  %v1113 = vunpack.c.l.b16 %v243
  %v1114 = vunpack.c.h.b16 %v243
  %v1115 = vunpack.c.l.b16 %v244
  %v1116 = vunpack.c.h.b16 %v244
  %v1117 = vunpack.c.l.b16 %v245
  %v1118 = vunpack.c.h.b16 %v245
  %v1119 = vunpack.c.l.b16 %v246
  %v1120 = vunpack.c.h.b16 %v246
  %v1121 = vunpack.c.l.b16 %v247
  %v1122 = vunpack.c.h.b16 %v247
  %v1123 = vunpack.c.l.b16 %v248
  %v1124 = vunpack.c.h.b16 %v248
  %v1125 = vunpack.c.l.b16 %v249
  %v1126 = vunpack.c.h.b16 %v249
  %v1127 = vunpack.c.l.b16 %v250
  %v1128 = vunpack.c.h.b16 %v250
  %v1129 = vunpack.c.l.b16 %v251
  %v1130 = vunpack.c.h.b16 %v251
  %v1131 = vunpack.c.l.b16 %v252
  %v1132 = vunpack.c.h.b16 %v252
  %v1133 = vunpack.c.l.b16 %v253
  %v1134 = vunpack.c.h.b16 %v253
  %v1135 = vunpack.c.l.b16 %v254
  %v1136 = vunpack.c.h.b16 %v254
  %v1137 = vunpack.c.l.b16 %v255
  %v1138 = vunpack.c.h.b16 %v255
  %v1139 = vunpack.c.l.b16 %v256
  %v1140 = vunpack.c.h.b16 %v256
  %v1141 = vunpack.c.l.b16 %v257
  %v1142 = vunpack.c.h.b16 %v257
  %v1143 = vunpack.c.l.b16 %v258
  %v1144 = vunpack.c.h.b16 %v258
  %v1145 = vunpack.c.l.b16 %v259
  %v1146 = vunpack.c.h.b16 %v259
  %v1147 = vunpack.c.l.b16 %v260
  %v1148 = vunpack.c.h.b16 %v260
  %v1149 = vunpack.c.l.b16 %v261
  %v1150 = vunpack.c.h.b16 %v261
  %v1151 = vunpack.c.l.b16 %v262
  %v1152 = vunpack.c.h.b16 %v262
  %v1153 = vunpack.c.l.b16 %v263
  %v1154 = vunpack.c.h.b16 %v263
  %v1155 = vunpack.c.l.b16 %v264
  %v1156 = vunpack.c.h.b16 %v264
  %v1157 = vunpack.c.l.b16 %v265
  %v1158 = vunpack.c.h.b16 %v265
  %v1159 = vunpack.c.l.b16 %v266
  %v1160 = vunpack.c.h.b16 %v266
  %v1161 = vunpack.c.l.b16 %v267
  %v1162 = vunpack.c.h.b16 %v267
  %v1163 = vunpack.c.l.b16 %v268
  %v1164 = vunpack.c.h.b16 %v268
  %v1165 = vunpack.c.l.b16 %v269
  %v1166 = vunpack.c.h.b16 %v269
  %v1167 = vunpack.c.l.b16 %v270
  %v1168 = vunpack.c.h.b16 %v270
  %v1169 = vunpack.c.l.b16 %v271
  %v1170 = vunpack.c.h.b16 %v271
  %v1171 = vunpack.c.l.b16 %v272
  %v1172 = vunpack.c.h.b16 %v272
  %v1173 = vunpack.c.l.b16 %v273
  %v1174 = vunpack.c.h.b16 %v273
  %v1175 = vunpack.c.l.b16 %v274
  %v1176 = vunpack.c.h.b16 %v274
  %v1177 = vunpack.c.l.b16 %v275
  %v1178 = vunpack.c.h.b16 %v275
  %v1179 = vunpack.c.l.b16 %v276
  %v1180 = vunpack.c.h.b16 %v276
  %v1181 = vunpack.c.l.b16 %v277
  %v1182 = vunpack.c.h.b16 %v277
  %v1183 = vunpack.c.l.b16 %v278
  %v1184 = vunpack.c.h.b16 %v278
  %v1185 = vunpack.c.l.b16 %v279
  %v1186 = vunpack.c.h.b16 %v279
  %v1187 = vunpack.c.l.b16 %v280
  %v1188 = vunpack.c.h.b16 %v280
  %v1189 = vunpack.c.l.b16 %v281
  %v1190 = vunpack.c.h.b16 %v281
  %v1191 = vunpack.c.l.b16 %v282
  %v1192 = vunpack.c.h.b16 %v282
  %v1193 = vunpack.c.l.b16 %v283
  %v1194 = vunpack.c.h.b16 %v283
  %v1195 = vunpack.c.l.b16 %v284
  %v1196 = vunpack.c.h.b16 %v284
  %v1197 = vunpack.c.l.b16 %v285
  %v1198 = vunpack.c.h.b16 %v285
  %v1199 = vunpack.c.l.b16 %v286
  %v1200 = vunpack.c.h.b16 %v286
  %v1201 = vunpack.c.l.b16 %v287
  %v1202 = vunpack.c.h.b16 %v287
  %v1203 = vunpack.c.l.b16 %v288
  %v1204 = vunpack.c.h.b16 %v288
  %v1205 = vunpack.c.l.b16 %v289
  %v1206 = vunpack.c.h.b16 %v289
  %v1207 = vunpack.c.l.b16 %v290
  %v1208 = vunpack.c.h.b16 %v290
  %v1209 = vunpack.c.l.b16 %v291
  %v1210 = vunpack.c.h.b16 %v291
  %v1211 = vunpack.c.l.b16 %v292
  %v1212 = vunpack.c.h.b16 %v292
  %v1213 = vunpack.c.l.b16 %v293
  %v1214 = vunpack.c.h.b16 %v293
  %v1215 = vunpack.c.l.b16 %v294
  %v1216 = vunpack.c.h.b16 %v294
  %v1217 = vunpack.c.l.b16 %v295
  %v1218 = vunpack.c.h.b16 %v295
  %v1219 = vunpack.c.l.b16 %v296
  %v1220 = vunpack.c.h.b16 %v296
  %v1221 = vunpack.c.l.b16 %v297
  %v1222 = vunpack.c.h.b16 %v297
  %v1223 = vunpack.c.l.b16 %v298
  %v1224 = vunpack.c.h.b16 %v298
  %v1225 = vunpack.c.l.b16 %v299
  %v1226 = vunpack.c.h.b16 %v299
  %v1227 = vunpack.c.l.b16 %v300
  %v1228 = vunpack.c.h.b16 %v300
  %v1229 = vpack.c.b16 %v719, %v717
  %v1230 = vpack.c.b16 %v720, %v718
  %v1231 = vpack.c.b16 %v723, %v721
  %v1232 = vpack.c.b16 %v724, %v722
  %v1233 = vpack.c.b16 %v727, %v725
  %v1234 = vpack.c.b16 %v728, %v726
  %v1235 = vpack.c.b16 %v731, %v729
  %v1236 = vpack.c.b16 %v732, %v730
  %v1237 = vpack.c.b16 %v735, %v733
  %v1238 = vpack.c.b16 %v736, %v734
  %v1239 = vpack.c.b16 %v739, %v737
  %v1240 = vpack.c.b16 %v740, %v738
  %v1241 = vpack.c.b16 %v743, %v741
  %v1242 = vpack.c.b16 %v744, %v742
  %v1243 = vpack.c.b16 %v747, %v745
  %v1244 = vpack.c.b16 %v748, %v746
  %v1245 = vpack.c.b16 %v751, %v749
  %v1246 = vpack.c.b16 %v752, %v750
  %v1247 = vpack.c.b16 %v755, %v753
  %v1248 = vpack.c.b16 %v756, %v754
  %v1249 = vpack.c.b16 %v759, %v757
  %v1250 = vpack.c.b16 %v760, %v758
  %v1251 = vpack.c.b16 %v763, %v761
  %v1252 = vpack.c.b16 %v764, %v762
  %v1253 = vpack.c.b16 %v767, %v765
  %v1254 = vpack.c.b16 %v768, %v766
  %v1255 = vpack.c.b16 %v771, %v769
  %v1256 = vpack.c.b16 %v772, %v770
  %v1257 = vpack.c.b16 %v775, %v773
  %v1258 = vpack.c.b16 %v776, %v774
  %v1259 = vpack.c.b16 %v779, %v777
  %v1260 = vpack.c.b16 %v780, %v778
  %v1261 = vpack.c.b16 %v783, %v781
  %v1262 = vpack.c.b16 %v784, %v782
  %v1263 = vpack.c.b16 %v787, %v785
  %v1264 = vpack.c.b16 %v788, %v786
  %v1265 = vpack.c.b16 %v791, %v789
  %v1266 = vpack.c.b16 %v792, %v790
  %v1267 = vpack.c.b16 %v795, %v793
  %v1268 = vpack.c.b16 %v796, %v794
  %v1269 = vpack.c.b16 %v799, %v797
  %v1270 = vpack.c.b16 %v800, %v798
  %v1271 = vpack.c.b16 %v803, %v801
  %v1272 = vpack.c.b16 %v804, %v802
  %v1273 = vpack.c.b16 %v807, %v805
  %v1274 = vpack.c.b16 %v808, %v806
  %v1275 = vpack.c.b16 %v811, %v809
  %v1276 = vpack.c.b16 %v812, %v810
  %v1277 = vpack.c.b16 %v815, %v813
  %v1278 = vpack.c.b16 %v816, %v814
  %v1279 = vpack.c.b16 %v819, %v817
  %v1280 = vpack.c.b16 %v820, %v818
  %v1281 = vpack.c.b16 %v823, %v821
  %v1282 = vpack.c.b16 %v824, %v822
  %v1283 = vpack.c.b16 %v827, %v825
  %v1284 = vpack.c.b16 %v828, %v826
  %v1285 = vpack.c.b16 %v831, %v829
  %v1286 = vpack.c.b16 %v832, %v830
  %v1287 = vpack.c.b16 %v835, %v833
  %v1288 = vpack.c.b16 %v836, %v834
  %v1289 = vpack.c.b16 %v839, %v837
  %v1290 = vpack.c.b16 %v840, %v838
  %v1291 = vpack.c.b16 %v843, %v841
  %v1292 = vpack.c.b16 %v844, %v842
  %v1293 = vpack.c.b16 %v847, %v845
  %v1294 = vpack.c.b16 %v848, %v846
  %v1295 = vpack.c.b16 %v851, %v849
  %v1296 = vpack.c.b16 %v852, %v850
  %v1297 = vpack.c.b16 %v855, %v853
  %v1298 = vpack.c.b16 %v856, %v854
  %v1299 = vpack.c.b16 %v859, %v857
  %v1300 = vpack.c.b16 %v860, %v858
  %v1301 = vpack.c.b16 %v863, %v861
  %v1302 = vpack.c.b16 %v864, %v862
  %v1303 = vpack.c.b16 %v867, %v865
  %v1304 = vpack.c.b16 %v868, %v866
  %v1305 = vpack.c.b16 %v871, %v869
  %v1306 = vpack.c.b16 %v872, %v870
  %v1307 = vpack.c.b16 %v875, %v873
  %v1308 = vpack.c.b16 %v876, %v874
  %v1309 = vpack.c.b16 %v879, %v877
  %v1310 = vpack.c.b16 %v880, %v878
  %v1311 = vpack.c.b16 %v883, %v881
  %v1312 = vpack.c.b16 %v884, %v882
  %v1313 = vpack.c.b16 %v887, %v885
  %v1314 = vpack.c.b16 %v888, %v886
  %v1315 = vpack.c.b16 %v891, %v889
  %v1316 = vpack.c.b16 %v892, %v890
  %v1317 = vpack.c.b16 %v895, %v893
  %v1318 = vpack.c.b16 %v896, %v894
  %v1319 = vpack.c.b16 %v899, %v897
  %v1320 = vpack.c.b16 %v900, %v898
  %v1321 = vpack.c.b16 %v903, %v901
  %v1322 = vpack.c.b16 %v904, %v902
  %v1323 = vpack.c.b16 %v907, %v905
  %v1324 = vpack.c.b16 %v908, %v906
  %v1325 = vpack.c.b16 %v911, %v909
  %v1326 = vpack.c.b16 %v912, %v910
  %v1327 = vpack.c.b16 %v915, %v913
  %v1328 = vpack.c.b16 %v916, %v914
  %v1329 = vpack.c.b16 %v919, %v917
  %v1330 = vpack.c.b16 %v920, %v918
  %v1331 = vpack.c.b16 %v923, %v921
  %v1332 = vpack.c.b16 %v924, %v922
  %v1333 = vpack.c.b16 %v927, %v925
  %v1334 = vpack.c.b16 %v928, %v926
  %v1335 = vpack.c.b16 %v931, %v929
  %v1336 = vpack.c.b16 %v932, %v930
  %v1337 = vpack.c.b16 %v935, %v933
  %v1338 = vpack.c.b16 %v936, %v934
  %v1339 = vpack.c.b16 %v939, %v937
  %v1340 = vpack.c.b16 %v940, %v938
  %v1341 = vpack.c.b16 %v943, %v941
  %v1342 = vpack.c.b16 %v944, %v942
  %v1343 = vpack.c.b16 %v947, %v945
  %v1344 = vpack.c.b16 %v948, %v946
  %v1345 = vpack.c.b16 %v951, %v949
  %v1346 = vpack.c.b16 %v952, %v950
  %v1347 = vpack.c.b16 %v955, %v953
  %v1348 = vpack.c.b16 %v956, %v954
  %v1349 = vpack.c.b16 %v959, %v957
  %v1350 = vpack.c.b16 %v960, %v958
  %v1351 = vpack.c.b16 %v963, %v961
  %v1352 = vpack.c.b16 %v964, %v962
  %v1353 = vpack.c.b16 %v967, %v965
  %v1354 = vpack.c.b16 %v968, %v966
  %v1355 = vpack.c.b16 %v971, %v969
  %v1356 = vpack.c.b16 %v972, %v970
  %v1357 = vpack.c.b16 %v975, %v973
  %v1358 = vpack.c.b16 %v976, %v974
  %v1359 = vpack.c.b16 %v979, %v977
  %v1360 = vpack.c.b16 %v980, %v978
  %v1361 = vpack.c.b16 %v983, %v981
  %v1362 = vpack.c.b16 %v984, %v982
  %v1363 = vpack.c.b16 %v987, %v985
  %v1364 = vpack.c.b16 %v988, %v986
  %v1365 = vpack.c.b16 %v991, %v989
  %v1366 = vpack.c.b16 %v992, %v990
  %v1367 = vpack.c.b16 %v995, %v993
  %v1368 = vpack.c.b16 %v996, %v994
  %v1369 = vpack.c.b16 %v999, %v997
  %v1370 = vpack.c.b16 %v1000, %v998
  %v1371 = vpack.c.b16 %v1003, %v1001
  %v1372 = vpack.c.b16 %v1004, %v1002
  %v1373 = vpack.c.b16 %v1007, %v1005
  %v1374 = vpack.c.b16 %v1008, %v1006
  %v1375 = vpack.c.b16 %v1011, %v1009
  %v1376 = vpack.c.b16 %v1012, %v1010
  %v1377 = vpack.c.b16 %v1015, %v1013
  %v1378 = vpack.c.b16 %v1016, %v1014
  %v1379 = vpack.c.b16 %v1019, %v1017
  %v1380 = vpack.c.b16 %v1020, %v1018
  %v1381 = vpack.c.b16 %v1023, %v1021
  %v1382 = vpack.c.b16 %v1024, %v1022
  %v1383 = vpack.c.b16 %v1027, %v1025
  %v1384 = vpack.c.b16 %v1028, %v1026
  %v1385 = vpack.c.b16 %v1031, %v1029
  %v1386 = vpack.c.b16 %v1032, %v1030
  %v1387 = vpack.c.b16 %v1035, %v1033
  %v1388 = vpack.c.b16 %v1036, %v1034
  %v1389 = vpack.c.b16 %v1039, %v1037
  %v1390 = vpack.c.b16 %v1040, %v1038
  %v1391 = vpack.c.b16 %v1043, %v1041
  %v1392 = vpack.c.b16 %v1044, %v1042
  %v1393 = vpack.c.b16 %v1047, %v1045
  %v1394 = vpack.c.b16 %v1048, %v1046
  %v1395 = vpack.c.b16 %v1051, %v1049
  %v1396 = vpack.c.b16 %v1052, %v1050
  %v1397 = vpack.c.b16 %v1055, %v1053
  %v1398 = vpack.c.b16 %v1056, %v1054
  %v1399 = vpack.c.b16 %v1059, %v1057
  %v1400 = vpack.c.b16 %v1060, %v1058
  %v1401 = vpack.c.b16 %v1063, %v1061
  %v1402 = vpack.c.b16 %v1064, %v1062
  %v1403 = vpack.c.b16 %v1067, %v1065
  %v1404 = vpack.c.b16 %v1068, %v1066
  %v1405 = vpack.c.b16 %v1071, %v1069
  %v1406 = vpack.c.b16 %v1072, %v1070
  %v1407 = vpack.c.b16 %v1075, %v1073
  %v1408 = vpack.c.b16 %v1076, %v1074
  %v1409 = vpack.c.b16 %v1079, %v1077
  %v1410 = vpack.c.b16 %v1080, %v1078
  %v1411 = vpack.c.b16 %v1083, %v1081
  %v1412 = vpack.c.b16 %v1084, %v1082
  %v1413 = vpack.c.b16 %v1087, %v1085
  %v1414 = vpack.c.b16 %v1088, %v1086
  %v1415 = vpack.c.b16 %v1091, %v1089
  %v1416 = vpack.c.b16 %v1092, %v1090
  %v1417 = vpack.c.b16 %v1095, %v1093
  %v1418 = vpack.c.b16 %v1096, %v1094
  %v1419 = vpack.c.b16 %v1099, %v1097
  %v1420 = vpack.c.b16 %v1100, %v1098
  %v1421 = vpack.c.b16 %v1103, %v1101
  %v1422 = vpack.c.b16 %v1104, %v1102
  %v1423 = vpack.c.b16 %v1107, %v1105
  %v1424 = vpack.c.b16 %v1108, %v1106
  %v1425 = vpack.c.b16 %v1111, %v1109
  %v1426 = vpack.c.b16 %v1112, %v1110
  %v1427 = vpack.c.b16 %v1115, %v1113
  %v1428 = vpack.c.b16 %v1116, %v1114
  %v1429 = vpack.c.b16 %v1119, %v1117
  %v1430 = vpack.c.b16 %v1120, %v1118
  %v1431 = vpack.c.b16 %v1123, %v1121
  %v1432 = vpack.c.b16 %v1124, %v1122
  %v1433 = vpack.c.b16 %v1127, %v1125
  %v1434 = vpack.c.b16 %v1128, %v1126
  %v1435 = vpack.c.b16 %v1131, %v1129
  %v1436 = vpack.c.b16 %v1132, %v1130
  %v1437 = vpack.c.b16 %v1135, %v1133
  %v1438 = vpack.c.b16 %v1136, %v1134
  %v1439 = vpack.c.b16 %v1139, %v1137
  %v1440 = vpack.c.b16 %v1140, %v1138
  %v1441 = vpack.c.b16 %v1143, %v1141
  %v1442 = vpack.c.b16 %v1144, %v1142
  %v1443 = vpack.c.b16 %v1147, %v1145
  %v1444 = vpack.c.b16 %v1148, %v1146
  %v1445 = vpack.c.b16 %v1151, %v1149
  %v1446 = vpack.c.b16 %v1152, %v1150
  %v1447 = vpack.c.b16 %v1155, %v1153
  %v1448 = vpack.c.b16 %v1156, %v1154
  %v1449 = vpack.c.b16 %v1159, %v1157
  %v1450 = vpack.c.b16 %v1160, %v1158
  %v1451 = vpack.c.b16 %v1163, %v1161
  %v1452 = vpack.c.b16 %v1164, %v1162
  %v1453 = vpack.c.b16 %v1167, %v1165
  %v1454 = vpack.c.b16 %v1168, %v1166
  %v1455 = vpack.c.b16 %v1171, %v1169
  %v1456 = vpack.c.b16 %v1172, %v1170
  %v1457 = vpack.c.b16 %v1175, %v1173
  %v1458 = vpack.c.b16 %v1176, %v1174
  %v1459 = vpack.c.b16 %v1179, %v1177
  %v1460 = vpack.c.b16 %v1180, %v1178
  %v1461 = vpack.c.b16 %v1183, %v1181
  %v1462 = vpack.c.b16 %v1184, %v1182
  %v1463 = vpack.c.b16 %v1187, %v1185
  %v1464 = vpack.c.b16 %v1188, %v1186
  %v1465 = vpack.c.b16 %v1191, %v1189
  %v1466 = vpack.c.b16 %v1192, %v1190
  %v1467 = vpack.c.b16 %v1195, %v1193
  %v1468 = vpack.c.b16 %v1196, %v1194
  %v1469 = vpack.c.b16 %v1199, %v1197
  %v1470 = vpack.c.b16 %v1200, %v1198
  %v1471 = vpack.c.b16 %v1203, %v1201
  %v1472 = vpack.c.b16 %v1204, %v1202
  %v1473 = vpack.c.b16 %v1207, %v1205
  %v1474 = vpack.c.b16 %v1208, %v1206
  %v1475 = vpack.c.b16 %v1211, %v1209
  %v1476 = vpack.c.b16 %v1212, %v1210
  %v1477 = vpack.c.b16 %v1215, %v1213
  %v1478 = vpack.c.b16 %v1216, %v1214
  %v1479 = vpack.c.b16 %v1219, %v1217
  %v1480 = vpack.c.b16 %v1220, %v1218
  %v1481 = vpack.c.b16 %v1223, %v1221
  %v1482 = vpack.c.b16 %v1224, %v1222
  %v1483 = vpack.c.b16 %v1227, %v1225
  %v1484 = vpack.c.b16 %v1228, %v1226
  %1741 = vmatprep.subr.bf16.mxu0 %v1230
  %1742 = vmatpush1.bf16.msra.mxu0 %v1229
  %1743 = vmatprep.subr.bf16.mxu0 %v1232
  %1744 = vmatpush1.bf16.msra.mxu0 %v1231
  %1745 = vmatprep.subr.bf16.mxu0 %v1234
  %1746 = vmatpush1.bf16.msra.mxu0 %v1233
  %1747 = vmatprep.subr.bf16.mxu0 %v1236
  %1748 = vmatpush1.bf16.msra.mxu0 %v1235
  %1749 = vmatprep.subr.bf16.mxu0 %v1238
  %1750 = vmatpush1.bf16.msra.mxu0 %v1237
  %1751 = vmatprep.subr.bf16.mxu0 %v1240
  %1752 = vmatpush1.bf16.msra.mxu0 %v1239
  %1753 = vmatprep.subr.bf16.mxu0 %v1242
  %1754 = vmatpush1.bf16.msra.mxu0 %v1241
  %1755 = vmatprep.subr.bf16.mxu0 %v1244
  %1756 = vmatpush1.bf16.msra.mxu0 %v1243
  %1757 = vmatprep.subr.bf16.mxu0 %v1246
  %1758 = vmatpush1.bf16.msra.mxu0 %v1245
  %1759 = vmatprep.subr.bf16.mxu0 %v1248
  %1760 = vmatpush1.bf16.msra.mxu0 %v1247
  %1761 = vmatprep.subr.bf16.mxu0 %v1250
  %1762 = vmatpush1.bf16.msra.mxu0 %v1249
  %1763 = vmatprep.subr.bf16.mxu0 %v1252
  %1764 = vmatpush1.bf16.msra.mxu0 %v1251
  %1765 = vmatprep.subr.bf16.mxu0 %v1254
  %1766 = vmatpush1.bf16.msra.mxu0 %v1253
  %1767 = vmatprep.subr.bf16.mxu0 %v1256
  %1768 = vmatpush1.bf16.msra.mxu0 %v1255
  %1769 = vmatprep.subr.bf16.mxu0 %v1258
  %1770 = vmatpush1.bf16.msra.mxu0 %v1257
  %1771 = vmatprep.subr.bf16.mxu0 %v1260
  %1772 = vmatpush1.bf16.msra.mxu0 %v1259
  %1773 = vmatprep.mubr.bf16.mxu0 %v398
  %1774 = vmatmul.mubr.bf16.gmra.mrb[0].mxu0 %v397
  %v1775 = vpop.f32.mrb[0].mxu0
  %v1776 = vadd.f32 0.0, %v1775
  %v1777 = vpop.f32.mrb[0].mxu0
  %v1778 = vadd.f32 0.0, %v1777
  %v1779 = vpop.f32.mrb[0].mxu0
  %v1780 = vadd.f32 0.0, %v1779
  %v1781 = vpop.f32.mrb[0].mxu0
  %v1782 = vadd.f32 0.0, %v1781
  %1783 = vmatprep.mubr.bf16.mxu0 %v414
  %1784 = vmatmul.mubr.bf16.gmra.mrb[0].mxu0 %v413
  %v1785 = vpop.f32.mrb[0].mxu0
  %v1786 = vadd.f32 0.0, %v1785
  %v1787 = vpop.f32.mrb[0].mxu0
  %v1788 = vadd.f32 0.0, %v1787
  %v1789 = vpop.f32.mrb[0].mxu0
  %v1790 = vadd.f32 0.0, %v1789
  %v1791 = vpop.f32.mrb[0].mxu0
  %v1792 = vadd.f32 0.0, %v1791
  %1793 = vdwg.mxu0
  %1794 = vmatprep.subr.bf16.mxu0 %v1262
  %1795 = vmatpush1.bf16.msra.mxu0 %v1261
  %1796 = vmatprep.subr.bf16.mxu0 %v1264
  %1797 = vmatpush1.bf16.msra.mxu0 %v1263
  %1798 = vmatprep.subr.bf16.mxu0 %v1266
  %1799 = vmatpush1.bf16.msra.mxu0 %v1265
  %1800 = vmatprep.subr.bf16.mxu0 %v1268
  %1801 = vmatpush1.bf16.msra.mxu0 %v1267
  %1802 = vmatprep.subr.bf16.mxu0 %v1270
  %1803 = vmatpush1.bf16.msra.mxu0 %v1269
  %1804 = vmatprep.subr.bf16.mxu0 %v1272
  %1805 = vmatpush1.bf16.msra.mxu0 %v1271
  %1806 = vmatprep.subr.bf16.mxu0 %v1274
  %1807 = vmatpush1.bf16.msra.mxu0 %v1273
  %1808 = vmatprep.subr.bf16.mxu0 %v1276
  %1809 = vmatpush1.bf16.msra.mxu0 %v1275
  %1810 = vmatprep.subr.bf16.mxu0 %v1278
  %1811 = vmatpush1.bf16.msra.mxu0 %v1277
  %1812 = vmatprep.subr.bf16.mxu0 %v1280
  %1813 = vmatpush1.bf16.msra.mxu0 %v1279
  %1814 = vmatprep.subr.bf16.mxu0 %v1282
  %1815 = vmatpush1.bf16.msra.mxu0 %v1281
  %1816 = vmatprep.subr.bf16.mxu0 %v1284
  %1817 = vmatpush1.bf16.msra.mxu0 %v1283
  %1818 = vmatprep.subr.bf16.mxu0 %v1286
  %1819 = vmatpush1.bf16.msra.mxu0 %v1285
  %1820 = vmatprep.subr.bf16.mxu0 %v1288
  %1821 = vmatpush1.bf16.msra.mxu0 %v1287
  %1822 = vmatprep.subr.bf16.mxu0 %v1290
  %1823 = vmatpush1.bf16.msra.mxu0 %v1289
  %1824 = vmatprep.subr.bf16.mxu0 %v1292
  %1825 = vmatpush1.bf16.msra.mxu0 %v1291
  %1826 = vmatprep.mubr.bf16.mxu0 %v400
  %1827 = vmatmul.mubr.bf16.gmra.mrb[0].mxu0 %v399
  %v1828 = vpop.f32.mrb[0].mxu0
  %v1829 = vadd.f32 %v1776, %v1828
  %v1830 = vpop.f32.mrb[0].mxu0
  %v1831 = vadd.f32 %v1778, %v1830
  %v1832 = vpop.f32.mrb[0].mxu0
  %v1833 = vadd.f32 %v1780, %v1832
  %v1834 = vpop.f32.mrb[0].mxu0
  %v1835 = vadd.f32 %v1782, %v1834
  %1836 = vmatprep.mubr.bf16.mxu0 %v416
  %1837 = vmatmul.mubr.bf16.gmra.mrb[0].mxu0 %v415
  %v1838 = vpop.f32.mrb[0].mxu0
  %v1839 = vadd.f32 %v1786, %v1838
  %v1840 = vpop.f32.mrb[0].mxu0
  %v1841 = vadd.f32 %v1788, %v1840
  %v1842 = vpop.f32.mrb[0].mxu0
  %v1843 = vadd.f32 %v1790, %v1842
  %v1844 = vpop.f32.mrb[0].mxu0
  %v1845 = vadd.f32 %v1792, %v1844
  %1846 = vdwg.mxu0
  %1847 = vmatprep.subr.bf16.mxu0 %v1294
  %1848 = vmatpush1.bf16.msra.mxu0 %v1293
  %1849 = vmatprep.subr.bf16.mxu0 %v1296
  %1850 = vmatpush1.bf16.msra.mxu0 %v1295
  %1851 = vmatprep.subr.bf16.mxu0 %v1298
  %1852 = vmatpush1.bf16.msra.mxu0 %v1297
  %1853 = vmatprep.subr.bf16.mxu0 %v1300
  %1854 = vmatpush1.bf16.msra.mxu0 %v1299
  %1855 = vmatprep.subr.bf16.mxu0 %v1302
  %1856 = vmatpush1.bf16.msra.mxu0 %v1301
  %1857 = vmatprep.subr.bf16.mxu0 %v1304
  %1858 = vmatpush1.bf16.msra.mxu0 %v1303
  %1859 = vmatprep.subr.bf16.mxu0 %v1306
  %1860 = vmatpush1.bf16.msra.mxu0 %v1305
  %1861 = vmatprep.subr.bf16.mxu0 %v1308
  %1862 = vmatpush1.bf16.msra.mxu0 %v1307
  %1863 = vmatprep.subr.bf16.mxu0 %v1310
  %1864 = vmatpush1.bf16.msra.mxu0 %v1309
  %1865 = vmatprep.subr.bf16.mxu0 %v1312
  %1866 = vmatpush1.bf16.msra.mxu0 %v1311
  %1867 = vmatprep.subr.bf16.mxu0 %v1314
  %1868 = vmatpush1.bf16.msra.mxu0 %v1313
  %1869 = vmatprep.subr.bf16.mxu0 %v1316
  %1870 = vmatpush1.bf16.msra.mxu0 %v1315
  %1871 = vmatprep.subr.bf16.mxu0 %v1318
  %1872 = vmatpush1.bf16.msra.mxu0 %v1317
  %1873 = vmatprep.subr.bf16.mxu0 %v1320
  %1874 = vmatpush1.bf16.msra.mxu0 %v1319
  %1875 = vmatprep.subr.bf16.mxu0 %v1322
  %1876 = vmatpush1.bf16.msra.mxu0 %v1321
  %1877 = vmatprep.subr.bf16.mxu0 %v1324
  %1878 = vmatpush1.bf16.msra.mxu0 %v1323
  %1879 = vmatprep.mubr.bf16.mxu0 %v402
  %1880 = vmatmul.mubr.bf16.gmra.mrb[0].mxu0 %v401
  %v1881 = vpop.f32.mrb[0].mxu0
  %v1882 = vadd.f32 %v1829, %v1881
  %v1883 = vpop.f32.mrb[0].mxu0
  %v1884 = vadd.f32 %v1831, %v1883
  %v1885 = vpop.f32.mrb[0].mxu0
  %v1886 = vadd.f32 %v1833, %v1885
  %v1887 = vpop.f32.mrb[0].mxu0
  %v1888 = vadd.f32 %v1835, %v1887
  %1889 = vmatprep.mubr.bf16.mxu0 %v418
  %1890 = vmatmul.mubr.bf16.gmra.mrb[0].mxu0 %v417
  %v1891 = vpop.f32.mrb[0].mxu0
  %v1892 = vadd.f32 %v1839, %v1891
  %v1893 = vpop.f32.mrb[0].mxu0
  %v1894 = vadd.f32 %v1841, %v1893
  %v1895 = vpop.f32.mrb[0].mxu0
  %v1896 = vadd.f32 %v1843, %v1895
  %v1897 = vpop.f32.mrb[0].mxu0
  %v1898 = vadd.f32 %v1845, %v1897
  %1899 = vdwg.mxu0
  %1900 = vmatprep.subr.bf16.mxu0 %v1326
  %1901 = vmatpush1.bf16.msra.mxu0 %v1325
  %1902 = vmatprep.subr.bf16.mxu0 %v1328
  %1903 = vmatpush1.bf16.msra.mxu0 %v1327
  %1904 = vmatprep.subr.bf16.mxu0 %v1330
  %1905 = vmatpush1.bf16.msra.mxu0 %v1329
  %1906 = vmatprep.subr.bf16.mxu0 %v1332
  %1907 = vmatpush1.bf16.msra.mxu0 %v1331
  %1908 = vmatprep.subr.bf16.mxu0 %v1334
  %1909 = vmatpush1.bf16.msra.mxu0 %v1333
  %1910 = vmatprep.subr.bf16.mxu0 %v1336
  %1911 = vmatpush1.bf16.msra.mxu0 %v1335
  %1912 = vmatprep.subr.bf16.mxu0 %v1338
  %1913 = vmatpush1.bf16.msra.mxu0 %v1337
  %1914 = vmatprep.subr.bf16.mxu0 %v1340
  %1915 = vmatpush1.bf16.msra.mxu0 %v1339
  %1916 = vmatprep.subr.bf16.mxu0 %v1342
  %1917 = vmatpush1.bf16.msra.mxu0 %v1341
  %1918 = vmatprep.subr.bf16.mxu0 %v1344
  %1919 = vmatpush1.bf16.msra.mxu0 %v1343
  %1920 = vmatprep.subr.bf16.mxu0 %v1346
  %1921 = vmatpush1.bf16.msra.mxu0 %v1345
  %1922 = vmatprep.subr.bf16.mxu0 %v1348
  %1923 = vmatpush1.bf16.msra.mxu0 %v1347
  %1924 = vmatprep.subr.bf16.mxu0 %v1350
  %1925 = vmatpush1.bf16.msra.mxu0 %v1349
  %1926 = vmatprep.subr.bf16.mxu0 %v1352
  %1927 = vmatpush1.bf16.msra.mxu0 %v1351
  %1928 = vmatprep.subr.bf16.mxu0 %v1354
  %1929 = vmatpush1.bf16.msra.mxu0 %v1353
  %1930 = vmatprep.subr.bf16.mxu0 %v1356
  %1931 = vmatpush1.bf16.msra.mxu0 %v1355
  %1932 = vmatprep.mubr.bf16.mxu0 %v404
  %1933 = vmatmul.mubr.bf16.gmra.mrb[0].mxu0 %v403
  %v1934 = vpop.f32.mrb[0].mxu0
  %v1935 = vadd.f32 %v1882, %v1934
  %v1936 = vpop.f32.mrb[0].mxu0
  %v1937 = vadd.f32 %v1884, %v1936
  %v1938 = vpop.f32.mrb[0].mxu0
  %v1939 = vadd.f32 %v1886, %v1938
  %v1940 = vpop.f32.mrb[0].mxu0
  %v1941 = vadd.f32 %v1888, %v1940
  %1942 = vmatprep.mubr.bf16.mxu0 %v420
  %1943 = vmatmul.mubr.bf16.gmra.mrb[0].mxu0 %v419
  %v1944 = vpop.f32.mrb[0].mxu0
  %v1945 = vadd.f32 %v1892, %v1944
  %v1946 = vpop.f32.mrb[0].mxu0
  %v1947 = vadd.f32 %v1894, %v1946
  %v1948 = vpop.f32.mrb[0].mxu0
  %v1949 = vadd.f32 %v1896, %v1948
  %v1950 = vpop.f32.mrb[0].mxu0
  %v1951 = vadd.f32 %v1898, %v1950
  %1952 = vdwg.mxu0
  %1953 = vmatprep.subr.bf16.mxu0 %v1358
  %1954 = vmatpush1.bf16.msra.mxu0 %v1357
  %1955 = vmatprep.subr.bf16.mxu0 %v1360
  %1956 = vmatpush1.bf16.msra.mxu0 %v1359
  %1957 = vmatprep.subr.bf16.mxu0 %v1362
  %1958 = vmatpush1.bf16.msra.mxu0 %v1361
  %1959 = vmatprep.subr.bf16.mxu0 %v1364
  %1960 = vmatpush1.bf16.msra.mxu0 %v1363
  %1961 = vmatprep.subr.bf16.mxu0 %v1366
  %1962 = vmatpush1.bf16.msra.mxu0 %v1365
  %1963 = vmatprep.subr.bf16.mxu0 %v1368
  %1964 = vmatpush1.bf16.msra.mxu0 %v1367
  %1965 = vmatprep.subr.bf16.mxu0 %v1370
  %1966 = vmatpush1.bf16.msra.mxu0 %v1369
  %1967 = vmatprep.subr.bf16.mxu0 %v1372
  %1968 = vmatpush1.bf16.msra.mxu0 %v1371
  %1969 = vmatprep.subr.bf16.mxu0 %v1374
  %1970 = vmatpush1.bf16.msra.mxu0 %v1373
  %1971 = vmatprep.subr.bf16.mxu0 %v1376
  %1972 = vmatpush1.bf16.msra.mxu0 %v1375
  %1973 = vmatprep.subr.bf16.mxu0 %v1378
  %1974 = vmatpush1.bf16.msra.mxu0 %v1377
  %1975 = vmatprep.subr.bf16.mxu0 %v1380
  %1976 = vmatpush1.bf16.msra.mxu0 %v1379
  %1977 = vmatprep.subr.bf16.mxu0 %v1382
  %1978 = vmatpush1.bf16.msra.mxu0 %v1381
  %1979 = vmatprep.subr.bf16.mxu0 %v1384
  %1980 = vmatpush1.bf16.msra.mxu0 %v1383
  %1981 = vmatprep.subr.bf16.mxu0 %v1386
  %1982 = vmatpush1.bf16.msra.mxu0 %v1385
  %1983 = vmatprep.subr.bf16.mxu0 %v1388
  %1984 = vmatpush1.bf16.msra.mxu0 %v1387
  %1985 = vmatprep.mubr.bf16.mxu0 %v406
  %1986 = vmatmul.mubr.bf16.gmra.mrb[0].mxu0 %v405
  %v1987 = vpop.f32.mrb[0].mxu0
  %v1988 = vadd.f32 %v1935, %v1987
  %v1989 = vpop.f32.mrb[0].mxu0
  %v1990 = vadd.f32 %v1937, %v1989
  %v1991 = vpop.f32.mrb[0].mxu0
  %v1992 = vadd.f32 %v1939, %v1991
  %v1993 = vpop.f32.mrb[0].mxu0
  %v1994 = vadd.f32 %v1941, %v1993
  %1995 = vmatprep.mubr.bf16.mxu0 %v422
  %1996 = vmatmul.mubr.bf16.gmra.mrb[0].mxu0 %v421
  %v1997 = vpop.f32.mrb[0].mxu0
  %v1998 = vadd.f32 %v1945, %v1997
  %v1999 = vpop.f32.mrb[0].mxu0
  %v2000 = vadd.f32 %v1947, %v1999
  %v2001 = vpop.f32.mrb[0].mxu0
  %v2002 = vadd.f32 %v1949, %v2001
  %v2003 = vpop.f32.mrb[0].mxu0
  %v2004 = vadd.f32 %v1951, %v2003
  %2005 = vdwg.mxu0
  %2006 = vmatprep.subr.bf16.mxu0 %v1390
  %2007 = vmatpush1.bf16.msra.mxu0 %v1389
  %2008 = vmatprep.subr.bf16.mxu0 %v1392
  %2009 = vmatpush1.bf16.msra.mxu0 %v1391
  %2010 = vmatprep.subr.bf16.mxu0 %v1394
  %2011 = vmatpush1.bf16.msra.mxu0 %v1393
  %2012 = vmatprep.subr.bf16.mxu0 %v1396
  %2013 = vmatpush1.bf16.msra.mxu0 %v1395
  %2014 = vmatprep.subr.bf16.mxu0 %v1398
  %2015 = vmatpush1.bf16.msra.mxu0 %v1397
  %2016 = vmatprep.subr.bf16.mxu0 %v1400
  %2017 = vmatpush1.bf16.msra.mxu0 %v1399
  %2018 = vmatprep.subr.bf16.mxu0 %v1402
  %2019 = vmatpush1.bf16.msra.mxu0 %v1401
  %2020 = vmatprep.subr.bf16.mxu0 %v1404
  %2021 = vmatpush1.bf16.msra.mxu0 %v1403
  %2022 = vmatprep.subr.bf16.mxu0 %v1406
  %2023 = vmatpush1.bf16.msra.mxu0 %v1405
  %2024 = vmatprep.subr.bf16.mxu0 %v1408
  %2025 = vmatpush1.bf16.msra.mxu0 %v1407
  %2026 = vmatprep.subr.bf16.mxu0 %v1410
  %2027 = vmatpush1.bf16.msra.mxu0 %v1409
  %2028 = vmatprep.subr.bf16.mxu0 %v1412
  %2029 = vmatpush1.bf16.msra.mxu0 %v1411
  %2030 = vmatprep.subr.bf16.mxu0 %v1414
  %2031 = vmatpush1.bf16.msra.mxu0 %v1413
  %2032 = vmatprep.subr.bf16.mxu0 %v1416
  %2033 = vmatpush1.bf16.msra.mxu0 %v1415
  %2034 = vmatprep.subr.bf16.mxu0 %v1418
  %2035 = vmatpush1.bf16.msra.mxu0 %v1417
  %2036 = vmatprep.subr.bf16.mxu0 %v1420
  %2037 = vmatpush1.bf16.msra.mxu0 %v1419
  %2038 = vmatprep.mubr.bf16.mxu0 %v408
  %2039 = vmatmul.mubr.bf16.gmra.mrb[0].mxu0 %v407
  %v2040 = vpop.f32.mrb[0].mxu0
  %v2041 = vadd.f32 %v1988, %v2040
  %v2042 = vpop.f32.mrb[0].mxu0
  %v2043 = vadd.f32 %v1990, %v2042
  %v2044 = vpop.f32.mrb[0].mxu0
  %v2045 = vadd.f32 %v1992, %v2044
  %v2046 = vpop.f32.mrb[0].mxu0
  %v2047 = vadd.f32 %v1994, %v2046
  %2048 = vmatprep.mubr.bf16.mxu0 %v424
  %2049 = vmatmul.mubr.bf16.gmra.mrb[0].mxu0 %v423
  %v2050 = vpop.f32.mrb[0].mxu0
  %v2051 = vadd.f32 %v1998, %v2050
  %v2052 = vpop.f32.mrb[0].mxu0
  %v2053 = vadd.f32 %v2000, %v2052
  %v2054 = vpop.f32.mrb[0].mxu0
  %v2055 = vadd.f32 %v2002, %v2054
  %v2056 = vpop.f32.mrb[0].mxu0
  %v2057 = vadd.f32 %v2004, %v2056
  %2058 = vdwg.mxu0
  %2059 = vmatprep.subr.bf16.mxu0 %v1422
  %2060 = vmatpush1.bf16.msra.mxu0 %v1421
  %2061 = vmatprep.subr.bf16.mxu0 %v1424
  %2062 = vmatpush1.bf16.msra.mxu0 %v1423
  %2063 = vmatprep.subr.bf16.mxu0 %v1426
  %2064 = vmatpush1.bf16.msra.mxu0 %v1425
  %2065 = vmatprep.subr.bf16.mxu0 %v1428
  %2066 = vmatpush1.bf16.msra.mxu0 %v1427
  %2067 = vmatprep.subr.bf16.mxu0 %v1430
  %2068 = vmatpush1.bf16.msra.mxu0 %v1429
  %2069 = vmatprep.subr.bf16.mxu0 %v1432
  %2070 = vmatpush1.bf16.msra.mxu0 %v1431
  %2071 = vmatprep.subr.bf16.mxu0 %v1434
  %2072 = vmatpush1.bf16.msra.mxu0 %v1433
  %2073 = vmatprep.subr.bf16.mxu0 %v1436
  %2074 = vmatpush1.bf16.msra.mxu0 %v1435
  %2075 = vmatprep.subr.bf16.mxu0 %v1438
  %2076 = vmatpush1.bf16.msra.mxu0 %v1437
  %2077 = vmatprep.subr.bf16.mxu0 %v1440
  %2078 = vmatpush1.bf16.msra.mxu0 %v1439
  %2079 = vmatprep.subr.bf16.mxu0 %v1442
  %2080 = vmatpush1.bf16.msra.mxu0 %v1441
  %2081 = vmatprep.subr.bf16.mxu0 %v1444
  %2082 = vmatpush1.bf16.msra.mxu0 %v1443
  %2083 = vmatprep.subr.bf16.mxu0 %v1446
  %2084 = vmatpush1.bf16.msra.mxu0 %v1445
  %2085 = vmatprep.subr.bf16.mxu0 %v1448
  %2086 = vmatpush1.bf16.msra.mxu0 %v1447
  %2087 = vmatprep.subr.bf16.mxu0 %v1450
  %2088 = vmatpush1.bf16.msra.mxu0 %v1449
  %2089 = vmatprep.subr.bf16.mxu0 %v1452
  %2090 = vmatpush1.bf16.msra.mxu0 %v1451
  %2091 = vmatprep.mubr.bf16.mxu0 %v410
  %2092 = vmatmul.mubr.bf16.gmra.mrb[0].mxu0 %v409
  %v2093 = vpop.f32.mrb[0].mxu0
  %v2094 = vadd.f32 %v2041, %v2093
  %v2095 = vpop.f32.mrb[0].mxu0
  %v2096 = vadd.f32 %v2043, %v2095
  %v2097 = vpop.f32.mrb[0].mxu0
  %v2098 = vadd.f32 %v2045, %v2097
  %v2099 = vpop.f32.mrb[0].mxu0
  %v2100 = vadd.f32 %v2047, %v2099
  %2101 = vmatprep.mubr.bf16.mxu0 %v426
  %2102 = vmatmul.mubr.bf16.gmra.mrb[0].mxu0 %v425
  %v2103 = vpop.f32.mrb[0].mxu0
  %v2104 = vadd.f32 %v2051, %v2103
  %v2105 = vpop.f32.mrb[0].mxu0
  %v2106 = vadd.f32 %v2053, %v2105
  %v2107 = vpop.f32.mrb[0].mxu0
  %v2108 = vadd.f32 %v2055, %v2107
  %v2109 = vpop.f32.mrb[0].mxu0
  %v2110 = vadd.f32 %v2057, %v2109
  %2111 = vdwg.mxu0
  %2112 = vmatprep.subr.bf16.mxu0 %v1454
  %2113 = vmatpush1.bf16.msra.mxu0 %v1453
  %2114 = vmatprep.subr.bf16.mxu0 %v1456
  %2115 = vmatpush1.bf16.msra.mxu0 %v1455
  %2116 = vmatprep.subr.bf16.mxu0 %v1458
  %2117 = vmatpush1.bf16.msra.mxu0 %v1457
  %2118 = vmatprep.subr.bf16.mxu0 %v1460
  %2119 = vmatpush1.bf16.msra.mxu0 %v1459
  %2120 = vmatprep.subr.bf16.mxu0 %v1462
  %2121 = vmatpush1.bf16.msra.mxu0 %v1461
  %2122 = vmatprep.subr.bf16.mxu0 %v1464
  %2123 = vmatpush1.bf16.msra.mxu0 %v1463
  %2124 = vmatprep.subr.bf16.mxu0 %v1466
  %2125 = vmatpush1.bf16.msra.mxu0 %v1465
  %2126 = vmatprep.subr.bf16.mxu0 %v1468
  %2127 = vmatpush1.bf16.msra.mxu0 %v1467
  %2128 = vmatprep.subr.bf16.mxu0 %v1470
  %2129 = vmatpush1.bf16.msra.mxu0 %v1469
  %2130 = vmatprep.subr.bf16.mxu0 %v1472
  %2131 = vmatpush1.bf16.msra.mxu0 %v1471
  %2132 = vmatprep.subr.bf16.mxu0 %v1474
  %2133 = vmatpush1.bf16.msra.mxu0 %v1473
  %2134 = vmatprep.subr.bf16.mxu0 %v1476
  %2135 = vmatpush1.bf16.msra.mxu0 %v1475
  %2136 = vmatprep.subr.bf16.mxu0 %v1478
  %2137 = vmatpush1.bf16.msra.mxu0 %v1477
  %2138 = vmatprep.subr.bf16.mxu0 %v1480
  %2139 = vmatpush1.bf16.msra.mxu0 %v1479
  %2140 = vmatprep.subr.bf16.mxu0 %v1482
  %2141 = vmatpush1.bf16.msra.mxu0 %v1481
  %2142 = vmatprep.subr.bf16.mxu0 %v1484
  %2143 = vmatpush1.bf16.msra.mxu0 %v1483
  %2144 = vmatprep.mubr.bf16.mxu0 %v412
  %2145 = vmatmul.mubr.bf16.gmra.mrb[0].mxu0 %v411
  %v2146 = vpop.f32.mrb[0].mxu0
  %v2147 = vadd.f32 %v2094, %v2146
  %v2148 = vpop.f32.mrb[0].mxu0
  %v2149 = vadd.f32 %v2096, %v2148
  %v2150 = vpop.f32.mrb[0].mxu0
  %v2151 = vadd.f32 %v2098, %v2150
  %v2152 = vpop.f32.mrb[0].mxu0
  %v2153 = vadd.f32 %v2100, %v2152
  %2154 = vmatprep.mubr.bf16.mxu0 %v428
  %2155 = vmatmul.mubr.bf16.gmra.mrb[0].mxu0 %v427
  %v2156 = vpop.f32.mrb[0].mxu0
  %v2157 = vadd.f32 %v2104, %v2156
  %v2158 = vpop.f32.mrb[0].mxu0
  %v2159 = vadd.f32 %v2106, %v2158
  %v2160 = vpop.f32.mrb[0].mxu0
  %v2161 = vadd.f32 %v2108, %v2160
  %v2162 = vpop.f32.mrb[0].mxu0
  %v2163 = vadd.f32 %v2110, %v2162
  %2164 = vdwg.mxu0
  %v2165 = vadd.f32 %v2147, %v2151
  %v2166 = vadd.f32 %v2165, %v2157
  %v2167 = vadd.f32 %v2166, %v2161
  %v2168 = vrot.slane %v2167, 4
  %v2169 = vadd.f32 %v2167, %v2168
  %v2170 = vrot.slane %v2169, 2
  %v2171 = vadd.f32 %v2169, %v2170
  %v2172 = vrot.slane %v2171, 1
  %v2173 = vadd.f32 %v2171, %v2172
  %v2174 = vadd.f32 %v2149, %v2153
  %v2175 = vadd.f32 %v2174, %v2159
  %v2176 = vadd.f32 %v2175, %v2163
  %v2177 = vrot.slane %v2176, 4
  %v2178 = vadd.f32 %v2176, %v2177
  %v2179 = vrot.slane %v2178, 2
  %v2180 = vadd.f32 %v2178, %v2179
  %v2181 = vrot.slane %v2180, 1
  %v2182 = vadd.f32 %v2180, %v2181
  %v2183 = vmul.f32 %v2173, 0.03125
  %v2184 = vmul.f32 %v2182, 0.03125
  %v2185 = vsub.f32 %v2147, %v2183
  %v2186 = vsub.f32 %v2149, %v2184
  %v2187 = vsub.f32 %v2151, %v2183
  %v2188 = vsub.f32 %v2153, %v2184
  %v2189 = vsub.f32 %v2157, %v2183
  %v2190 = vsub.f32 %v2159, %v2184
  %v2191 = vsub.f32 %v2161, %v2183
  %v2192 = vsub.f32 %v2163, %v2184
  %v2193 = vmul.f32 %v2185, %v2185
  %v2194 = vmul.f32 %v2186, %v2186
  %v2195 = vmul.f32 %v2187, %v2187
  %v2196 = vmul.f32 %v2188, %v2188
  %v2197 = vmul.f32 %v2189, %v2189
  %v2198 = vmul.f32 %v2190, %v2190
  %v2199 = vmul.f32 %v2191, %v2191
  %v2200 = vmul.f32 %v2192, %v2192
  %v2201 = vadd.f32 %v2193, %v2195
  %v2202 = vadd.f32 %v2201, %v2197
  %v2203 = vadd.f32 %v2202, %v2199
  %v2204 = vrot.slane %v2203, 4
  %v2205 = vadd.f32 %v2203, %v2204
  %v2206 = vrot.slane %v2205, 2
  %v2207 = vadd.f32 %v2205, %v2206
  %v2208 = vrot.slane %v2207, 1
  %v2209 = vadd.f32 %v2207, %v2208
  %v2210 = vadd.f32 %v2194, %v2196
  %v2211 = vadd.f32 %v2210, %v2198
  %v2212 = vadd.f32 %v2211, %v2200
  %v2213 = vrot.slane %v2212, 4
  %v2214 = vadd.f32 %v2212, %v2213
  %v2215 = vrot.slane %v2214, 2
  %v2216 = vadd.f32 %v2214, %v2215
  %v2217 = vrot.slane %v2216, 1
  %v2218 = vadd.f32 %v2216, %v2217
  %vm2219 = vcmask 1040384
  %v2220 = vsel %vm2219, %v2173, %v2209
  %v2221 = vsel %vm2219, %v2182, %v2218
  %v2224 = vcombine.low %v2220, %v2221
  %v2226 = vunpack.c.l.s4 1983009808
  %v2227 = vunpack.c.0.s8 %v2226
  %v2228 = vlaneseq
  %v2229 = vshrl.u32 %v2228, 7
  %v2230 = vsub.s32 %v2227, %v2229
  %v2231 = vrot.slane %v2224, %v2230
  %2233 = vst [vmem:[%s3] sm:$0xf] %v2231
  %v2234 = vpack.c.bf16 %v2151, %v2147
  %v2235 = vpack.c.bf16 %v2153, %v2149
  %v2236 = vpack.c.bf16 %v2161, %v2157
  %v2237 = vpack.c.bf16 %v2163, %v2159
  %v2242 = vunpack.c.l.b16 %v2234
  %v2243 = vunpack.c.l.b16 %v2235
  %v2244 = vunpack.c.h.b16 %v2234
  %v2245 = vunpack.c.h.b16 %v2235
  %v2246 = vunpack.c.l.b16 %v2236
  %v2247 = vunpack.c.l.b16 %v2237
  %v2248 = vunpack.c.h.b16 %v2236
  %v2249 = vunpack.c.h.b16 %v2237
  %v2250 = vpack.c.b16 %v2243, %v2242
  %v2251 = vpack.c.b16 %v2245, %v2244
  %v2252 = vpack.c.b16 %v2247, %v2246
  %v2253 = vpack.c.b16 %v2249, %v2248
  %2258 = vst [vmem:[%s2] sm:$0xff] %v2250
  %2259 = vst [vmem:[%s2 + $0x8] sm:$0xff] %v2251
  %2260 = vst [vmem:[%s2 + $0x10] sm:$0xff] %v2252
  %2261 = vst [vmem:[%s2 + $0x18] sm:$0xff] %v2253
  // Predicated region
  $region10: #{encoder_forward.11} parent=0 // pred_check
    _
  $region11: #{encoder_forward.11} parent=0 // pred_check_branch
    %2263 = sbr.rel (0) target = $region13
  $region12: #{encoder_forward.11} parent=0 // pred_region
    _
  $region13: #{encoder_forward.11} parent=0 // pred_fallthru
    _
  // Predicated region
  $region14: #{encoder_forward.11} parent=0 // pred_check
    _
  $region15: #{encoder_forward.11} parent=0 // pred_check_branch
    %2265 = sbr.rel (0) target = $region17
  $region16: #{encoder_forward.11} parent=0 // pred_region
    _
  $region17: #{encoder_forward.11} parent=0 // pred_fallthru
    _
  // Predicated region
  $region18: #{encoder_forward.11} parent=0 // pred_check
    _
  $region19: #{encoder_forward.11} parent=0 // pred_check_branch
    %2267 = sbr.rel (0) target = $region21
  $region20: #{encoder_forward.11} parent=0 // pred_region
    _
  $region21: #{encoder_forward.11} parent=0 // pred_fallthru
    _
  // Predicated region
  $region22: #{encoder_forward.11} parent=0 // pred_check
    _
  $region23: #{encoder_forward.11} parent=0 // pred_check_branch
    %2269 = sbr.rel (0) target = $region25
  $region24: #{encoder_forward.11} parent=0 // pred_region
    _
  $region25: #{encoder_forward.11} parent=0 // pred_fallthru
    _

// kernel: encoder_forward.13
$region0: #{encoder_forward.13}
  #allocation0 [shape = 'u32[]', space=smem, size = 0x4, offset = 0x4, fixed_abs, tag = 'smem constant byte address 0x4 - core index']
  #allocation1 [shape = 'u32[144,128]{1,0:T(1,128)}', space=vmem, size = 0x12000, scoped, tag = 'internal scratch']
  %s0 = inlined_call_operand.vmem [shape: bf16[2,4096], index: 0, kind: input, shape index: {}]
  %s1 = inlined_call_operand.vmem [shape: bf16[4096,8], index: 1, kind: input, shape index: {}]
  %s2 = inlined_call_operand.vmem [shape: f32[1,8], index: 2, kind: input, shape index: {}]
  %s3 = inlined_call_operand.vmem [shape: bf16[4096,8], index: 3, kind: input, shape index: {}]
  %s4 = inlined_call_operand.vmem [shape: f32[1,8], index: 4, kind: input, shape index: {}]
  %s5 = inlined_call_operand.vmem [shape: f32[2,8], index: 5, kind: input, shape index: {}]
  %s6 = inlined_call_operand.hbm [shape: f32[2,8], index: 6, kind: output, shape index: {0}]
  %s7 = inlined_call_operand.hbm [shape: f32[1,1], index: 7, kind: output, shape index: {1}]
  %8 = xla_tuple %s6, %s7
  %s9 = sld [smem:[#allocation0]]
  $region42: #{encoder_forward.13} parent=0
    _
  %s11 = ssub.s32 1, %s9
  %s12 = scalar_select 0, %s11, %s9
  $region1: #{encoder_forward.13} parent=0
    #allocation2 [shape = 'u8[1024]{0}', space=vmem, size = 0x400, scoped, tag = 'output window, operand 0, single buffered']
    #allocation3 [shape = 's32[1]{0}', space=sflag, size = 0x4, scoped, tag = 'scoped memory for encoder_forward.13']
    #allocation4 [shape = 'u8[512]{0}', space=vmem, size = 0x400, scoped, tag = 'output window, operand 1, single buffered']
    #allocation5 [shape = 's32[1]{0}', space=sflag, size = 0x4, scoped, tag = 'scoped memory for encoder_forward.13']
    %13 = vsyncpa [#allocation3], 0
    %14 = vsyncpa [#allocation5], 0
    // Predicated region
    $region2: #{encoder_forward.13} parent=1 // pred_check
      _
    $region3: #{encoder_forward.13} parent=1 // pred_check_branch
      %16 = sbr.rel (0) target = $region5
    $region4: #{encoder_forward.13} parent=1 // pred_region
      _
    $region5: #{encoder_forward.13} parent=1 // pred_fallthru
      _
    // Predicated region
    $region6: #{encoder_forward.13} parent=1 // pred_check
      _
    $region7: #{encoder_forward.13} parent=1 // pred_check_branch
      %18 = sbr.rel (0) target = $region9
    $region8: #{encoder_forward.13} parent=1 // pred_region
      _
    $region9: #{encoder_forward.13} parent=1 // pred_fallthru
      _
    // Predicated region
    $region10: #{encoder_forward.13} parent=1 // pred_check
      _
    $region11: #{encoder_forward.13} parent=1 // pred_check_branch
      %20 = sbr.rel (0) target = $region13
    $region12: #{encoder_forward.13} parent=1 // pred_region
      _
    $region13: #{encoder_forward.13} parent=1 // pred_fallthru
      _
    // Predicated region
    $region14: #{encoder_forward.13} parent=1 // pred_check
      _
    $region15: #{encoder_forward.13} parent=1 // pred_check_branch
      %22 = sbr.rel (0) target = $region17
    $region16: #{encoder_forward.13} parent=1 // pred_region
      _
    $region17: #{encoder_forward.13} parent=1 // pred_fallthru
      _
    // Predicated region
    $region18: #{encoder_forward.13} parent=1 // pred_check
      _
    $region19: #{encoder_forward.13} parent=1 // pred_check_branch
      %24 = sbr.rel (0) target = $region21
    $region20: #{encoder_forward.13} parent=1 // pred_region
      _
    $region21: #{encoder_forward.13} parent=1 // pred_fallthru
      _
    // Predicated region
    $region22: #{encoder_forward.13} parent=1 // pred_check
      _
    $region23: #{encoder_forward.13} parent=1 // pred_check_branch
      %26 = sbr.rel (0) target = $region25
    $region24: #{encoder_forward.13} parent=1 // pred_region
      _
    $region25: #{encoder_forward.13} parent=1 // pred_fallthru
      _
    %v28 = vld [vmem:[%s0] sm:$0xff]
    %v29 = vld [vmem:[%s0 + $0x8] sm:$0xff]
    %v30 = vld [vmem:[%s0 + $0x10] sm:$0xff]
    %v31 = vld [vmem:[%s0 + $0x18] sm:$0xff]
    %v32 = vld [vmem:[%s1] sm:$0xf]
    %v33 = vld [vmem:[%s1 + $0x4] sm:$0xf]
    %v34 = vld [vmem:[%s1 + $0x8] sm:$0xf]
    %v35 = vld [vmem:[%s1 + $0xc] sm:$0xf]
    %v36 = vld [vmem:[%s1 + $0x10] sm:$0xf]
    %v37 = vld [vmem:[%s1 + $0x14] sm:$0xf]
    %v38 = vld [vmem:[%s1 + $0x18] sm:$0xf]
    %v39 = vld [vmem:[%s1 + $0x1c] sm:$0xf]
    %v40 = vld [vmem:[%s1 + $0x20] sm:$0xf]
    %v41 = vld [vmem:[%s1 + $0x24] sm:$0xf]
    %v42 = vld [vmem:[%s1 + $0x28] sm:$0xf]
    %v43 = vld [vmem:[%s1 + $0x2c] sm:$0xf]
    %v44 = vld [vmem:[%s1 + $0x30] sm:$0xf]
    %v45 = vld [vmem:[%s1 + $0x34] sm:$0xf]
    %v46 = vld [vmem:[%s1 + $0x38] sm:$0xf]
    %v47 = vld [vmem:[%s1 + $0x3c] sm:$0xf]
    %v48 = vld [vmem:[%s1 + $0x40] sm:$0xf]
    %v49 = vld [vmem:[%s1 + $0x44] sm:$0xf]
    %v50 = vld [vmem:[%s1 + $0x48] sm:$0xf]
    %v51 = vld [vmem:[%s1 + $0x4c] sm:$0xf]
    %v52 = vld [vmem:[%s1 + $0x50] sm:$0xf]
    %v53 = vld [vmem:[%s1 + $0x54] sm:$0xf]
    %v54 = vld [vmem:[%s1 + $0x58] sm:$0xf]
    %v55 = vld [vmem:[%s1 + $0x5c] sm:$0xf]
    %v56 = vld [vmem:[%s1 + $0x60] sm:$0xf]
    %v57 = vld [vmem:[%s1 + $0x64] sm:$0xf]
    %v58 = vld [vmem:[%s1 + $0x68] sm:$0xf]
    %v59 = vld [vmem:[%s1 + $0x6c] sm:$0xf]
    %v60 = vld [vmem:[%s1 + $0x70] sm:$0xf]
    %v61 = vld [vmem:[%s1 + $0x74] sm:$0xf]
    %v62 = vld [vmem:[%s1 + $0x78] sm:$0xf]
    %v63 = vld [vmem:[%s1 + $0x7c] sm:$0xf]
    %v64 = vld [vmem:[%s1 + $0x80] sm:$0xf]
    %v65 = vld [vmem:[%s1 + $0x84] sm:$0xf]
    %v66 = vld [vmem:[%s1 + $0x88] sm:$0xf]
    %v67 = vld [vmem:[%s1 + $0x8c] sm:$0xf]
    %v68 = vld [vmem:[%s1 + $0x90] sm:$0xf]
    %v69 = vld [vmem:[%s1 + $0x94] sm:$0xf]
    %v70 = vld [vmem:[%s1 + $0x98] sm:$0xf]
    %v71 = vld [vmem:[%s1 + $0x9c] sm:$0xf]
    %v72 = vld [vmem:[%s1 + $0xa0] sm:$0xf]
    %v73 = vld [vmem:[%s1 + $0xa4] sm:$0xf]
    %v74 = vld [vmem:[%s1 + $0xa8] sm:$0xf]
    %v75 = vld [vmem:[%s1 + $0xac] sm:$0xf]
    %v76 = vld [vmem:[%s1 + $0xb0] sm:$0xf]
    %v77 = vld [vmem:[%s1 + $0xb4] sm:$0xf]
    %v78 = vld [vmem:[%s1 + $0xb8] sm:$0xf]
    %v79 = vld [vmem:[%s1 + $0xbc] sm:$0xf]
    %v80 = vld [vmem:[%s1 + $0xc0] sm:$0xf]
    %v81 = vld [vmem:[%s1 + $0xc4] sm:$0xf]
    %v82 = vld [vmem:[%s1 + $0xc8] sm:$0xf]
    %v83 = vld [vmem:[%s1 + $0xcc] sm:$0xf]
    %v84 = vld [vmem:[%s1 + $0xd0] sm:$0xf]
    %v85 = vld [vmem:[%s1 + $0xd4] sm:$0xf]
    %v86 = vld [vmem:[%s1 + $0xd8] sm:$0xf]
    %v87 = vld [vmem:[%s1 + $0xdc] sm:$0xf]
    %v88 = vld [vmem:[%s1 + $0xe0] sm:$0xf]
    %v89 = vld [vmem:[%s1 + $0xe4] sm:$0xf]
    %v90 = vld [vmem:[%s1 + $0xe8] sm:$0xf]
    %v91 = vld [vmem:[%s1 + $0xec] sm:$0xf]
    %v92 = vld [vmem:[%s1 + $0xf0] sm:$0xf]
    %v93 = vld [vmem:[%s1 + $0xf4] sm:$0xf]
    %v94 = vld [vmem:[%s1 + $0xf8] sm:$0xf]
    %v95 = vld [vmem:[%s1 + $0xfc] sm:$0xf]
    %v96 = vld [vmem:[%s1 + $0x100] sm:$0xf]
    %v97 = vld [vmem:[%s1 + $0x104] sm:$0xf]
    %v98 = vld [vmem:[%s1 + $0x108] sm:$0xf]
    %v99 = vld [vmem:[%s1 + $0x10c] sm:$0xf]
    %v100 = vld [vmem:[%s1 + $0x110] sm:$0xf]
    %v101 = vld [vmem:[%s1 + $0x114] sm:$0xf]
    %v102 = vld [vmem:[%s1 + $0x118] sm:$0xf]
    %v103 = vld [vmem:[%s1 + $0x11c] sm:$0xf]
    %v104 = vld [vmem:[%s1 + $0x120] sm:$0xf]
    %v105 = vld [vmem:[%s1 + $0x124] sm:$0xf]
    %v106 = vld [vmem:[%s1 + $0x128] sm:$0xf]
    %v107 = vld [vmem:[%s1 + $0x12c] sm:$0xf]
    %v108 = vld [vmem:[%s1 + $0x130] sm:$0xf]
    %v109 = vld [vmem:[%s1 + $0x134] sm:$0xf]
    %v110 = vld [vmem:[%s1 + $0x138] sm:$0xf]
    %v111 = vld [vmem:[%s1 + $0x13c] sm:$0xf]
    %v112 = vld [vmem:[%s1 + $0x140] sm:$0xf]
    %v113 = vld [vmem:[%s1 + $0x144] sm:$0xf]
    %v114 = vld [vmem:[%s1 + $0x148] sm:$0xf]
    %v115 = vld [vmem:[%s1 + $0x14c] sm:$0xf]
    %v116 = vld [vmem:[%s1 + $0x150] sm:$0xf]
    %v117 = vld [vmem:[%s1 + $0x154] sm:$0xf]
    %v118 = vld [vmem:[%s1 + $0x158] sm:$0xf]
    %v119 = vld [vmem:[%s1 + $0x15c] sm:$0xf]
    %v120 = vld [vmem:[%s1 + $0x160] sm:$0xf]
    %v121 = vld [vmem:[%s1 + $0x164] sm:$0xf]
    %v122 = vld [vmem:[%s1 + $0x168] sm:$0xf]
    %v123 = vld [vmem:[%s1 + $0x16c] sm:$0xf]
    %v124 = vld [vmem:[%s1 + $0x170] sm:$0xf]
    %v125 = vld [vmem:[%s1 + $0x174] sm:$0xf]
    %v126 = vld [vmem:[%s1 + $0x178] sm:$0xf]
    %v127 = vld [vmem:[%s1 + $0x17c] sm:$0xf]
    %v128 = vld [vmem:[%s1 + $0x180] sm:$0xf]
    %v129 = vld [vmem:[%s1 + $0x184] sm:$0xf]
    %v130 = vld [vmem:[%s1 + $0x188] sm:$0xf]
    %v131 = vld [vmem:[%s1 + $0x18c] sm:$0xf]
    %v132 = vld [vmem:[%s1 + $0x190] sm:$0xf]
    %v133 = vld [vmem:[%s1 + $0x194] sm:$0xf]
    %v134 = vld [vmem:[%s1 + $0x198] sm:$0xf]
    %v135 = vld [vmem:[%s1 + $0x19c] sm:$0xf]
    %v136 = vld [vmem:[%s1 + $0x1a0] sm:$0xf]
    %v137 = vld [vmem:[%s1 + $0x1a4] sm:$0xf]
    %v138 = vld [vmem:[%s1 + $0x1a8] sm:$0xf]
    %v139 = vld [vmem:[%s1 + $0x1ac] sm:$0xf]
    %v140 = vld [vmem:[%s1 + $0x1b0] sm:$0xf]
    %v141 = vld [vmem:[%s1 + $0x1b4] sm:$0xf]
    %v142 = vld [vmem:[%s1 + $0x1b8] sm:$0xf]
    %v143 = vld [vmem:[%s1 + $0x1bc] sm:$0xf]
    %v144 = vld [vmem:[%s1 + $0x1c0] sm:$0xf]
    %v145 = vld [vmem:[%s1 + $0x1c4] sm:$0xf]
    %v146 = vld [vmem:[%s1 + $0x1c8] sm:$0xf]
    %v147 = vld [vmem:[%s1 + $0x1cc] sm:$0xf]
    %v148 = vld [vmem:[%s1 + $0x1d0] sm:$0xf]
    %v149 = vld [vmem:[%s1 + $0x1d4] sm:$0xf]
    %v150 = vld [vmem:[%s1 + $0x1d8] sm:$0xf]
    %v151 = vld [vmem:[%s1 + $0x1dc] sm:$0xf]
    %v152 = vld [vmem:[%s1 + $0x1e0] sm:$0xf]
    %v153 = vld [vmem:[%s1 + $0x1e4] sm:$0xf]
    %v154 = vld [vmem:[%s1 + $0x1e8] sm:$0xf]
    %v155 = vld [vmem:[%s1 + $0x1ec] sm:$0xf]
    %v156 = vld [vmem:[%s1 + $0x1f0] sm:$0xf]
    %v157 = vld [vmem:[%s1 + $0x1f4] sm:$0xf]
    %v158 = vld [vmem:[%s1 + $0x1f8] sm:$0xf]
    %v159 = vld [vmem:[%s1 + $0x1fc] sm:$0xf]
    %v160 = vld [vmem:[%s1 + $0x200] sm:$0xf]
    %v161 = vld [vmem:[%s1 + $0x204] sm:$0xf]
    %v162 = vld [vmem:[%s1 + $0x208] sm:$0xf]
    %v163 = vld [vmem:[%s1 + $0x20c] sm:$0xf]
    %v164 = vld [vmem:[%s1 + $0x210] sm:$0xf]
    %v165 = vld [vmem:[%s1 + $0x214] sm:$0xf]
    %v166 = vld [vmem:[%s1 + $0x218] sm:$0xf]
    %v167 = vld [vmem:[%s1 + $0x21c] sm:$0xf]
    %v168 = vld [vmem:[%s1 + $0x220] sm:$0xf]
    %v169 = vld [vmem:[%s1 + $0x224] sm:$0xf]
    %v170 = vld [vmem:[%s1 + $0x228] sm:$0xf]
    %v171 = vld [vmem:[%s1 + $0x22c] sm:$0xf]
    %v172 = vld [vmem:[%s1 + $0x230] sm:$0xf]
    %v173 = vld [vmem:[%s1 + $0x234] sm:$0xf]
    %v174 = vld [vmem:[%s1 + $0x238] sm:$0xf]
    %v175 = vld [vmem:[%s1 + $0x23c] sm:$0xf]
    %v176 = vld [vmem:[%s1 + $0x240] sm:$0xf]
    %v177 = vld [vmem:[%s1 + $0x244] sm:$0xf]
    %v178 = vld [vmem:[%s1 + $0x248] sm:$0xf]
    %v179 = vld [vmem:[%s1 + $0x24c] sm:$0xf]
    %v180 = vld [vmem:[%s1 + $0x250] sm:$0xf]
    %v181 = vld [vmem:[%s1 + $0x254] sm:$0xf]
    %v182 = vld [vmem:[%s1 + $0x258] sm:$0xf]
    %v183 = vld [vmem:[%s1 + $0x25c] sm:$0xf]
    %v184 = vld [vmem:[%s1 + $0x260] sm:$0xf]
    %v185 = vld [vmem:[%s1 + $0x264] sm:$0xf]
    %v186 = vld [vmem:[%s1 + $0x268] sm:$0xf]
    %v187 = vld [vmem:[%s1 + $0x26c] sm:$0xf]
    %v188 = vld [vmem:[%s1 + $0x270] sm:$0xf]
    %v189 = vld [vmem:[%s1 + $0x274] sm:$0xf]
    %v190 = vld [vmem:[%s1 + $0x278] sm:$0xf]
    %v191 = vld [vmem:[%s1 + $0x27c] sm:$0xf]
    %v192 = vld [vmem:[%s1 + $0x280] sm:$0xf]
    %v193 = vld [vmem:[%s1 + $0x284] sm:$0xf]
    %v194 = vld [vmem:[%s1 + $0x288] sm:$0xf]
    %v195 = vld [vmem:[%s1 + $0x28c] sm:$0xf]
    %v196 = vld [vmem:[%s1 + $0x290] sm:$0xf]
    %v197 = vld [vmem:[%s1 + $0x294] sm:$0xf]
    %v198 = vld [vmem:[%s1 + $0x298] sm:$0xf]
    %v199 = vld [vmem:[%s1 + $0x29c] sm:$0xf]
    %v200 = vld [vmem:[%s1 + $0x2a0] sm:$0xf]
    %v201 = vld [vmem:[%s1 + $0x2a4] sm:$0xf]
    %v202 = vld [vmem:[%s1 + $0x2a8] sm:$0xf]
    %v203 = vld [vmem:[%s1 + $0x2ac] sm:$0xf]
    %v204 = vld [vmem:[%s1 + $0x2b0] sm:$0xf]
    %v205 = vld [vmem:[%s1 + $0x2b4] sm:$0xf]
    %v206 = vld [vmem:[%s1 + $0x2b8] sm:$0xf]
    %v207 = vld [vmem:[%s1 + $0x2bc] sm:$0xf]
    %v208 = vld [vmem:[%s1 + $0x2c0] sm:$0xf]
    %v209 = vld [vmem:[%s1 + $0x2c4] sm:$0xf]
    %v210 = vld [vmem:[%s1 + $0x2c8] sm:$0xf]
    %v211 = vld [vmem:[%s1 + $0x2cc] sm:$0xf]
    %v212 = vld [vmem:[%s1 + $0x2d0] sm:$0xf]
    %v213 = vld [vmem:[%s1 + $0x2d4] sm:$0xf]
    %v214 = vld [vmem:[%s1 + $0x2d8] sm:$0xf]
    %v215 = vld [vmem:[%s1 + $0x2dc] sm:$0xf]
    %v216 = vld [vmem:[%s1 + $0x2e0] sm:$0xf]
    %v217 = vld [vmem:[%s1 + $0x2e4] sm:$0xf]
    %v218 = vld [vmem:[%s1 + $0x2e8] sm:$0xf]
    %v219 = vld [vmem:[%s1 + $0x2ec] sm:$0xf]
    %v220 = vld [vmem:[%s1 + $0x2f0] sm:$0xf]
    %v221 = vld [vmem:[%s1 + $0x2f4] sm:$0xf]
    %v222 = vld [vmem:[%s1 + $0x2f8] sm:$0xf]
    %v223 = vld [vmem:[%s1 + $0x2fc] sm:$0xf]
    %v224 = vld [vmem:[%s1 + $0x300] sm:$0xf]
    %v225 = vld [vmem:[%s1 + $0x304] sm:$0xf]
    %v226 = vld [vmem:[%s1 + $0x308] sm:$0xf]
    %v227 = vld [vmem:[%s1 + $0x30c] sm:$0xf]
    %v228 = vld [vmem:[%s1 + $0x310] sm:$0xf]
    %v229 = vld [vmem:[%s1 + $0x314] sm:$0xf]
    %v230 = vld [vmem:[%s1 + $0x318] sm:$0xf]
    %v231 = vld [vmem:[%s1 + $0x31c] sm:$0xf]
    %v232 = vld [vmem:[%s1 + $0x320] sm:$0xf]
    %v233 = vld [vmem:[%s1 + $0x324] sm:$0xf]
    %v234 = vld [vmem:[%s1 + $0x328] sm:$0xf]
    %v235 = vld [vmem:[%s1 + $0x32c] sm:$0xf]
    %v236 = vld [vmem:[%s1 + $0x330] sm:$0xf]
    %v237 = vld [vmem:[%s1 + $0x334] sm:$0xf]
    %v238 = vld [vmem:[%s1 + $0x338] sm:$0xf]
    %v239 = vld [vmem:[%s1 + $0x33c] sm:$0xf]
    %v240 = vld [vmem:[%s1 + $0x340] sm:$0xf]
    %v241 = vld [vmem:[%s1 + $0x344] sm:$0xf]
    %v242 = vld [vmem:[%s1 + $0x348] sm:$0xf]
    %v243 = vld [vmem:[%s1 + $0x34c] sm:$0xf]
    %v244 = vld [vmem:[%s1 + $0x350] sm:$0xf]
    %v245 = vld [vmem:[%s1 + $0x354] sm:$0xf]
    %v246 = vld [vmem:[%s1 + $0x358] sm:$0xf]
    %v247 = vld [vmem:[%s1 + $0x35c] sm:$0xf]
    %v248 = vld [vmem:[%s1 + $0x360] sm:$0xf]
    %v249 = vld [vmem:[%s1 + $0x364] sm:$0xf]
    %v250 = vld [vmem:[%s1 + $0x368] sm:$0xf]
    %v251 = vld [vmem:[%s1 + $0x36c] sm:$0xf]
    %v252 = vld [vmem:[%s1 + $0x370] sm:$0xf]
    %v253 = vld [vmem:[%s1 + $0x374] sm:$0xf]
    %v254 = vld [vmem:[%s1 + $0x378] sm:$0xf]
    %v255 = vld [vmem:[%s1 + $0x37c] sm:$0xf]
    %v256 = vld [vmem:[%s1 + $0x380] sm:$0xf]
    %v257 = vld [vmem:[%s1 + $0x384] sm:$0xf]
    %v258 = vld [vmem:[%s1 + $0x388] sm:$0xf]
    %v259 = vld [vmem:[%s1 + $0x38c] sm:$0xf]
    %v260 = vld [vmem:[%s1 + $0x390] sm:$0xf]
    %v261 = vld [vmem:[%s1 + $0x394] sm:$0xf]
    %v262 = vld [vmem:[%s1 + $0x398] sm:$0xf]
    %v263 = vld [vmem:[%s1 + $0x39c] sm:$0xf]
    %v264 = vld [vmem:[%s1 + $0x3a0] sm:$0xf]
    %v265 = vld [vmem:[%s1 + $0x3a4] sm:$0xf]
    %v266 = vld [vmem:[%s1 + $0x3a8] sm:$0xf]
    %v267 = vld [vmem:[%s1 + $0x3ac] sm:$0xf]
    %v268 = vld [vmem:[%s1 + $0x3b0] sm:$0xf]
    %v269 = vld [vmem:[%s1 + $0x3b4] sm:$0xf]
    %v270 = vld [vmem:[%s1 + $0x3b8] sm:$0xf]
    %v271 = vld [vmem:[%s1 + $0x3bc] sm:$0xf]
    %v272 = vld [vmem:[%s1 + $0x3c0] sm:$0xf]
    %v273 = vld [vmem:[%s1 + $0x3c4] sm:$0xf]
    %v274 = vld [vmem:[%s1 + $0x3c8] sm:$0xf]
    %v275 = vld [vmem:[%s1 + $0x3cc] sm:$0xf]
    %v276 = vld [vmem:[%s1 + $0x3d0] sm:$0xf]
    %v277 = vld [vmem:[%s1 + $0x3d4] sm:$0xf]
    %v278 = vld [vmem:[%s1 + $0x3d8] sm:$0xf]
    %v279 = vld [vmem:[%s1 + $0x3dc] sm:$0xf]
    %v280 = vld [vmem:[%s1 + $0x3e0] sm:$0xf]
    %v281 = vld [vmem:[%s1 + $0x3e4] sm:$0xf]
    %v282 = vld [vmem:[%s1 + $0x3e8] sm:$0xf]
    %v283 = vld [vmem:[%s1 + $0x3ec] sm:$0xf]
    %v284 = vld [vmem:[%s1 + $0x3f0] sm:$0xf]
    %v285 = vld [vmem:[%s1 + $0x3f4] sm:$0xf]
    %v286 = vld [vmem:[%s1 + $0x3f8] sm:$0xf]
    %v287 = vld [vmem:[%s1 + $0x3fc] sm:$0xf]
    %v288 = vld [vmem:[%s1 + $0x400] sm:$0xf]
    %v289 = vld [vmem:[%s1 + $0x404] sm:$0xf]
    %v290 = vld [vmem:[%s1 + $0x408] sm:$0xf]
    %v291 = vld [vmem:[%s1 + $0x40c] sm:$0xf]
    %v292 = vld [vmem:[%s1 + $0x410] sm:$0xf]
    %v293 = vld [vmem:[%s1 + $0x414] sm:$0xf]
    %v294 = vld [vmem:[%s1 + $0x418] sm:$0xf]
    %v295 = vld [vmem:[%s1 + $0x41c] sm:$0xf]
    %v296 = vld [vmem:[%s1 + $0x420] sm:$0xf]
    %v297 = vld [vmem:[%s1 + $0x424] sm:$0xf]
    %v298 = vld [vmem:[%s1 + $0x428] sm:$0xf]
    %v299 = vld [vmem:[%s1 + $0x42c] sm:$0xf]
    %v300 = vld [vmem:[%s1 + $0x430] sm:$0xf]
    %v301 = vld [vmem:[%s1 + $0x434] sm:$0xf]
    %v302 = vld [vmem:[%s1 + $0x438] sm:$0xf]
    %v303 = vld [vmem:[%s1 + $0x43c] sm:$0xf]
    %v304 = vld [vmem:[%s1 + $0x440] sm:$0xf]
    %v305 = vld [vmem:[%s1 + $0x444] sm:$0xf]
    %v306 = vld [vmem:[%s1 + $0x448] sm:$0xf]
    %v307 = vld [vmem:[%s1 + $0x44c] sm:$0xf]
    %v308 = vld [vmem:[%s1 + $0x450] sm:$0xf]
    %v309 = vld [vmem:[%s1 + $0x454] sm:$0xf]
    %v310 = vld [vmem:[%s1 + $0x458] sm:$0xf]
    %v311 = vld [vmem:[%s1 + $0x45c] sm:$0xf]
    %v312 = vld [vmem:[%s1 + $0x460] sm:$0xf]
    %v313 = vld [vmem:[%s1 + $0x464] sm:$0xf]
    %v314 = vld [vmem:[%s1 + $0x468] sm:$0xf]
    %v315 = vld [vmem:[%s1 + $0x46c] sm:$0xf]
    %v316 = vld [vmem:[%s1 + $0x470] sm:$0xf]
    %v317 = vld [vmem:[%s1 + $0x474] sm:$0xf]
    %v318 = vld [vmem:[%s1 + $0x478] sm:$0xf]
    %v319 = vld [vmem:[%s1 + $0x47c] sm:$0xf]
    %v320 = vld [vmem:[%s1 + $0x480] sm:$0xf]
    %v321 = vld [vmem:[%s1 + $0x484] sm:$0xf]
    %v322 = vld [vmem:[%s1 + $0x488] sm:$0xf]
    %v323 = vld [vmem:[%s1 + $0x48c] sm:$0xf]
    %v324 = vld [vmem:[%s1 + $0x490] sm:$0xf]
    %v325 = vld [vmem:[%s1 + $0x494] sm:$0xf]
    %v326 = vld [vmem:[%s1 + $0x498] sm:$0xf]
    %v327 = vld [vmem:[%s1 + $0x49c] sm:$0xf]
    %v328 = vld [vmem:[%s1 + $0x4a0] sm:$0xf]
    %v329 = vld [vmem:[%s1 + $0x4a4] sm:$0xf]
    %v330 = vld [vmem:[%s1 + $0x4a8] sm:$0xf]
    %v331 = vld [vmem:[%s1 + $0x4ac] sm:$0xf]
    %v332 = vld [vmem:[%s1 + $0x4b0] sm:$0xf]
    %v333 = vld [vmem:[%s1 + $0x4b4] sm:$0xf]
    %v334 = vld [vmem:[%s1 + $0x4b8] sm:$0xf]
    %v335 = vld [vmem:[%s1 + $0x4bc] sm:$0xf]
    %v336 = vld [vmem:[%s1 + $0x4c0] sm:$0xf]
    %v337 = vld [vmem:[%s1 + $0x4c4] sm:$0xf]
    %v338 = vld [vmem:[%s1 + $0x4c8] sm:$0xf]
    %v339 = vld [vmem:[%s1 + $0x4cc] sm:$0xf]
    %v340 = vld [vmem:[%s1 + $0x4d0] sm:$0xf]
    %v341 = vld [vmem:[%s1 + $0x4d4] sm:$0xf]
    %v342 = vld [vmem:[%s1 + $0x4d8] sm:$0xf]
    %v343 = vld [vmem:[%s1 + $0x4dc] sm:$0xf]
    %v344 = vld [vmem:[%s1 + $0x4e0] sm:$0xf]
    %v345 = vld [vmem:[%s1 + $0x4e4] sm:$0xf]
    %v346 = vld [vmem:[%s1 + $0x4e8] sm:$0xf]
    %v347 = vld [vmem:[%s1 + $0x4ec] sm:$0xf]
    %v348 = vld [vmem:[%s1 + $0x4f0] sm:$0xf]
    %v349 = vld [vmem:[%s1 + $0x4f4] sm:$0xf]
    %v350 = vld [vmem:[%s1 + $0x4f8] sm:$0xf]
    %v351 = vld [vmem:[%s1 + $0x4fc] sm:$0xf]
    %v352 = vld [vmem:[%s1 + $0x500] sm:$0xf]
    %v353 = vld [vmem:[%s1 + $0x504] sm:$0xf]
    %v354 = vld [vmem:[%s1 + $0x508] sm:$0xf]
    %v355 = vld [vmem:[%s1 + $0x50c] sm:$0xf]
    %v356 = vld [vmem:[%s1 + $0x510] sm:$0xf]
    %v357 = vld [vmem:[%s1 + $0x514] sm:$0xf]
    %v358 = vld [vmem:[%s1 + $0x518] sm:$0xf]
    %v359 = vld [vmem:[%s1 + $0x51c] sm:$0xf]
    %v360 = vld [vmem:[%s1 + $0x520] sm:$0xf]
    %v361 = vld [vmem:[%s1 + $0x524] sm:$0xf]
    %v362 = vld [vmem:[%s1 + $0x528] sm:$0xf]
    %v363 = vld [vmem:[%s1 + $0x52c] sm:$0xf]
    %v364 = vld [vmem:[%s1 + $0x530] sm:$0xf]
    %v365 = vld [vmem:[%s1 + $0x534] sm:$0xf]
    %v366 = vld [vmem:[%s1 + $0x538] sm:$0xf]
    %v367 = vld [vmem:[%s1 + $0x53c] sm:$0xf]
    %v368 = vld [vmem:[%s1 + $0x540] sm:$0xf]
    %v369 = vld [vmem:[%s1 + $0x544] sm:$0xf]
    %v370 = vld [vmem:[%s1 + $0x548] sm:$0xf]
    %v371 = vld [vmem:[%s1 + $0x54c] sm:$0xf]
    %v372 = vld [vmem:[%s1 + $0x550] sm:$0xf]
    %v373 = vld [vmem:[%s1 + $0x554] sm:$0xf]
    %v374 = vld [vmem:[%s1 + $0x558] sm:$0xf]
    %v375 = vld [vmem:[%s1 + $0x55c] sm:$0xf]
    %v376 = vld [vmem:[%s1 + $0x560] sm:$0xf]
    %v377 = vld [vmem:[%s1 + $0x564] sm:$0xf]
    %v378 = vld [vmem:[%s1 + $0x568] sm:$0xf]
    %v379 = vld [vmem:[%s1 + $0x56c] sm:$0xf]
    %v380 = vld [vmem:[%s1 + $0x570] sm:$0xf]
    %v381 = vld [vmem:[%s1 + $0x574] sm:$0xf]
    %v382 = vld [vmem:[%s1 + $0x578] sm:$0xf]
    %v383 = vld [vmem:[%s1 + $0x57c] sm:$0xf]
    %v384 = vld [vmem:[%s1 + $0x580] sm:$0xf]
    %v385 = vld [vmem:[%s1 + $0x584] sm:$0xf]
    %v386 = vld [vmem:[%s1 + $0x588] sm:$0xf]
    %v387 = vld [vmem:[%s1 + $0x58c] sm:$0xf]
    %v388 = vld [vmem:[%s1 + $0x590] sm:$0xf]
    %v389 = vld [vmem:[%s1 + $0x594] sm:$0xf]
    %v390 = vld [vmem:[%s1 + $0x598] sm:$0xf]
    %v391 = vld [vmem:[%s1 + $0x59c] sm:$0xf]
    %v392 = vld [vmem:[%s1 + $0x5a0] sm:$0xf]
    %v393 = vld [vmem:[%s1 + $0x5a4] sm:$0xf]
    %v394 = vld [vmem:[%s1 + $0x5a8] sm:$0xf]
    %v395 = vld [vmem:[%s1 + $0x5ac] sm:$0xf]
    %v396 = vld [vmem:[%s1 + $0x5b0] sm:$0xf]
    %v397 = vld [vmem:[%s1 + $0x5b4] sm:$0xf]
    %v398 = vld [vmem:[%s1 + $0x5b8] sm:$0xf]
    %v399 = vld [vmem:[%s1 + $0x5bc] sm:$0xf]
    %v400 = vld [vmem:[%s1 + $0x5c0] sm:$0xf]
    %v401 = vld [vmem:[%s1 + $0x5c4] sm:$0xf]
    %v402 = vld [vmem:[%s1 + $0x5c8] sm:$0xf]
    %v403 = vld [vmem:[%s1 + $0x5cc] sm:$0xf]
    %v404 = vld [vmem:[%s1 + $0x5d0] sm:$0xf]
    %v405 = vld [vmem:[%s1 + $0x5d4] sm:$0xf]
    %v406 = vld [vmem:[%s1 + $0x5d8] sm:$0xf]
    %v407 = vld [vmem:[%s1 + $0x5dc] sm:$0xf]
    %v408 = vld [vmem:[%s1 + $0x5e0] sm:$0xf]
    %v409 = vld [vmem:[%s1 + $0x5e4] sm:$0xf]
    %v410 = vld [vmem:[%s1 + $0x5e8] sm:$0xf]
    %v411 = vld [vmem:[%s1 + $0x5ec] sm:$0xf]
    %v412 = vld [vmem:[%s1 + $0x5f0] sm:$0xf]
    %v413 = vld [vmem:[%s1 + $0x5f4] sm:$0xf]
    %v414 = vld [vmem:[%s1 + $0x5f8] sm:$0xf]
    %v415 = vld [vmem:[%s1 + $0x5fc] sm:$0xf]
    %v416 = vld [vmem:[%s1 + $0x600] sm:$0xf]
    %v417 = vld [vmem:[%s1 + $0x604] sm:$0xf]
    %v418 = vld [vmem:[%s1 + $0x608] sm:$0xf]
    %v419 = vld [vmem:[%s1 + $0x60c] sm:$0xf]
    %v420 = vld [vmem:[%s1 + $0x610] sm:$0xf]
    %v421 = vld [vmem:[%s1 + $0x614] sm:$0xf]
    %v422 = vld [vmem:[%s1 + $0x618] sm:$0xf]
    %v423 = vld [vmem:[%s1 + $0x61c] sm:$0xf]
    %v424 = vld [vmem:[%s1 + $0x620] sm:$0xf]
    %v425 = vld [vmem:[%s1 + $0x624] sm:$0xf]
    %v426 = vld [vmem:[%s1 + $0x628] sm:$0xf]
    %v427 = vld [vmem:[%s1 + $0x62c] sm:$0xf]
    %v428 = vld [vmem:[%s1 + $0x630] sm:$0xf]
    %v429 = vld [vmem:[%s1 + $0x634] sm:$0xf]
    %v430 = vld [vmem:[%s1 + $0x638] sm:$0xf]
    %v431 = vld [vmem:[%s1 + $0x63c] sm:$0xf]
    %v432 = vld [vmem:[%s1 + $0x640] sm:$0xf]
    %v433 = vld [vmem:[%s1 + $0x644] sm:$0xf]
    %v434 = vld [vmem:[%s1 + $0x648] sm:$0xf]
    %v435 = vld [vmem:[%s1 + $0x64c] sm:$0xf]
    %v436 = vld [vmem:[%s1 + $0x650] sm:$0xf]
    %v437 = vld [vmem:[%s1 + $0x654] sm:$0xf]
    %v438 = vld [vmem:[%s1 + $0x658] sm:$0xf]
    %v439 = vld [vmem:[%s1 + $0x65c] sm:$0xf]
    %v440 = vld [vmem:[%s1 + $0x660] sm:$0xf]
    %v441 = vld [vmem:[%s1 + $0x664] sm:$0xf]
    %v442 = vld [vmem:[%s1 + $0x668] sm:$0xf]
    %v443 = vld [vmem:[%s1 + $0x66c] sm:$0xf]
    %v444 = vld [vmem:[%s1 + $0x670] sm:$0xf]
    %v445 = vld [vmem:[%s1 + $0x674] sm:$0xf]
    %v446 = vld [vmem:[%s1 + $0x678] sm:$0xf]
    %v447 = vld [vmem:[%s1 + $0x67c] sm:$0xf]
    %v448 = vld [vmem:[%s1 + $0x680] sm:$0xf]
    %v449 = vld [vmem:[%s1 + $0x684] sm:$0xf]
    %v450 = vld [vmem:[%s1 + $0x688] sm:$0xf]
    %v451 = vld [vmem:[%s1 + $0x68c] sm:$0xf]
    %v452 = vld [vmem:[%s1 + $0x690] sm:$0xf]
    %v453 = vld [vmem:[%s1 + $0x694] sm:$0xf]
    %v454 = vld [vmem:[%s1 + $0x698] sm:$0xf]
    %v455 = vld [vmem:[%s1 + $0x69c] sm:$0xf]
    %v456 = vld [vmem:[%s1 + $0x6a0] sm:$0xf]
    %v457 = vld [vmem:[%s1 + $0x6a4] sm:$0xf]
    %v458 = vld [vmem:[%s1 + $0x6a8] sm:$0xf]
    %v459 = vld [vmem:[%s1 + $0x6ac] sm:$0xf]
    %v460 = vld [vmem:[%s1 + $0x6b0] sm:$0xf]
    %v461 = vld [vmem:[%s1 + $0x6b4] sm:$0xf]
    %v462 = vld [vmem:[%s1 + $0x6b8] sm:$0xf]
    %v463 = vld [vmem:[%s1 + $0x6bc] sm:$0xf]
    %v464 = vld [vmem:[%s1 + $0x6c0] sm:$0xf]
    %v465 = vld [vmem:[%s1 + $0x6c4] sm:$0xf]
    %v466 = vld [vmem:[%s1 + $0x6c8] sm:$0xf]
    %v467 = vld [vmem:[%s1 + $0x6cc] sm:$0xf]
    %v468 = vld [vmem:[%s1 + $0x6d0] sm:$0xf]
    %v469 = vld [vmem:[%s1 + $0x6d4] sm:$0xf]
    %v470 = vld [vmem:[%s1 + $0x6d8] sm:$0xf]
    %v471 = vld [vmem:[%s1 + $0x6dc] sm:$0xf]
    %v472 = vld [vmem:[%s1 + $0x6e0] sm:$0xf]
    %v473 = vld [vmem:[%s1 + $0x6e4] sm:$0xf]
    %v474 = vld [vmem:[%s1 + $0x6e8] sm:$0xf]
    %v475 = vld [vmem:[%s1 + $0x6ec] sm:$0xf]
    %v476 = vld [vmem:[%s1 + $0x6f0] sm:$0xf]
    %v477 = vld [vmem:[%s1 + $0x6f4] sm:$0xf]
    %v478 = vld [vmem:[%s1 + $0x6f8] sm:$0xf]
    %v479 = vld [vmem:[%s1 + $0x6fc] sm:$0xf]
    %v480 = vld [vmem:[%s1 + $0x700] sm:$0xf]
    %v481 = vld [vmem:[%s1 + $0x704] sm:$0xf]
    %v482 = vld [vmem:[%s1 + $0x708] sm:$0xf]
    %v483 = vld [vmem:[%s1 + $0x70c] sm:$0xf]
    %v484 = vld [vmem:[%s1 + $0x710] sm:$0xf]
    %v485 = vld [vmem:[%s1 + $0x714] sm:$0xf]
    %v486 = vld [vmem:[%s1 + $0x718] sm:$0xf]
    %v487 = vld [vmem:[%s1 + $0x71c] sm:$0xf]
    %v488 = vld [vmem:[%s1 + $0x720] sm:$0xf]
    %v489 = vld [vmem:[%s1 + $0x724] sm:$0xf]
    %v490 = vld [vmem:[%s1 + $0x728] sm:$0xf]
    %v491 = vld [vmem:[%s1 + $0x72c] sm:$0xf]
    %v492 = vld [vmem:[%s1 + $0x730] sm:$0xf]
    %v493 = vld [vmem:[%s1 + $0x734] sm:$0xf]
    %v494 = vld [vmem:[%s1 + $0x738] sm:$0xf]
    %v495 = vld [vmem:[%s1 + $0x73c] sm:$0xf]
    %v496 = vld [vmem:[%s1 + $0x740] sm:$0xf]
    %v497 = vld [vmem:[%s1 + $0x744] sm:$0xf]
    %v498 = vld [vmem:[%s1 + $0x748] sm:$0xf]
    %v499 = vld [vmem:[%s1 + $0x74c] sm:$0xf]
    %v500 = vld [vmem:[%s1 + $0x750] sm:$0xf]
    %v501 = vld [vmem:[%s1 + $0x754] sm:$0xf]
    %v502 = vld [vmem:[%s1 + $0x758] sm:$0xf]
    %v503 = vld [vmem:[%s1 + $0x75c] sm:$0xf]
    %v504 = vld [vmem:[%s1 + $0x760] sm:$0xf]
    %v505 = vld [vmem:[%s1 + $0x764] sm:$0xf]
    %v506 = vld [vmem:[%s1 + $0x768] sm:$0xf]
    %v507 = vld [vmem:[%s1 + $0x76c] sm:$0xf]
    %v508 = vld [vmem:[%s1 + $0x770] sm:$0xf]
    %v509 = vld [vmem:[%s1 + $0x774] sm:$0xf]
    %v510 = vld [vmem:[%s1 + $0x778] sm:$0xf]
    %v511 = vld [vmem:[%s1 + $0x77c] sm:$0xf]
    %v512 = vld [vmem:[%s1 + $0x780] sm:$0xf]
    %v513 = vld [vmem:[%s1 + $0x784] sm:$0xf]
    %v514 = vld [vmem:[%s1 + $0x788] sm:$0xf]
    %v515 = vld [vmem:[%s1 + $0x78c] sm:$0xf]
    %v516 = vld [vmem:[%s1 + $0x790] sm:$0xf]
    %v517 = vld [vmem:[%s1 + $0x794] sm:$0xf]
    %v518 = vld [vmem:[%s1 + $0x798] sm:$0xf]
    %v519 = vld [vmem:[%s1 + $0x79c] sm:$0xf]
    %v520 = vld [vmem:[%s1 + $0x7a0] sm:$0xf]
    %v521 = vld [vmem:[%s1 + $0x7a4] sm:$0xf]
    %v522 = vld [vmem:[%s1 + $0x7a8] sm:$0xf]
    %v523 = vld [vmem:[%s1 + $0x7ac] sm:$0xf]
    %v524 = vld [vmem:[%s1 + $0x7b0] sm:$0xf]
    %v525 = vld [vmem:[%s1 + $0x7b4] sm:$0xf]
    %v526 = vld [vmem:[%s1 + $0x7b8] sm:$0xf]
    %v527 = vld [vmem:[%s1 + $0x7bc] sm:$0xf]
    %v528 = vld [vmem:[%s1 + $0x7c0] sm:$0xf]
    %v529 = vld [vmem:[%s1 + $0x7c4] sm:$0xf]
    %v530 = vld [vmem:[%s1 + $0x7c8] sm:$0xf]
    %v531 = vld [vmem:[%s1 + $0x7cc] sm:$0xf]
    %v532 = vld [vmem:[%s1 + $0x7d0] sm:$0xf]
    %v533 = vld [vmem:[%s1 + $0x7d4] sm:$0xf]
    %v534 = vld [vmem:[%s1 + $0x7d8] sm:$0xf]
    %v535 = vld [vmem:[%s1 + $0x7dc] sm:$0xf]
    %v536 = vld [vmem:[%s1 + $0x7e0] sm:$0xf]
    %v537 = vld [vmem:[%s1 + $0x7e4] sm:$0xf]
    %v538 = vld [vmem:[%s1 + $0x7e8] sm:$0xf]
    %v539 = vld [vmem:[%s1 + $0x7ec] sm:$0xf]
    %v540 = vld [vmem:[%s1 + $0x7f0] sm:$0xf]
    %v541 = vld [vmem:[%s1 + $0x7f4] sm:$0xf]
    %v542 = vld [vmem:[%s1 + $0x7f8] sm:$0xf]
    %v543 = vld [vmem:[%s1 + $0x7fc] sm:$0xf]
    %v544 = vld [vmem:[%s2] sm:$0x1]
    %v546 = vlaneseq
    %v547 = vshrl.u32 %v546, 7
    %v548 = vsub.s32 0, %v547
    %v549 = vrot.slane %v544, %v548
    %v555 = vcombine.high %v28, %v28
    %v557 = vunpack.c.l.s4 1966171168
    %v558 = vunpack.c.0.s8 %v557
    %v559 = vlaneseq
    %v560 = vshrl.u32 %v559, 7
    %v561 = vsub.s32 %v558, %v560
    %v562 = vrot.slane %v28, %v561
    %v564 = vunpack.c.l.s4 1966171168
    %v565 = vunpack.c.0.s8 %v564
    %v566 = vlaneseq
    %v567 = vshrl.u32 %v566, 7
    %v568 = vsub.s32 %v565, %v567
    %v569 = vrot.slane %v555, %v568
    %v570 = vcombine.high %v562, %v562
    %v571 = vcombine.high %v569, %v569
    %v573 = vunpack.c.l.s4 1966171168
    %v574 = vunpack.c.0.s8 %v573
    %v575 = vlaneseq
    %v576 = vshrl.u32 %v575, 7
    %v577 = vsub.s32 %v574, %v576
    %v578 = vrot.slane %v562, %v577
    %v580 = vunpack.c.l.s4 1966171168
    %v581 = vunpack.c.0.s8 %v580
    %v582 = vlaneseq
    %v583 = vshrl.u32 %v582, 7
    %v584 = vsub.s32 %v581, %v583
    %v585 = vrot.slane %v569, %v584
    %v587 = vunpack.c.l.s4 1966171168
    %v588 = vunpack.c.0.s8 %v587
    %v589 = vlaneseq
    %v590 = vshrl.u32 %v589, 7
    %v591 = vsub.s32 %v588, %v590
    %v592 = vrot.slane %v570, %v591
    %v594 = vunpack.c.l.s4 1966171168
    %v595 = vunpack.c.0.s8 %v594
    %v596 = vlaneseq
    %v597 = vshrl.u32 %v596, 7
    %v598 = vsub.s32 %v595, %v597
    %v599 = vrot.slane %v571, %v598
    %v600 = vcombine.high %v578, %v578
    %v601 = vcombine.high %v585, %v585
    %v602 = vcombine.high %v592, %v592
    %v603 = vcombine.high %v599, %v599
    %v604 = vcombine.high %v29, %v29
    %v606 = vunpack.c.l.s4 1966171168
    %v607 = vunpack.c.0.s8 %v606
    %v608 = vlaneseq
    %v609 = vshrl.u32 %v608, 7
    %v610 = vsub.s32 %v607, %v609
    %v611 = vrot.slane %v29, %v610
    %v613 = vunpack.c.l.s4 1966171168
    %v614 = vunpack.c.0.s8 %v613
    %v615 = vlaneseq
    %v616 = vshrl.u32 %v615, 7
    %v617 = vsub.s32 %v614, %v616
    %v618 = vrot.slane %v604, %v617
    %v619 = vcombine.high %v611, %v611
    %v620 = vcombine.high %v618, %v618
    %v622 = vunpack.c.l.s4 1966171168
    %v623 = vunpack.c.0.s8 %v622
    %v624 = vlaneseq
    %v625 = vshrl.u32 %v624, 7
    %v626 = vsub.s32 %v623, %v625
    %v627 = vrot.slane %v611, %v626
    %v629 = vunpack.c.l.s4 1966171168
    %v630 = vunpack.c.0.s8 %v629
    %v631 = vlaneseq
    %v632 = vshrl.u32 %v631, 7
    %v633 = vsub.s32 %v630, %v632
    %v634 = vrot.slane %v618, %v633
    %v636 = vunpack.c.l.s4 1966171168
    %v637 = vunpack.c.0.s8 %v636
    %v638 = vlaneseq
    %v639 = vshrl.u32 %v638, 7
    %v640 = vsub.s32 %v637, %v639
    %v641 = vrot.slane %v619, %v640
    %v643 = vunpack.c.l.s4 1966171168
    %v644 = vunpack.c.0.s8 %v643
    %v645 = vlaneseq
    %v646 = vshrl.u32 %v645, 7
    %v647 = vsub.s32 %v644, %v646
    %v648 = vrot.slane %v620, %v647
    %v649 = vcombine.high %v627, %v627
    %v650 = vcombine.high %v634, %v634
    %v651 = vcombine.high %v641, %v641
    %v652 = vcombine.high %v648, %v648
    %v653 = vcombine.high %v30, %v30
    %v655 = vunpack.c.l.s4 1966171168
    %v656 = vunpack.c.0.s8 %v655
    %v657 = vlaneseq
    %v658 = vshrl.u32 %v657, 7
    %v659 = vsub.s32 %v656, %v658
    %v660 = vrot.slane %v30, %v659
    %v662 = vunpack.c.l.s4 1966171168
    %v663 = vunpack.c.0.s8 %v662
    %v664 = vlaneseq
    %v665 = vshrl.u32 %v664, 7
    %v666 = vsub.s32 %v663, %v665
    %v667 = vrot.slane %v653, %v666
    %v668 = vcombine.high %v660, %v660
    %v669 = vcombine.high %v667, %v667
    %v671 = vunpack.c.l.s4 1966171168
    %v672 = vunpack.c.0.s8 %v671
    %v673 = vlaneseq
    %v674 = vshrl.u32 %v673, 7
    %v675 = vsub.s32 %v672, %v674
    %v676 = vrot.slane %v660, %v675
    %v678 = vunpack.c.l.s4 1966171168
    %v679 = vunpack.c.0.s8 %v678
    %v680 = vlaneseq
    %v681 = vshrl.u32 %v680, 7
    %v682 = vsub.s32 %v679, %v681
    %v683 = vrot.slane %v667, %v682
    %v685 = vunpack.c.l.s4 1966171168
    %v686 = vunpack.c.0.s8 %v685
    %v687 = vlaneseq
    %v688 = vshrl.u32 %v687, 7
    %v689 = vsub.s32 %v686, %v688
    %v690 = vrot.slane %v668, %v689
    %v692 = vunpack.c.l.s4 1966171168
    %v693 = vunpack.c.0.s8 %v692
    %v694 = vlaneseq
    %v695 = vshrl.u32 %v694, 7
    %v696 = vsub.s32 %v693, %v695
    %v697 = vrot.slane %v669, %v696
    %v698 = vcombine.high %v676, %v676
    %v699 = vcombine.high %v683, %v683
    %v700 = vcombine.high %v690, %v690
    %v701 = vcombine.high %v697, %v697
    %v702 = vcombine.high %v31, %v31
    %v704 = vunpack.c.l.s4 1966171168
    %v705 = vunpack.c.0.s8 %v704
    %v706 = vlaneseq
    %v707 = vshrl.u32 %v706, 7
    %v708 = vsub.s32 %v705, %v707
    %v709 = vrot.slane %v31, %v708
    %v711 = vunpack.c.l.s4 1966171168
    %v712 = vunpack.c.0.s8 %v711
    %v713 = vlaneseq
    %v714 = vshrl.u32 %v713, 7
    %v715 = vsub.s32 %v712, %v714
    %v716 = vrot.slane %v702, %v715
    %v717 = vcombine.high %v709, %v709
    %v718 = vcombine.high %v716, %v716
    %v720 = vunpack.c.l.s4 1966171168
    %v721 = vunpack.c.0.s8 %v720
    %v722 = vlaneseq
    %v723 = vshrl.u32 %v722, 7
    %v724 = vsub.s32 %v721, %v723
    %v725 = vrot.slane %v709, %v724
    %v727 = vunpack.c.l.s4 1966171168
    %v728 = vunpack.c.0.s8 %v727
    %v729 = vlaneseq
    %v730 = vshrl.u32 %v729, 7
    %v731 = vsub.s32 %v728, %v730
    %v732 = vrot.slane %v716, %v731
    %v734 = vunpack.c.l.s4 1966171168
    %v735 = vunpack.c.0.s8 %v734
    %v736 = vlaneseq
    %v737 = vshrl.u32 %v736, 7
    %v738 = vsub.s32 %v735, %v737
    %v739 = vrot.slane %v717, %v738
    %v741 = vunpack.c.l.s4 1966171168
    %v742 = vunpack.c.0.s8 %v741
    %v743 = vlaneseq
    %v744 = vshrl.u32 %v743, 7
    %v745 = vsub.s32 %v742, %v744
    %v746 = vrot.slane %v718, %v745
    %v747 = vcombine.high %v725, %v725
    %v748 = vcombine.high %v732, %v732
    %v749 = vcombine.high %v739, %v739
    %v750 = vcombine.high %v746, %v746
    %v1295 = vunpack.c.l.b16 %v32
    %v1296 = vunpack.c.l.b16 %v33
    %v1297 = vunpack.c.l.b16 %v34
    %v1298 = vunpack.c.l.b16 %v35
    %v1299 = vunpack.c.l.b16 %v36
    %v1300 = vunpack.c.l.b16 %v37
    %v1301 = vunpack.c.l.b16 %v38
    %v1302 = vunpack.c.l.b16 %v39
    %v1303 = vunpack.c.l.b16 %v40
    %v1304 = vunpack.c.l.b16 %v41
    %v1305 = vunpack.c.l.b16 %v42
    %v1306 = vunpack.c.l.b16 %v43
    %v1307 = vunpack.c.l.b16 %v44
    %v1308 = vunpack.c.l.b16 %v45
    %v1309 = vunpack.c.l.b16 %v46
    %v1310 = vunpack.c.l.b16 %v47
    %v1311 = vunpack.c.l.b16 %v48
    %v1312 = vunpack.c.l.b16 %v49
    %v1313 = vunpack.c.l.b16 %v50
    %v1314 = vunpack.c.l.b16 %v51
    %v1315 = vunpack.c.l.b16 %v52
    %v1316 = vunpack.c.l.b16 %v53
    %v1317 = vunpack.c.l.b16 %v54
    %v1318 = vunpack.c.l.b16 %v55
    %v1319 = vunpack.c.l.b16 %v56
    %v1320 = vunpack.c.l.b16 %v57
    %v1321 = vunpack.c.l.b16 %v58
    %v1322 = vunpack.c.l.b16 %v59
    %v1323 = vunpack.c.l.b16 %v60
    %v1324 = vunpack.c.l.b16 %v61
    %v1325 = vunpack.c.l.b16 %v62
    %v1326 = vunpack.c.l.b16 %v63
    %v1327 = vunpack.c.l.b16 %v64
    %v1328 = vunpack.c.l.b16 %v65
    %v1329 = vunpack.c.l.b16 %v66
    %v1330 = vunpack.c.l.b16 %v67
    %v1331 = vunpack.c.l.b16 %v68
    %v1332 = vunpack.c.l.b16 %v69
    %v1333 = vunpack.c.l.b16 %v70
    %v1334 = vunpack.c.l.b16 %v71
    %v1335 = vunpack.c.l.b16 %v72
    %v1336 = vunpack.c.l.b16 %v73
    %v1337 = vunpack.c.l.b16 %v74
    %v1338 = vunpack.c.l.b16 %v75
    %v1339 = vunpack.c.l.b16 %v76
    %v1340 = vunpack.c.l.b16 %v77
    %v1341 = vunpack.c.l.b16 %v78
    %v1342 = vunpack.c.l.b16 %v79
    %v1343 = vunpack.c.l.b16 %v80
    %v1344 = vunpack.c.l.b16 %v81
    %v1345 = vunpack.c.l.b16 %v82
    %v1346 = vunpack.c.l.b16 %v83
    %v1347 = vunpack.c.l.b16 %v84
    %v1348 = vunpack.c.l.b16 %v85
    %v1349 = vunpack.c.l.b16 %v86
    %v1350 = vunpack.c.l.b16 %v87
    %v1351 = vunpack.c.l.b16 %v88
    %v1352 = vunpack.c.l.b16 %v89
    %v1353 = vunpack.c.l.b16 %v90
    %v1354 = vunpack.c.l.b16 %v91
    %v1355 = vunpack.c.l.b16 %v92
    %v1356 = vunpack.c.l.b16 %v93
    %v1357 = vunpack.c.l.b16 %v94
    %v1358 = vunpack.c.l.b16 %v95
    %v1359 = vunpack.c.l.b16 %v96
    %v1360 = vunpack.c.l.b16 %v97
    %v1361 = vunpack.c.l.b16 %v98
    %v1362 = vunpack.c.l.b16 %v99
    %v1363 = vunpack.c.l.b16 %v100
    %v1364 = vunpack.c.l.b16 %v101
    %v1365 = vunpack.c.l.b16 %v102
    %v1366 = vunpack.c.l.b16 %v103
    %v1367 = vunpack.c.l.b16 %v104
    %v1368 = vunpack.c.l.b16 %v105
    %v1369 = vunpack.c.l.b16 %v106
    %v1370 = vunpack.c.l.b16 %v107
    %v1371 = vunpack.c.l.b16 %v108
    %v1372 = vunpack.c.l.b16 %v109
    %v1373 = vunpack.c.l.b16 %v110
    %v1374 = vunpack.c.l.b16 %v111
    %v1375 = vunpack.c.l.b16 %v112
    %v1376 = vunpack.c.l.b16 %v113
    %v1377 = vunpack.c.l.b16 %v114
    %v1378 = vunpack.c.l.b16 %v115
    %v1379 = vunpack.c.l.b16 %v116
    %v1380 = vunpack.c.l.b16 %v117
    %v1381 = vunpack.c.l.b16 %v118
    %v1382 = vunpack.c.l.b16 %v119
    %v1383 = vunpack.c.l.b16 %v120
    %v1384 = vunpack.c.l.b16 %v121
    %v1385 = vunpack.c.l.b16 %v122
    %v1386 = vunpack.c.l.b16 %v123
    %v1387 = vunpack.c.l.b16 %v124
    %v1388 = vunpack.c.l.b16 %v125
    %v1389 = vunpack.c.l.b16 %v126
    %v1390 = vunpack.c.l.b16 %v127
    %v1391 = vunpack.c.l.b16 %v128
    %v1392 = vunpack.c.l.b16 %v129
    %v1393 = vunpack.c.l.b16 %v130
    %v1394 = vunpack.c.l.b16 %v131
    %v1395 = vunpack.c.l.b16 %v132
    %v1396 = vunpack.c.l.b16 %v133
    %v1397 = vunpack.c.l.b16 %v134
    %v1398 = vunpack.c.l.b16 %v135
    %v1399 = vunpack.c.l.b16 %v136
    %v1400 = vunpack.c.l.b16 %v137
    %v1401 = vunpack.c.l.b16 %v138
    %v1402 = vunpack.c.l.b16 %v139
    %v1403 = vunpack.c.l.b16 %v140
    %v1404 = vunpack.c.l.b16 %v141
    %v1405 = vunpack.c.l.b16 %v142
    %v1406 = vunpack.c.l.b16 %v143
    %v1407 = vunpack.c.l.b16 %v144
    %v1408 = vunpack.c.l.b16 %v145
    %v1409 = vunpack.c.l.b16 %v146
    %v1410 = vunpack.c.l.b16 %v147
    %v1411 = vunpack.c.l.b16 %v148
    %v1412 = vunpack.c.l.b16 %v149
    %v1413 = vunpack.c.l.b16 %v150
    %v1414 = vunpack.c.l.b16 %v151
    %v1415 = vunpack.c.l.b16 %v152
    %v1416 = vunpack.c.l.b16 %v153
    %v1417 = vunpack.c.l.b16 %v154
    %v1418 = vunpack.c.l.b16 %v155
    %v1419 = vunpack.c.l.b16 %v156
    %v1420 = vunpack.c.l.b16 %v157
    %v1421 = vunpack.c.l.b16 %v158
    %v1422 = vunpack.c.l.b16 %v159
    %v1423 = vunpack.c.l.b16 %v160
    %v1424 = vunpack.c.l.b16 %v161
    %v1425 = vunpack.c.l.b16 %v162
    %v1426 = vunpack.c.l.b16 %v163
    %v1427 = vunpack.c.l.b16 %v164
    %v1428 = vunpack.c.l.b16 %v165
    %v1429 = vunpack.c.l.b16 %v166
    %v1430 = vunpack.c.l.b16 %v167
    %v1431 = vunpack.c.l.b16 %v168
    %v1432 = vunpack.c.l.b16 %v169
    %v1433 = vunpack.c.l.b16 %v170
    %v1434 = vunpack.c.l.b16 %v171
    %v1435 = vunpack.c.l.b16 %v172
    %v1436 = vunpack.c.l.b16 %v173
    %v1437 = vunpack.c.l.b16 %v174
    %v1438 = vunpack.c.l.b16 %v175
    %v1439 = vunpack.c.l.b16 %v176
    %v1440 = vunpack.c.l.b16 %v177
    %v1441 = vunpack.c.l.b16 %v178
    %v1442 = vunpack.c.l.b16 %v179
    %v1443 = vunpack.c.l.b16 %v180
    %v1444 = vunpack.c.l.b16 %v181
    %v1445 = vunpack.c.l.b16 %v182
    %v1446 = vunpack.c.l.b16 %v183
    %v1447 = vunpack.c.l.b16 %v184
    %v1448 = vunpack.c.l.b16 %v185
    %v1449 = vunpack.c.l.b16 %v186
    %v1450 = vunpack.c.l.b16 %v187
    %v1451 = vunpack.c.l.b16 %v188
    %v1452 = vunpack.c.l.b16 %v189
    %v1453 = vunpack.c.l.b16 %v190
    %v1454 = vunpack.c.l.b16 %v191
    %v1455 = vunpack.c.l.b16 %v192
    %v1456 = vunpack.c.l.b16 %v193
    %v1457 = vunpack.c.l.b16 %v194
    %v1458 = vunpack.c.l.b16 %v195
    %v1459 = vunpack.c.l.b16 %v196
    %v1460 = vunpack.c.l.b16 %v197
    %v1461 = vunpack.c.l.b16 %v198
    %v1462 = vunpack.c.l.b16 %v199
    %v1463 = vunpack.c.l.b16 %v200
    %v1464 = vunpack.c.l.b16 %v201
    %v1465 = vunpack.c.l.b16 %v202
    %v1466 = vunpack.c.l.b16 %v203
    %v1467 = vunpack.c.l.b16 %v204
    %v1468 = vunpack.c.l.b16 %v205
    %v1469 = vunpack.c.l.b16 %v206
    %v1470 = vunpack.c.l.b16 %v207
    %v1471 = vunpack.c.l.b16 %v208
    %v1472 = vunpack.c.l.b16 %v209
    %v1473 = vunpack.c.l.b16 %v210
    %v1474 = vunpack.c.l.b16 %v211
    %v1475 = vunpack.c.l.b16 %v212
    %v1476 = vunpack.c.l.b16 %v213
    %v1477 = vunpack.c.l.b16 %v214
    %v1478 = vunpack.c.l.b16 %v215
    %v1479 = vunpack.c.l.b16 %v216
    %v1480 = vunpack.c.l.b16 %v217
    %v1481 = vunpack.c.l.b16 %v218
    %v1482 = vunpack.c.l.b16 %v219
    %v1483 = vunpack.c.l.b16 %v220
    %v1484 = vunpack.c.l.b16 %v221
    %v1485 = vunpack.c.l.b16 %v222
    %v1486 = vunpack.c.l.b16 %v223
    %v1487 = vunpack.c.l.b16 %v224
    %v1488 = vunpack.c.l.b16 %v225
    %v1489 = vunpack.c.l.b16 %v226
    %v1490 = vunpack.c.l.b16 %v227
    %v1491 = vunpack.c.l.b16 %v228
    %v1492 = vunpack.c.l.b16 %v229
    %v1493 = vunpack.c.l.b16 %v230
    %v1494 = vunpack.c.l.b16 %v231
    %v1495 = vunpack.c.l.b16 %v232
    %v1496 = vunpack.c.l.b16 %v233
    %v1497 = vunpack.c.l.b16 %v234
    %v1498 = vunpack.c.l.b16 %v235
    %v1499 = vunpack.c.l.b16 %v236
    %v1500 = vunpack.c.l.b16 %v237
    %v1501 = vunpack.c.l.b16 %v238
    %v1502 = vunpack.c.l.b16 %v239
    %v1503 = vunpack.c.l.b16 %v240
    %v1504 = vunpack.c.l.b16 %v241
    %v1505 = vunpack.c.l.b16 %v242
    %v1506 = vunpack.c.l.b16 %v243
    %v1507 = vunpack.c.l.b16 %v244
    %v1508 = vunpack.c.l.b16 %v245
    %v1509 = vunpack.c.l.b16 %v246
    %v1510 = vunpack.c.l.b16 %v247
    %v1511 = vunpack.c.l.b16 %v248
    %v1512 = vunpack.c.l.b16 %v249
    %v1513 = vunpack.c.l.b16 %v250
    %v1514 = vunpack.c.l.b16 %v251
    %v1515 = vunpack.c.l.b16 %v252
    %v1516 = vunpack.c.l.b16 %v253
    %v1517 = vunpack.c.l.b16 %v254
    %v1518 = vunpack.c.l.b16 %v255
    %v1519 = vunpack.c.l.b16 %v256
    %v1520 = vunpack.c.l.b16 %v257
    %v1521 = vunpack.c.l.b16 %v258
    %v1522 = vunpack.c.l.b16 %v259
    %v1523 = vunpack.c.l.b16 %v260
    %v1524 = vunpack.c.l.b16 %v261
    %v1525 = vunpack.c.l.b16 %v262
    %v1526 = vunpack.c.l.b16 %v263
    %v1527 = vunpack.c.l.b16 %v264
    %v1528 = vunpack.c.l.b16 %v265
    %v1529 = vunpack.c.l.b16 %v266
    %v1530 = vunpack.c.l.b16 %v267
    %v1531 = vunpack.c.l.b16 %v268
    %v1532 = vunpack.c.l.b16 %v269
    %v1533 = vunpack.c.l.b16 %v270
    %v1534 = vunpack.c.l.b16 %v271
    %v1535 = vunpack.c.l.b16 %v272
    %v1536 = vunpack.c.l.b16 %v273
    %v1537 = vunpack.c.l.b16 %v274
    %v1538 = vunpack.c.l.b16 %v275
    %v1539 = vunpack.c.l.b16 %v276
    %v1540 = vunpack.c.l.b16 %v277
    %v1541 = vunpack.c.l.b16 %v278
    %v1542 = vunpack.c.l.b16 %v279
    %v1543 = vunpack.c.l.b16 %v280
    %v1544 = vunpack.c.l.b16 %v281
    %v1545 = vunpack.c.l.b16 %v282
    %v1546 = vunpack.c.l.b16 %v283
    %v1547 = vunpack.c.l.b16 %v284
    %v1548 = vunpack.c.l.b16 %v285
    %v1549 = vunpack.c.l.b16 %v286
    %v1550 = vunpack.c.l.b16 %v287
    %v1551 = vunpack.c.l.b16 %v288
    %v1552 = vunpack.c.l.b16 %v289
    %v1553 = vunpack.c.l.b16 %v290
    %v1554 = vunpack.c.l.b16 %v291
    %v1555 = vunpack.c.l.b16 %v292
    %v1556 = vunpack.c.l.b16 %v293
    %v1557 = vunpack.c.l.b16 %v294
    %v1558 = vunpack.c.l.b16 %v295
    %v1559 = vunpack.c.l.b16 %v296
    %v1560 = vunpack.c.l.b16 %v297
    %v1561 = vunpack.c.l.b16 %v298
    %v1562 = vunpack.c.l.b16 %v299
    %v1563 = vunpack.c.l.b16 %v300
    %v1564 = vunpack.c.l.b16 %v301
    %v1565 = vunpack.c.l.b16 %v302
    %v1566 = vunpack.c.l.b16 %v303
    %v1567 = vunpack.c.l.b16 %v304
    %v1568 = vunpack.c.l.b16 %v305
    %v1569 = vunpack.c.l.b16 %v306
    %v1570 = vunpack.c.l.b16 %v307
    %v1571 = vunpack.c.l.b16 %v308
    %v1572 = vunpack.c.l.b16 %v309
    %v1573 = vunpack.c.l.b16 %v310
    %v1574 = vunpack.c.l.b16 %v311
    %v1575 = vunpack.c.l.b16 %v312
    %v1576 = vunpack.c.l.b16 %v313
    %v1577 = vunpack.c.l.b16 %v314
    %v1578 = vunpack.c.l.b16 %v315
    %v1579 = vunpack.c.l.b16 %v316
    %v1580 = vunpack.c.l.b16 %v317
    %v1581 = vunpack.c.l.b16 %v318
    %v1582 = vunpack.c.l.b16 %v319
    %v1583 = vunpack.c.l.b16 %v320
    %v1584 = vunpack.c.l.b16 %v321
    %v1585 = vunpack.c.l.b16 %v322
    %v1586 = vunpack.c.l.b16 %v323
    %v1587 = vunpack.c.l.b16 %v324
    %v1588 = vunpack.c.l.b16 %v325
    %v1589 = vunpack.c.l.b16 %v326
    %v1590 = vunpack.c.l.b16 %v327
    %v1591 = vunpack.c.l.b16 %v328
    %v1592 = vunpack.c.l.b16 %v329
    %v1593 = vunpack.c.l.b16 %v330
    %v1594 = vunpack.c.l.b16 %v331
    %v1595 = vunpack.c.l.b16 %v332
    %v1596 = vunpack.c.l.b16 %v333
    %v1597 = vunpack.c.l.b16 %v334
    %v1598 = vunpack.c.l.b16 %v335
    %v1599 = vunpack.c.l.b16 %v336
    %v1600 = vunpack.c.l.b16 %v337
    %v1601 = vunpack.c.l.b16 %v338
    %v1602 = vunpack.c.l.b16 %v339
    %v1603 = vunpack.c.l.b16 %v340
    %v1604 = vunpack.c.l.b16 %v341
    %v1605 = vunpack.c.l.b16 %v342
    %v1606 = vunpack.c.l.b16 %v343
    %v1607 = vunpack.c.l.b16 %v344
    %v1608 = vunpack.c.l.b16 %v345
    %v1609 = vunpack.c.l.b16 %v346
    %v1610 = vunpack.c.l.b16 %v347
    %v1611 = vunpack.c.l.b16 %v348
    %v1612 = vunpack.c.l.b16 %v349
    %v1613 = vunpack.c.l.b16 %v350
    %v1614 = vunpack.c.l.b16 %v351
    %v1615 = vunpack.c.l.b16 %v352
    %v1616 = vunpack.c.l.b16 %v353
    %v1617 = vunpack.c.l.b16 %v354
    %v1618 = vunpack.c.l.b16 %v355
    %v1619 = vunpack.c.l.b16 %v356
    %v1620 = vunpack.c.l.b16 %v357
    %v1621 = vunpack.c.l.b16 %v358
    %v1622 = vunpack.c.l.b16 %v359
    %v1623 = vunpack.c.l.b16 %v360
    %v1624 = vunpack.c.l.b16 %v361
    %v1625 = vunpack.c.l.b16 %v362
    %v1626 = vunpack.c.l.b16 %v363
    %v1627 = vunpack.c.l.b16 %v364
    %v1628 = vunpack.c.l.b16 %v365
    %v1629 = vunpack.c.l.b16 %v366
    %v1630 = vunpack.c.l.b16 %v367
    %v1631 = vunpack.c.l.b16 %v368
    %v1632 = vunpack.c.l.b16 %v369
    %v1633 = vunpack.c.l.b16 %v370
    %v1634 = vunpack.c.l.b16 %v371
    %v1635 = vunpack.c.l.b16 %v372
    %v1636 = vunpack.c.l.b16 %v373
    %v1637 = vunpack.c.l.b16 %v374
    %v1638 = vunpack.c.l.b16 %v375
    %v1639 = vunpack.c.l.b16 %v376
    %v1640 = vunpack.c.l.b16 %v377
    %v1641 = vunpack.c.l.b16 %v378
    %v1642 = vunpack.c.l.b16 %v379
    %v1643 = vunpack.c.l.b16 %v380
    %v1644 = vunpack.c.l.b16 %v381
    %v1645 = vunpack.c.l.b16 %v382
    %v1646 = vunpack.c.l.b16 %v383
    %v1647 = vunpack.c.l.b16 %v384
    %v1648 = vunpack.c.l.b16 %v385
    %v1649 = vunpack.c.l.b16 %v386
    %v1650 = vunpack.c.l.b16 %v387
    %v1651 = vunpack.c.l.b16 %v388
    %v1652 = vunpack.c.l.b16 %v389
    %v1653 = vunpack.c.l.b16 %v390
    %v1654 = vunpack.c.l.b16 %v391
    %v1655 = vunpack.c.l.b16 %v392
    %v1656 = vunpack.c.l.b16 %v393
    %v1657 = vunpack.c.l.b16 %v394
    %v1658 = vunpack.c.l.b16 %v395
    %v1659 = vunpack.c.l.b16 %v396
    %v1660 = vunpack.c.l.b16 %v397
    %v1661 = vunpack.c.l.b16 %v398
    %v1662 = vunpack.c.l.b16 %v399
    %v1663 = vunpack.c.l.b16 %v400
    %v1664 = vunpack.c.l.b16 %v401
    %v1665 = vunpack.c.l.b16 %v402
    %v1666 = vunpack.c.l.b16 %v403
    %v1667 = vunpack.c.l.b16 %v404
    %v1668 = vunpack.c.l.b16 %v405
    %v1669 = vunpack.c.l.b16 %v406
    %v1670 = vunpack.c.l.b16 %v407
    %v1671 = vunpack.c.l.b16 %v408
    %v1672 = vunpack.c.l.b16 %v409
    %v1673 = vunpack.c.l.b16 %v410
    %v1674 = vunpack.c.l.b16 %v411
    %v1675 = vunpack.c.l.b16 %v412
    %v1676 = vunpack.c.l.b16 %v413
    %v1677 = vunpack.c.l.b16 %v414
    %v1678 = vunpack.c.l.b16 %v415
    %v1679 = vunpack.c.l.b16 %v416
    %v1680 = vunpack.c.l.b16 %v417
    %v1681 = vunpack.c.l.b16 %v418
    %v1682 = vunpack.c.l.b16 %v419
    %v1683 = vunpack.c.l.b16 %v420
    %v1684 = vunpack.c.l.b16 %v421
    %v1685 = vunpack.c.l.b16 %v422
    %v1686 = vunpack.c.l.b16 %v423
    %v1687 = vunpack.c.l.b16 %v424
    %v1688 = vunpack.c.l.b16 %v425
    %v1689 = vunpack.c.l.b16 %v426
    %v1690 = vunpack.c.l.b16 %v427
    %v1691 = vunpack.c.l.b16 %v428
    %v1692 = vunpack.c.l.b16 %v429
    %v1693 = vunpack.c.l.b16 %v430
    %v1694 = vunpack.c.l.b16 %v431
    %v1695 = vunpack.c.l.b16 %v432
    %v1696 = vunpack.c.l.b16 %v433
    %v1697 = vunpack.c.l.b16 %v434
    %v1698 = vunpack.c.l.b16 %v435
    %v1699 = vunpack.c.l.b16 %v436
    %v1700 = vunpack.c.l.b16 %v437
    %v1701 = vunpack.c.l.b16 %v438
    %v1702 = vunpack.c.l.b16 %v439
    %v1703 = vunpack.c.l.b16 %v440
    %v1704 = vunpack.c.l.b16 %v441
    %v1705 = vunpack.c.l.b16 %v442
    %v1706 = vunpack.c.l.b16 %v443
    %v1707 = vunpack.c.l.b16 %v444
    %v1708 = vunpack.c.l.b16 %v445
    %v1709 = vunpack.c.l.b16 %v446
    %v1710 = vunpack.c.l.b16 %v447
    %v1711 = vunpack.c.l.b16 %v448
    %v1712 = vunpack.c.l.b16 %v449
    %v1713 = vunpack.c.l.b16 %v450
    %v1714 = vunpack.c.l.b16 %v451
    %v1715 = vunpack.c.l.b16 %v452
    %v1716 = vunpack.c.l.b16 %v453
    %v1717 = vunpack.c.l.b16 %v454
    %v1718 = vunpack.c.l.b16 %v455
    %v1719 = vunpack.c.l.b16 %v456
    %v1720 = vunpack.c.l.b16 %v457
    %v1721 = vunpack.c.l.b16 %v458
    %v1722 = vunpack.c.l.b16 %v459
    %v1723 = vunpack.c.l.b16 %v460
    %v1724 = vunpack.c.l.b16 %v461
    %v1725 = vunpack.c.l.b16 %v462
    %v1726 = vunpack.c.l.b16 %v463
    %v1727 = vunpack.c.l.b16 %v464
    %v1728 = vunpack.c.l.b16 %v465
    %v1729 = vunpack.c.l.b16 %v466
    %v1730 = vunpack.c.l.b16 %v467
    %v1731 = vunpack.c.l.b16 %v468
    %v1732 = vunpack.c.l.b16 %v469
    %v1733 = vunpack.c.l.b16 %v470
    %v1734 = vunpack.c.l.b16 %v471
    %v1735 = vunpack.c.l.b16 %v472
    %v1736 = vunpack.c.l.b16 %v473
    %v1737 = vunpack.c.l.b16 %v474
    %v1738 = vunpack.c.l.b16 %v475
    %v1739 = vunpack.c.l.b16 %v476
    %v1740 = vunpack.c.l.b16 %v477
    %v1741 = vunpack.c.l.b16 %v478
    %v1742 = vunpack.c.l.b16 %v479
    %v1743 = vunpack.c.l.b16 %v480
    %v1744 = vunpack.c.l.b16 %v481
    %v1745 = vunpack.c.l.b16 %v482
    %v1746 = vunpack.c.l.b16 %v483
    %v1747 = vunpack.c.l.b16 %v484
    %v1748 = vunpack.c.l.b16 %v485
    %v1749 = vunpack.c.l.b16 %v486
    %v1750 = vunpack.c.l.b16 %v487
    %v1751 = vunpack.c.l.b16 %v488
    %v1752 = vunpack.c.l.b16 %v489
    %v1753 = vunpack.c.l.b16 %v490
    %v1754 = vunpack.c.l.b16 %v491
    %v1755 = vunpack.c.l.b16 %v492
    %v1756 = vunpack.c.l.b16 %v493
    %v1757 = vunpack.c.l.b16 %v494
    %v1758 = vunpack.c.l.b16 %v495
    %v1759 = vunpack.c.l.b16 %v496
    %v1760 = vunpack.c.l.b16 %v497
    %v1761 = vunpack.c.l.b16 %v498
    %v1762 = vunpack.c.l.b16 %v499
    %v1763 = vunpack.c.l.b16 %v500
    %v1764 = vunpack.c.l.b16 %v501
    %v1765 = vunpack.c.l.b16 %v502
    %v1766 = vunpack.c.l.b16 %v503
    %v1767 = vunpack.c.l.b16 %v504
    %v1768 = vunpack.c.l.b16 %v505
    %v1769 = vunpack.c.l.b16 %v506
    %v1770 = vunpack.c.l.b16 %v507
    %v1771 = vunpack.c.l.b16 %v508
    %v1772 = vunpack.c.l.b16 %v509
    %v1773 = vunpack.c.l.b16 %v510
    %v1774 = vunpack.c.l.b16 %v511
    %v1775 = vunpack.c.l.b16 %v512
    %v1776 = vunpack.c.l.b16 %v513
    %v1777 = vunpack.c.l.b16 %v514
    %v1778 = vunpack.c.l.b16 %v515
    %v1779 = vunpack.c.l.b16 %v516
    %v1780 = vunpack.c.l.b16 %v517
    %v1781 = vunpack.c.l.b16 %v518
    %v1782 = vunpack.c.l.b16 %v519
    %v1783 = vunpack.c.l.b16 %v520
    %v1784 = vunpack.c.l.b16 %v521
    %v1785 = vunpack.c.l.b16 %v522
    %v1786 = vunpack.c.l.b16 %v523
    %v1787 = vunpack.c.l.b16 %v524
    %v1788 = vunpack.c.l.b16 %v525
    %v1789 = vunpack.c.l.b16 %v526
    %v1790 = vunpack.c.l.b16 %v527
    %v1791 = vunpack.c.l.b16 %v528
    %v1792 = vunpack.c.l.b16 %v529
    %v1793 = vunpack.c.l.b16 %v530
    %v1794 = vunpack.c.l.b16 %v531
    %v1795 = vunpack.c.l.b16 %v532
    %v1796 = vunpack.c.l.b16 %v533
    %v1797 = vunpack.c.l.b16 %v534
    %v1798 = vunpack.c.l.b16 %v535
    %v1799 = vunpack.c.l.b16 %v536
    %v1800 = vunpack.c.l.b16 %v537
    %v1801 = vunpack.c.l.b16 %v538
    %v1802 = vunpack.c.l.b16 %v539
    %v1803 = vunpack.c.l.b16 %v540
    %v1804 = vunpack.c.l.b16 %v541
    %v1805 = vunpack.c.l.b16 %v542
    %v1806 = vunpack.c.l.b16 %v543
    %v1807 = vpack.c.b16 %v1296, %v1295
    %v1808 = vpack.c.b16 %v1298, %v1297
    %v1809 = vpack.c.b16 %v1300, %v1299
    %v1810 = vpack.c.b16 %v1302, %v1301
    %v1811 = vpack.c.b16 %v1304, %v1303
    %v1812 = vpack.c.b16 %v1306, %v1305
    %v1813 = vpack.c.b16 %v1308, %v1307
    %v1814 = vpack.c.b16 %v1310, %v1309
    %v1815 = vpack.c.b16 %v1312, %v1311
    %v1816 = vpack.c.b16 %v1314, %v1313
    %v1817 = vpack.c.b16 %v1316, %v1315
    %v1818 = vpack.c.b16 %v1318, %v1317
    %v1819 = vpack.c.b16 %v1320, %v1319
    %v1820 = vpack.c.b16 %v1322, %v1321
    %v1821 = vpack.c.b16 %v1324, %v1323
    %v1822 = vpack.c.b16 %v1326, %v1325
    %v1823 = vpack.c.b16 %v1328, %v1327
    %v1824 = vpack.c.b16 %v1330, %v1329
    %v1825 = vpack.c.b16 %v1332, %v1331
    %v1826 = vpack.c.b16 %v1334, %v1333
    %v1827 = vpack.c.b16 %v1336, %v1335
    %v1828 = vpack.c.b16 %v1338, %v1337
    %v1829 = vpack.c.b16 %v1340, %v1339
    %v1830 = vpack.c.b16 %v1342, %v1341
    %v1831 = vpack.c.b16 %v1344, %v1343
    %v1832 = vpack.c.b16 %v1346, %v1345
    %v1833 = vpack.c.b16 %v1348, %v1347
    %v1834 = vpack.c.b16 %v1350, %v1349
    %v1835 = vpack.c.b16 %v1352, %v1351
    %v1836 = vpack.c.b16 %v1354, %v1353
    %v1837 = vpack.c.b16 %v1356, %v1355
    %v1838 = vpack.c.b16 %v1358, %v1357
    %v1839 = vpack.c.b16 %v1360, %v1359
    %v1840 = vpack.c.b16 %v1362, %v1361
    %v1841 = vpack.c.b16 %v1364, %v1363
    %v1842 = vpack.c.b16 %v1366, %v1365
    %v1843 = vpack.c.b16 %v1368, %v1367
    %v1844 = vpack.c.b16 %v1370, %v1369
    %v1845 = vpack.c.b16 %v1372, %v1371
    %v1846 = vpack.c.b16 %v1374, %v1373
    %v1847 = vpack.c.b16 %v1376, %v1375
    %v1848 = vpack.c.b16 %v1378, %v1377
    %v1849 = vpack.c.b16 %v1380, %v1379
    %v1850 = vpack.c.b16 %v1382, %v1381
    %v1851 = vpack.c.b16 %v1384, %v1383
    %v1852 = vpack.c.b16 %v1386, %v1385
    %v1853 = vpack.c.b16 %v1388, %v1387
    %v1854 = vpack.c.b16 %v1390, %v1389
    %v1855 = vpack.c.b16 %v1392, %v1391
    %v1856 = vpack.c.b16 %v1394, %v1393
    %v1857 = vpack.c.b16 %v1396, %v1395
    %v1858 = vpack.c.b16 %v1398, %v1397
    %v1859 = vpack.c.b16 %v1400, %v1399
    %v1860 = vpack.c.b16 %v1402, %v1401
    %v1861 = vpack.c.b16 %v1404, %v1403
    %v1862 = vpack.c.b16 %v1406, %v1405
    %v1863 = vpack.c.b16 %v1408, %v1407
    %v1864 = vpack.c.b16 %v1410, %v1409
    %v1865 = vpack.c.b16 %v1412, %v1411
    %v1866 = vpack.c.b16 %v1414, %v1413
    %v1867 = vpack.c.b16 %v1416, %v1415
    %v1868 = vpack.c.b16 %v1418, %v1417
    %v1869 = vpack.c.b16 %v1420, %v1419
    %v1870 = vpack.c.b16 %v1422, %v1421
    %v1871 = vpack.c.b16 %v1424, %v1423
    %v1872 = vpack.c.b16 %v1426, %v1425
    %v1873 = vpack.c.b16 %v1428, %v1427
    %v1874 = vpack.c.b16 %v1430, %v1429
    %v1875 = vpack.c.b16 %v1432, %v1431
    %v1876 = vpack.c.b16 %v1434, %v1433
    %v1877 = vpack.c.b16 %v1436, %v1435
    %v1878 = vpack.c.b16 %v1438, %v1437
    %v1879 = vpack.c.b16 %v1440, %v1439
    %v1880 = vpack.c.b16 %v1442, %v1441
    %v1881 = vpack.c.b16 %v1444, %v1443
    %v1882 = vpack.c.b16 %v1446, %v1445
    %v1883 = vpack.c.b16 %v1448, %v1447
    %v1884 = vpack.c.b16 %v1450, %v1449
    %v1885 = vpack.c.b16 %v1452, %v1451
    %v1886 = vpack.c.b16 %v1454, %v1453
    %v1887 = vpack.c.b16 %v1456, %v1455
    %v1888 = vpack.c.b16 %v1458, %v1457
    %v1889 = vpack.c.b16 %v1460, %v1459
    %v1890 = vpack.c.b16 %v1462, %v1461
    %v1891 = vpack.c.b16 %v1464, %v1463
    %v1892 = vpack.c.b16 %v1466, %v1465
    %v1893 = vpack.c.b16 %v1468, %v1467
    %v1894 = vpack.c.b16 %v1470, %v1469
    %v1895 = vpack.c.b16 %v1472, %v1471
    %v1896 = vpack.c.b16 %v1474, %v1473
    %v1897 = vpack.c.b16 %v1476, %v1475
    %v1898 = vpack.c.b16 %v1478, %v1477
    %v1899 = vpack.c.b16 %v1480, %v1479
    %v1900 = vpack.c.b16 %v1482, %v1481
    %v1901 = vpack.c.b16 %v1484, %v1483
    %v1902 = vpack.c.b16 %v1486, %v1485
    %v1903 = vpack.c.b16 %v1488, %v1487
    %v1904 = vpack.c.b16 %v1490, %v1489
    %v1905 = vpack.c.b16 %v1492, %v1491
    %v1906 = vpack.c.b16 %v1494, %v1493
    %v1907 = vpack.c.b16 %v1496, %v1495
    %v1908 = vpack.c.b16 %v1498, %v1497
    %v1909 = vpack.c.b16 %v1500, %v1499
    %v1910 = vpack.c.b16 %v1502, %v1501
    %v1911 = vpack.c.b16 %v1504, %v1503
    %v1912 = vpack.c.b16 %v1506, %v1505
    %v1913 = vpack.c.b16 %v1508, %v1507
    %v1914 = vpack.c.b16 %v1510, %v1509
    %v1915 = vpack.c.b16 %v1512, %v1511
    %v1916 = vpack.c.b16 %v1514, %v1513
    %v1917 = vpack.c.b16 %v1516, %v1515
    %v1918 = vpack.c.b16 %v1518, %v1517
    %v1919 = vpack.c.b16 %v1520, %v1519
    %v1920 = vpack.c.b16 %v1522, %v1521
    %v1921 = vpack.c.b16 %v1524, %v1523
    %v1922 = vpack.c.b16 %v1526, %v1525
    %v1923 = vpack.c.b16 %v1528, %v1527
    %v1924 = vpack.c.b16 %v1530, %v1529
    %v1925 = vpack.c.b16 %v1532, %v1531
    %v1926 = vpack.c.b16 %v1534, %v1533
    %v1927 = vpack.c.b16 %v1536, %v1535
    %v1928 = vpack.c.b16 %v1538, %v1537
    %v1929 = vpack.c.b16 %v1540, %v1539
    %v1930 = vpack.c.b16 %v1542, %v1541
    %v1931 = vpack.c.b16 %v1544, %v1543
    %v1932 = vpack.c.b16 %v1546, %v1545
    %v1933 = vpack.c.b16 %v1548, %v1547
    %v1934 = vpack.c.b16 %v1550, %v1549
    %v1935 = vpack.c.b16 %v1552, %v1551
    %v1936 = vpack.c.b16 %v1554, %v1553
    %v1937 = vpack.c.b16 %v1556, %v1555
    %v1938 = vpack.c.b16 %v1558, %v1557
    %v1939 = vpack.c.b16 %v1560, %v1559
    %v1940 = vpack.c.b16 %v1562, %v1561
    %v1941 = vpack.c.b16 %v1564, %v1563
    %v1942 = vpack.c.b16 %v1566, %v1565
    %v1943 = vpack.c.b16 %v1568, %v1567
    %v1944 = vpack.c.b16 %v1570, %v1569
    %v1945 = vpack.c.b16 %v1572, %v1571
    %v1946 = vpack.c.b16 %v1574, %v1573
    %v1947 = vpack.c.b16 %v1576, %v1575
    %v1948 = vpack.c.b16 %v1578, %v1577
    %v1949 = vpack.c.b16 %v1580, %v1579
    %v1950 = vpack.c.b16 %v1582, %v1581
    %v1951 = vpack.c.b16 %v1584, %v1583
    %v1952 = vpack.c.b16 %v1586, %v1585
    %v1953 = vpack.c.b16 %v1588, %v1587
    %v1954 = vpack.c.b16 %v1590, %v1589
    %v1955 = vpack.c.b16 %v1592, %v1591
    %v1956 = vpack.c.b16 %v1594, %v1593
    %v1957 = vpack.c.b16 %v1596, %v1595
    %v1958 = vpack.c.b16 %v1598, %v1597
    %v1959 = vpack.c.b16 %v1600, %v1599
    %v1960 = vpack.c.b16 %v1602, %v1601
    %v1961 = vpack.c.b16 %v1604, %v1603
    %v1962 = vpack.c.b16 %v1606, %v1605
    %v1963 = vpack.c.b16 %v1608, %v1607
    %v1964 = vpack.c.b16 %v1610, %v1609
    %v1965 = vpack.c.b16 %v1612, %v1611
    %v1966 = vpack.c.b16 %v1614, %v1613
    %v1967 = vpack.c.b16 %v1616, %v1615
    %v1968 = vpack.c.b16 %v1618, %v1617
    %v1969 = vpack.c.b16 %v1620, %v1619
    %v1970 = vpack.c.b16 %v1622, %v1621
    %v1971 = vpack.c.b16 %v1624, %v1623
    %v1972 = vpack.c.b16 %v1626, %v1625
    %v1973 = vpack.c.b16 %v1628, %v1627
    %v1974 = vpack.c.b16 %v1630, %v1629
    %v1975 = vpack.c.b16 %v1632, %v1631
    %v1976 = vpack.c.b16 %v1634, %v1633
    %v1977 = vpack.c.b16 %v1636, %v1635
    %v1978 = vpack.c.b16 %v1638, %v1637
    %v1979 = vpack.c.b16 %v1640, %v1639
    %v1980 = vpack.c.b16 %v1642, %v1641
    %v1981 = vpack.c.b16 %v1644, %v1643
    %v1982 = vpack.c.b16 %v1646, %v1645
    %v1983 = vpack.c.b16 %v1648, %v1647
    %v1984 = vpack.c.b16 %v1650, %v1649
    %v1985 = vpack.c.b16 %v1652, %v1651
    %v1986 = vpack.c.b16 %v1654, %v1653
    %v1987 = vpack.c.b16 %v1656, %v1655
    %v1988 = vpack.c.b16 %v1658, %v1657
    %v1989 = vpack.c.b16 %v1660, %v1659
    %v1990 = vpack.c.b16 %v1662, %v1661
    %v1991 = vpack.c.b16 %v1664, %v1663
    %v1992 = vpack.c.b16 %v1666, %v1665
    %v1993 = vpack.c.b16 %v1668, %v1667
    %v1994 = vpack.c.b16 %v1670, %v1669
    %v1995 = vpack.c.b16 %v1672, %v1671
    %v1996 = vpack.c.b16 %v1674, %v1673
    %v1997 = vpack.c.b16 %v1676, %v1675
    %v1998 = vpack.c.b16 %v1678, %v1677
    %v1999 = vpack.c.b16 %v1680, %v1679
    %v2000 = vpack.c.b16 %v1682, %v1681
    %v2001 = vpack.c.b16 %v1684, %v1683
    %v2002 = vpack.c.b16 %v1686, %v1685
    %v2003 = vpack.c.b16 %v1688, %v1687
    %v2004 = vpack.c.b16 %v1690, %v1689
    %v2005 = vpack.c.b16 %v1692, %v1691
    %v2006 = vpack.c.b16 %v1694, %v1693
    %v2007 = vpack.c.b16 %v1696, %v1695
    %v2008 = vpack.c.b16 %v1698, %v1697
    %v2009 = vpack.c.b16 %v1700, %v1699
    %v2010 = vpack.c.b16 %v1702, %v1701
    %v2011 = vpack.c.b16 %v1704, %v1703
    %v2012 = vpack.c.b16 %v1706, %v1705
    %v2013 = vpack.c.b16 %v1708, %v1707
    %v2014 = vpack.c.b16 %v1710, %v1709
    %v2015 = vpack.c.b16 %v1712, %v1711
    %v2016 = vpack.c.b16 %v1714, %v1713
    %v2017 = vpack.c.b16 %v1716, %v1715
    %v2018 = vpack.c.b16 %v1718, %v1717
    %v2019 = vpack.c.b16 %v1720, %v1719
    %v2020 = vpack.c.b16 %v1722, %v1721
    %v2021 = vpack.c.b16 %v1724, %v1723
    %v2022 = vpack.c.b16 %v1726, %v1725
    %v2023 = vpack.c.b16 %v1728, %v1727
    %v2024 = vpack.c.b16 %v1730, %v1729
    %v2025 = vpack.c.b16 %v1732, %v1731
    %v2026 = vpack.c.b16 %v1734, %v1733
    %v2027 = vpack.c.b16 %v1736, %v1735
    %v2028 = vpack.c.b16 %v1738, %v1737
    %v2029 = vpack.c.b16 %v1740, %v1739
    %v2030 = vpack.c.b16 %v1742, %v1741
    %v2031 = vpack.c.b16 %v1744, %v1743
    %v2032 = vpack.c.b16 %v1746, %v1745
    %v2033 = vpack.c.b16 %v1748, %v1747
    %v2034 = vpack.c.b16 %v1750, %v1749
    %v2035 = vpack.c.b16 %v1752, %v1751
    %v2036 = vpack.c.b16 %v1754, %v1753
    %v2037 = vpack.c.b16 %v1756, %v1755
    %v2038 = vpack.c.b16 %v1758, %v1757
    %v2039 = vpack.c.b16 %v1760, %v1759
    %v2040 = vpack.c.b16 %v1762, %v1761
    %v2041 = vpack.c.b16 %v1764, %v1763
    %v2042 = vpack.c.b16 %v1766, %v1765
    %v2043 = vpack.c.b16 %v1768, %v1767
    %v2044 = vpack.c.b16 %v1770, %v1769
    %v2045 = vpack.c.b16 %v1772, %v1771
    %v2046 = vpack.c.b16 %v1774, %v1773
    %v2047 = vpack.c.b16 %v1776, %v1775
    %v2048 = vpack.c.b16 %v1778, %v1777
    %v2049 = vpack.c.b16 %v1780, %v1779
    %v2050 = vpack.c.b16 %v1782, %v1781
    %v2051 = vpack.c.b16 %v1784, %v1783
    %v2052 = vpack.c.b16 %v1786, %v1785
    %v2053 = vpack.c.b16 %v1788, %v1787
    %v2054 = vpack.c.b16 %v1790, %v1789
    %v2055 = vpack.c.b16 %v1792, %v1791
    %v2056 = vpack.c.b16 %v1794, %v1793
    %v2057 = vpack.c.b16 %v1796, %v1795
    %v2058 = vpack.c.b16 %v1798, %v1797
    %v2059 = vpack.c.b16 %v1800, %v1799
    %v2060 = vpack.c.b16 %v1802, %v1801
    %v2061 = vpack.c.b16 %v1804, %v1803
    %v2062 = vpack.c.b16 %v1806, %v1805
    %2319 = vmatprep.subr.bf16.mxu0 0
    %2320 = vmatpush1.bf16.msra.mxu0 %v1807
    %2321 = vmatprep.subr.bf16.mxu0 0
    %2322 = vmatpush1.bf16.msra.mxu0 %v1808
    %2323 = vmatprep.subr.bf16.mxu0 0
    %2324 = vmatpush1.bf16.msra.mxu0 %v1809
    %2325 = vmatprep.subr.bf16.mxu0 0
    %2326 = vmatpush1.bf16.msra.mxu0 %v1810
    %2327 = vmatprep.subr.bf16.mxu0 0
    %2328 = vmatpush1.bf16.msra.mxu0 %v1811
    %2329 = vmatprep.subr.bf16.mxu0 0
    %2330 = vmatpush1.bf16.msra.mxu0 %v1812
    %2331 = vmatprep.subr.bf16.mxu0 0
    %2332 = vmatpush1.bf16.msra.mxu0 %v1813
    %2333 = vmatprep.subr.bf16.mxu0 0
    %2334 = vmatpush1.bf16.msra.mxu0 %v1814
    %2335 = vmatprep.subr.bf16.mxu0 0
    %2336 = vmatpush1.bf16.msra.mxu0 %v1815
    %2337 = vmatprep.subr.bf16.mxu0 0
    %2338 = vmatpush1.bf16.msra.mxu0 %v1816
    %2339 = vmatprep.subr.bf16.mxu0 0
    %2340 = vmatpush1.bf16.msra.mxu0 %v1817
    %2341 = vmatprep.subr.bf16.mxu0 0
    %2342 = vmatpush1.bf16.msra.mxu0 %v1818
    %2343 = vmatprep.subr.bf16.mxu0 0
    %2344 = vmatpush1.bf16.msra.mxu0 %v1819
    %2345 = vmatprep.subr.bf16.mxu0 0
    %2346 = vmatpush1.bf16.msra.mxu0 %v1820
    %2347 = vmatprep.subr.bf16.mxu0 0
    %2348 = vmatpush1.bf16.msra.mxu0 %v1821
    %2349 = vmatprep.subr.bf16.mxu0 0
    %2350 = vmatpush1.bf16.msra.mxu0 %v1822
    %2351 = vmatprep.mubr.bf16.mxu0 %v592
    %2352 = vmatmul.mubr.bf16.gmra.mrb[0].mxu0 %v578
    %v2353 = vpop.f32.mrb[0].mxu0
    %v2354 = vadd.f32 %v549, %v2353
    %v2355 = vpop.f32.mrb[0].mxu0
    %v2356 = vpop.f32.mrb[0].mxu0
    %v2357 = vpop.f32.mrb[0].mxu0
    %2358 = vdwg.mxu0
    %2359 = vmatprep.subr.bf16.mxu0 0
    %2360 = vmatpush1.bf16.msra.mxu0 %v1823
    %2361 = vmatprep.subr.bf16.mxu0 0
    %2362 = vmatpush1.bf16.msra.mxu0 %v1824
    %2363 = vmatprep.subr.bf16.mxu0 0
    %2364 = vmatpush1.bf16.msra.mxu0 %v1825
    %2365 = vmatprep.subr.bf16.mxu0 0
    %2366 = vmatpush1.bf16.msra.mxu0 %v1826
    %2367 = vmatprep.subr.bf16.mxu0 0
    %2368 = vmatpush1.bf16.msra.mxu0 %v1827
    %2369 = vmatprep.subr.bf16.mxu0 0
    %2370 = vmatpush1.bf16.msra.mxu0 %v1828
    %2371 = vmatprep.subr.bf16.mxu0 0
    %2372 = vmatpush1.bf16.msra.mxu0 %v1829
    %2373 = vmatprep.subr.bf16.mxu0 0
    %2374 = vmatpush1.bf16.msra.mxu0 %v1830
    %2375 = vmatprep.subr.bf16.mxu0 0
    %2376 = vmatpush1.bf16.msra.mxu0 %v1831
    %2377 = vmatprep.subr.bf16.mxu0 0
    %2378 = vmatpush1.bf16.msra.mxu0 %v1832
    %2379 = vmatprep.subr.bf16.mxu0 0
    %2380 = vmatpush1.bf16.msra.mxu0 %v1833
    %2381 = vmatprep.subr.bf16.mxu0 0
    %2382 = vmatpush1.bf16.msra.mxu0 %v1834
    %2383 = vmatprep.subr.bf16.mxu0 0
    %2384 = vmatpush1.bf16.msra.mxu0 %v1835
    %2385 = vmatprep.subr.bf16.mxu0 0
    %2386 = vmatpush1.bf16.msra.mxu0 %v1836
    %2387 = vmatprep.subr.bf16.mxu0 0
    %2388 = vmatpush1.bf16.msra.mxu0 %v1837
    %2389 = vmatprep.subr.bf16.mxu0 0
    %2390 = vmatpush1.bf16.msra.mxu0 %v1838
    %2391 = vmatprep.mubr.bf16.mxu0 %v602
    %2392 = vmatmul.mubr.bf16.gmra.mrb[0].mxu0 %v600
    %v2393 = vpop.f32.mrb[0].mxu0
    %v2394 = vadd.f32 %v2354, %v2393
    %v2395 = vpop.f32.mrb[0].mxu0
    %v2396 = vpop.f32.mrb[0].mxu0
    %v2397 = vpop.f32.mrb[0].mxu0
    %2398 = vdwg.mxu0
    %2399 = vmatprep.subr.bf16.mxu0 0
    %2400 = vmatpush1.bf16.msra.mxu0 %v1839
    %2401 = vmatprep.subr.bf16.mxu0 0
    %2402 = vmatpush1.bf16.msra.mxu0 %v1840
    %2403 = vmatprep.subr.bf16.mxu0 0
    %2404 = vmatpush1.bf16.msra.mxu0 %v1841
    %2405 = vmatprep.subr.bf16.mxu0 0
    %2406 = vmatpush1.bf16.msra.mxu0 %v1842
    %2407 = vmatprep.subr.bf16.mxu0 0
    %2408 = vmatpush1.bf16.msra.mxu0 %v1843
    %2409 = vmatprep.subr.bf16.mxu0 0
    %2410 = vmatpush1.bf16.msra.mxu0 %v1844
    %2411 = vmatprep.subr.bf16.mxu0 0
    %2412 = vmatpush1.bf16.msra.mxu0 %v1845
    %2413 = vmatprep.subr.bf16.mxu0 0
    %2414 = vmatpush1.bf16.msra.mxu0 %v1846
    %2415 = vmatprep.subr.bf16.mxu0 0
    %2416 = vmatpush1.bf16.msra.mxu0 %v1847
    %2417 = vmatprep.subr.bf16.mxu0 0
    %2418 = vmatpush1.bf16.msra.mxu0 %v1848
    %2419 = vmatprep.subr.bf16.mxu0 0
    %2420 = vmatpush1.bf16.msra.mxu0 %v1849
    %2421 = vmatprep.subr.bf16.mxu0 0
    %2422 = vmatpush1.bf16.msra.mxu0 %v1850
    %2423 = vmatprep.subr.bf16.mxu0 0
    %2424 = vmatpush1.bf16.msra.mxu0 %v1851
    %2425 = vmatprep.subr.bf16.mxu0 0
    %2426 = vmatpush1.bf16.msra.mxu0 %v1852
    %2427 = vmatprep.subr.bf16.mxu0 0
    %2428 = vmatpush1.bf16.msra.mxu0 %v1853
    %2429 = vmatprep.subr.bf16.mxu0 0
    %2430 = vmatpush1.bf16.msra.mxu0 %v1854
    %2431 = vmatprep.mubr.bf16.mxu0 %v599
    %2432 = vmatmul.mubr.bf16.gmra.mrb[0].mxu0 %v585
    %v2433 = vpop.f32.mrb[0].mxu0
    %v2434 = vadd.f32 %v2394, %v2433
    %v2435 = vpop.f32.mrb[0].mxu0
    %v2436 = vpop.f32.mrb[0].mxu0
    %v2437 = vpop.f32.mrb[0].mxu0
    %2438 = vdwg.mxu0
    %2439 = vmatprep.subr.bf16.mxu0 0
    %2440 = vmatpush1.bf16.msra.mxu0 %v1855
    %2441 = vmatprep.subr.bf16.mxu0 0
    %2442 = vmatpush1.bf16.msra.mxu0 %v1856
    %2443 = vmatprep.subr.bf16.mxu0 0
    %2444 = vmatpush1.bf16.msra.mxu0 %v1857
    %2445 = vmatprep.subr.bf16.mxu0 0
    %2446 = vmatpush1.bf16.msra.mxu0 %v1858
    %2447 = vmatprep.subr.bf16.mxu0 0
    %2448 = vmatpush1.bf16.msra.mxu0 %v1859
    %2449 = vmatprep.subr.bf16.mxu0 0
    %2450 = vmatpush1.bf16.msra.mxu0 %v1860
    %2451 = vmatprep.subr.bf16.mxu0 0
    %2452 = vmatpush1.bf16.msra.mxu0 %v1861
    %2453 = vmatprep.subr.bf16.mxu0 0
    %2454 = vmatpush1.bf16.msra.mxu0 %v1862
    %2455 = vmatprep.subr.bf16.mxu0 0
    %2456 = vmatpush1.bf16.msra.mxu0 %v1863
    %2457 = vmatprep.subr.bf16.mxu0 0
    %2458 = vmatpush1.bf16.msra.mxu0 %v1864
    %2459 = vmatprep.subr.bf16.mxu0 0
    %2460 = vmatpush1.bf16.msra.mxu0 %v1865
    %2461 = vmatprep.subr.bf16.mxu0 0
    %2462 = vmatpush1.bf16.msra.mxu0 %v1866
    %2463 = vmatprep.subr.bf16.mxu0 0
    %2464 = vmatpush1.bf16.msra.mxu0 %v1867
    %2465 = vmatprep.subr.bf16.mxu0 0
    %2466 = vmatpush1.bf16.msra.mxu0 %v1868
    %2467 = vmatprep.subr.bf16.mxu0 0
    %2468 = vmatpush1.bf16.msra.mxu0 %v1869
    %2469 = vmatprep.subr.bf16.mxu0 0
    %2470 = vmatpush1.bf16.msra.mxu0 %v1870
    %2471 = vmatprep.mubr.bf16.mxu0 %v603
    %2472 = vmatmul.mubr.bf16.gmra.mrb[0].mxu0 %v601
    %v2473 = vpop.f32.mrb[0].mxu0
    %v2474 = vadd.f32 %v2434, %v2473
    %v2475 = vpop.f32.mrb[0].mxu0
    %v2476 = vpop.f32.mrb[0].mxu0
    %v2477 = vpop.f32.mrb[0].mxu0
    %2478 = vdwg.mxu0
    %2479 = vmatprep.subr.bf16.mxu0 0
    %2480 = vmatpush1.bf16.msra.mxu0 %v1871
    %2481 = vmatprep.subr.bf16.mxu0 0
    %2482 = vmatpush1.bf16.msra.mxu0 %v1872
    %2483 = vmatprep.subr.bf16.mxu0 0
    %2484 = vmatpush1.bf16.msra.mxu0 %v1873
    %2485 = vmatprep.subr.bf16.mxu0 0
    %2486 = vmatpush1.bf16.msra.mxu0 %v1874
    %2487 = vmatprep.subr.bf16.mxu0 0
    %2488 = vmatpush1.bf16.msra.mxu0 %v1875
    %2489 = vmatprep.subr.bf16.mxu0 0
    %2490 = vmatpush1.bf16.msra.mxu0 %v1876
    %2491 = vmatprep.subr.bf16.mxu0 0
    %2492 = vmatpush1.bf16.msra.mxu0 %v1877
    %2493 = vmatprep.subr.bf16.mxu0 0
    %2494 = vmatpush1.bf16.msra.mxu0 %v1878
    %2495 = vmatprep.subr.bf16.mxu0 0
    %2496 = vmatpush1.bf16.msra.mxu0 %v1879
    %2497 = vmatprep.subr.bf16.mxu0 0
    %2498 = vmatpush1.bf16.msra.mxu0 %v1880
    %2499 = vmatprep.subr.bf16.mxu0 0
    %2500 = vmatpush1.bf16.msra.mxu0 %v1881
    %2501 = vmatprep.subr.bf16.mxu0 0
    %2502 = vmatpush1.bf16.msra.mxu0 %v1882
    %2503 = vmatprep.subr.bf16.mxu0 0
    %2504 = vmatpush1.bf16.msra.mxu0 %v1883
    %2505 = vmatprep.subr.bf16.mxu0 0
    %2506 = vmatpush1.bf16.msra.mxu0 %v1884
    %2507 = vmatprep.subr.bf16.mxu0 0
    %2508 = vmatpush1.bf16.msra.mxu0 %v1885
    %2509 = vmatprep.subr.bf16.mxu0 0
    %2510 = vmatpush1.bf16.msra.mxu0 %v1886
    %2511 = vmatprep.mubr.bf16.mxu0 %v641
    %2512 = vmatmul.mubr.bf16.gmra.mrb[0].mxu0 %v627
    %v2513 = vpop.f32.mrb[0].mxu0
    %v2514 = vadd.f32 %v2474, %v2513
    %v2515 = vpop.f32.mrb[0].mxu0
    %v2516 = vpop.f32.mrb[0].mxu0
    %v2517 = vpop.f32.mrb[0].mxu0
    %2518 = vdwg.mxu0
    %2519 = vmatprep.subr.bf16.mxu0 0
    %2520 = vmatpush1.bf16.msra.mxu0 %v1887
    %2521 = vmatprep.subr.bf16.mxu0 0
    %2522 = vmatpush1.bf16.msra.mxu0 %v1888
    %2523 = vmatprep.subr.bf16.mxu0 0
    %2524 = vmatpush1.bf16.msra.mxu0 %v1889
    %2525 = vmatprep.subr.bf16.mxu0 0
    %2526 = vmatpush1.bf16.msra.mxu0 %v1890
    %2527 = vmatprep.subr.bf16.mxu0 0
    %2528 = vmatpush1.bf16.msra.mxu0 %v1891
    %2529 = vmatprep.subr.bf16.mxu0 0
    %2530 = vmatpush1.bf16.msra.mxu0 %v1892
    %2531 = vmatprep.subr.bf16.mxu0 0
    %2532 = vmatpush1.bf16.msra.mxu0 %v1893
    %2533 = vmatprep.subr.bf16.mxu0 0
    %2534 = vmatpush1.bf16.msra.mxu0 %v1894
    %2535 = vmatprep.subr.bf16.mxu0 0
    %2536 = vmatpush1.bf16.msra.mxu0 %v1895
    %2537 = vmatprep.subr.bf16.mxu0 0
    %2538 = vmatpush1.bf16.msra.mxu0 %v1896
    %2539 = vmatprep.subr.bf16.mxu0 0
    %2540 = vmatpush1.bf16.msra.mxu0 %v1897
    %2541 = vmatprep.subr.bf16.mxu0 0
    %2542 = vmatpush1.bf16.msra.mxu0 %v1898
    %2543 = vmatprep.subr.bf16.mxu0 0
    %2544 = vmatpush1.bf16.msra.mxu0 %v1899
    %2545 = vmatprep.subr.bf16.mxu0 0
    %2546 = vmatpush1.bf16.msra.mxu0 %v1900
    %2547 = vmatprep.subr.bf16.mxu0 0
    %2548 = vmatpush1.bf16.msra.mxu0 %v1901
    %2549 = vmatprep.subr.bf16.mxu0 0
    %2550 = vmatpush1.bf16.msra.mxu0 %v1902
    %2551 = vmatprep.mubr.bf16.mxu0 %v651
    %2552 = vmatmul.mubr.bf16.gmra.mrb[0].mxu0 %v649
    %v2553 = vpop.f32.mrb[0].mxu0
    %v2554 = vadd.f32 %v2514, %v2553
    %v2555 = vpop.f32.mrb[0].mxu0
    %v2556 = vpop.f32.mrb[0].mxu0
    %v2557 = vpop.f32.mrb[0].mxu0
    %2558 = vdwg.mxu0
    %2559 = vmatprep.subr.bf16.mxu0 0
    %2560 = vmatpush1.bf16.msra.mxu0 %v1903
    %2561 = vmatprep.subr.bf16.mxu0 0
    %2562 = vmatpush1.bf16.msra.mxu0 %v1904
    %2563 = vmatprep.subr.bf16.mxu0 0
    %2564 = vmatpush1.bf16.msra.mxu0 %v1905
    %2565 = vmatprep.subr.bf16.mxu0 0
    %2566 = vmatpush1.bf16.msra.mxu0 %v1906
    %2567 = vmatprep.subr.bf16.mxu0 0
    %2568 = vmatpush1.bf16.msra.mxu0 %v1907
    %2569 = vmatprep.subr.bf16.mxu0 0
    %2570 = vmatpush1.bf16.msra.mxu0 %v1908
    %2571 = vmatprep.subr.bf16.mxu0 0
    %2572 = vmatpush1.bf16.msra.mxu0 %v1909
    %2573 = vmatprep.subr.bf16.mxu0 0
    %2574 = vmatpush1.bf16.msra.mxu0 %v1910
    %2575 = vmatprep.subr.bf16.mxu0 0
    %2576 = vmatpush1.bf16.msra.mxu0 %v1911
    %2577 = vmatprep.subr.bf16.mxu0 0
    %2578 = vmatpush1.bf16.msra.mxu0 %v1912
    %2579 = vmatprep.subr.bf16.mxu0 0
    %2580 = vmatpush1.bf16.msra.mxu0 %v1913
    %2581 = vmatprep.subr.bf16.mxu0 0
    %2582 = vmatpush1.bf16.msra.mxu0 %v1914
    %2583 = vmatprep.subr.bf16.mxu0 0
    %2584 = vmatpush1.bf16.msra.mxu0 %v1915
    %2585 = vmatprep.subr.bf16.mxu0 0
    %2586 = vmatpush1.bf16.msra.mxu0 %v1916
    %2587 = vmatprep.subr.bf16.mxu0 0
    %2588 = vmatpush1.bf16.msra.mxu0 %v1917
    %2589 = vmatprep.subr.bf16.mxu0 0
    %2590 = vmatpush1.bf16.msra.mxu0 %v1918
    %2591 = vmatprep.mubr.bf16.mxu0 %v648
    %2592 = vmatmul.mubr.bf16.gmra.mrb[0].mxu0 %v634
    %v2593 = vpop.f32.mrb[0].mxu0
    %v2594 = vadd.f32 %v2554, %v2593
    %v2595 = vpop.f32.mrb[0].mxu0
    %v2596 = vpop.f32.mrb[0].mxu0
    %v2597 = vpop.f32.mrb[0].mxu0
    %2598 = vdwg.mxu0
    %2599 = vmatprep.subr.bf16.mxu0 0
    %2600 = vmatpush1.bf16.msra.mxu0 %v1919
    %2601 = vmatprep.subr.bf16.mxu0 0
    %2602 = vmatpush1.bf16.msra.mxu0 %v1920
    %2603 = vmatprep.subr.bf16.mxu0 0
    %2604 = vmatpush1.bf16.msra.mxu0 %v1921
    %2605 = vmatprep.subr.bf16.mxu0 0
    %2606 = vmatpush1.bf16.msra.mxu0 %v1922
    %2607 = vmatprep.subr.bf16.mxu0 0
    %2608 = vmatpush1.bf16.msra.mxu0 %v1923
    %2609 = vmatprep.subr.bf16.mxu0 0
    %2610 = vmatpush1.bf16.msra.mxu0 %v1924
    %2611 = vmatprep.subr.bf16.mxu0 0
    %2612 = vmatpush1.bf16.msra.mxu0 %v1925
    %2613 = vmatprep.subr.bf16.mxu0 0
    %2614 = vmatpush1.bf16.msra.mxu0 %v1926
    %2615 = vmatprep.subr.bf16.mxu0 0
    %2616 = vmatpush1.bf16.msra.mxu0 %v1927
    %2617 = vmatprep.subr.bf16.mxu0 0
    %2618 = vmatpush1.bf16.msra.mxu0 %v1928
    %2619 = vmatprep.subr.bf16.mxu0 0
    %2620 = vmatpush1.bf16.msra.mxu0 %v1929
    %2621 = vmatprep.subr.bf16.mxu0 0
    %2622 = vmatpush1.bf16.msra.mxu0 %v1930
    %2623 = vmatprep.subr.bf16.mxu0 0
    %2624 = vmatpush1.bf16.msra.mxu0 %v1931
    %2625 = vmatprep.subr.bf16.mxu0 0
    %2626 = vmatpush1.bf16.msra.mxu0 %v1932
    %2627 = vmatprep.subr.bf16.mxu0 0
    %2628 = vmatpush1.bf16.msra.mxu0 %v1933
    %2629 = vmatprep.subr.bf16.mxu0 0
    %2630 = vmatpush1.bf16.msra.mxu0 %v1934
    %2631 = vmatprep.mubr.bf16.mxu0 %v652
    %2632 = vmatmul.mubr.bf16.gmra.mrb[0].mxu0 %v650
    %v2633 = vpop.f32.mrb[0].mxu0
    %v2634 = vadd.f32 %v2594, %v2633
    %v2635 = vpop.f32.mrb[0].mxu0
    %v2636 = vpop.f32.mrb[0].mxu0
    %v2637 = vpop.f32.mrb[0].mxu0
    %2638 = vdwg.mxu0
    %2639 = vmatprep.subr.bf16.mxu0 0
    %2640 = vmatpush1.bf16.msra.mxu0 %v1935
    %2641 = vmatprep.subr.bf16.mxu0 0
    %2642 = vmatpush1.bf16.msra.mxu0 %v1936
    %2643 = vmatprep.subr.bf16.mxu0 0
    %2644 = vmatpush1.bf16.msra.mxu0 %v1937
    %2645 = vmatprep.subr.bf16.mxu0 0
    %2646 = vmatpush1.bf16.msra.mxu0 %v1938
    %2647 = vmatprep.subr.bf16.mxu0 0
    %2648 = vmatpush1.bf16.msra.mxu0 %v1939
    %2649 = vmatprep.subr.bf16.mxu0 0
    %2650 = vmatpush1.bf16.msra.mxu0 %v1940
    %2651 = vmatprep.subr.bf16.mxu0 0
    %2652 = vmatpush1.bf16.msra.mxu0 %v1941
    %2653 = vmatprep.subr.bf16.mxu0 0
    %2654 = vmatpush1.bf16.msra.mxu0 %v1942
    %2655 = vmatprep.subr.bf16.mxu0 0
    %2656 = vmatpush1.bf16.msra.mxu0 %v1943
    %2657 = vmatprep.subr.bf16.mxu0 0
    %2658 = vmatpush1.bf16.msra.mxu0 %v1944
    %2659 = vmatprep.subr.bf16.mxu0 0
    %2660 = vmatpush1.bf16.msra.mxu0 %v1945
    %2661 = vmatprep.subr.bf16.mxu0 0
    %2662 = vmatpush1.bf16.msra.mxu0 %v1946
    %2663 = vmatprep.subr.bf16.mxu0 0
    %2664 = vmatpush1.bf16.msra.mxu0 %v1947
    %2665 = vmatprep.subr.bf16.mxu0 0
    %2666 = vmatpush1.bf16.msra.mxu0 %v1948
    %2667 = vmatprep.subr.bf16.mxu0 0
    %2668 = vmatpush1.bf16.msra.mxu0 %v1949
    %2669 = vmatprep.subr.bf16.mxu0 0
    %2670 = vmatpush1.bf16.msra.mxu0 %v1950
    %2671 = vmatprep.mubr.bf16.mxu0 %v690
    %2672 = vmatmul.mubr.bf16.gmra.mrb[0].mxu0 %v676
    %v2673 = vpop.f32.mrb[0].mxu0
    %v2674 = vadd.f32 %v2634, %v2673
    %v2675 = vpop.f32.mrb[0].mxu0
    %v2676 = vpop.f32.mrb[0].mxu0
    %v2677 = vpop.f32.mrb[0].mxu0
    %2678 = vdwg.mxu0
    %2679 = vmatprep.subr.bf16.mxu0 0
    %2680 = vmatpush1.bf16.msra.mxu0 %v1951
    %2681 = vmatprep.subr.bf16.mxu0 0
    %2682 = vmatpush1.bf16.msra.mxu0 %v1952
    %2683 = vmatprep.subr.bf16.mxu0 0
    %2684 = vmatpush1.bf16.msra.mxu0 %v1953
    %2685 = vmatprep.subr.bf16.mxu0 0
    %2686 = vmatpush1.bf16.msra.mxu0 %v1954
    %2687 = vmatprep.subr.bf16.mxu0 0
    %2688 = vmatpush1.bf16.msra.mxu0 %v1955
    %2689 = vmatprep.subr.bf16.mxu0 0
    %2690 = vmatpush1.bf16.msra.mxu0 %v1956
    %2691 = vmatprep.subr.bf16.mxu0 0
    %2692 = vmatpush1.bf16.msra.mxu0 %v1957
    %2693 = vmatprep.subr.bf16.mxu0 0
    %2694 = vmatpush1.bf16.msra.mxu0 %v1958
    %2695 = vmatprep.subr.bf16.mxu0 0
    %2696 = vmatpush1.bf16.msra.mxu0 %v1959
    %2697 = vmatprep.subr.bf16.mxu0 0
    %2698 = vmatpush1.bf16.msra.mxu0 %v1960
    %2699 = vmatprep.subr.bf16.mxu0 0
    %2700 = vmatpush1.bf16.msra.mxu0 %v1961
    %2701 = vmatprep.subr.bf16.mxu0 0
    %2702 = vmatpush1.bf16.msra.mxu0 %v1962
    %2703 = vmatprep.subr.bf16.mxu0 0
    %2704 = vmatpush1.bf16.msra.mxu0 %v1963
    %2705 = vmatprep.subr.bf16.mxu0 0
    %2706 = vmatpush1.bf16.msra.mxu0 %v1964
    %2707 = vmatprep.subr.bf16.mxu0 0
    %2708 = vmatpush1.bf16.msra.mxu0 %v1965
    %2709 = vmatprep.subr.bf16.mxu0 0
    %2710 = vmatpush1.bf16.msra.mxu0 %v1966
    %2711 = vmatprep.mubr.bf16.mxu0 %v700
    %2712 = vmatmul.mubr.bf16.gmra.mrb[0].mxu0 %v698
    %v2713 = vpop.f32.mrb[0].mxu0
    %v2714 = vadd.f32 %v2674, %v2713
    %v2715 = vpop.f32.mrb[0].mxu0
    %v2716 = vpop.f32.mrb[0].mxu0
    %v2717 = vpop.f32.mrb[0].mxu0
    %2718 = vdwg.mxu0
    %2719 = vmatprep.subr.bf16.mxu0 0
    %2720 = vmatpush1.bf16.msra.mxu0 %v1967
    %2721 = vmatprep.subr.bf16.mxu0 0
    %2722 = vmatpush1.bf16.msra.mxu0 %v1968
    %2723 = vmatprep.subr.bf16.mxu0 0
    %2724 = vmatpush1.bf16.msra.mxu0 %v1969
    %2725 = vmatprep.subr.bf16.mxu0 0
    %2726 = vmatpush1.bf16.msra.mxu0 %v1970
    %2727 = vmatprep.subr.bf16.mxu0 0
    %2728 = vmatpush1.bf16.msra.mxu0 %v1971
    %2729 = vmatprep.subr.bf16.mxu0 0
    %2730 = vmatpush1.bf16.msra.mxu0 %v1972
    %2731 = vmatprep.subr.bf16.mxu0 0
    %2732 = vmatpush1.bf16.msra.mxu0 %v1973
    %2733 = vmatprep.subr.bf16.mxu0 0
    %2734 = vmatpush1.bf16.msra.mxu0 %v1974
    %2735 = vmatprep.subr.bf16.mxu0 0
    %2736 = vmatpush1.bf16.msra.mxu0 %v1975
    %2737 = vmatprep.subr.bf16.mxu0 0
    %2738 = vmatpush1.bf16.msra.mxu0 %v1976
    %2739 = vmatprep.subr.bf16.mxu0 0
    %2740 = vmatpush1.bf16.msra.mxu0 %v1977
    %2741 = vmatprep.subr.bf16.mxu0 0
    %2742 = vmatpush1.bf16.msra.mxu0 %v1978
    %2743 = vmatprep.subr.bf16.mxu0 0
    %2744 = vmatpush1.bf16.msra.mxu0 %v1979
    %2745 = vmatprep.subr.bf16.mxu0 0
    %2746 = vmatpush1.bf16.msra.mxu0 %v1980
    %2747 = vmatprep.subr.bf16.mxu0 0
    %2748 = vmatpush1.bf16.msra.mxu0 %v1981
    %2749 = vmatprep.subr.bf16.mxu0 0
    %2750 = vmatpush1.bf16.msra.mxu0 %v1982
    %2751 = vmatprep.mubr.bf16.mxu0 %v697
    %2752 = vmatmul.mubr.bf16.gmra.mrb[0].mxu0 %v683
    %v2753 = vpop.f32.mrb[0].mxu0
    %v2754 = vadd.f32 %v2714, %v2753
    %v2755 = vpop.f32.mrb[0].mxu0
    %v2756 = vpop.f32.mrb[0].mxu0
    %v2757 = vpop.f32.mrb[0].mxu0
    %2758 = vdwg.mxu0
    %2759 = vmatprep.subr.bf16.mxu0 0
    %2760 = vmatpush1.bf16.msra.mxu0 %v1983
    %2761 = vmatprep.subr.bf16.mxu0 0
    %2762 = vmatpush1.bf16.msra.mxu0 %v1984
    %2763 = vmatprep.subr.bf16.mxu0 0
    %2764 = vmatpush1.bf16.msra.mxu0 %v1985
    %2765 = vmatprep.subr.bf16.mxu0 0
    %2766 = vmatpush1.bf16.msra.mxu0 %v1986
    %2767 = vmatprep.subr.bf16.mxu0 0
    %2768 = vmatpush1.bf16.msra.mxu0 %v1987
    %2769 = vmatprep.subr.bf16.mxu0 0
    %2770 = vmatpush1.bf16.msra.mxu0 %v1988
    %2771 = vmatprep.subr.bf16.mxu0 0
    %2772 = vmatpush1.bf16.msra.mxu0 %v1989
    %2773 = vmatprep.subr.bf16.mxu0 0
    %2774 = vmatpush1.bf16.msra.mxu0 %v1990
    %2775 = vmatprep.subr.bf16.mxu0 0
    %2776 = vmatpush1.bf16.msra.mxu0 %v1991
    %2777 = vmatprep.subr.bf16.mxu0 0
    %2778 = vmatpush1.bf16.msra.mxu0 %v1992
    %2779 = vmatprep.subr.bf16.mxu0 0
    %2780 = vmatpush1.bf16.msra.mxu0 %v1993
    %2781 = vmatprep.subr.bf16.mxu0 0
    %2782 = vmatpush1.bf16.msra.mxu0 %v1994
    %2783 = vmatprep.subr.bf16.mxu0 0
    %2784 = vmatpush1.bf16.msra.mxu0 %v1995
    %2785 = vmatprep.subr.bf16.mxu0 0
    %2786 = vmatpush1.bf16.msra.mxu0 %v1996
    %2787 = vmatprep.subr.bf16.mxu0 0
    %2788 = vmatpush1.bf16.msra.mxu0 %v1997
    %2789 = vmatprep.subr.bf16.mxu0 0
    %2790 = vmatpush1.bf16.msra.mxu0 %v1998
    %2791 = vmatprep.mubr.bf16.mxu0 %v701
    %2792 = vmatmul.mubr.bf16.gmra.mrb[0].mxu0 %v699
    %v2793 = vpop.f32.mrb[0].mxu0
    %v2794 = vadd.f32 %v2754, %v2793
    %v2795 = vpop.f32.mrb[0].mxu0
    %v2796 = vpop.f32.mrb[0].mxu0
    %v2797 = vpop.f32.mrb[0].mxu0
    %2798 = vdwg.mxu0
    %2799 = vmatprep.subr.bf16.mxu0 0
    %2800 = vmatpush1.bf16.msra.mxu0 %v1999
    %2801 = vmatprep.subr.bf16.mxu0 0
    %2802 = vmatpush1.bf16.msra.mxu0 %v2000
    %2803 = vmatprep.subr.bf16.mxu0 0
    %2804 = vmatpush1.bf16.msra.mxu0 %v2001
    %2805 = vmatprep.subr.bf16.mxu0 0
    %2806 = vmatpush1.bf16.msra.mxu0 %v2002
    %2807 = vmatprep.subr.bf16.mxu0 0
    %2808 = vmatpush1.bf16.msra.mxu0 %v2003
    %2809 = vmatprep.subr.bf16.mxu0 0
    %2810 = vmatpush1.bf16.msra.mxu0 %v2004
    %2811 = vmatprep.subr.bf16.mxu0 0
    %2812 = vmatpush1.bf16.msra.mxu0 %v2005
    %2813 = vmatprep.subr.bf16.mxu0 0
    %2814 = vmatpush1.bf16.msra.mxu0 %v2006
    %2815 = vmatprep.subr.bf16.mxu0 0
    %2816 = vmatpush1.bf16.msra.mxu0 %v2007
    %2817 = vmatprep.subr.bf16.mxu0 0
    %2818 = vmatpush1.bf16.msra.mxu0 %v2008
    %2819 = vmatprep.subr.bf16.mxu0 0
    %2820 = vmatpush1.bf16.msra.mxu0 %v2009
    %2821 = vmatprep.subr.bf16.mxu0 0
    %2822 = vmatpush1.bf16.msra.mxu0 %v2010
    %2823 = vmatprep.subr.bf16.mxu0 0
    %2824 = vmatpush1.bf16.msra.mxu0 %v2011
    %2825 = vmatprep.subr.bf16.mxu0 0
    %2826 = vmatpush1.bf16.msra.mxu0 %v2012
    %2827 = vmatprep.subr.bf16.mxu0 0
    %2828 = vmatpush1.bf16.msra.mxu0 %v2013
    %2829 = vmatprep.subr.bf16.mxu0 0
    %2830 = vmatpush1.bf16.msra.mxu0 %v2014
    %2831 = vmatprep.mubr.bf16.mxu0 %v739
    %2832 = vmatmul.mubr.bf16.gmra.mrb[0].mxu0 %v725
    %v2833 = vpop.f32.mrb[0].mxu0
    %v2834 = vadd.f32 %v2794, %v2833
    %v2835 = vpop.f32.mrb[0].mxu0
    %v2836 = vpop.f32.mrb[0].mxu0
    %v2837 = vpop.f32.mrb[0].mxu0
    %2838 = vdwg.mxu0
    %2839 = vmatprep.subr.bf16.mxu0 0
    %2840 = vmatpush1.bf16.msra.mxu0 %v2015
    %2841 = vmatprep.subr.bf16.mxu0 0
    %2842 = vmatpush1.bf16.msra.mxu0 %v2016
    %2843 = vmatprep.subr.bf16.mxu0 0
    %2844 = vmatpush1.bf16.msra.mxu0 %v2017
    %2845 = vmatprep.subr.bf16.mxu0 0
    %2846 = vmatpush1.bf16.msra.mxu0 %v2018
    %2847 = vmatprep.subr.bf16.mxu0 0
    %2848 = vmatpush1.bf16.msra.mxu0 %v2019
    %2849 = vmatprep.subr.bf16.mxu0 0
    %2850 = vmatpush1.bf16.msra.mxu0 %v2020
    %2851 = vmatprep.subr.bf16.mxu0 0
    %2852 = vmatpush1.bf16.msra.mxu0 %v2021
    %2853 = vmatprep.subr.bf16.mxu0 0
    %2854 = vmatpush1.bf16.msra.mxu0 %v2022
    %2855 = vmatprep.subr.bf16.mxu0 0
    %2856 = vmatpush1.bf16.msra.mxu0 %v2023
    %2857 = vmatprep.subr.bf16.mxu0 0
    %2858 = vmatpush1.bf16.msra.mxu0 %v2024
    %2859 = vmatprep.subr.bf16.mxu0 0
    %2860 = vmatpush1.bf16.msra.mxu0 %v2025
    %2861 = vmatprep.subr.bf16.mxu0 0
    %2862 = vmatpush1.bf16.msra.mxu0 %v2026
    %2863 = vmatprep.subr.bf16.mxu0 0
    %2864 = vmatpush1.bf16.msra.mxu0 %v2027
    %2865 = vmatprep.subr.bf16.mxu0 0
    %2866 = vmatpush1.bf16.msra.mxu0 %v2028
    %2867 = vmatprep.subr.bf16.mxu0 0
    %2868 = vmatpush1.bf16.msra.mxu0 %v2029
    %2869 = vmatprep.subr.bf16.mxu0 0
    %2870 = vmatpush1.bf16.msra.mxu0 %v2030
    %2871 = vmatprep.mubr.bf16.mxu0 %v749
    %2872 = vmatmul.mubr.bf16.gmra.mrb[0].mxu0 %v747
    %v2873 = vpop.f32.mrb[0].mxu0
    %v2874 = vadd.f32 %v2834, %v2873
    %v2875 = vpop.f32.mrb[0].mxu0
    %v2876 = vpop.f32.mrb[0].mxu0
    %v2877 = vpop.f32.mrb[0].mxu0
    %2878 = vdwg.mxu0
    %2879 = vmatprep.subr.bf16.mxu0 0
    %2880 = vmatpush1.bf16.msra.mxu0 %v2031
    %2881 = vmatprep.subr.bf16.mxu0 0
    %2882 = vmatpush1.bf16.msra.mxu0 %v2032
    %2883 = vmatprep.subr.bf16.mxu0 0
    %2884 = vmatpush1.bf16.msra.mxu0 %v2033
    %2885 = vmatprep.subr.bf16.mxu0 0
    %2886 = vmatpush1.bf16.msra.mxu0 %v2034
    %2887 = vmatprep.subr.bf16.mxu0 0
    %2888 = vmatpush1.bf16.msra.mxu0 %v2035
    %2889 = vmatprep.subr.bf16.mxu0 0
    %2890 = vmatpush1.bf16.msra.mxu0 %v2036
    %2891 = vmatprep.subr.bf16.mxu0 0
    %2892 = vmatpush1.bf16.msra.mxu0 %v2037
    %2893 = vmatprep.subr.bf16.mxu0 0
    %2894 = vmatpush1.bf16.msra.mxu0 %v2038
    %2895 = vmatprep.subr.bf16.mxu0 0
    %2896 = vmatpush1.bf16.msra.mxu0 %v2039
    %2897 = vmatprep.subr.bf16.mxu0 0
    %2898 = vmatpush1.bf16.msra.mxu0 %v2040
    %2899 = vmatprep.subr.bf16.mxu0 0
    %2900 = vmatpush1.bf16.msra.mxu0 %v2041
    %2901 = vmatprep.subr.bf16.mxu0 0
    %2902 = vmatpush1.bf16.msra.mxu0 %v2042
    %2903 = vmatprep.subr.bf16.mxu0 0
    %2904 = vmatpush1.bf16.msra.mxu0 %v2043
    %2905 = vmatprep.subr.bf16.mxu0 0
    %2906 = vmatpush1.bf16.msra.mxu0 %v2044
    %2907 = vmatprep.subr.bf16.mxu0 0
    %2908 = vmatpush1.bf16.msra.mxu0 %v2045
    %2909 = vmatprep.subr.bf16.mxu0 0
    %2910 = vmatpush1.bf16.msra.mxu0 %v2046
    %2911 = vmatprep.mubr.bf16.mxu0 %v746
    %2912 = vmatmul.mubr.bf16.gmra.mrb[0].mxu0 %v732
    %v2913 = vpop.f32.mrb[0].mxu0
    %v2914 = vadd.f32 %v2874, %v2913
    %v2915 = vpop.f32.mrb[0].mxu0
    %v2916 = vpop.f32.mrb[0].mxu0
    %v2917 = vpop.f32.mrb[0].mxu0
    %2918 = vdwg.mxu0
    %2919 = vmatprep.subr.bf16.mxu0 0
    %2920 = vmatpush1.bf16.msra.mxu0 %v2047
    %2921 = vmatprep.subr.bf16.mxu0 0
    %2922 = vmatpush1.bf16.msra.mxu0 %v2048
    %2923 = vmatprep.subr.bf16.mxu0 0
    %2924 = vmatpush1.bf16.msra.mxu0 %v2049
    %2925 = vmatprep.subr.bf16.mxu0 0
    %2926 = vmatpush1.bf16.msra.mxu0 %v2050
    %2927 = vmatprep.subr.bf16.mxu0 0
    %2928 = vmatpush1.bf16.msra.mxu0 %v2051
    %2929 = vmatprep.subr.bf16.mxu0 0
    %2930 = vmatpush1.bf16.msra.mxu0 %v2052
    %2931 = vmatprep.subr.bf16.mxu0 0
    %2932 = vmatpush1.bf16.msra.mxu0 %v2053
    %2933 = vmatprep.subr.bf16.mxu0 0
    %2934 = vmatpush1.bf16.msra.mxu0 %v2054
    %2935 = vmatprep.subr.bf16.mxu0 0
    %2936 = vmatpush1.bf16.msra.mxu0 %v2055
    %2937 = vmatprep.subr.bf16.mxu0 0
    %2938 = vmatpush1.bf16.msra.mxu0 %v2056
    %2939 = vmatprep.subr.bf16.mxu0 0
    %2940 = vmatpush1.bf16.msra.mxu0 %v2057
    %2941 = vmatprep.subr.bf16.mxu0 0
    %2942 = vmatpush1.bf16.msra.mxu0 %v2058
    %2943 = vmatprep.subr.bf16.mxu0 0
    %2944 = vmatpush1.bf16.msra.mxu0 %v2059
    %2945 = vmatprep.subr.bf16.mxu0 0
    %2946 = vmatpush1.bf16.msra.mxu0 %v2060
    %2947 = vmatprep.subr.bf16.mxu0 0
    %2948 = vmatpush1.bf16.msra.mxu0 %v2061
    %2949 = vmatprep.subr.bf16.mxu0 0
    %2950 = vmatpush1.bf16.msra.mxu0 %v2062
    %2951 = vmatprep.mubr.bf16.mxu0 %v750
    %2952 = vmatmul.mubr.bf16.gmra.mrb[0].mxu0 %v748
    %v2953 = vpop.f32.mrb[0].mxu0
    %v2954 = vadd.f32 %v2914, %v2953
    %v2955 = vpop.f32.mrb[0].mxu0
    %v2956 = vpop.f32.mrb[0].mxu0
    %v2957 = vpop.f32.mrb[0].mxu0
    %2958 = vdwg.mxu0
    %v2959 = vld [vmem:[%s3] sm:$0xf]
    %v2960 = vld [vmem:[%s3 + $0x4] sm:$0xf]
    %v2961 = vld [vmem:[%s3 + $0x8] sm:$0xf]
    %v2962 = vld [vmem:[%s3 + $0xc] sm:$0xf]
    %v2963 = vld [vmem:[%s3 + $0x10] sm:$0xf]
    %v2964 = vld [vmem:[%s3 + $0x14] sm:$0xf]
    %v2965 = vld [vmem:[%s3 + $0x18] sm:$0xf]
    %v2966 = vld [vmem:[%s3 + $0x1c] sm:$0xf]
    %v2967 = vld [vmem:[%s3 + $0x20] sm:$0xf]
    %v2968 = vld [vmem:[%s3 + $0x24] sm:$0xf]
    %v2969 = vld [vmem:[%s3 + $0x28] sm:$0xf]
    %v2970 = vld [vmem:[%s3 + $0x2c] sm:$0xf]
    %v2971 = vld [vmem:[%s3 + $0x30] sm:$0xf]
    %v2972 = vld [vmem:[%s3 + $0x34] sm:$0xf]
    %v2973 = vld [vmem:[%s3 + $0x38] sm:$0xf]
    %v2974 = vld [vmem:[%s3 + $0x3c] sm:$0xf]
    %v2975 = vld [vmem:[%s3 + $0x40] sm:$0xf]
    %v2976 = vld [vmem:[%s3 + $0x44] sm:$0xf]
    %v2977 = vld [vmem:[%s3 + $0x48] sm:$0xf]
    %v2978 = vld [vmem:[%s3 + $0x4c] sm:$0xf]
    %v2979 = vld [vmem:[%s3 + $0x50] sm:$0xf]
    %v2980 = vld [vmem:[%s3 + $0x54] sm:$0xf]
    %v2981 = vld [vmem:[%s3 + $0x58] sm:$0xf]
    %v2982 = vld [vmem:[%s3 + $0x5c] sm:$0xf]
    %v2983 = vld [vmem:[%s3 + $0x60] sm:$0xf]
    %v2984 = vld [vmem:[%s3 + $0x64] sm:$0xf]
    %v2985 = vld [vmem:[%s3 + $0x68] sm:$0xf]
    %v2986 = vld [vmem:[%s3 + $0x6c] sm:$0xf]
    %v2987 = vld [vmem:[%s3 + $0x70] sm:$0xf]
    %v2988 = vld [vmem:[%s3 + $0x74] sm:$0xf]
    %v2989 = vld [vmem:[%s3 + $0x78] sm:$0xf]
    %v2990 = vld [vmem:[%s3 + $0x7c] sm:$0xf]
    %v2991 = vld [vmem:[%s3 + $0x80] sm:$0xf]
    %v2992 = vld [vmem:[%s3 + $0x84] sm:$0xf]
    %v2993 = vld [vmem:[%s3 + $0x88] sm:$0xf]
    %v2994 = vld [vmem:[%s3 + $0x8c] sm:$0xf]
    %v2995 = vld [vmem:[%s3 + $0x90] sm:$0xf]
    %v2996 = vld [vmem:[%s3 + $0x94] sm:$0xf]
    %v2997 = vld [vmem:[%s3 + $0x98] sm:$0xf]
    %v2998 = vld [vmem:[%s3 + $0x9c] sm:$0xf]
    %v2999 = vld [vmem:[%s3 + $0xa0] sm:$0xf]
    %v3000 = vld [vmem:[%s3 + $0xa4] sm:$0xf]
    %v3001 = vld [vmem:[%s3 + $0xa8] sm:$0xf]
    %v3002 = vld [vmem:[%s3 + $0xac] sm:$0xf]
    %v3003 = vld [vmem:[%s3 + $0xb0] sm:$0xf]
    %v3004 = vld [vmem:[%s3 + $0xb4] sm:$0xf]
    %v3005 = vld [vmem:[%s3 + $0xb8] sm:$0xf]
    %v3006 = vld [vmem:[%s3 + $0xbc] sm:$0xf]
    %v3007 = vld [vmem:[%s3 + $0xc0] sm:$0xf]
    %v3008 = vld [vmem:[%s3 + $0xc4] sm:$0xf]
    %v3009 = vld [vmem:[%s3 + $0xc8] sm:$0xf]
    %v3010 = vld [vmem:[%s3 + $0xcc] sm:$0xf]
    %v3011 = vld [vmem:[%s3 + $0xd0] sm:$0xf]
    %v3012 = vld [vmem:[%s3 + $0xd4] sm:$0xf]
    %v3013 = vld [vmem:[%s3 + $0xd8] sm:$0xf]
    %v3014 = vld [vmem:[%s3 + $0xdc] sm:$0xf]
    %v3015 = vld [vmem:[%s3 + $0xe0] sm:$0xf]
    %v3016 = vld [vmem:[%s3 + $0xe4] sm:$0xf]
    %v3017 = vld [vmem:[%s3 + $0xe8] sm:$0xf]
    %v3018 = vld [vmem:[%s3 + $0xec] sm:$0xf]
    %v3019 = vld [vmem:[%s3 + $0xf0] sm:$0xf]
    %v3020 = vld [vmem:[%s3 + $0xf4] sm:$0xf]
    %v3021 = vld [vmem:[%s3 + $0xf8] sm:$0xf]
    %v3022 = vld [vmem:[%s3 + $0xfc] sm:$0xf]
    %v3023 = vld [vmem:[%s3 + $0x100] sm:$0xf]
    %v3024 = vld [vmem:[%s3 + $0x104] sm:$0xf]
    %v3025 = vld [vmem:[%s3 + $0x108] sm:$0xf]
    %v3026 = vld [vmem:[%s3 + $0x10c] sm:$0xf]
    %v3027 = vld [vmem:[%s3 + $0x110] sm:$0xf]
    %v3028 = vld [vmem:[%s3 + $0x114] sm:$0xf]
    %v3029 = vld [vmem:[%s3 + $0x118] sm:$0xf]
    %v3030 = vld [vmem:[%s3 + $0x11c] sm:$0xf]
    %v3031 = vld [vmem:[%s3 + $0x120] sm:$0xf]
    %v3032 = vld [vmem:[%s3 + $0x124] sm:$0xf]
    %v3033 = vld [vmem:[%s3 + $0x128] sm:$0xf]
    %v3034 = vld [vmem:[%s3 + $0x12c] sm:$0xf]
    %v3035 = vld [vmem:[%s3 + $0x130] sm:$0xf]
    %v3036 = vld [vmem:[%s3 + $0x134] sm:$0xf]
    %v3037 = vld [vmem:[%s3 + $0x138] sm:$0xf]
    %v3038 = vld [vmem:[%s3 + $0x13c] sm:$0xf]
    %v3039 = vld [vmem:[%s3 + $0x140] sm:$0xf]
    %v3040 = vld [vmem:[%s3 + $0x144] sm:$0xf]
    %v3041 = vld [vmem:[%s3 + $0x148] sm:$0xf]
    %v3042 = vld [vmem:[%s3 + $0x14c] sm:$0xf]
    %v3043 = vld [vmem:[%s3 + $0x150] sm:$0xf]
    %v3044 = vld [vmem:[%s3 + $0x154] sm:$0xf]
    %v3045 = vld [vmem:[%s3 + $0x158] sm:$0xf]
    %v3046 = vld [vmem:[%s3 + $0x15c] sm:$0xf]
    %v3047 = vld [vmem:[%s3 + $0x160] sm:$0xf]
    %v3048 = vld [vmem:[%s3 + $0x164] sm:$0xf]
    %v3049 = vld [vmem:[%s3 + $0x168] sm:$0xf]
    %v3050 = vld [vmem:[%s3 + $0x16c] sm:$0xf]
    %v3051 = vld [vmem:[%s3 + $0x170] sm:$0xf]
    %v3052 = vld [vmem:[%s3 + $0x174] sm:$0xf]
    %v3053 = vld [vmem:[%s3 + $0x178] sm:$0xf]
    %v3054 = vld [vmem:[%s3 + $0x17c] sm:$0xf]
    %v3055 = vld [vmem:[%s3 + $0x180] sm:$0xf]
    %v3056 = vld [vmem:[%s3 + $0x184] sm:$0xf]
    %v3057 = vld [vmem:[%s3 + $0x188] sm:$0xf]
    %v3058 = vld [vmem:[%s3 + $0x18c] sm:$0xf]
    %v3059 = vld [vmem:[%s3 + $0x190] sm:$0xf]
    %v3060 = vld [vmem:[%s3 + $0x194] sm:$0xf]
    %v3061 = vld [vmem:[%s3 + $0x198] sm:$0xf]
    %v3062 = vld [vmem:[%s3 + $0x19c] sm:$0xf]
    %v3063 = vld [vmem:[%s3 + $0x1a0] sm:$0xf]
    %v3064 = vld [vmem:[%s3 + $0x1a4] sm:$0xf]
    %v3065 = vld [vmem:[%s3 + $0x1a8] sm:$0xf]
    %v3066 = vld [vmem:[%s3 + $0x1ac] sm:$0xf]
    %v3067 = vld [vmem:[%s3 + $0x1b0] sm:$0xf]
    %v3068 = vld [vmem:[%s3 + $0x1b4] sm:$0xf]
    %v3069 = vld [vmem:[%s3 + $0x1b8] sm:$0xf]
    %v3070 = vld [vmem:[%s3 + $0x1bc] sm:$0xf]
    %v3071 = vld [vmem:[%s3 + $0x1c0] sm:$0xf]
    %v3072 = vld [vmem:[%s3 + $0x1c4] sm:$0xf]
    %v3073 = vld [vmem:[%s3 + $0x1c8] sm:$0xf]
    %v3074 = vld [vmem:[%s3 + $0x1cc] sm:$0xf]
    %v3075 = vld [vmem:[%s3 + $0x1d0] sm:$0xf]
    %v3076 = vld [vmem:[%s3 + $0x1d4] sm:$0xf]
    %v3077 = vld [vmem:[%s3 + $0x1d8] sm:$0xf]
    %v3078 = vld [vmem:[%s3 + $0x1dc] sm:$0xf]
    %v3079 = vld [vmem:[%s3 + $0x1e0] sm:$0xf]
    %v3080 = vld [vmem:[%s3 + $0x1e4] sm:$0xf]
    %v3081 = vld [vmem:[%s3 + $0x1e8] sm:$0xf]
    %v3082 = vld [vmem:[%s3 + $0x1ec] sm:$0xf]
    %v3083 = vld [vmem:[%s3 + $0x1f0] sm:$0xf]
    %v3084 = vld [vmem:[%s3 + $0x1f4] sm:$0xf]
    %v3085 = vld [vmem:[%s3 + $0x1f8] sm:$0xf]
    %v3086 = vld [vmem:[%s3 + $0x1fc] sm:$0xf]
    %v3087 = vld [vmem:[%s3 + $0x200] sm:$0xf]
    %v3088 = vld [vmem:[%s3 + $0x204] sm:$0xf]
    %v3089 = vld [vmem:[%s3 + $0x208] sm:$0xf]
    %v3090 = vld [vmem:[%s3 + $0x20c] sm:$0xf]
    %v3091 = vld [vmem:[%s3 + $0x210] sm:$0xf]
    %v3092 = vld [vmem:[%s3 + $0x214] sm:$0xf]
    %v3093 = vld [vmem:[%s3 + $0x218] sm:$0xf]
    %v3094 = vld [vmem:[%s3 + $0x21c] sm:$0xf]
    %v3095 = vld [vmem:[%s3 + $0x220] sm:$0xf]
    %v3096 = vld [vmem:[%s3 + $0x224] sm:$0xf]
    %v3097 = vld [vmem:[%s3 + $0x228] sm:$0xf]
    %v3098 = vld [vmem:[%s3 + $0x22c] sm:$0xf]
    %v3099 = vld [vmem:[%s3 + $0x230] sm:$0xf]
    %v3100 = vld [vmem:[%s3 + $0x234] sm:$0xf]
    %v3101 = vld [vmem:[%s3 + $0x238] sm:$0xf]
    %v3102 = vld [vmem:[%s3 + $0x23c] sm:$0xf]
    %v3103 = vld [vmem:[%s3 + $0x240] sm:$0xf]
    %v3104 = vld [vmem:[%s3 + $0x244] sm:$0xf]
    %v3105 = vld [vmem:[%s3 + $0x248] sm:$0xf]
    %v3106 = vld [vmem:[%s3 + $0x24c] sm:$0xf]
    %v3107 = vld [vmem:[%s3 + $0x250] sm:$0xf]
    %v3108 = vld [vmem:[%s3 + $0x254] sm:$0xf]
    %v3109 = vld [vmem:[%s3 + $0x258] sm:$0xf]
    %v3110 = vld [vmem:[%s3 + $0x25c] sm:$0xf]
    %v3111 = vld [vmem:[%s3 + $0x260] sm:$0xf]
    %v3112 = vld [vmem:[%s3 + $0x264] sm:$0xf]
    %v3113 = vld [vmem:[%s3 + $0x268] sm:$0xf]
    %v3114 = vld [vmem:[%s3 + $0x26c] sm:$0xf]
    %v3115 = vld [vmem:[%s3 + $0x270] sm:$0xf]
    %v3116 = vld [vmem:[%s3 + $0x274] sm:$0xf]
    %v3117 = vld [vmem:[%s3 + $0x278] sm:$0xf]
    %v3118 = vld [vmem:[%s3 + $0x27c] sm:$0xf]
    %v3119 = vld [vmem:[%s3 + $0x280] sm:$0xf]
    %v3120 = vld [vmem:[%s3 + $0x284] sm:$0xf]
    %v3121 = vld [vmem:[%s3 + $0x288] sm:$0xf]
    %v3122 = vld [vmem:[%s3 + $0x28c] sm:$0xf]
    %v3123 = vld [vmem:[%s3 + $0x290] sm:$0xf]
    %v3124 = vld [vmem:[%s3 + $0x294] sm:$0xf]
    %v3125 = vld [vmem:[%s3 + $0x298] sm:$0xf]
    %v3126 = vld [vmem:[%s3 + $0x29c] sm:$0xf]
    %v3127 = vld [vmem:[%s3 + $0x2a0] sm:$0xf]
    %v3128 = vld [vmem:[%s3 + $0x2a4] sm:$0xf]
    %v3129 = vld [vmem:[%s3 + $0x2a8] sm:$0xf]
    %v3130 = vld [vmem:[%s3 + $0x2ac] sm:$0xf]
    %v3131 = vld [vmem:[%s3 + $0x2b0] sm:$0xf]
    %v3132 = vld [vmem:[%s3 + $0x2b4] sm:$0xf]
    %v3133 = vld [vmem:[%s3 + $0x2b8] sm:$0xf]
    %v3134 = vld [vmem:[%s3 + $0x2bc] sm:$0xf]
    %v3135 = vld [vmem:[%s3 + $0x2c0] sm:$0xf]
    %v3136 = vld [vmem:[%s3 + $0x2c4] sm:$0xf]
    %v3137 = vld [vmem:[%s3 + $0x2c8] sm:$0xf]
    %v3138 = vld [vmem:[%s3 + $0x2cc] sm:$0xf]
    %v3139 = vld [vmem:[%s3 + $0x2d0] sm:$0xf]
    %v3140 = vld [vmem:[%s3 + $0x2d4] sm:$0xf]
    %v3141 = vld [vmem:[%s3 + $0x2d8] sm:$0xf]
    %v3142 = vld [vmem:[%s3 + $0x2dc] sm:$0xf]
    %v3143 = vld [vmem:[%s3 + $0x2e0] sm:$0xf]
    %v3144 = vld [vmem:[%s3 + $0x2e4] sm:$0xf]
    %v3145 = vld [vmem:[%s3 + $0x2e8] sm:$0xf]
    %v3146 = vld [vmem:[%s3 + $0x2ec] sm:$0xf]
    %v3147 = vld [vmem:[%s3 + $0x2f0] sm:$0xf]
    %v3148 = vld [vmem:[%s3 + $0x2f4] sm:$0xf]
    %v3149 = vld [vmem:[%s3 + $0x2f8] sm:$0xf]
    %v3150 = vld [vmem:[%s3 + $0x2fc] sm:$0xf]
    %v3151 = vld [vmem:[%s3 + $0x300] sm:$0xf]
    %v3152 = vld [vmem:[%s3 + $0x304] sm:$0xf]
    %v3153 = vld [vmem:[%s3 + $0x308] sm:$0xf]
    %v3154 = vld [vmem:[%s3 + $0x30c] sm:$0xf]
    %v3155 = vld [vmem:[%s3 + $0x310] sm:$0xf]
    %v3156 = vld [vmem:[%s3 + $0x314] sm:$0xf]
    %v3157 = vld [vmem:[%s3 + $0x318] sm:$0xf]
    %v3158 = vld [vmem:[%s3 + $0x31c] sm:$0xf]
    %v3159 = vld [vmem:[%s3 + $0x320] sm:$0xf]
    %v3160 = vld [vmem:[%s3 + $0x324] sm:$0xf]
    %v3161 = vld [vmem:[%s3 + $0x328] sm:$0xf]
    %v3162 = vld [vmem:[%s3 + $0x32c] sm:$0xf]
    %v3163 = vld [vmem:[%s3 + $0x330] sm:$0xf]
    %v3164 = vld [vmem:[%s3 + $0x334] sm:$0xf]
    %v3165 = vld [vmem:[%s3 + $0x338] sm:$0xf]
    %v3166 = vld [vmem:[%s3 + $0x33c] sm:$0xf]
    %v3167 = vld [vmem:[%s3 + $0x340] sm:$0xf]
    %v3168 = vld [vmem:[%s3 + $0x344] sm:$0xf]
    %v3169 = vld [vmem:[%s3 + $0x348] sm:$0xf]
    %v3170 = vld [vmem:[%s3 + $0x34c] sm:$0xf]
    %v3171 = vld [vmem:[%s3 + $0x350] sm:$0xf]
    %v3172 = vld [vmem:[%s3 + $0x354] sm:$0xf]
    %v3173 = vld [vmem:[%s3 + $0x358] sm:$0xf]
    %v3174 = vld [vmem:[%s3 + $0x35c] sm:$0xf]
    %v3175 = vld [vmem:[%s3 + $0x360] sm:$0xf]
    %v3176 = vld [vmem:[%s3 + $0x364] sm:$0xf]
    %v3177 = vld [vmem:[%s3 + $0x368] sm:$0xf]
    %v3178 = vld [vmem:[%s3 + $0x36c] sm:$0xf]
    %v3179 = vld [vmem:[%s3 + $0x370] sm:$0xf]
    %v3180 = vld [vmem:[%s3 + $0x374] sm:$0xf]
    %v3181 = vld [vmem:[%s3 + $0x378] sm:$0xf]
    %v3182 = vld [vmem:[%s3 + $0x37c] sm:$0xf]
    %v3183 = vld [vmem:[%s3 + $0x380] sm:$0xf]
    %v3184 = vld [vmem:[%s3 + $0x384] sm:$0xf]
    %v3185 = vld [vmem:[%s3 + $0x388] sm:$0xf]
    %v3186 = vld [vmem:[%s3 + $0x38c] sm:$0xf]
    %v3187 = vld [vmem:[%s3 + $0x390] sm:$0xf]
    %v3188 = vld [vmem:[%s3 + $0x394] sm:$0xf]
    %v3189 = vld [vmem:[%s3 + $0x398] sm:$0xf]
    %v3190 = vld [vmem:[%s3 + $0x39c] sm:$0xf]
    %v3191 = vld [vmem:[%s3 + $0x3a0] sm:$0xf]
    %v3192 = vld [vmem:[%s3 + $0x3a4] sm:$0xf]
    %v3193 = vld [vmem:[%s3 + $0x3a8] sm:$0xf]
    %v3194 = vld [vmem:[%s3 + $0x3ac] sm:$0xf]
    %v3195 = vld [vmem:[%s3 + $0x3b0] sm:$0xf]
    %v3196 = vld [vmem:[%s3 + $0x3b4] sm:$0xf]
    %v3197 = vld [vmem:[%s3 + $0x3b8] sm:$0xf]
    %v3198 = vld [vmem:[%s3 + $0x3bc] sm:$0xf]
    %v3199 = vld [vmem:[%s3 + $0x3c0] sm:$0xf]
    %v3200 = vld [vmem:[%s3 + $0x3c4] sm:$0xf]
    %v3201 = vld [vmem:[%s3 + $0x3c8] sm:$0xf]
    %v3202 = vld [vmem:[%s3 + $0x3cc] sm:$0xf]
    %v3203 = vld [vmem:[%s3 + $0x3d0] sm:$0xf]
    %v3204 = vld [vmem:[%s3 + $0x3d4] sm:$0xf]
    %v3205 = vld [vmem:[%s3 + $0x3d8] sm:$0xf]
    %v3206 = vld [vmem:[%s3 + $0x3dc] sm:$0xf]
    %v3207 = vld [vmem:[%s3 + $0x3e0] sm:$0xf]
    %v3208 = vld [vmem:[%s3 + $0x3e4] sm:$0xf]
    %v3209 = vld [vmem:[%s3 + $0x3e8] sm:$0xf]
    %v3210 = vld [vmem:[%s3 + $0x3ec] sm:$0xf]
    %v3211 = vld [vmem:[%s3 + $0x3f0] sm:$0xf]
    %v3212 = vld [vmem:[%s3 + $0x3f4] sm:$0xf]
    %v3213 = vld [vmem:[%s3 + $0x3f8] sm:$0xf]
    %v3214 = vld [vmem:[%s3 + $0x3fc] sm:$0xf]
    %v3215 = vld [vmem:[%s3 + $0x400] sm:$0xf]
    %v3216 = vld [vmem:[%s3 + $0x404] sm:$0xf]
    %v3217 = vld [vmem:[%s3 + $0x408] sm:$0xf]
    %v3218 = vld [vmem:[%s3 + $0x40c] sm:$0xf]
    %v3219 = vld [vmem:[%s3 + $0x410] sm:$0xf]
    %v3220 = vld [vmem:[%s3 + $0x414] sm:$0xf]
    %v3221 = vld [vmem:[%s3 + $0x418] sm:$0xf]
    %v3222 = vld [vmem:[%s3 + $0x41c] sm:$0xf]
    %v3223 = vld [vmem:[%s3 + $0x420] sm:$0xf]
    %v3224 = vld [vmem:[%s3 + $0x424] sm:$0xf]
    %v3225 = vld [vmem:[%s3 + $0x428] sm:$0xf]
    %v3226 = vld [vmem:[%s3 + $0x42c] sm:$0xf]
    %v3227 = vld [vmem:[%s3 + $0x430] sm:$0xf]
    %v3228 = vld [vmem:[%s3 + $0x434] sm:$0xf]
    %v3229 = vld [vmem:[%s3 + $0x438] sm:$0xf]
    %v3230 = vld [vmem:[%s3 + $0x43c] sm:$0xf]
    %v3231 = vld [vmem:[%s3 + $0x440] sm:$0xf]
    %v3232 = vld [vmem:[%s3 + $0x444] sm:$0xf]
    %v3233 = vld [vmem:[%s3 + $0x448] sm:$0xf]
    %v3234 = vld [vmem:[%s3 + $0x44c] sm:$0xf]
    %v3235 = vld [vmem:[%s3 + $0x450] sm:$0xf]
    %v3236 = vld [vmem:[%s3 + $0x454] sm:$0xf]
    %v3237 = vld [vmem:[%s3 + $0x458] sm:$0xf]
    %v3238 = vld [vmem:[%s3 + $0x45c] sm:$0xf]
    %v3239 = vld [vmem:[%s3 + $0x460] sm:$0xf]
    %v3240 = vld [vmem:[%s3 + $0x464] sm:$0xf]
    %v3241 = vld [vmem:[%s3 + $0x468] sm:$0xf]
    %v3242 = vld [vmem:[%s3 + $0x46c] sm:$0xf]
    %v3243 = vld [vmem:[%s3 + $0x470] sm:$0xf]
    %v3244 = vld [vmem:[%s3 + $0x474] sm:$0xf]
    %v3245 = vld [vmem:[%s3 + $0x478] sm:$0xf]
    %v3246 = vld [vmem:[%s3 + $0x47c] sm:$0xf]
    %v3247 = vld [vmem:[%s3 + $0x480] sm:$0xf]
    %v3248 = vld [vmem:[%s3 + $0x484] sm:$0xf]
    %v3249 = vld [vmem:[%s3 + $0x488] sm:$0xf]
    %v3250 = vld [vmem:[%s3 + $0x48c] sm:$0xf]
    %v3251 = vld [vmem:[%s3 + $0x490] sm:$0xf]
    %v3252 = vld [vmem:[%s3 + $0x494] sm:$0xf]
    %v3253 = vld [vmem:[%s3 + $0x498] sm:$0xf]
    %v3254 = vld [vmem:[%s3 + $0x49c] sm:$0xf]
    %v3255 = vld [vmem:[%s3 + $0x4a0] sm:$0xf]
    %v3256 = vld [vmem:[%s3 + $0x4a4] sm:$0xf]
    %v3257 = vld [vmem:[%s3 + $0x4a8] sm:$0xf]
    %v3258 = vld [vmem:[%s3 + $0x4ac] sm:$0xf]
    %v3259 = vld [vmem:[%s3 + $0x4b0] sm:$0xf]
    %v3260 = vld [vmem:[%s3 + $0x4b4] sm:$0xf]
    %v3261 = vld [vmem:[%s3 + $0x4b8] sm:$0xf]
    %v3262 = vld [vmem:[%s3 + $0x4bc] sm:$0xf]
    %v3263 = vld [vmem:[%s3 + $0x4c0] sm:$0xf]
    %v3264 = vld [vmem:[%s3 + $0x4c4] sm:$0xf]
    %v3265 = vld [vmem:[%s3 + $0x4c8] sm:$0xf]
    %v3266 = vld [vmem:[%s3 + $0x4cc] sm:$0xf]
    %v3267 = vld [vmem:[%s3 + $0x4d0] sm:$0xf]
    %v3268 = vld [vmem:[%s3 + $0x4d4] sm:$0xf]
    %v3269 = vld [vmem:[%s3 + $0x4d8] sm:$0xf]
    %v3270 = vld [vmem:[%s3 + $0x4dc] sm:$0xf]
    %v3271 = vld [vmem:[%s3 + $0x4e0] sm:$0xf]
    %v3272 = vld [vmem:[%s3 + $0x4e4] sm:$0xf]
    %v3273 = vld [vmem:[%s3 + $0x4e8] sm:$0xf]
    %v3274 = vld [vmem:[%s3 + $0x4ec] sm:$0xf]
    %v3275 = vld [vmem:[%s3 + $0x4f0] sm:$0xf]
    %v3276 = vld [vmem:[%s3 + $0x4f4] sm:$0xf]
    %v3277 = vld [vmem:[%s3 + $0x4f8] sm:$0xf]
    %v3278 = vld [vmem:[%s3 + $0x4fc] sm:$0xf]
    %v3279 = vld [vmem:[%s3 + $0x500] sm:$0xf]
    %v3280 = vld [vmem:[%s3 + $0x504] sm:$0xf]
    %v3281 = vld [vmem:[%s3 + $0x508] sm:$0xf]
    %v3282 = vld [vmem:[%s3 + $0x50c] sm:$0xf]
    %v3283 = vld [vmem:[%s3 + $0x510] sm:$0xf]
    %v3284 = vld [vmem:[%s3 + $0x514] sm:$0xf]
    %v3285 = vld [vmem:[%s3 + $0x518] sm:$0xf]
    %v3286 = vld [vmem:[%s3 + $0x51c] sm:$0xf]
    %v3287 = vld [vmem:[%s3 + $0x520] sm:$0xf]
    %v3288 = vld [vmem:[%s3 + $0x524] sm:$0xf]
    %v3289 = vld [vmem:[%s3 + $0x528] sm:$0xf]
    %v3290 = vld [vmem:[%s3 + $0x52c] sm:$0xf]
    %v3291 = vld [vmem:[%s3 + $0x530] sm:$0xf]
    %v3292 = vld [vmem:[%s3 + $0x534] sm:$0xf]
    %v3293 = vld [vmem:[%s3 + $0x538] sm:$0xf]
    %v3294 = vld [vmem:[%s3 + $0x53c] sm:$0xf]
    %v3295 = vld [vmem:[%s3 + $0x540] sm:$0xf]
    %v3296 = vld [vmem:[%s3 + $0x544] sm:$0xf]
    %v3297 = vld [vmem:[%s3 + $0x548] sm:$0xf]
    %v3298 = vld [vmem:[%s3 + $0x54c] sm:$0xf]
    %v3299 = vld [vmem:[%s3 + $0x550] sm:$0xf]
    %v3300 = vld [vmem:[%s3 + $0x554] sm:$0xf]
    %v3301 = vld [vmem:[%s3 + $0x558] sm:$0xf]
    %v3302 = vld [vmem:[%s3 + $0x55c] sm:$0xf]
    %v3303 = vld [vmem:[%s3 + $0x560] sm:$0xf]
    %v3304 = vld [vmem:[%s3 + $0x564] sm:$0xf]
    %v3305 = vld [vmem:[%s3 + $0x568] sm:$0xf]
    %v3306 = vld [vmem:[%s3 + $0x56c] sm:$0xf]
    %v3307 = vld [vmem:[%s3 + $0x570] sm:$0xf]
    %v3308 = vld [vmem:[%s3 + $0x574] sm:$0xf]
    %v3309 = vld [vmem:[%s3 + $0x578] sm:$0xf]
    %v3310 = vld [vmem:[%s3 + $0x57c] sm:$0xf]
    %v3311 = vld [vmem:[%s3 + $0x580] sm:$0xf]
    %v3312 = vld [vmem:[%s3 + $0x584] sm:$0xf]
    %v3313 = vld [vmem:[%s3 + $0x588] sm:$0xf]
    %v3314 = vld [vmem:[%s3 + $0x58c] sm:$0xf]
    %v3315 = vld [vmem:[%s3 + $0x590] sm:$0xf]
    %v3316 = vld [vmem:[%s3 + $0x594] sm:$0xf]
    %v3317 = vld [vmem:[%s3 + $0x598] sm:$0xf]
    %v3318 = vld [vmem:[%s3 + $0x59c] sm:$0xf]
    %v3319 = vld [vmem:[%s3 + $0x5a0] sm:$0xf]
    %v3320 = vld [vmem:[%s3 + $0x5a4] sm:$0xf]
    %v3321 = vld [vmem:[%s3 + $0x5a8] sm:$0xf]
    %v3322 = vld [vmem:[%s3 + $0x5ac] sm:$0xf]
    %v3323 = vld [vmem:[%s3 + $0x5b0] sm:$0xf]
    %v3324 = vld [vmem:[%s3 + $0x5b4] sm:$0xf]
    %v3325 = vld [vmem:[%s3 + $0x5b8] sm:$0xf]
    %v3326 = vld [vmem:[%s3 + $0x5bc] sm:$0xf]
    %v3327 = vld [vmem:[%s3 + $0x5c0] sm:$0xf]
    %v3328 = vld [vmem:[%s3 + $0x5c4] sm:$0xf]
    %v3329 = vld [vmem:[%s3 + $0x5c8] sm:$0xf]
    %v3330 = vld [vmem:[%s3 + $0x5cc] sm:$0xf]
    %v3331 = vld [vmem:[%s3 + $0x5d0] sm:$0xf]
    %v3332 = vld [vmem:[%s3 + $0x5d4] sm:$0xf]
    %v3333 = vld [vmem:[%s3 + $0x5d8] sm:$0xf]
    %v3334 = vld [vmem:[%s3 + $0x5dc] sm:$0xf]
    %v3335 = vld [vmem:[%s3 + $0x5e0] sm:$0xf]
    %v3336 = vld [vmem:[%s3 + $0x5e4] sm:$0xf]
    %v3337 = vld [vmem:[%s3 + $0x5e8] sm:$0xf]
    %v3338 = vld [vmem:[%s3 + $0x5ec] sm:$0xf]
    %v3339 = vld [vmem:[%s3 + $0x5f0] sm:$0xf]
    %v3340 = vld [vmem:[%s3 + $0x5f4] sm:$0xf]
    %v3341 = vld [vmem:[%s3 + $0x5f8] sm:$0xf]
    %v3342 = vld [vmem:[%s3 + $0x5fc] sm:$0xf]
    %v3343 = vld [vmem:[%s3 + $0x600] sm:$0xf]
    %v3344 = vld [vmem:[%s3 + $0x604] sm:$0xf]
    %v3345 = vld [vmem:[%s3 + $0x608] sm:$0xf]
    %v3346 = vld [vmem:[%s3 + $0x60c] sm:$0xf]
    %v3347 = vld [vmem:[%s3 + $0x610] sm:$0xf]
    %v3348 = vld [vmem:[%s3 + $0x614] sm:$0xf]
    %v3349 = vld [vmem:[%s3 + $0x618] sm:$0xf]
    %v3350 = vld [vmem:[%s3 + $0x61c] sm:$0xf]
    %v3351 = vld [vmem:[%s3 + $0x620] sm:$0xf]
    %v3352 = vld [vmem:[%s3 + $0x624] sm:$0xf]
    %v3353 = vld [vmem:[%s3 + $0x628] sm:$0xf]
    %v3354 = vld [vmem:[%s3 + $0x62c] sm:$0xf]
    %v3355 = vld [vmem:[%s3 + $0x630] sm:$0xf]
    %v3356 = vld [vmem:[%s3 + $0x634] sm:$0xf]
    %v3357 = vld [vmem:[%s3 + $0x638] sm:$0xf]
    %v3358 = vld [vmem:[%s3 + $0x63c] sm:$0xf]
    %v3359 = vld [vmem:[%s3 + $0x640] sm:$0xf]
    %v3360 = vld [vmem:[%s3 + $0x644] sm:$0xf]
    %v3361 = vld [vmem:[%s3 + $0x648] sm:$0xf]
    %v3362 = vld [vmem:[%s3 + $0x64c] sm:$0xf]
    %v3363 = vld [vmem:[%s3 + $0x650] sm:$0xf]
    %v3364 = vld [vmem:[%s3 + $0x654] sm:$0xf]
    %v3365 = vld [vmem:[%s3 + $0x658] sm:$0xf]
    %v3366 = vld [vmem:[%s3 + $0x65c] sm:$0xf]
    %v3367 = vld [vmem:[%s3 + $0x660] sm:$0xf]
    %v3368 = vld [vmem:[%s3 + $0x664] sm:$0xf]
    %v3369 = vld [vmem:[%s3 + $0x668] sm:$0xf]
    %v3370 = vld [vmem:[%s3 + $0x66c] sm:$0xf]
    %v3371 = vld [vmem:[%s3 + $0x670] sm:$0xf]
    %v3372 = vld [vmem:[%s3 + $0x674] sm:$0xf]
    %v3373 = vld [vmem:[%s3 + $0x678] sm:$0xf]
    %v3374 = vld [vmem:[%s3 + $0x67c] sm:$0xf]
    %v3375 = vld [vmem:[%s3 + $0x680] sm:$0xf]
    %v3376 = vld [vmem:[%s3 + $0x684] sm:$0xf]
    %v3377 = vld [vmem:[%s3 + $0x688] sm:$0xf]
    %v3378 = vld [vmem:[%s3 + $0x68c] sm:$0xf]
    %v3379 = vld [vmem:[%s3 + $0x690] sm:$0xf]
    %v3380 = vld [vmem:[%s3 + $0x694] sm:$0xf]
    %v3381 = vld [vmem:[%s3 + $0x698] sm:$0xf]
    %v3382 = vld [vmem:[%s3 + $0x69c] sm:$0xf]
    %v3383 = vld [vmem:[%s3 + $0x6a0] sm:$0xf]
    %v3384 = vld [vmem:[%s3 + $0x6a4] sm:$0xf]
    %v3385 = vld [vmem:[%s3 + $0x6a8] sm:$0xf]
    %v3386 = vld [vmem:[%s3 + $0x6ac] sm:$0xf]
    %v3387 = vld [vmem:[%s3 + $0x6b0] sm:$0xf]
    %v3388 = vld [vmem:[%s3 + $0x6b4] sm:$0xf]
    %v3389 = vld [vmem:[%s3 + $0x6b8] sm:$0xf]
    %v3390 = vld [vmem:[%s3 + $0x6bc] sm:$0xf]
    %v3391 = vld [vmem:[%s3 + $0x6c0] sm:$0xf]
    %v3392 = vld [vmem:[%s3 + $0x6c4] sm:$0xf]
    %v3393 = vld [vmem:[%s3 + $0x6c8] sm:$0xf]
    %v3394 = vld [vmem:[%s3 + $0x6cc] sm:$0xf]
    %v3395 = vld [vmem:[%s3 + $0x6d0] sm:$0xf]
    %v3396 = vld [vmem:[%s3 + $0x6d4] sm:$0xf]
    %v3397 = vld [vmem:[%s3 + $0x6d8] sm:$0xf]
    %v3398 = vld [vmem:[%s3 + $0x6dc] sm:$0xf]
    %v3399 = vld [vmem:[%s3 + $0x6e0] sm:$0xf]
    %v3400 = vld [vmem:[%s3 + $0x6e4] sm:$0xf]
    %v3401 = vld [vmem:[%s3 + $0x6e8] sm:$0xf]
    %v3402 = vld [vmem:[%s3 + $0x6ec] sm:$0xf]
    %v3403 = vld [vmem:[%s3 + $0x6f0] sm:$0xf]
    %v3404 = vld [vmem:[%s3 + $0x6f4] sm:$0xf]
    %v3405 = vld [vmem:[%s3 + $0x6f8] sm:$0xf]
    %v3406 = vld [vmem:[%s3 + $0x6fc] sm:$0xf]
    %v3407 = vld [vmem:[%s3 + $0x700] sm:$0xf]
    %v3408 = vld [vmem:[%s3 + $0x704] sm:$0xf]
    %v3409 = vld [vmem:[%s3 + $0x708] sm:$0xf]
    %v3410 = vld [vmem:[%s3 + $0x70c] sm:$0xf]
    %v3411 = vld [vmem:[%s3 + $0x710] sm:$0xf]
    %v3412 = vld [vmem:[%s3 + $0x714] sm:$0xf]
    %v3413 = vld [vmem:[%s3 + $0x718] sm:$0xf]
    %v3414 = vld [vmem:[%s3 + $0x71c] sm:$0xf]
    %v3415 = vld [vmem:[%s3 + $0x720] sm:$0xf]
    %v3416 = vld [vmem:[%s3 + $0x724] sm:$0xf]
    %v3417 = vld [vmem:[%s3 + $0x728] sm:$0xf]
    %v3418 = vld [vmem:[%s3 + $0x72c] sm:$0xf]
    %v3419 = vld [vmem:[%s3 + $0x730] sm:$0xf]
    %v3420 = vld [vmem:[%s3 + $0x734] sm:$0xf]
    %v3421 = vld [vmem:[%s3 + $0x738] sm:$0xf]
    %v3422 = vld [vmem:[%s3 + $0x73c] sm:$0xf]
    %v3423 = vld [vmem:[%s3 + $0x740] sm:$0xf]
    %v3424 = vld [vmem:[%s3 + $0x744] sm:$0xf]
    %v3425 = vld [vmem:[%s3 + $0x748] sm:$0xf]
    %v3426 = vld [vmem:[%s3 + $0x74c] sm:$0xf]
    %v3427 = vld [vmem:[%s3 + $0x750] sm:$0xf]
    %v3428 = vld [vmem:[%s3 + $0x754] sm:$0xf]
    %v3429 = vld [vmem:[%s3 + $0x758] sm:$0xf]
    %v3430 = vld [vmem:[%s3 + $0x75c] sm:$0xf]
    %v3431 = vld [vmem:[%s3 + $0x760] sm:$0xf]
    %v3432 = vld [vmem:[%s3 + $0x764] sm:$0xf]
    %v3433 = vld [vmem:[%s3 + $0x768] sm:$0xf]
    %v3434 = vld [vmem:[%s3 + $0x76c] sm:$0xf]
    %v3435 = vld [vmem:[%s3 + $0x770] sm:$0xf]
    %v3436 = vld [vmem:[%s3 + $0x774] sm:$0xf]
    %v3437 = vld [vmem:[%s3 + $0x778] sm:$0xf]
    %v3438 = vld [vmem:[%s3 + $0x77c] sm:$0xf]
    %v3439 = vld [vmem:[%s3 + $0x780] sm:$0xf]
    %v3440 = vld [vmem:[%s3 + $0x784] sm:$0xf]
    %v3441 = vld [vmem:[%s3 + $0x788] sm:$0xf]
    %v3442 = vld [vmem:[%s3 + $0x78c] sm:$0xf]
    %v3443 = vld [vmem:[%s3 + $0x790] sm:$0xf]
    %v3444 = vld [vmem:[%s3 + $0x794] sm:$0xf]
    %v3445 = vld [vmem:[%s3 + $0x798] sm:$0xf]
    %v3446 = vld [vmem:[%s3 + $0x79c] sm:$0xf]
    %v3447 = vld [vmem:[%s3 + $0x7a0] sm:$0xf]
    %v3448 = vld [vmem:[%s3 + $0x7a4] sm:$0xf]
    %v3449 = vld [vmem:[%s3 + $0x7a8] sm:$0xf]
    %v3450 = vld [vmem:[%s3 + $0x7ac] sm:$0xf]
    %v3451 = vld [vmem:[%s3 + $0x7b0] sm:$0xf]
    %v3452 = vld [vmem:[%s3 + $0x7b4] sm:$0xf]
    %v3453 = vld [vmem:[%s3 + $0x7b8] sm:$0xf]
    %v3454 = vld [vmem:[%s3 + $0x7bc] sm:$0xf]
    %v3455 = vld [vmem:[%s3 + $0x7c0] sm:$0xf]
    %v3456 = vld [vmem:[%s3 + $0x7c4] sm:$0xf]
    %v3457 = vld [vmem:[%s3 + $0x7c8] sm:$0xf]
    %v3458 = vld [vmem:[%s3 + $0x7cc] sm:$0xf]
    %v3459 = vld [vmem:[%s3 + $0x7d0] sm:$0xf]
    %v3460 = vld [vmem:[%s3 + $0x7d4] sm:$0xf]
    %v3461 = vld [vmem:[%s3 + $0x7d8] sm:$0xf]
    %v3462 = vld [vmem:[%s3 + $0x7dc] sm:$0xf]
    %v3463 = vld [vmem:[%s3 + $0x7e0] sm:$0xf]
    %v3464 = vld [vmem:[%s3 + $0x7e4] sm:$0xf]
    %v3465 = vld [vmem:[%s3 + $0x7e8] sm:$0xf]
    %v3466 = vld [vmem:[%s3 + $0x7ec] sm:$0xf]
    %v3467 = vld [vmem:[%s3 + $0x7f0] sm:$0xf]
    %v3468 = vld [vmem:[%s3 + $0x7f4] sm:$0xf]
    %v3469 = vld [vmem:[%s3 + $0x7f8] sm:$0xf]
    %v3470 = vld [vmem:[%s3 + $0x7fc] sm:$0xf]
    %v3471 = vld [vmem:[%s4] sm:$0x1]
    %v3473 = vlaneseq
    %v3474 = vshrl.u32 %v3473, 7
    %v3475 = vsub.s32 0, %v3474
    %v3476 = vrot.slane %v3471, %v3475
    %v3990 = vunpack.c.l.b16 %v2959
    %v3991 = vunpack.c.l.b16 %v2960
    %v3992 = vunpack.c.l.b16 %v2961
    %v3993 = vunpack.c.l.b16 %v2962
    %v3994 = vunpack.c.l.b16 %v2963
    %v3995 = vunpack.c.l.b16 %v2964
    %v3996 = vunpack.c.l.b16 %v2965
    %v3997 = vunpack.c.l.b16 %v2966
    %v3998 = vunpack.c.l.b16 %v2967
    %v3999 = vunpack.c.l.b16 %v2968
    %v4000 = vunpack.c.l.b16 %v2969
    %v4001 = vunpack.c.l.b16 %v2970
    %v4002 = vunpack.c.l.b16 %v2971
    %v4003 = vunpack.c.l.b16 %v2972
    %v4004 = vunpack.c.l.b16 %v2973
    %v4005 = vunpack.c.l.b16 %v2974
    %v4006 = vunpack.c.l.b16 %v2975
    %v4007 = vunpack.c.l.b16 %v2976
    %v4008 = vunpack.c.l.b16 %v2977
    %v4009 = vunpack.c.l.b16 %v2978
    %v4010 = vunpack.c.l.b16 %v2979
    %v4011 = vunpack.c.l.b16 %v2980
    %v4012 = vunpack.c.l.b16 %v2981
    %v4013 = vunpack.c.l.b16 %v2982
    %v4014 = vunpack.c.l.b16 %v2983
    %v4015 = vunpack.c.l.b16 %v2984
    %v4016 = vunpack.c.l.b16 %v2985
    %v4017 = vunpack.c.l.b16 %v2986
    %v4018 = vunpack.c.l.b16 %v2987
    %v4019 = vunpack.c.l.b16 %v2988
    %v4020 = vunpack.c.l.b16 %v2989
    %v4021 = vunpack.c.l.b16 %v2990
    %v4022 = vunpack.c.l.b16 %v2991
    %v4023 = vunpack.c.l.b16 %v2992
    %v4024 = vunpack.c.l.b16 %v2993
    %v4025 = vunpack.c.l.b16 %v2994
    %v4026 = vunpack.c.l.b16 %v2995
    %v4027 = vunpack.c.l.b16 %v2996
    %v4028 = vunpack.c.l.b16 %v2997
    %v4029 = vunpack.c.l.b16 %v2998
    %v4030 = vunpack.c.l.b16 %v2999
    %v4031 = vunpack.c.l.b16 %v3000
    %v4032 = vunpack.c.l.b16 %v3001
    %v4033 = vunpack.c.l.b16 %v3002
    %v4034 = vunpack.c.l.b16 %v3003
    %v4035 = vunpack.c.l.b16 %v3004
    %v4036 = vunpack.c.l.b16 %v3005
    %v4037 = vunpack.c.l.b16 %v3006
    %v4038 = vunpack.c.l.b16 %v3007
    %v4039 = vunpack.c.l.b16 %v3008
    %v4040 = vunpack.c.l.b16 %v3009
    %v4041 = vunpack.c.l.b16 %v3010
    %v4042 = vunpack.c.l.b16 %v3011
    %v4043 = vunpack.c.l.b16 %v3012
    %v4044 = vunpack.c.l.b16 %v3013
    %v4045 = vunpack.c.l.b16 %v3014
    %v4046 = vunpack.c.l.b16 %v3015
    %v4047 = vunpack.c.l.b16 %v3016
    %v4048 = vunpack.c.l.b16 %v3017
    %v4049 = vunpack.c.l.b16 %v3018
    %v4050 = vunpack.c.l.b16 %v3019
    %v4051 = vunpack.c.l.b16 %v3020
    %v4052 = vunpack.c.l.b16 %v3021
    %v4053 = vunpack.c.l.b16 %v3022
    %v4054 = vunpack.c.l.b16 %v3023
    %v4055 = vunpack.c.l.b16 %v3024
    %v4056 = vunpack.c.l.b16 %v3025
    %v4057 = vunpack.c.l.b16 %v3026
    %v4058 = vunpack.c.l.b16 %v3027
    %v4059 = vunpack.c.l.b16 %v3028
    %v4060 = vunpack.c.l.b16 %v3029
    %v4061 = vunpack.c.l.b16 %v3030
    %v4062 = vunpack.c.l.b16 %v3031
    %v4063 = vunpack.c.l.b16 %v3032
    %v4064 = vunpack.c.l.b16 %v3033
    %v4065 = vunpack.c.l.b16 %v3034
    %v4066 = vunpack.c.l.b16 %v3035
    %v4067 = vunpack.c.l.b16 %v3036
    %v4068 = vunpack.c.l.b16 %v3037
    %v4069 = vunpack.c.l.b16 %v3038
    %v4070 = vunpack.c.l.b16 %v3039
    %v4071 = vunpack.c.l.b16 %v3040
    %v4072 = vunpack.c.l.b16 %v3041
    %v4073 = vunpack.c.l.b16 %v3042
    %v4074 = vunpack.c.l.b16 %v3043
    %v4075 = vunpack.c.l.b16 %v3044
    %v4076 = vunpack.c.l.b16 %v3045
    %v4077 = vunpack.c.l.b16 %v3046
    %v4078 = vunpack.c.l.b16 %v3047
    %v4079 = vunpack.c.l.b16 %v3048
    %v4080 = vunpack.c.l.b16 %v3049
    %v4081 = vunpack.c.l.b16 %v3050
    %v4082 = vunpack.c.l.b16 %v3051
    %v4083 = vunpack.c.l.b16 %v3052
    %v4084 = vunpack.c.l.b16 %v3053
    %v4085 = vunpack.c.l.b16 %v3054
    %v4086 = vunpack.c.l.b16 %v3055
    %v4087 = vunpack.c.l.b16 %v3056
    %v4088 = vunpack.c.l.b16 %v3057
    %v4089 = vunpack.c.l.b16 %v3058
    %v4090 = vunpack.c.l.b16 %v3059
    %v4091 = vunpack.c.l.b16 %v3060
    %v4092 = vunpack.c.l.b16 %v3061
    %v4093 = vunpack.c.l.b16 %v3062
    %v4094 = vunpack.c.l.b16 %v3063
    %v4095 = vunpack.c.l.b16 %v3064
    %v4096 = vunpack.c.l.b16 %v3065
    %v4097 = vunpack.c.l.b16 %v3066
    %v4098 = vunpack.c.l.b16 %v3067
    %v4099 = vunpack.c.l.b16 %v3068
    %v4100 = vunpack.c.l.b16 %v3069
    %v4101 = vunpack.c.l.b16 %v3070
    %v4102 = vunpack.c.l.b16 %v3071
    %v4103 = vunpack.c.l.b16 %v3072
    %v4104 = vunpack.c.l.b16 %v3073
    %v4105 = vunpack.c.l.b16 %v3074
    %v4106 = vunpack.c.l.b16 %v3075
    %v4107 = vunpack.c.l.b16 %v3076
    %v4108 = vunpack.c.l.b16 %v3077
    %v4109 = vunpack.c.l.b16 %v3078
    %v4110 = vunpack.c.l.b16 %v3079
    %v4111 = vunpack.c.l.b16 %v3080
    %v4112 = vunpack.c.l.b16 %v3081
    %v4113 = vunpack.c.l.b16 %v3082
    %v4114 = vunpack.c.l.b16 %v3083
    %v4115 = vunpack.c.l.b16 %v3084
    %v4116 = vunpack.c.l.b16 %v3085
    %v4117 = vunpack.c.l.b16 %v3086
    %v4118 = vunpack.c.l.b16 %v3087
    %v4119 = vunpack.c.l.b16 %v3088
    %v4120 = vunpack.c.l.b16 %v3089
    %v4121 = vunpack.c.l.b16 %v3090
    %v4122 = vunpack.c.l.b16 %v3091
    %v4123 = vunpack.c.l.b16 %v3092
    %v4124 = vunpack.c.l.b16 %v3093
    %v4125 = vunpack.c.l.b16 %v3094
    %v4126 = vunpack.c.l.b16 %v3095
    %v4127 = vunpack.c.l.b16 %v3096
    %v4128 = vunpack.c.l.b16 %v3097
    %v4129 = vunpack.c.l.b16 %v3098
    %v4130 = vunpack.c.l.b16 %v3099
    %v4131 = vunpack.c.l.b16 %v3100
    %v4132 = vunpack.c.l.b16 %v3101
    %v4133 = vunpack.c.l.b16 %v3102
    %v4134 = vunpack.c.l.b16 %v3103
    %v4135 = vunpack.c.l.b16 %v3104
    %v4136 = vunpack.c.l.b16 %v3105
    %v4137 = vunpack.c.l.b16 %v3106
    %v4138 = vunpack.c.l.b16 %v3107
    %v4139 = vunpack.c.l.b16 %v3108
    %v4140 = vunpack.c.l.b16 %v3109
    %v4141 = vunpack.c.l.b16 %v3110
    %v4142 = vunpack.c.l.b16 %v3111
    %v4143 = vunpack.c.l.b16 %v3112
    %v4144 = vunpack.c.l.b16 %v3113
    %v4145 = vunpack.c.l.b16 %v3114
    %v4146 = vunpack.c.l.b16 %v3115
    %v4147 = vunpack.c.l.b16 %v3116
    %v4148 = vunpack.c.l.b16 %v3117
    %v4149 = vunpack.c.l.b16 %v3118
    %v4150 = vunpack.c.l.b16 %v3119
    %v4151 = vunpack.c.l.b16 %v3120
    %v4152 = vunpack.c.l.b16 %v3121
    %v4153 = vunpack.c.l.b16 %v3122
    %v4154 = vunpack.c.l.b16 %v3123
    %v4155 = vunpack.c.l.b16 %v3124
    %v4156 = vunpack.c.l.b16 %v3125
    %v4157 = vunpack.c.l.b16 %v3126
    %v4158 = vunpack.c.l.b16 %v3127
    %v4159 = vunpack.c.l.b16 %v3128
    %v4160 = vunpack.c.l.b16 %v3129
    %v4161 = vunpack.c.l.b16 %v3130
    %v4162 = vunpack.c.l.b16 %v3131
    %v4163 = vunpack.c.l.b16 %v3132
    %v4164 = vunpack.c.l.b16 %v3133
    %v4165 = vunpack.c.l.b16 %v3134
    %v4166 = vunpack.c.l.b16 %v3135
    %v4167 = vunpack.c.l.b16 %v3136
    %v4168 = vunpack.c.l.b16 %v3137
    %v4169 = vunpack.c.l.b16 %v3138
    %v4170 = vunpack.c.l.b16 %v3139
    %v4171 = vunpack.c.l.b16 %v3140
    %v4172 = vunpack.c.l.b16 %v3141
    %v4173 = vunpack.c.l.b16 %v3142
    %v4174 = vunpack.c.l.b16 %v3143
    %v4175 = vunpack.c.l.b16 %v3144
    %v4176 = vunpack.c.l.b16 %v3145
    %v4177 = vunpack.c.l.b16 %v3146
    %v4178 = vunpack.c.l.b16 %v3147
    %v4179 = vunpack.c.l.b16 %v3148
    %v4180 = vunpack.c.l.b16 %v3149
    %v4181 = vunpack.c.l.b16 %v3150
    %v4182 = vunpack.c.l.b16 %v3151
    %v4183 = vunpack.c.l.b16 %v3152
    %v4184 = vunpack.c.l.b16 %v3153
    %v4185 = vunpack.c.l.b16 %v3154
    %v4186 = vunpack.c.l.b16 %v3155
    %v4187 = vunpack.c.l.b16 %v3156
    %v4188 = vunpack.c.l.b16 %v3157
    %v4189 = vunpack.c.l.b16 %v3158
    %v4190 = vunpack.c.l.b16 %v3159
    %v4191 = vunpack.c.l.b16 %v3160
    %v4192 = vunpack.c.l.b16 %v3161
    %v4193 = vunpack.c.l.b16 %v3162
    %v4194 = vunpack.c.l.b16 %v3163
    %v4195 = vunpack.c.l.b16 %v3164
    %v4196 = vunpack.c.l.b16 %v3165
    %v4197 = vunpack.c.l.b16 %v3166
    %v4198 = vunpack.c.l.b16 %v3167
    %v4199 = vunpack.c.l.b16 %v3168
    %v4200 = vunpack.c.l.b16 %v3169
    %v4201 = vunpack.c.l.b16 %v3170
    %v4202 = vunpack.c.l.b16 %v3171
    %v4203 = vunpack.c.l.b16 %v3172
    %v4204 = vunpack.c.l.b16 %v3173
    %v4205 = vunpack.c.l.b16 %v3174
    %v4206 = vunpack.c.l.b16 %v3175
    %v4207 = vunpack.c.l.b16 %v3176
    %v4208 = vunpack.c.l.b16 %v3177
    %v4209 = vunpack.c.l.b16 %v3178
    %v4210 = vunpack.c.l.b16 %v3179
    %v4211 = vunpack.c.l.b16 %v3180
    %v4212 = vunpack.c.l.b16 %v3181
    %v4213 = vunpack.c.l.b16 %v3182
    %v4214 = vunpack.c.l.b16 %v3183
    %v4215 = vunpack.c.l.b16 %v3184
    %v4216 = vunpack.c.l.b16 %v3185
    %v4217 = vunpack.c.l.b16 %v3186
    %v4218 = vunpack.c.l.b16 %v3187
    %v4219 = vunpack.c.l.b16 %v3188
    %v4220 = vunpack.c.l.b16 %v3189
    %v4221 = vunpack.c.l.b16 %v3190
    %v4222 = vunpack.c.l.b16 %v3191
    %v4223 = vunpack.c.l.b16 %v3192
    %v4224 = vunpack.c.l.b16 %v3193
    %v4225 = vunpack.c.l.b16 %v3194
    %v4226 = vunpack.c.l.b16 %v3195
    %v4227 = vunpack.c.l.b16 %v3196
    %v4228 = vunpack.c.l.b16 %v3197
    %v4229 = vunpack.c.l.b16 %v3198
    %v4230 = vunpack.c.l.b16 %v3199
    %v4231 = vunpack.c.l.b16 %v3200
    %v4232 = vunpack.c.l.b16 %v3201
    %v4233 = vunpack.c.l.b16 %v3202
    %v4234 = vunpack.c.l.b16 %v3203
    %v4235 = vunpack.c.l.b16 %v3204
    %v4236 = vunpack.c.l.b16 %v3205
    %v4237 = vunpack.c.l.b16 %v3206
    %v4238 = vunpack.c.l.b16 %v3207
    %v4239 = vunpack.c.l.b16 %v3208
    %v4240 = vunpack.c.l.b16 %v3209
    %v4241 = vunpack.c.l.b16 %v3210
    %v4242 = vunpack.c.l.b16 %v3211
    %v4243 = vunpack.c.l.b16 %v3212
    %v4244 = vunpack.c.l.b16 %v3213
    %v4245 = vunpack.c.l.b16 %v3214
    %v4246 = vunpack.c.l.b16 %v3215
    %v4247 = vunpack.c.l.b16 %v3216
    %v4248 = vunpack.c.l.b16 %v3217
    %v4249 = vunpack.c.l.b16 %v3218
    %v4250 = vunpack.c.l.b16 %v3219
    %v4251 = vunpack.c.l.b16 %v3220
    %v4252 = vunpack.c.l.b16 %v3221
    %v4253 = vunpack.c.l.b16 %v3222
    %v4254 = vunpack.c.l.b16 %v3223
    %v4255 = vunpack.c.l.b16 %v3224
    %v4256 = vunpack.c.l.b16 %v3225
    %v4257 = vunpack.c.l.b16 %v3226
    %v4258 = vunpack.c.l.b16 %v3227
    %v4259 = vunpack.c.l.b16 %v3228
    %v4260 = vunpack.c.l.b16 %v3229
    %v4261 = vunpack.c.l.b16 %v3230
    %v4262 = vunpack.c.l.b16 %v3231
    %v4263 = vunpack.c.l.b16 %v3232
    %v4264 = vunpack.c.l.b16 %v3233
    %v4265 = vunpack.c.l.b16 %v3234
    %v4266 = vunpack.c.l.b16 %v3235
    %v4267 = vunpack.c.l.b16 %v3236
    %v4268 = vunpack.c.l.b16 %v3237
    %v4269 = vunpack.c.l.b16 %v3238
    %v4270 = vunpack.c.l.b16 %v3239
    %v4271 = vunpack.c.l.b16 %v3240
    %v4272 = vunpack.c.l.b16 %v3241
    %v4273 = vunpack.c.l.b16 %v3242
    %v4274 = vunpack.c.l.b16 %v3243
    %v4275 = vunpack.c.l.b16 %v3244
    %v4276 = vunpack.c.l.b16 %v3245
    %v4277 = vunpack.c.l.b16 %v3246
    %v4278 = vunpack.c.l.b16 %v3247
    %v4279 = vunpack.c.l.b16 %v3248
    %v4280 = vunpack.c.l.b16 %v3249
    %v4281 = vunpack.c.l.b16 %v3250
    %v4282 = vunpack.c.l.b16 %v3251
    %v4283 = vunpack.c.l.b16 %v3252
    %v4284 = vunpack.c.l.b16 %v3253
    %v4285 = vunpack.c.l.b16 %v3254
    %v4286 = vunpack.c.l.b16 %v3255
    %v4287 = vunpack.c.l.b16 %v3256
    %v4288 = vunpack.c.l.b16 %v3257
    %v4289 = vunpack.c.l.b16 %v3258
    %v4290 = vunpack.c.l.b16 %v3259
    %v4291 = vunpack.c.l.b16 %v3260
    %v4292 = vunpack.c.l.b16 %v3261
    %v4293 = vunpack.c.l.b16 %v3262
    %v4294 = vunpack.c.l.b16 %v3263
    %v4295 = vunpack.c.l.b16 %v3264
    %v4296 = vunpack.c.l.b16 %v3265
    %v4297 = vunpack.c.l.b16 %v3266
    %v4298 = vunpack.c.l.b16 %v3267
    %v4299 = vunpack.c.l.b16 %v3268
    %v4300 = vunpack.c.l.b16 %v3269
    %v4301 = vunpack.c.l.b16 %v3270
    %v4302 = vunpack.c.l.b16 %v3271
    %v4303 = vunpack.c.l.b16 %v3272
    %v4304 = vunpack.c.l.b16 %v3273
    %v4305 = vunpack.c.l.b16 %v3274
    %v4306 = vunpack.c.l.b16 %v3275
    %v4307 = vunpack.c.l.b16 %v3276
    %v4308 = vunpack.c.l.b16 %v3277
    %v4309 = vunpack.c.l.b16 %v3278
    %v4310 = vunpack.c.l.b16 %v3279
    %v4311 = vunpack.c.l.b16 %v3280
    %v4312 = vunpack.c.l.b16 %v3281
    %v4313 = vunpack.c.l.b16 %v3282
    %v4314 = vunpack.c.l.b16 %v3283
    %v4315 = vunpack.c.l.b16 %v3284
    %v4316 = vunpack.c.l.b16 %v3285
    %v4317 = vunpack.c.l.b16 %v3286
    %v4318 = vunpack.c.l.b16 %v3287
    %v4319 = vunpack.c.l.b16 %v3288
    %v4320 = vunpack.c.l.b16 %v3289
    %v4321 = vunpack.c.l.b16 %v3290
    %v4322 = vunpack.c.l.b16 %v3291
    %v4323 = vunpack.c.l.b16 %v3292
    %v4324 = vunpack.c.l.b16 %v3293
    %v4325 = vunpack.c.l.b16 %v3294
    %v4326 = vunpack.c.l.b16 %v3295
    %v4327 = vunpack.c.l.b16 %v3296
    %v4328 = vunpack.c.l.b16 %v3297
    %v4329 = vunpack.c.l.b16 %v3298
    %v4330 = vunpack.c.l.b16 %v3299
    %v4331 = vunpack.c.l.b16 %v3300
    %v4332 = vunpack.c.l.b16 %v3301
    %v4333 = vunpack.c.l.b16 %v3302
    %v4334 = vunpack.c.l.b16 %v3303
    %v4335 = vunpack.c.l.b16 %v3304
    %v4336 = vunpack.c.l.b16 %v3305
    %v4337 = vunpack.c.l.b16 %v3306
    %v4338 = vunpack.c.l.b16 %v3307
    %v4339 = vunpack.c.l.b16 %v3308
    %v4340 = vunpack.c.l.b16 %v3309
    %v4341 = vunpack.c.l.b16 %v3310
    %v4342 = vunpack.c.l.b16 %v3311
    %v4343 = vunpack.c.l.b16 %v3312
    %v4344 = vunpack.c.l.b16 %v3313
    %v4345 = vunpack.c.l.b16 %v3314
    %v4346 = vunpack.c.l.b16 %v3315
    %v4347 = vunpack.c.l.b16 %v3316
    %v4348 = vunpack.c.l.b16 %v3317
    %v4349 = vunpack.c.l.b16 %v3318
    %v4350 = vunpack.c.l.b16 %v3319
    %v4351 = vunpack.c.l.b16 %v3320
    %v4352 = vunpack.c.l.b16 %v3321
    %v4353 = vunpack.c.l.b16 %v3322
    %v4354 = vunpack.c.l.b16 %v3323
    %v4355 = vunpack.c.l.b16 %v3324
    %v4356 = vunpack.c.l.b16 %v3325
    %v4357 = vunpack.c.l.b16 %v3326
    %v4358 = vunpack.c.l.b16 %v3327
    %v4359 = vunpack.c.l.b16 %v3328
    %v4360 = vunpack.c.l.b16 %v3329
    %v4361 = vunpack.c.l.b16 %v3330
    %v4362 = vunpack.c.l.b16 %v3331
    %v4363 = vunpack.c.l.b16 %v3332
    %v4364 = vunpack.c.l.b16 %v3333
    %v4365 = vunpack.c.l.b16 %v3334
    %v4366 = vunpack.c.l.b16 %v3335
    %v4367 = vunpack.c.l.b16 %v3336
    %v4368 = vunpack.c.l.b16 %v3337
    %v4369 = vunpack.c.l.b16 %v3338
    %v4370 = vunpack.c.l.b16 %v3339
    %v4371 = vunpack.c.l.b16 %v3340
    %v4372 = vunpack.c.l.b16 %v3341
    %v4373 = vunpack.c.l.b16 %v3342
    %v4374 = vunpack.c.l.b16 %v3343
    %v4375 = vunpack.c.l.b16 %v3344
    %v4376 = vunpack.c.l.b16 %v3345
    %v4377 = vunpack.c.l.b16 %v3346
    %v4378 = vunpack.c.l.b16 %v3347
    %v4379 = vunpack.c.l.b16 %v3348
    %v4380 = vunpack.c.l.b16 %v3349
    %v4381 = vunpack.c.l.b16 %v3350
    %v4382 = vunpack.c.l.b16 %v3351
    %v4383 = vunpack.c.l.b16 %v3352
    %v4384 = vunpack.c.l.b16 %v3353
    %v4385 = vunpack.c.l.b16 %v3354
    %v4386 = vunpack.c.l.b16 %v3355
    %v4387 = vunpack.c.l.b16 %v3356
    %v4388 = vunpack.c.l.b16 %v3357
    %v4389 = vunpack.c.l.b16 %v3358
    %v4390 = vunpack.c.l.b16 %v3359
    %v4391 = vunpack.c.l.b16 %v3360
    %v4392 = vunpack.c.l.b16 %v3361
    %v4393 = vunpack.c.l.b16 %v3362
    %v4394 = vunpack.c.l.b16 %v3363
    %v4395 = vunpack.c.l.b16 %v3364
    %v4396 = vunpack.c.l.b16 %v3365
    %v4397 = vunpack.c.l.b16 %v3366
    %v4398 = vunpack.c.l.b16 %v3367
    %v4399 = vunpack.c.l.b16 %v3368
    %v4400 = vunpack.c.l.b16 %v3369
    %v4401 = vunpack.c.l.b16 %v3370
    %v4402 = vunpack.c.l.b16 %v3371
    %v4403 = vunpack.c.l.b16 %v3372
    %v4404 = vunpack.c.l.b16 %v3373
    %v4405 = vunpack.c.l.b16 %v3374
    %v4406 = vunpack.c.l.b16 %v3375
    %v4407 = vunpack.c.l.b16 %v3376
    %v4408 = vunpack.c.l.b16 %v3377
    %v4409 = vunpack.c.l.b16 %v3378
    %v4410 = vunpack.c.l.b16 %v3379
    %v4411 = vunpack.c.l.b16 %v3380
    %v4412 = vunpack.c.l.b16 %v3381
    %v4413 = vunpack.c.l.b16 %v3382
    %v4414 = vunpack.c.l.b16 %v3383
    %v4415 = vunpack.c.l.b16 %v3384
    %v4416 = vunpack.c.l.b16 %v3385
    %v4417 = vunpack.c.l.b16 %v3386
    %v4418 = vunpack.c.l.b16 %v3387
    %v4419 = vunpack.c.l.b16 %v3388
    %v4420 = vunpack.c.l.b16 %v3389
    %v4421 = vunpack.c.l.b16 %v3390
    %v4422 = vunpack.c.l.b16 %v3391
    %v4423 = vunpack.c.l.b16 %v3392
    %v4424 = vunpack.c.l.b16 %v3393
    %v4425 = vunpack.c.l.b16 %v3394
    %v4426 = vunpack.c.l.b16 %v3395
    %v4427 = vunpack.c.l.b16 %v3396
    %v4428 = vunpack.c.l.b16 %v3397
    %v4429 = vunpack.c.l.b16 %v3398
    %v4430 = vunpack.c.l.b16 %v3399
    %v4431 = vunpack.c.l.b16 %v3400
    %v4432 = vunpack.c.l.b16 %v3401
    %v4433 = vunpack.c.l.b16 %v3402
    %v4434 = vunpack.c.l.b16 %v3403
    %v4435 = vunpack.c.l.b16 %v3404
    %v4436 = vunpack.c.l.b16 %v3405
    %v4437 = vunpack.c.l.b16 %v3406
    %v4438 = vunpack.c.l.b16 %v3407
    %v4439 = vunpack.c.l.b16 %v3408
    %v4440 = vunpack.c.l.b16 %v3409
    %v4441 = vunpack.c.l.b16 %v3410
    %v4442 = vunpack.c.l.b16 %v3411
    %v4443 = vunpack.c.l.b16 %v3412
    %v4444 = vunpack.c.l.b16 %v3413
    %v4445 = vunpack.c.l.b16 %v3414
    %v4446 = vunpack.c.l.b16 %v3415
    %v4447 = vunpack.c.l.b16 %v3416
    %v4448 = vunpack.c.l.b16 %v3417
    %v4449 = vunpack.c.l.b16 %v3418
    %v4450 = vunpack.c.l.b16 %v3419
    %v4451 = vunpack.c.l.b16 %v3420
    %v4452 = vunpack.c.l.b16 %v3421
    %v4453 = vunpack.c.l.b16 %v3422
    %v4454 = vunpack.c.l.b16 %v3423
    %v4455 = vunpack.c.l.b16 %v3424
    %v4456 = vunpack.c.l.b16 %v3425
    %v4457 = vunpack.c.l.b16 %v3426
    %v4458 = vunpack.c.l.b16 %v3427
    %v4459 = vunpack.c.l.b16 %v3428
    %v4460 = vunpack.c.l.b16 %v3429
    %v4461 = vunpack.c.l.b16 %v3430
    %v4462 = vunpack.c.l.b16 %v3431
    %v4463 = vunpack.c.l.b16 %v3432
    %v4464 = vunpack.c.l.b16 %v3433
    %v4465 = vunpack.c.l.b16 %v3434
    %v4466 = vunpack.c.l.b16 %v3435
    %v4467 = vunpack.c.l.b16 %v3436
    %v4468 = vunpack.c.l.b16 %v3437
    %v4469 = vunpack.c.l.b16 %v3438
    %v4470 = vunpack.c.l.b16 %v3439
    %v4471 = vunpack.c.l.b16 %v3440
    %v4472 = vunpack.c.l.b16 %v3441
    %v4473 = vunpack.c.l.b16 %v3442
    %v4474 = vunpack.c.l.b16 %v3443
    %v4475 = vunpack.c.l.b16 %v3444
    %v4476 = vunpack.c.l.b16 %v3445
    %v4477 = vunpack.c.l.b16 %v3446
    %v4478 = vunpack.c.l.b16 %v3447
    %v4479 = vunpack.c.l.b16 %v3448
    %v4480 = vunpack.c.l.b16 %v3449
    %v4481 = vunpack.c.l.b16 %v3450
    %v4482 = vunpack.c.l.b16 %v3451
    %v4483 = vunpack.c.l.b16 %v3452
    %v4484 = vunpack.c.l.b16 %v3453
    %v4485 = vunpack.c.l.b16 %v3454
    %v4486 = vunpack.c.l.b16 %v3455
    %v4487 = vunpack.c.l.b16 %v3456
    %v4488 = vunpack.c.l.b16 %v3457
    %v4489 = vunpack.c.l.b16 %v3458
    %v4490 = vunpack.c.l.b16 %v3459
    %v4491 = vunpack.c.l.b16 %v3460
    %v4492 = vunpack.c.l.b16 %v3461
    %v4493 = vunpack.c.l.b16 %v3462
    %v4494 = vunpack.c.l.b16 %v3463
    %v4495 = vunpack.c.l.b16 %v3464
    %v4496 = vunpack.c.l.b16 %v3465
    %v4497 = vunpack.c.l.b16 %v3466
    %v4498 = vunpack.c.l.b16 %v3467
    %v4499 = vunpack.c.l.b16 %v3468
    %v4500 = vunpack.c.l.b16 %v3469
    %v4501 = vunpack.c.l.b16 %v3470
    %v4502 = vpack.c.b16 %v3991, %v3990
    %v4503 = vpack.c.b16 %v3993, %v3992
    %v4504 = vpack.c.b16 %v3995, %v3994
    %v4505 = vpack.c.b16 %v3997, %v3996
    %v4506 = vpack.c.b16 %v3999, %v3998
    %v4507 = vpack.c.b16 %v4001, %v4000
    %v4508 = vpack.c.b16 %v4003, %v4002
    %v4509 = vpack.c.b16 %v4005, %v4004
    %v4510 = vpack.c.b16 %v4007, %v4006
    %v4511 = vpack.c.b16 %v4009, %v4008
    %v4512 = vpack.c.b16 %v4011, %v4010
    %v4513 = vpack.c.b16 %v4013, %v4012
    %v4514 = vpack.c.b16 %v4015, %v4014
    %v4515 = vpack.c.b16 %v4017, %v4016
    %v4516 = vpack.c.b16 %v4019, %v4018
    %v4517 = vpack.c.b16 %v4021, %v4020
    %v4518 = vpack.c.b16 %v4023, %v4022
    %v4519 = vpack.c.b16 %v4025, %v4024
    %v4520 = vpack.c.b16 %v4027, %v4026
    %v4521 = vpack.c.b16 %v4029, %v4028
    %v4522 = vpack.c.b16 %v4031, %v4030
    %v4523 = vpack.c.b16 %v4033, %v4032
    %v4524 = vpack.c.b16 %v4035, %v4034
    %v4525 = vpack.c.b16 %v4037, %v4036
    %v4526 = vpack.c.b16 %v4039, %v4038
    %v4527 = vpack.c.b16 %v4041, %v4040
    %v4528 = vpack.c.b16 %v4043, %v4042
    %v4529 = vpack.c.b16 %v4045, %v4044
    %v4530 = vpack.c.b16 %v4047, %v4046
    %v4531 = vpack.c.b16 %v4049, %v4048
    %v4532 = vpack.c.b16 %v4051, %v4050
    %v4533 = vpack.c.b16 %v4053, %v4052
    %v4534 = vpack.c.b16 %v4055, %v4054
    %v4535 = vpack.c.b16 %v4057, %v4056
    %v4536 = vpack.c.b16 %v4059, %v4058
    %v4537 = vpack.c.b16 %v4061, %v4060
    %v4538 = vpack.c.b16 %v4063, %v4062
    %v4539 = vpack.c.b16 %v4065, %v4064
    %v4540 = vpack.c.b16 %v4067, %v4066
    %v4541 = vpack.c.b16 %v4069, %v4068
    %v4542 = vpack.c.b16 %v4071, %v4070
    %v4543 = vpack.c.b16 %v4073, %v4072
    %v4544 = vpack.c.b16 %v4075, %v4074
    %v4545 = vpack.c.b16 %v4077, %v4076
    %v4546 = vpack.c.b16 %v4079, %v4078
    %v4547 = vpack.c.b16 %v4081, %v4080
    %v4548 = vpack.c.b16 %v4083, %v4082
    %v4549 = vpack.c.b16 %v4085, %v4084
    %v4550 = vpack.c.b16 %v4087, %v4086
    %v4551 = vpack.c.b16 %v4089, %v4088
    %v4552 = vpack.c.b16 %v4091, %v4090
    %v4553 = vpack.c.b16 %v4093, %v4092
    %v4554 = vpack.c.b16 %v4095, %v4094
    %v4555 = vpack.c.b16 %v4097, %v4096
    %v4556 = vpack.c.b16 %v4099, %v4098
    %v4557 = vpack.c.b16 %v4101, %v4100
    %v4558 = vpack.c.b16 %v4103, %v4102
    %v4559 = vpack.c.b16 %v4105, %v4104
    %v4560 = vpack.c.b16 %v4107, %v4106
    %v4561 = vpack.c.b16 %v4109, %v4108
    %v4562 = vpack.c.b16 %v4111, %v4110
    %v4563 = vpack.c.b16 %v4113, %v4112
    %v4564 = vpack.c.b16 %v4115, %v4114
    %v4565 = vpack.c.b16 %v4117, %v4116
    %v4566 = vpack.c.b16 %v4119, %v4118
    %v4567 = vpack.c.b16 %v4121, %v4120
    %v4568 = vpack.c.b16 %v4123, %v4122
    %v4569 = vpack.c.b16 %v4125, %v4124
    %v4570 = vpack.c.b16 %v4127, %v4126
    %v4571 = vpack.c.b16 %v4129, %v4128
    %v4572 = vpack.c.b16 %v4131, %v4130
    %v4573 = vpack.c.b16 %v4133, %v4132
    %v4574 = vpack.c.b16 %v4135, %v4134
    %v4575 = vpack.c.b16 %v4137, %v4136
    %v4576 = vpack.c.b16 %v4139, %v4138
    %v4577 = vpack.c.b16 %v4141, %v4140
    %v4578 = vpack.c.b16 %v4143, %v4142
    %v4579 = vpack.c.b16 %v4145, %v4144
    %v4580 = vpack.c.b16 %v4147, %v4146
    %v4581 = vpack.c.b16 %v4149, %v4148
    %v4582 = vpack.c.b16 %v4151, %v4150
    %v4583 = vpack.c.b16 %v4153, %v4152
    %v4584 = vpack.c.b16 %v4155, %v4154
    %v4585 = vpack.c.b16 %v4157, %v4156
    %v4586 = vpack.c.b16 %v4159, %v4158
    %v4587 = vpack.c.b16 %v4161, %v4160
    %v4588 = vpack.c.b16 %v4163, %v4162
    %v4589 = vpack.c.b16 %v4165, %v4164
    %v4590 = vpack.c.b16 %v4167, %v4166
    %v4591 = vpack.c.b16 %v4169, %v4168
    %v4592 = vpack.c.b16 %v4171, %v4170
    %v4593 = vpack.c.b16 %v4173, %v4172
    %v4594 = vpack.c.b16 %v4175, %v4174
    %v4595 = vpack.c.b16 %v4177, %v4176
    %v4596 = vpack.c.b16 %v4179, %v4178
    %v4597 = vpack.c.b16 %v4181, %v4180
    %v4598 = vpack.c.b16 %v4183, %v4182
    %v4599 = vpack.c.b16 %v4185, %v4184
    %v4600 = vpack.c.b16 %v4187, %v4186
    %v4601 = vpack.c.b16 %v4189, %v4188
    %v4602 = vpack.c.b16 %v4191, %v4190
    %v4603 = vpack.c.b16 %v4193, %v4192
    %v4604 = vpack.c.b16 %v4195, %v4194
    %v4605 = vpack.c.b16 %v4197, %v4196
    %v4606 = vpack.c.b16 %v4199, %v4198
    %v4607 = vpack.c.b16 %v4201, %v4200
    %v4608 = vpack.c.b16 %v4203, %v4202
    %v4609 = vpack.c.b16 %v4205, %v4204
    %v4610 = vpack.c.b16 %v4207, %v4206
    %v4611 = vpack.c.b16 %v4209, %v4208
    %v4612 = vpack.c.b16 %v4211, %v4210
    %v4613 = vpack.c.b16 %v4213, %v4212
    %v4614 = vpack.c.b16 %v4215, %v4214
    %v4615 = vpack.c.b16 %v4217, %v4216
    %v4616 = vpack.c.b16 %v4219, %v4218
    %v4617 = vpack.c.b16 %v4221, %v4220
    %v4618 = vpack.c.b16 %v4223, %v4222
    %v4619 = vpack.c.b16 %v4225, %v4224
    %v4620 = vpack.c.b16 %v4227, %v4226
    %v4621 = vpack.c.b16 %v4229, %v4228
    %v4622 = vpack.c.b16 %v4231, %v4230
    %v4623 = vpack.c.b16 %v4233, %v4232
    %v4624 = vpack.c.b16 %v4235, %v4234
    %v4625 = vpack.c.b16 %v4237, %v4236
    %v4626 = vpack.c.b16 %v4239, %v4238
    %v4627 = vpack.c.b16 %v4241, %v4240
    %v4628 = vpack.c.b16 %v4243, %v4242
    %v4629 = vpack.c.b16 %v4245, %v4244
    %v4630 = vpack.c.b16 %v4247, %v4246
    %v4631 = vpack.c.b16 %v4249, %v4248
    %v4632 = vpack.c.b16 %v4251, %v4250
    %v4633 = vpack.c.b16 %v4253, %v4252
    %v4634 = vpack.c.b16 %v4255, %v4254
    %v4635 = vpack.c.b16 %v4257, %v4256
    %v4636 = vpack.c.b16 %v4259, %v4258
    %v4637 = vpack.c.b16 %v4261, %v4260
    %v4638 = vpack.c.b16 %v4263, %v4262
    %v4639 = vpack.c.b16 %v4265, %v4264
    %v4640 = vpack.c.b16 %v4267, %v4266
    %v4641 = vpack.c.b16 %v4269, %v4268
    %v4642 = vpack.c.b16 %v4271, %v4270
    %v4643 = vpack.c.b16 %v4273, %v4272
    %v4644 = vpack.c.b16 %v4275, %v4274
    %v4645 = vpack.c.b16 %v4277, %v4276
    %v4646 = vpack.c.b16 %v4279, %v4278
    %v4647 = vpack.c.b16 %v4281, %v4280
    %v4648 = vpack.c.b16 %v4283, %v4282
    %v4649 = vpack.c.b16 %v4285, %v4284
    %v4650 = vpack.c.b16 %v4287, %v4286
    %v4651 = vpack.c.b16 %v4289, %v4288
    %v4652 = vpack.c.b16 %v4291, %v4290
    %v4653 = vpack.c.b16 %v4293, %v4292
    %v4654 = vpack.c.b16 %v4295, %v4294
    %v4655 = vpack.c.b16 %v4297, %v4296
    %v4656 = vpack.c.b16 %v4299, %v4298
    %v4657 = vpack.c.b16 %v4301, %v4300
    %v4658 = vpack.c.b16 %v4303, %v4302
    %v4659 = vpack.c.b16 %v4305, %v4304
    %v4660 = vpack.c.b16 %v4307, %v4306
    %v4661 = vpack.c.b16 %v4309, %v4308
    %v4662 = vpack.c.b16 %v4311, %v4310
    %v4663 = vpack.c.b16 %v4313, %v4312
    %v4664 = vpack.c.b16 %v4315, %v4314
    %v4665 = vpack.c.b16 %v4317, %v4316
    %v4666 = vpack.c.b16 %v4319, %v4318
    %v4667 = vpack.c.b16 %v4321, %v4320
    %v4668 = vpack.c.b16 %v4323, %v4322
    %v4669 = vpack.c.b16 %v4325, %v4324
    %v4670 = vpack.c.b16 %v4327, %v4326
    %v4671 = vpack.c.b16 %v4329, %v4328
    %v4672 = vpack.c.b16 %v4331, %v4330
    %v4673 = vpack.c.b16 %v4333, %v4332
    %v4674 = vpack.c.b16 %v4335, %v4334
    %v4675 = vpack.c.b16 %v4337, %v4336
    %v4676 = vpack.c.b16 %v4339, %v4338
    %v4677 = vpack.c.b16 %v4341, %v4340
    %v4678 = vpack.c.b16 %v4343, %v4342
    %v4679 = vpack.c.b16 %v4345, %v4344
    %v4680 = vpack.c.b16 %v4347, %v4346
    %v4681 = vpack.c.b16 %v4349, %v4348
    %v4682 = vpack.c.b16 %v4351, %v4350
    %v4683 = vpack.c.b16 %v4353, %v4352
    %v4684 = vpack.c.b16 %v4355, %v4354
    %v4685 = vpack.c.b16 %v4357, %v4356
    %v4686 = vpack.c.b16 %v4359, %v4358
    %v4687 = vpack.c.b16 %v4361, %v4360
    %v4688 = vpack.c.b16 %v4363, %v4362
    %v4689 = vpack.c.b16 %v4365, %v4364
    %v4690 = vpack.c.b16 %v4367, %v4366
    %v4691 = vpack.c.b16 %v4369, %v4368
    %v4692 = vpack.c.b16 %v4371, %v4370
    %v4693 = vpack.c.b16 %v4373, %v4372
    %v4694 = vpack.c.b16 %v4375, %v4374
    %v4695 = vpack.c.b16 %v4377, %v4376
    %v4696 = vpack.c.b16 %v4379, %v4378
    %v4697 = vpack.c.b16 %v4381, %v4380
    %v4698 = vpack.c.b16 %v4383, %v4382
    %v4699 = vpack.c.b16 %v4385, %v4384
    %v4700 = vpack.c.b16 %v4387, %v4386
    %v4701 = vpack.c.b16 %v4389, %v4388
    %v4702 = vpack.c.b16 %v4391, %v4390
    %v4703 = vpack.c.b16 %v4393, %v4392
    %v4704 = vpack.c.b16 %v4395, %v4394
    %v4705 = vpack.c.b16 %v4397, %v4396
    %v4706 = vpack.c.b16 %v4399, %v4398
    %v4707 = vpack.c.b16 %v4401, %v4400
    %v4708 = vpack.c.b16 %v4403, %v4402
    %v4709 = vpack.c.b16 %v4405, %v4404
    %v4710 = vpack.c.b16 %v4407, %v4406
    %v4711 = vpack.c.b16 %v4409, %v4408
    %v4712 = vpack.c.b16 %v4411, %v4410
    %v4713 = vpack.c.b16 %v4413, %v4412
    %v4714 = vpack.c.b16 %v4415, %v4414
    %v4715 = vpack.c.b16 %v4417, %v4416
    %v4716 = vpack.c.b16 %v4419, %v4418
    %v4717 = vpack.c.b16 %v4421, %v4420
    %v4718 = vpack.c.b16 %v4423, %v4422
    %v4719 = vpack.c.b16 %v4425, %v4424
    %v4720 = vpack.c.b16 %v4427, %v4426
    %v4721 = vpack.c.b16 %v4429, %v4428
    %v4722 = vpack.c.b16 %v4431, %v4430
    %v4723 = vpack.c.b16 %v4433, %v4432
    %v4724 = vpack.c.b16 %v4435, %v4434
    %v4725 = vpack.c.b16 %v4437, %v4436
    %v4726 = vpack.c.b16 %v4439, %v4438
    %v4727 = vpack.c.b16 %v4441, %v4440
    %v4728 = vpack.c.b16 %v4443, %v4442
    %v4729 = vpack.c.b16 %v4445, %v4444
    %v4730 = vpack.c.b16 %v4447, %v4446
    %v4731 = vpack.c.b16 %v4449, %v4448
    %v4732 = vpack.c.b16 %v4451, %v4450
    %v4733 = vpack.c.b16 %v4453, %v4452
    %v4734 = vpack.c.b16 %v4455, %v4454
    %v4735 = vpack.c.b16 %v4457, %v4456
    %v4736 = vpack.c.b16 %v4459, %v4458
    %v4737 = vpack.c.b16 %v4461, %v4460
    %v4738 = vpack.c.b16 %v4463, %v4462
    %v4739 = vpack.c.b16 %v4465, %v4464
    %v4740 = vpack.c.b16 %v4467, %v4466
    %v4741 = vpack.c.b16 %v4469, %v4468
    %v4742 = vpack.c.b16 %v4471, %v4470
    %v4743 = vpack.c.b16 %v4473, %v4472
    %v4744 = vpack.c.b16 %v4475, %v4474
    %v4745 = vpack.c.b16 %v4477, %v4476
    %v4746 = vpack.c.b16 %v4479, %v4478
    %v4747 = vpack.c.b16 %v4481, %v4480
    %v4748 = vpack.c.b16 %v4483, %v4482
    %v4749 = vpack.c.b16 %v4485, %v4484
    %v4750 = vpack.c.b16 %v4487, %v4486
    %v4751 = vpack.c.b16 %v4489, %v4488
    %v4752 = vpack.c.b16 %v4491, %v4490
    %v4753 = vpack.c.b16 %v4493, %v4492
    %v4754 = vpack.c.b16 %v4495, %v4494
    %v4755 = vpack.c.b16 %v4497, %v4496
    %v4756 = vpack.c.b16 %v4499, %v4498
    %v4757 = vpack.c.b16 %v4501, %v4500
    %5014 = vmatprep.subr.bf16.mxu0 0
    %5015 = vmatpush1.bf16.msra.mxu0 %v4502
    %5016 = vmatprep.subr.bf16.mxu0 0
    %5017 = vmatpush1.bf16.msra.mxu0 %v4503
    %5018 = vmatprep.subr.bf16.mxu0 0
    %5019 = vmatpush1.bf16.msra.mxu0 %v4504
    %5020 = vmatprep.subr.bf16.mxu0 0
    %5021 = vmatpush1.bf16.msra.mxu0 %v4505
    %5022 = vmatprep.subr.bf16.mxu0 0
    %5023 = vmatpush1.bf16.msra.mxu0 %v4506
    %5024 = vmatprep.subr.bf16.mxu0 0
    %5025 = vmatpush1.bf16.msra.mxu0 %v4507
    %5026 = vmatprep.subr.bf16.mxu0 0
    %5027 = vmatpush1.bf16.msra.mxu0 %v4508
    %5028 = vmatprep.subr.bf16.mxu0 0
    %5029 = vmatpush1.bf16.msra.mxu0 %v4509
    %5030 = vmatprep.subr.bf16.mxu0 0
    %5031 = vmatpush1.bf16.msra.mxu0 %v4510
    %5032 = vmatprep.subr.bf16.mxu0 0
    %5033 = vmatpush1.bf16.msra.mxu0 %v4511
    %5034 = vmatprep.subr.bf16.mxu0 0
    %5035 = vmatpush1.bf16.msra.mxu0 %v4512
    %5036 = vmatprep.subr.bf16.mxu0 0
    %5037 = vmatpush1.bf16.msra.mxu0 %v4513
    %5038 = vmatprep.subr.bf16.mxu0 0
    %5039 = vmatpush1.bf16.msra.mxu0 %v4514
    %5040 = vmatprep.subr.bf16.mxu0 0
    %5041 = vmatpush1.bf16.msra.mxu0 %v4515
    %5042 = vmatprep.subr.bf16.mxu0 0
    %5043 = vmatpush1.bf16.msra.mxu0 %v4516
    %5044 = vmatprep.subr.bf16.mxu0 0
    %5045 = vmatpush1.bf16.msra.mxu0 %v4517
    %5046 = vmatprep.mubr.bf16.mxu0 %v592
    %5047 = vmatmul.mubr.bf16.gmra.mrb[0].mxu0 %v578
    %v5048 = vpop.f32.mrb[0].mxu0
    %v5049 = vadd.f32 %v3476, %v5048
    %v5050 = vpop.f32.mrb[0].mxu0
    %v5051 = vpop.f32.mrb[0].mxu0
    %v5052 = vpop.f32.mrb[0].mxu0
    %5053 = vdwg.mxu0
    %5054 = vmatprep.subr.bf16.mxu0 0
    %5055 = vmatpush1.bf16.msra.mxu0 %v4518
    %5056 = vmatprep.subr.bf16.mxu0 0
    %5057 = vmatpush1.bf16.msra.mxu0 %v4519
    %5058 = vmatprep.subr.bf16.mxu0 0
    %5059 = vmatpush1.bf16.msra.mxu0 %v4520
    %5060 = vmatprep.subr.bf16.mxu0 0
    %5061 = vmatpush1.bf16.msra.mxu0 %v4521
    %5062 = vmatprep.subr.bf16.mxu0 0
    %5063 = vmatpush1.bf16.msra.mxu0 %v4522
    %5064 = vmatprep.subr.bf16.mxu0 0
    %5065 = vmatpush1.bf16.msra.mxu0 %v4523
    %5066 = vmatprep.subr.bf16.mxu0 0
    %5067 = vmatpush1.bf16.msra.mxu0 %v4524
    %5068 = vmatprep.subr.bf16.mxu0 0
    %5069 = vmatpush1.bf16.msra.mxu0 %v4525
    %5070 = vmatprep.subr.bf16.mxu0 0
    %5071 = vmatpush1.bf16.msra.mxu0 %v4526
    %5072 = vmatprep.subr.bf16.mxu0 0
    %5073 = vmatpush1.bf16.msra.mxu0 %v4527
    %5074 = vmatprep.subr.bf16.mxu0 0
    %5075 = vmatpush1.bf16.msra.mxu0 %v4528
    %5076 = vmatprep.subr.bf16.mxu0 0
    %5077 = vmatpush1.bf16.msra.mxu0 %v4529
    %5078 = vmatprep.subr.bf16.mxu0 0
    %5079 = vmatpush1.bf16.msra.mxu0 %v4530
    %5080 = vmatprep.subr.bf16.mxu0 0
    %5081 = vmatpush1.bf16.msra.mxu0 %v4531
    %5082 = vmatprep.subr.bf16.mxu0 0
    %5083 = vmatpush1.bf16.msra.mxu0 %v4532
    %5084 = vmatprep.subr.bf16.mxu0 0
    %5085 = vmatpush1.bf16.msra.mxu0 %v4533
    %5086 = vmatprep.mubr.bf16.mxu0 %v602
    %5087 = vmatmul.mubr.bf16.gmra.mrb[0].mxu0 %v600
    %v5088 = vpop.f32.mrb[0].mxu0
    %v5089 = vadd.f32 %v5049, %v5088
    %v5090 = vpop.f32.mrb[0].mxu0
    %v5091 = vpop.f32.mrb[0].mxu0
    %v5092 = vpop.f32.mrb[0].mxu0
    %5093 = vdwg.mxu0
    %5094 = vmatprep.subr.bf16.mxu0 0
    %5095 = vmatpush1.bf16.msra.mxu0 %v4534
    %5096 = vmatprep.subr.bf16.mxu0 0
    %5097 = vmatpush1.bf16.msra.mxu0 %v4535
    %5098 = vmatprep.subr.bf16.mxu0 0
    %5099 = vmatpush1.bf16.msra.mxu0 %v4536
    %5100 = vmatprep.subr.bf16.mxu0 0
    %5101 = vmatpush1.bf16.msra.mxu0 %v4537
    %5102 = vmatprep.subr.bf16.mxu0 0
    %5103 = vmatpush1.bf16.msra.mxu0 %v4538
    %5104 = vmatprep.subr.bf16.mxu0 0
    %5105 = vmatpush1.bf16.msra.mxu0 %v4539
    %5106 = vmatprep.subr.bf16.mxu0 0
    %5107 = vmatpush1.bf16.msra.mxu0 %v4540
    %5108 = vmatprep.subr.bf16.mxu0 0
    %5109 = vmatpush1.bf16.msra.mxu0 %v4541
    %5110 = vmatprep.subr.bf16.mxu0 0
    %5111 = vmatpush1.bf16.msra.mxu0 %v4542
    %5112 = vmatprep.subr.bf16.mxu0 0
    %5113 = vmatpush1.bf16.msra.mxu0 %v4543
    %5114 = vmatprep.subr.bf16.mxu0 0
    %5115 = vmatpush1.bf16.msra.mxu0 %v4544
    %5116 = vmatprep.subr.bf16.mxu0 0
    %5117 = vmatpush1.bf16.msra.mxu0 %v4545
    %5118 = vmatprep.subr.bf16.mxu0 0
    %5119 = vmatpush1.bf16.msra.mxu0 %v4546
    %5120 = vmatprep.subr.bf16.mxu0 0
    %5121 = vmatpush1.bf16.msra.mxu0 %v4547
    %5122 = vmatprep.subr.bf16.mxu0 0
    %5123 = vmatpush1.bf16.msra.mxu0 %v4548
    %5124 = vmatprep.subr.bf16.mxu0 0
    %5125 = vmatpush1.bf16.msra.mxu0 %v4549
    %5126 = vmatprep.mubr.bf16.mxu0 %v599
    %5127 = vmatmul.mubr.bf16.gmra.mrb[0].mxu0 %v585
    %v5128 = vpop.f32.mrb[0].mxu0
    %v5129 = vadd.f32 %v5089, %v5128
    %v5130 = vpop.f32.mrb[0].mxu0
    %v5131 = vpop.f32.mrb[0].mxu0
    %v5132 = vpop.f32.mrb[0].mxu0
    %5133 = vdwg.mxu0
    %5134 = vmatprep.subr.bf16.mxu0 0
    %5135 = vmatpush1.bf16.msra.mxu0 %v4550
    %5136 = vmatprep.subr.bf16.mxu0 0
    %5137 = vmatpush1.bf16.msra.mxu0 %v4551
    %5138 = vmatprep.subr.bf16.mxu0 0
    %5139 = vmatpush1.bf16.msra.mxu0 %v4552
    %5140 = vmatprep.subr.bf16.mxu0 0
    %5141 = vmatpush1.bf16.msra.mxu0 %v4553
    %5142 = vmatprep.subr.bf16.mxu0 0
    %5143 = vmatpush1.bf16.msra.mxu0 %v4554
    %5144 = vmatprep.subr.bf16.mxu0 0
    %5145 = vmatpush1.bf16.msra.mxu0 %v4555
    %5146 = vmatprep.subr.bf16.mxu0 0
    %5147 = vmatpush1.bf16.msra.mxu0 %v4556
    %5148 = vmatprep.subr.bf16.mxu0 0
    %5149 = vmatpush1.bf16.msra.mxu0 %v4557
    %5150 = vmatprep.subr.bf16.mxu0 0
    %5151 = vmatpush1.bf16.msra.mxu0 %v4558
    %5152 = vmatprep.subr.bf16.mxu0 0
    %5153 = vmatpush1.bf16.msra.mxu0 %v4559
    %5154 = vmatprep.subr.bf16.mxu0 0
    %5155 = vmatpush1.bf16.msra.mxu0 %v4560
    %5156 = vmatprep.subr.bf16.mxu0 0
    %5157 = vmatpush1.bf16.msra.mxu0 %v4561
    %5158 = vmatprep.subr.bf16.mxu0 0
    %5159 = vmatpush1.bf16.msra.mxu0 %v4562
    %5160 = vmatprep.subr.bf16.mxu0 0
    %5161 = vmatpush1.bf16.msra.mxu0 %v4563
    %5162 = vmatprep.subr.bf16.mxu0 0
    %5163 = vmatpush1.bf16.msra.mxu0 %v4564
    %5164 = vmatprep.subr.bf16.mxu0 0
    %5165 = vmatpush1.bf16.msra.mxu0 %v4565
    %5166 = vmatprep.mubr.bf16.mxu0 %v603
    %5167 = vmatmul.mubr.bf16.gmra.mrb[0].mxu0 %v601
    %v5168 = vpop.f32.mrb[0].mxu0
    %v5169 = vadd.f32 %v5129, %v5168
    %v5170 = vpop.f32.mrb[0].mxu0
    %v5171 = vpop.f32.mrb[0].mxu0
    %v5172 = vpop.f32.mrb[0].mxu0
    %5173 = vdwg.mxu0
    %5174 = vmatprep.subr.bf16.mxu0 0
    %5175 = vmatpush1.bf16.msra.mxu0 %v4566
    %5176 = vmatprep.subr.bf16.mxu0 0
    %5177 = vmatpush1.bf16.msra.mxu0 %v4567
    %5178 = vmatprep.subr.bf16.mxu0 0
    %5179 = vmatpush1.bf16.msra.mxu0 %v4568
    %5180 = vmatprep.subr.bf16.mxu0 0
    %5181 = vmatpush1.bf16.msra.mxu0 %v4569
    %5182 = vmatprep.subr.bf16.mxu0 0
    %5183 = vmatpush1.bf16.msra.mxu0 %v4570
    %5184 = vmatprep.subr.bf16.mxu0 0
    %5185 = vmatpush1.bf16.msra.mxu0 %v4571
    %5186 = vmatprep.subr.bf16.mxu0 0
    %5187 = vmatpush1.bf16.msra.mxu0 %v4572
    %5188 = vmatprep.subr.bf16.mxu0 0
    %5189 = vmatpush1.bf16.msra.mxu0 %v4573
    %5190 = vmatprep.subr.bf16.mxu0 0
    %5191 = vmatpush1.bf16.msra.mxu0 %v4574
    %5192 = vmatprep.subr.bf16.mxu0 0
    %5193 = vmatpush1.bf16.msra.mxu0 %v4575
    %5194 = vmatprep.subr.bf16.mxu0 0
    %5195 = vmatpush1.bf16.msra.mxu0 %v4576
    %5196 = vmatprep.subr.bf16.mxu0 0
    %5197 = vmatpush1.bf16.msra.mxu0 %v4577
    %5198 = vmatprep.subr.bf16.mxu0 0
    %5199 = vmatpush1.bf16.msra.mxu0 %v4578
    %5200 = vmatprep.subr.bf16.mxu0 0
    %5201 = vmatpush1.bf16.msra.mxu0 %v4579
    %5202 = vmatprep.subr.bf16.mxu0 0
    %5203 = vmatpush1.bf16.msra.mxu0 %v4580
    %5204 = vmatprep.subr.bf16.mxu0 0
    %5205 = vmatpush1.bf16.msra.mxu0 %v4581
    %5206 = vmatprep.mubr.bf16.mxu0 %v641
    %5207 = vmatmul.mubr.bf16.gmra.mrb[0].mxu0 %v627
    %v5208 = vpop.f32.mrb[0].mxu0
    %v5209 = vadd.f32 %v5169, %v5208
    %v5210 = vpop.f32.mrb[0].mxu0
    %v5211 = vpop.f32.mrb[0].mxu0
    %v5212 = vpop.f32.mrb[0].mxu0
    %5213 = vdwg.mxu0
    %5214 = vmatprep.subr.bf16.mxu0 0
    %5215 = vmatpush1.bf16.msra.mxu0 %v4582
    %5216 = vmatprep.subr.bf16.mxu0 0
    %5217 = vmatpush1.bf16.msra.mxu0 %v4583
    %5218 = vmatprep.subr.bf16.mxu0 0
    %5219 = vmatpush1.bf16.msra.mxu0 %v4584
    %5220 = vmatprep.subr.bf16.mxu0 0
    %5221 = vmatpush1.bf16.msra.mxu0 %v4585
    %5222 = vmatprep.subr.bf16.mxu0 0
    %5223 = vmatpush1.bf16.msra.mxu0 %v4586
    %5224 = vmatprep.subr.bf16.mxu0 0
    %5225 = vmatpush1.bf16.msra.mxu0 %v4587
    %5226 = vmatprep.subr.bf16.mxu0 0
    %5227 = vmatpush1.bf16.msra.mxu0 %v4588
    %5228 = vmatprep.subr.bf16.mxu0 0
    %5229 = vmatpush1.bf16.msra.mxu0 %v4589
    %5230 = vmatprep.subr.bf16.mxu0 0
    %5231 = vmatpush1.bf16.msra.mxu0 %v4590
    %5232 = vmatprep.subr.bf16.mxu0 0
    %5233 = vmatpush1.bf16.msra.mxu0 %v4591
    %5234 = vmatprep.subr.bf16.mxu0 0
    %5235 = vmatpush1.bf16.msra.mxu0 %v4592
    %5236 = vmatprep.subr.bf16.mxu0 0
    %5237 = vmatpush1.bf16.msra.mxu0 %v4593
    %5238 = vmatprep.subr.bf16.mxu0 0
    %5239 = vmatpush1.bf16.msra.mxu0 %v4594
    %5240 = vmatprep.subr.bf16.mxu0 0
    %5241 = vmatpush1.bf16.msra.mxu0 %v4595
    %5242 = vmatprep.subr.bf16.mxu0 0
    %5243 = vmatpush1.bf16.msra.mxu0 %v4596
    %5244 = vmatprep.subr.bf16.mxu0 0
    %5245 = vmatpush1.bf16.msra.mxu0 %v4597
    %5246 = vmatprep.mubr.bf16.mxu0 %v651
    %5247 = vmatmul.mubr.bf16.gmra.mrb[0].mxu0 %v649
    %v5248 = vpop.f32.mrb[0].mxu0
    %v5249 = vadd.f32 %v5209, %v5248
    %v5250 = vpop.f32.mrb[0].mxu0
    %v5251 = vpop.f32.mrb[0].mxu0
    %v5252 = vpop.f32.mrb[0].mxu0
    %5253 = vdwg.mxu0
    %5254 = vmatprep.subr.bf16.mxu0 0
    %5255 = vmatpush1.bf16.msra.mxu0 %v4598
    %5256 = vmatprep.subr.bf16.mxu0 0
    %5257 = vmatpush1.bf16.msra.mxu0 %v4599
    %5258 = vmatprep.subr.bf16.mxu0 0
    %5259 = vmatpush1.bf16.msra.mxu0 %v4600
    %5260 = vmatprep.subr.bf16.mxu0 0
    %5261 = vmatpush1.bf16.msra.mxu0 %v4601
    %5262 = vmatprep.subr.bf16.mxu0 0
    %5263 = vmatpush1.bf16.msra.mxu0 %v4602
    %5264 = vmatprep.subr.bf16.mxu0 0
    %5265 = vmatpush1.bf16.msra.mxu0 %v4603
    %5266 = vmatprep.subr.bf16.mxu0 0
    %5267 = vmatpush1.bf16.msra.mxu0 %v4604
    %5268 = vmatprep.subr.bf16.mxu0 0
    %5269 = vmatpush1.bf16.msra.mxu0 %v4605
    %5270 = vmatprep.subr.bf16.mxu0 0
    %5271 = vmatpush1.bf16.msra.mxu0 %v4606
    %5272 = vmatprep.subr.bf16.mxu0 0
    %5273 = vmatpush1.bf16.msra.mxu0 %v4607
    %5274 = vmatprep.subr.bf16.mxu0 0
    %5275 = vmatpush1.bf16.msra.mxu0 %v4608
    %5276 = vmatprep.subr.bf16.mxu0 0
    %5277 = vmatpush1.bf16.msra.mxu0 %v4609
    %5278 = vmatprep.subr.bf16.mxu0 0
    %5279 = vmatpush1.bf16.msra.mxu0 %v4610
    %5280 = vmatprep.subr.bf16.mxu0 0
    %5281 = vmatpush1.bf16.msra.mxu0 %v4611
    %5282 = vmatprep.subr.bf16.mxu0 0
    %5283 = vmatpush1.bf16.msra.mxu0 %v4612
    %5284 = vmatprep.subr.bf16.mxu0 0
    %5285 = vmatpush1.bf16.msra.mxu0 %v4613
    %5286 = vmatprep.mubr.bf16.mxu0 %v648
    %5287 = vmatmul.mubr.bf16.gmra.mrb[0].mxu0 %v634
    %v5288 = vpop.f32.mrb[0].mxu0
    %v5289 = vadd.f32 %v5249, %v5288
    %v5290 = vpop.f32.mrb[0].mxu0
    %v5291 = vpop.f32.mrb[0].mxu0
    %v5292 = vpop.f32.mrb[0].mxu0
    %5293 = vdwg.mxu0
    %5294 = vmatprep.subr.bf16.mxu0 0
    %5295 = vmatpush1.bf16.msra.mxu0 %v4614
    %5296 = vmatprep.subr.bf16.mxu0 0
    %5297 = vmatpush1.bf16.msra.mxu0 %v4615
    %5298 = vmatprep.subr.bf16.mxu0 0
    %5299 = vmatpush1.bf16.msra.mxu0 %v4616
    %5300 = vmatprep.subr.bf16.mxu0 0
    %5301 = vmatpush1.bf16.msra.mxu0 %v4617
    %5302 = vmatprep.subr.bf16.mxu0 0
    %5303 = vmatpush1.bf16.msra.mxu0 %v4618
    %5304 = vmatprep.subr.bf16.mxu0 0
    %5305 = vmatpush1.bf16.msra.mxu0 %v4619
    %5306 = vmatprep.subr.bf16.mxu0 0
    %5307 = vmatpush1.bf16.msra.mxu0 %v4620
    %5308 = vmatprep.subr.bf16.mxu0 0
    %5309 = vmatpush1.bf16.msra.mxu0 %v4621
    %5310 = vmatprep.subr.bf16.mxu0 0
    %5311 = vmatpush1.bf16.msra.mxu0 %v4622
    %5312 = vmatprep.subr.bf16.mxu0 0
    %5313 = vmatpush1.bf16.msra.mxu0 %v4623
    %5314 = vmatprep.subr.bf16.mxu0 0
    %5315 = vmatpush1.bf16.msra.mxu0 %v4624
    %5316 = vmatprep.subr.bf16.mxu0 0
    %5317 = vmatpush1.bf16.msra.mxu0 %v4625
    %5318 = vmatprep.subr.bf16.mxu0 0
    %5319 = vmatpush1.bf16.msra.mxu0 %v4626
    %5320 = vmatprep.subr.bf16.mxu0 0
    %5321 = vmatpush1.bf16.msra.mxu0 %v4627
    %5322 = vmatprep.subr.bf16.mxu0 0
    %5323 = vmatpush1.bf16.msra.mxu0 %v4628
    %5324 = vmatprep.subr.bf16.mxu0 0
    %5325 = vmatpush1.bf16.msra.mxu0 %v4629
    %5326 = vmatprep.mubr.bf16.mxu0 %v652
    %5327 = vmatmul.mubr.bf16.gmra.mrb[0].mxu0 %v650
    %v5328 = vpop.f32.mrb[0].mxu0
    %v5329 = vadd.f32 %v5289, %v5328
    %v5330 = vpop.f32.mrb[0].mxu0
    %v5331 = vpop.f32.mrb[0].mxu0
    %v5332 = vpop.f32.mrb[0].mxu0
    %5333 = vdwg.mxu0
    %5334 = vmatprep.subr.bf16.mxu0 0
    %5335 = vmatpush1.bf16.msra.mxu0 %v4630
    %5336 = vmatprep.subr.bf16.mxu0 0
    %5337 = vmatpush1.bf16.msra.mxu0 %v4631
    %5338 = vmatprep.subr.bf16.mxu0 0
    %5339 = vmatpush1.bf16.msra.mxu0 %v4632
    %5340 = vmatprep.subr.bf16.mxu0 0
    %5341 = vmatpush1.bf16.msra.mxu0 %v4633
    %5342 = vmatprep.subr.bf16.mxu0 0
    %5343 = vmatpush1.bf16.msra.mxu0 %v4634
    %5344 = vmatprep.subr.bf16.mxu0 0
    %5345 = vmatpush1.bf16.msra.mxu0 %v4635
    %5346 = vmatprep.subr.bf16.mxu0 0
    %5347 = vmatpush1.bf16.msra.mxu0 %v4636
    %5348 = vmatprep.subr.bf16.mxu0 0
    %5349 = vmatpush1.bf16.msra.mxu0 %v4637
    %5350 = vmatprep.subr.bf16.mxu0 0
    %5351 = vmatpush1.bf16.msra.mxu0 %v4638
    %5352 = vmatprep.subr.bf16.mxu0 0
    %5353 = vmatpush1.bf16.msra.mxu0 %v4639
    %5354 = vmatprep.subr.bf16.mxu0 0
    %5355 = vmatpush1.bf16.msra.mxu0 %v4640
    %5356 = vmatprep.subr.bf16.mxu0 0
    %5357 = vmatpush1.bf16.msra.mxu0 %v4641
    %5358 = vmatprep.subr.bf16.mxu0 0
    %5359 = vmatpush1.bf16.msra.mxu0 %v4642
    %5360 = vmatprep.subr.bf16.mxu0 0
    %5361 = vmatpush1.bf16.msra.mxu0 %v4643
    %5362 = vmatprep.subr.bf16.mxu0 0
    %5363 = vmatpush1.bf16.msra.mxu0 %v4644
    %5364 = vmatprep.subr.bf16.mxu0 0
    %5365 = vmatpush1.bf16.msra.mxu0 %v4645
    %5366 = vmatprep.mubr.bf16.mxu0 %v690
    %5367 = vmatmul.mubr.bf16.gmra.mrb[0].mxu0 %v676
    %v5368 = vpop.f32.mrb[0].mxu0
    %v5369 = vadd.f32 %v5329, %v5368
    %v5370 = vpop.f32.mrb[0].mxu0
    %v5371 = vpop.f32.mrb[0].mxu0
    %v5372 = vpop.f32.mrb[0].mxu0
    %5373 = vdwg.mxu0
    %5374 = vmatprep.subr.bf16.mxu0 0
    %5375 = vmatpush1.bf16.msra.mxu0 %v4646
    %5376 = vmatprep.subr.bf16.mxu0 0
    %5377 = vmatpush1.bf16.msra.mxu0 %v4647
    %5378 = vmatprep.subr.bf16.mxu0 0
    %5379 = vmatpush1.bf16.msra.mxu0 %v4648
    %5380 = vmatprep.subr.bf16.mxu0 0
    %5381 = vmatpush1.bf16.msra.mxu0 %v4649
    %5382 = vmatprep.subr.bf16.mxu0 0
    %5383 = vmatpush1.bf16.msra.mxu0 %v4650
    %5384 = vmatprep.subr.bf16.mxu0 0
    %5385 = vmatpush1.bf16.msra.mxu0 %v4651
    %5386 = vmatprep.subr.bf16.mxu0 0
    %5387 = vmatpush1.bf16.msra.mxu0 %v4652
    %5388 = vmatprep.subr.bf16.mxu0 0
    %5389 = vmatpush1.bf16.msra.mxu0 %v4653
    %5390 = vmatprep.subr.bf16.mxu0 0
    %5391 = vmatpush1.bf16.msra.mxu0 %v4654
    %5392 = vmatprep.subr.bf16.mxu0 0
    %5393 = vmatpush1.bf16.msra.mxu0 %v4655
    %5394 = vmatprep.subr.bf16.mxu0 0
    %5395 = vmatpush1.bf16.msra.mxu0 %v4656
    %5396 = vmatprep.subr.bf16.mxu0 0
    %5397 = vmatpush1.bf16.msra.mxu0 %v4657
    %5398 = vmatprep.subr.bf16.mxu0 0
    %5399 = vmatpush1.bf16.msra.mxu0 %v4658
    %5400 = vmatprep.subr.bf16.mxu0 0
    %5401 = vmatpush1.bf16.msra.mxu0 %v4659
    %5402 = vmatprep.subr.bf16.mxu0 0
    %5403 = vmatpush1.bf16.msra.mxu0 %v4660
    %5404 = vmatprep.subr.bf16.mxu0 0
    %5405 = vmatpush1.bf16.msra.mxu0 %v4661
    %5406 = vmatprep.mubr.bf16.mxu0 %v700
    %5407 = vmatmul.mubr.bf16.gmra.mrb[0].mxu0 %v698
    %v5408 = vpop.f32.mrb[0].mxu0
    %v5409 = vadd.f32 %v5369, %v5408
    %v5410 = vpop.f32.mrb[0].mxu0
    %v5411 = vpop.f32.mrb[0].mxu0
    %v5412 = vpop.f32.mrb[0].mxu0
    %5413 = vdwg.mxu0
    %5414 = vmatprep.subr.bf16.mxu0 0
    %5415 = vmatpush1.bf16.msra.mxu0 %v4662
    %5416 = vmatprep.subr.bf16.mxu0 0
    %5417 = vmatpush1.bf16.msra.mxu0 %v4663
    %5418 = vmatprep.subr.bf16.mxu0 0
    %5419 = vmatpush1.bf16.msra.mxu0 %v4664
    %5420 = vmatprep.subr.bf16.mxu0 0
    %5421 = vmatpush1.bf16.msra.mxu0 %v4665
    %5422 = vmatprep.subr.bf16.mxu0 0
    %5423 = vmatpush1.bf16.msra.mxu0 %v4666
    %5424 = vmatprep.subr.bf16.mxu0 0
    %5425 = vmatpush1.bf16.msra.mxu0 %v4667
    %5426 = vmatprep.subr.bf16.mxu0 0
    %5427 = vmatpush1.bf16.msra.mxu0 %v4668
    %5428 = vmatprep.subr.bf16.mxu0 0
    %5429 = vmatpush1.bf16.msra.mxu0 %v4669
    %5430 = vmatprep.subr.bf16.mxu0 0
    %5431 = vmatpush1.bf16.msra.mxu0 %v4670
    %5432 = vmatprep.subr.bf16.mxu0 0
    %5433 = vmatpush1.bf16.msra.mxu0 %v4671
    %5434 = vmatprep.subr.bf16.mxu0 0
    %5435 = vmatpush1.bf16.msra.mxu0 %v4672
    %5436 = vmatprep.subr.bf16.mxu0 0
    %5437 = vmatpush1.bf16.msra.mxu0 %v4673
    %5438 = vmatprep.subr.bf16.mxu0 0
    %5439 = vmatpush1.bf16.msra.mxu0 %v4674
    %5440 = vmatprep.subr.bf16.mxu0 0
    %5441 = vmatpush1.bf16.msra.mxu0 %v4675
    %5442 = vmatprep.subr.bf16.mxu0 0
    %5443 = vmatpush1.bf16.msra.mxu0 %v4676
    %5444 = vmatprep.subr.bf16.mxu0 0
    %5445 = vmatpush1.bf16.msra.mxu0 %v4677
    %5446 = vmatprep.mubr.bf16.mxu0 %v697
    %5447 = vmatmul.mubr.bf16.gmra.mrb[0].mxu0 %v683
    %v5448 = vpop.f32.mrb[0].mxu0
    %v5449 = vadd.f32 %v5409, %v5448
    %v5450 = vpop.f32.mrb[0].mxu0
    %v5451 = vpop.f32.mrb[0].mxu0
    %v5452 = vpop.f32.mrb[0].mxu0
    %5453 = vdwg.mxu0
    %5454 = vmatprep.subr.bf16.mxu0 0
    %5455 = vmatpush1.bf16.msra.mxu0 %v4678
    %5456 = vmatprep.subr.bf16.mxu0 0
    %5457 = vmatpush1.bf16.msra.mxu0 %v4679
    %5458 = vmatprep.subr.bf16.mxu0 0
    %5459 = vmatpush1.bf16.msra.mxu0 %v4680
    %5460 = vmatprep.subr.bf16.mxu0 0
    %5461 = vmatpush1.bf16.msra.mxu0 %v4681
    %5462 = vmatprep.subr.bf16.mxu0 0
    %5463 = vmatpush1.bf16.msra.mxu0 %v4682
    %5464 = vmatprep.subr.bf16.mxu0 0
    %5465 = vmatpush1.bf16.msra.mxu0 %v4683
    %5466 = vmatprep.subr.bf16.mxu0 0
    %5467 = vmatpush1.bf16.msra.mxu0 %v4684
    %5468 = vmatprep.subr.bf16.mxu0 0
    %5469 = vmatpush1.bf16.msra.mxu0 %v4685
    %5470 = vmatprep.subr.bf16.mxu0 0
    %5471 = vmatpush1.bf16.msra.mxu0 %v4686
    %5472 = vmatprep.subr.bf16.mxu0 0
    %5473 = vmatpush1.bf16.msra.mxu0 %v4687
    %5474 = vmatprep.subr.bf16.mxu0 0
    %5475 = vmatpush1.bf16.msra.mxu0 %v4688
    %5476 = vmatprep.subr.bf16.mxu0 0
    %5477 = vmatpush1.bf16.msra.mxu0 %v4689
    %5478 = vmatprep.subr.bf16.mxu0 0
    %5479 = vmatpush1.bf16.msra.mxu0 %v4690
    %5480 = vmatprep.subr.bf16.mxu0 0
    %5481 = vmatpush1.bf16.msra.mxu0 %v4691
    %5482 = vmatprep.subr.bf16.mxu0 0
    %5483 = vmatpush1.bf16.msra.mxu0 %v4692
    %5484 = vmatprep.subr.bf16.mxu0 0
    %5485 = vmatpush1.bf16.msra.mxu0 %v4693
    %5486 = vmatprep.mubr.bf16.mxu0 %v701
    %5487 = vmatmul.mubr.bf16.gmra.mrb[0].mxu0 %v699
    %v5488 = vpop.f32.mrb[0].mxu0
    %v5489 = vadd.f32 %v5449, %v5488
    %v5490 = vpop.f32.mrb[0].mxu0
    %v5491 = vpop.f32.mrb[0].mxu0
    %v5492 = vpop.f32.mrb[0].mxu0
    %5493 = vdwg.mxu0
    %5494 = vmatprep.subr.bf16.mxu0 0
    %5495 = vmatpush1.bf16.msra.mxu0 %v4694
    %5496 = vmatprep.subr.bf16.mxu0 0
    %5497 = vmatpush1.bf16.msra.mxu0 %v4695
    %5498 = vmatprep.subr.bf16.mxu0 0
    %5499 = vmatpush1.bf16.msra.mxu0 %v4696
    %5500 = vmatprep.subr.bf16.mxu0 0
    %5501 = vmatpush1.bf16.msra.mxu0 %v4697
    %5502 = vmatprep.subr.bf16.mxu0 0
    %5503 = vmatpush1.bf16.msra.mxu0 %v4698
    %5504 = vmatprep.subr.bf16.mxu0 0
    %5505 = vmatpush1.bf16.msra.mxu0 %v4699
    %5506 = vmatprep.subr.bf16.mxu0 0
    %5507 = vmatpush1.bf16.msra.mxu0 %v4700
    %5508 = vmatprep.subr.bf16.mxu0 0
    %5509 = vmatpush1.bf16.msra.mxu0 %v4701
    %5510 = vmatprep.subr.bf16.mxu0 0
    %5511 = vmatpush1.bf16.msra.mxu0 %v4702
    %5512 = vmatprep.subr.bf16.mxu0 0
    %5513 = vmatpush1.bf16.msra.mxu0 %v4703
    %5514 = vmatprep.subr.bf16.mxu0 0
    %5515 = vmatpush1.bf16.msra.mxu0 %v4704
    %5516 = vmatprep.subr.bf16.mxu0 0
    %5517 = vmatpush1.bf16.msra.mxu0 %v4705
    %5518 = vmatprep.subr.bf16.mxu0 0
    %5519 = vmatpush1.bf16.msra.mxu0 %v4706
    %5520 = vmatprep.subr.bf16.mxu0 0
    %5521 = vmatpush1.bf16.msra.mxu0 %v4707
    %5522 = vmatprep.subr.bf16.mxu0 0
    %5523 = vmatpush1.bf16.msra.mxu0 %v4708
    %5524 = vmatprep.subr.bf16.mxu0 0
    %5525 = vmatpush1.bf16.msra.mxu0 %v4709
    %5526 = vmatprep.mubr.bf16.mxu0 %v739
    %5527 = vmatmul.mubr.bf16.gmra.mrb[0].mxu0 %v725
    %v5528 = vpop.f32.mrb[0].mxu0
    %v5529 = vadd.f32 %v5489, %v5528
    %v5530 = vpop.f32.mrb[0].mxu0
    %v5531 = vpop.f32.mrb[0].mxu0
    %v5532 = vpop.f32.mrb[0].mxu0
    %5533 = vdwg.mxu0
    %5534 = vmatprep.subr.bf16.mxu0 0
    %5535 = vmatpush1.bf16.msra.mxu0 %v4710
    %5536 = vmatprep.subr.bf16.mxu0 0
    %5537 = vmatpush1.bf16.msra.mxu0 %v4711
    %5538 = vmatprep.subr.bf16.mxu0 0
    %5539 = vmatpush1.bf16.msra.mxu0 %v4712
    %5540 = vmatprep.subr.bf16.mxu0 0
    %5541 = vmatpush1.bf16.msra.mxu0 %v4713
    %5542 = vmatprep.subr.bf16.mxu0 0
    %5543 = vmatpush1.bf16.msra.mxu0 %v4714
    %5544 = vmatprep.subr.bf16.mxu0 0
    %5545 = vmatpush1.bf16.msra.mxu0 %v4715
    %5546 = vmatprep.subr.bf16.mxu0 0
    %5547 = vmatpush1.bf16.msra.mxu0 %v4716
    %5548 = vmatprep.subr.bf16.mxu0 0
    %5549 = vmatpush1.bf16.msra.mxu0 %v4717
    %5550 = vmatprep.subr.bf16.mxu0 0
    %5551 = vmatpush1.bf16.msra.mxu0 %v4718
    %5552 = vmatprep.subr.bf16.mxu0 0
    %5553 = vmatpush1.bf16.msra.mxu0 %v4719
    %5554 = vmatprep.subr.bf16.mxu0 0
    %5555 = vmatpush1.bf16.msra.mxu0 %v4720
    %5556 = vmatprep.subr.bf16.mxu0 0
    %5557 = vmatpush1.bf16.msra.mxu0 %v4721
    %5558 = vmatprep.subr.bf16.mxu0 0
    %5559 = vmatpush1.bf16.msra.mxu0 %v4722
    %5560 = vmatprep.subr.bf16.mxu0 0
    %5561 = vmatpush1.bf16.msra.mxu0 %v4723
    %5562 = vmatprep.subr.bf16.mxu0 0
    %5563 = vmatpush1.bf16.msra.mxu0 %v4724
    %5564 = vmatprep.subr.bf16.mxu0 0
    %5565 = vmatpush1.bf16.msra.mxu0 %v4725
    %5566 = vmatprep.mubr.bf16.mxu0 %v749
    %5567 = vmatmul.mubr.bf16.gmra.mrb[0].mxu0 %v747
    %v5568 = vpop.f32.mrb[0].mxu0
    %v5569 = vadd.f32 %v5529, %v5568
    %v5570 = vpop.f32.mrb[0].mxu0
    %v5571 = vpop.f32.mrb[0].mxu0
    %v5572 = vpop.f32.mrb[0].mxu0
    %5573 = vdwg.mxu0
    %5574 = vmatprep.subr.bf16.mxu0 0
    %5575 = vmatpush1.bf16.msra.mxu0 %v4726
    %5576 = vmatprep.subr.bf16.mxu0 0
    %5577 = vmatpush1.bf16.msra.mxu0 %v4727
    %5578 = vmatprep.subr.bf16.mxu0 0
    %5579 = vmatpush1.bf16.msra.mxu0 %v4728
    %5580 = vmatprep.subr.bf16.mxu0 0
    %5581 = vmatpush1.bf16.msra.mxu0 %v4729
    %5582 = vmatprep.subr.bf16.mxu0 0
    %5583 = vmatpush1.bf16.msra.mxu0 %v4730
    %5584 = vmatprep.subr.bf16.mxu0 0
    %5585 = vmatpush1.bf16.msra.mxu0 %v4731
    %5586 = vmatprep.subr.bf16.mxu0 0
    %5587 = vmatpush1.bf16.msra.mxu0 %v4732
    %5588 = vmatprep.subr.bf16.mxu0 0
    %5589 = vmatpush1.bf16.msra.mxu0 %v4733
    %5590 = vmatprep.subr.bf16.mxu0 0
    %5591 = vmatpush1.bf16.msra.mxu0 %v4734
    %5592 = vmatprep.subr.bf16.mxu0 0
    %5593 = vmatpush1.bf16.msra.mxu0 %v4735
    %5594 = vmatprep.subr.bf16.mxu0 0
    %5595 = vmatpush1.bf16.msra.mxu0 %v4736
    %5596 = vmatprep.subr.bf16.mxu0 0
    %5597 = vmatpush1.bf16.msra.mxu0 %v4737
    %5598 = vmatprep.subr.bf16.mxu0 0
    %5599 = vmatpush1.bf16.msra.mxu0 %v4738
    %5600 = vmatprep.subr.bf16.mxu0 0
    %5601 = vmatpush1.bf16.msra.mxu0 %v4739
    %5602 = vmatprep.subr.bf16.mxu0 0
    %5603 = vmatpush1.bf16.msra.mxu0 %v4740
    %5604 = vmatprep.subr.bf16.mxu0 0
    %5605 = vmatpush1.bf16.msra.mxu0 %v4741
    %5606 = vmatprep.mubr.bf16.mxu0 %v746
    %5607 = vmatmul.mubr.bf16.gmra.mrb[0].mxu0 %v732
    %v5608 = vpop.f32.mrb[0].mxu0
    %v5609 = vadd.f32 %v5569, %v5608
    %v5610 = vpop.f32.mrb[0].mxu0
    %v5611 = vpop.f32.mrb[0].mxu0
    %v5612 = vpop.f32.mrb[0].mxu0
    %5613 = vdwg.mxu0
    %5614 = vmatprep.subr.bf16.mxu0 0
    %5615 = vmatpush1.bf16.msra.mxu0 %v4742
    %5616 = vmatprep.subr.bf16.mxu0 0
    %5617 = vmatpush1.bf16.msra.mxu0 %v4743
    %5618 = vmatprep.subr.bf16.mxu0 0
    %5619 = vmatpush1.bf16.msra.mxu0 %v4744
    %5620 = vmatprep.subr.bf16.mxu0 0
    %5621 = vmatpush1.bf16.msra.mxu0 %v4745
    %5622 = vmatprep.subr.bf16.mxu0 0
    %5623 = vmatpush1.bf16.msra.mxu0 %v4746
    %5624 = vmatprep.subr.bf16.mxu0 0
    %5625 = vmatpush1.bf16.msra.mxu0 %v4747
    %5626 = vmatprep.subr.bf16.mxu0 0
    %5627 = vmatpush1.bf16.msra.mxu0 %v4748
    %5628 = vmatprep.subr.bf16.mxu0 0
    %5629 = vmatpush1.bf16.msra.mxu0 %v4749
    %5630 = vmatprep.subr.bf16.mxu0 0
    %5631 = vmatpush1.bf16.msra.mxu0 %v4750
    %5632 = vmatprep.subr.bf16.mxu0 0
    %5633 = vmatpush1.bf16.msra.mxu0 %v4751
    %5634 = vmatprep.subr.bf16.mxu0 0
    %5635 = vmatpush1.bf16.msra.mxu0 %v4752
    %5636 = vmatprep.subr.bf16.mxu0 0
    %5637 = vmatpush1.bf16.msra.mxu0 %v4753
    %5638 = vmatprep.subr.bf16.mxu0 0
    %5639 = vmatpush1.bf16.msra.mxu0 %v4754
    %5640 = vmatprep.subr.bf16.mxu0 0
    %5641 = vmatpush1.bf16.msra.mxu0 %v4755
    %5642 = vmatprep.subr.bf16.mxu0 0
    %5643 = vmatpush1.bf16.msra.mxu0 %v4756
    %5644 = vmatprep.subr.bf16.mxu0 0
    %5645 = vmatpush1.bf16.msra.mxu0 %v4757
    %5646 = vmatprep.mubr.bf16.mxu0 %v750
    %5647 = vmatmul.mubr.bf16.gmra.mrb[0].mxu0 %v748
    %v5648 = vpop.f32.mrb[0].mxu0
    %v5649 = vadd.f32 %v5609, %v5648
    %v5650 = vpop.f32.mrb[0].mxu0
    %v5651 = vpop.f32.mrb[0].mxu0
    %v5652 = vpop.f32.mrb[0].mxu0
    %5653 = vdwg.mxu0
    %v5654 = vmin.f32 %v5649, 1.0
    %v5655 = vmul.f32 %v5654, 1.442695
    %v5656 = vpow.pop %v5655
    %v5657 = vld [vmem:[%s5] sm:$0x3]
    %v5658 = vmul.f32 %v5656, %v5657
    %v5659 = vadd.f32 %v2954, %v5658
    %vm5660 = vcmask 58368
    %5661 = vst.msk [vmem:[#allocation2] sm:$0x3] %vm5660, %v5659
    %v5662 = vmul.f32 %v5656, %v5656
    %v5663 = vmul.f32 %v2954, %v2954
    %v5664 = vadd.f32 %v5662, %v5663
    %v5665 = vmul.f32 %v5664, 0.5
    %v5666 = vsub.f32 %v5665, %v5654
    %v5667 = vsub.f32 %v5666, 0.5
    %v5668 = vsel %vm5660, %v5667, 0.0
    %5669 = vadd.xlane.f32.xlu0 %v5668
    %v5670 = vpop.xlane.xlu0 %5669
    %v5671 = vrot.slane %v5670, 4
    %v5672 = vadd.f32 %v5670, %v5671
    %v5673 = vrot.slane %v5672, 2
    %v5674 = vadd.f32 %v5672, %v5673
    %v5675 = vrot.slane %v5674, 1
    %v5676 = vadd.f32 %v5674, %v5675
    %s5677 = vtos %v5676
    %v5678 = vstv %s5677
    %vm5679 = vcmask 0
    %5680 = vst.msk [vmem:[#allocation4] sm:$0x1] %vm5679, %v5678
    // Predicated region
    $region26: #{encoder_forward.13} parent=1 // pred_check
      _
    $region27: #{encoder_forward.13} parent=1 // pred_check_branch
      %5682 = sbr.rel (0) target = $region29
    $region28: #{encoder_forward.13} parent=1 // pred_region
      %s5684 = ssub.s32 32, 32
      %5685 = vsyncadd [#allocation3], %s5684
      %s5687 = sshll.u32 [#allocation2], 4
      %s5688 = int_to_ptr.vmem [resolvable:$true] %s5687
      %5690 = dma.vmem_to_hbm [thread:$0]  %s5688, 32, %s6, [#allocation3]
    $region29: #{encoder_forward.13} parent=1 // pred_fallthru
      _
    // Predicated region
    $region30: #{encoder_forward.13} parent=1 // pred_check
      _
    $region31: #{encoder_forward.13} parent=1 // pred_check_branch
      %5692 = sbr.rel (0) target = $region33
    $region32: #{encoder_forward.13} parent=1 // pred_region
      %s5694 = ssub.s32 16, 16
      %5695 = vsyncadd [#allocation5], %s5694
      %s5697 = sshll.u32 [#allocation4], 4
      %s5698 = int_to_ptr.vmem [resolvable:$true] %s5697
      %5700 = dma.vmem_to_hbm [thread:$0]  %s5698, 16, %s7, [#allocation5]
    $region33: #{encoder_forward.13} parent=1 // pred_fallthru
      _
    // Predicated region
    $region34: #{encoder_forward.13} parent=1 // pred_check
      _
    $region35: #{encoder_forward.13} parent=1 // pred_check_branch
      %5702 = sbr.rel (0) target = $region37
    $region36: #{encoder_forward.13} parent=1 // pred_region
      %5703 = dma.done [#allocation3], 32
    $region37: #{encoder_forward.13} parent=1 // pred_fallthru
      _
    // Predicated region
    $region38: #{encoder_forward.13} parent=1 // pred_check
      _
    $region39: #{encoder_forward.13} parent=1 // pred_check_branch
      %5705 = sbr.rel (0) target = $region41
    $region40: #{encoder_forward.13} parent=1 // pred_region
      %5706 = dma.done [#allocation5], 16
    $region41: #{encoder_forward.13} parent=1 // pred_fallthru
      _
    %5707 = vsyncpa [#allocation3], 1
    %5708 = vsyncpa [#allocation5], 1

</llo_original>
